<compile_context>
chip_gen: v6e
topology: v6e:2x2x1
jax: 0.10.0
libtpu: 0.0.40
codegen_flags: <defaults>
</compile_context>

<pallas_src>
import functools

import jax
import jax.numpy as jnp
from jax.experimental import pallas as pl
from jax.experimental.pallas import tpu as pltpu


_CH_ALIGN = 8   # channel counts padded to the f32 sublane tile -> aligned concats
_ENC_CONVS = ("ex1", "ty1", "ex2", "ty2", "ex3", "ty3", "ex4", "ty4", "ex5")
_DEC_CONVS = ("d4", "d3", "d2", "d1")


def _ceil_to(x, m):
    return (x + m - 1) // m * m


# ---------------------------------------------------------------------------
# pltpu.roll availability / convention probe (cached).
#   +1 : jnp.roll semantics (out[i] = in[i - shift])
#   -1 : opposite convention
#    0 : roll unavailable -> zero-pad + static-slice fallback everywhere
# ---------------------------------------------------------------------------
_ROLL_SIGN = [None]


def _roll_sign():
    if _ROLL_SIGN[0] is None:
        try:
            def probe(x_ref, o_ref):
                o_ref[...] = pltpu.roll(x_ref[...], shift=1, axis=1)

            xp = jnp.arange(8 * 128, dtype=jnp.float32).reshape(8, 128)
            rp = jax.device_get(pl.pallas_call(
                probe,
                out_shape=jax.ShapeDtypeStruct((8, 128), jnp.float32))(xp))
            if float(rp[0, 0]) == 127.0:
                _ROLL_SIGN[0] = 1
            elif float(rp[0, 0]) == 1.0:
                _ROLL_SIGN[0] = -1
            else:
                _ROLL_SIGN[0] = 0
        except Exception:        # any lowering failure -> safe fallback path
            _ROLL_SIGN[0] = 0
    return _ROLL_SIGN[0]


# ---------------------------------------------------------------------------
# In-kernel building blocks (channels-major flat images: (C, M), M = B*H*W)
# ---------------------------------------------------------------------------

def _shifted(a, d):
    """shifted[:, col] = a[:, col + d].  Columns whose source lies outside the
    image (or wraps across images / array ends) are either wrapped (roll path)
    or zero (pad path); callers mask (conv) or discard (pool) those columns."""
    if d == 0:
        return a
    m = a.shape[-1]
    sign = _roll_sign()
    if m % 128 == 0 and sign != 0:
        # lane-dense levels: XLU rotate, no padded-buffer copy.
        return pltpu.roll(a, shift=(sign * -d) % m, axis=1)
    # tiny deep levels (< 1 vreg of lanes): zero-pad + static slice, negligible.
    c = a.shape[0]
    z = jnp.zeros((c, abs(d)), a.dtype)
    ap = jnp.concatenate([z, a, z], axis=1)
    return ap[:, abs(d) + d: abs(d) + d + m]


def _conv3x3(sources, mask, b_ref, W, relu=True):
    """3x3 'same' conv on channels-major flat images.

    sources : list of (activation (Cin_i, M) f32, weight ref (Cout, 9*Cin_i) bf16).
              One tap-stacked bf16 MXU matmul per source, f32 accumulation
              across sources (decoder skip "concat" without the concat).
    mask    : (9, M) f32 per-tap boundary mask (precomputed on the host).
    """
    acc = None
    for a, w_ref in sources:
        taps = []
        for k in range(9):
            dy, dx = k // 3 - 1, k % 3 - 1
            t = _shifted(a, dy * W + dx)
            if k != 4:                       # centre tap is never masked
                t = t * mask[k:k + 1, :]
            taps.append(t)
        stacked = jnp.concatenate(taps, axis=0).astype(jnp.bfloat16)  # (9*Cin, M)
        y = jnp.dot(w_ref[...], stacked, preferred_element_type=jnp.float32)
        acc = y if acc is None else acc + y
    out = acc + b_ref[...]
    return jnp.maximum(out, 0.0) if relu else out


def _maxpool2x2(a, sel_ref, W):
    """2x2 stride-2 max pool: f32 max over the 4 window taps, then a bf16 0/1
    decimation matmul (precomputed selection matrix picks window top-lefts)."""
    m = jnp.maximum(jnp.maximum(a, _shifted(a, 1)),
                    jnp.maximum(_shifted(a, W), _shifted(a, W + 1)))
    return jnp.dot(m.astype(jnp.bfloat16), sel_ref[...],
                   preferred_element_type=jnp.float32)


def _upsample2x(a, sel_ref):
    """Nearest-neighbour 2x upsample via a bf16 0/1 selection matmul."""
    return jnp.dot(a.astype(jnp.bfloat16), sel_ref[...],
                   preferred_element_type=jnp.float32)


# ---------------------------------------------------------------------------
# The fused whole-network kernel (one grid step == B images, all VMEM-resident)
# ---------------------------------------------------------------------------

def _dual_unet_kernel(x_ref, y_ref, *rest, W1):
    o_ref = rest[-1]
    it = iter(rest[:-1])
    enc = {n: (next(it), next(it)) for n in _ENC_CONVS}
    dec = {n: (next(it), next(it), next(it), next(it)) for n in _DEC_CONVS}
    w_out, b_out = next(it), next(it)
    masks = [next(it)[...] for _ in range(5)]        # (9, M_l) f32, per level
    psel = [next(it) for _ in range(4)]              # pool decimation sels (bf16)
    usel = [next(it) for _ in range(4)]              # upsample sels (bf16)

    Ws = (W1, W1 // 2, W1 // 4, W1 // 8, W1 // 16)

    x = x_ref[...]                                   # (in_ch_pad, M1) f32
    y = y_ref[...]                                   # (d_ch_pad,  M1) f32

    # ----- DualEncoder_CWF ('ToRGB': depth fused additively into RGB path) ----
    e1 = _conv3x3([(x, enc["ex1"][0])], masks[0], enc["ex1"][1], Ws[0])
    t1 = _conv3x3([(y, enc["ty1"][0])], masks[0], enc["ty1"][1], Ws[0])
    x2 = _maxpool2x2(e1 + t1, psel[0], Ws[0])
    y2 = _maxpool2x2(t1, psel[0], Ws[0])

    e2 = _conv3x3([(x2, enc["ex2"][0])], masks[1], enc["ex2"][1], Ws[1])
    t2 = _conv3x3([(y2, enc["ty2"][0])], masks[1], enc["ty2"][1], Ws[1])
    x3 = _maxpool2x2(e2 + t2, psel[1], Ws[1])
    y3 = _maxpool2x2(t2, psel[1], Ws[1])

    e3 = _conv3x3([(x3, enc["ex3"][0])], masks[2], enc["ex3"][1], Ws[2])
    t3 = _conv3x3([(y3, enc["ty3"][0])], masks[2], enc["ty3"][1], Ws[2])
    x4 = _maxpool2x2(e3 + t3, psel[2], Ws[2])
    y4 = _maxpool2x2(t3, psel[2], Ws[2])

    e4 = _conv3x3([(x4, enc["ex4"][0])], masks[3], enc["ex4"][1], Ws[3])
    t4 = _conv3x3([(y4, enc["ty4"][0])], masks[3], enc["ty4"][1], Ws[3])
    x5 = _maxpool2x2(e4 + t4, psel[3], Ws[3])

    e5 = _conv3x3([(x5, enc["ex5"][0])], masks[4], enc["ex5"][1], Ws[4])

    # ----- Decoder: upsample + per-source stacked matmuls (no channel concat) --
    wu, we, wt, b = dec["d4"]
    d4 = _conv3x3([(_upsample2x(e5, usel[0]), wu), (e4, we), (t4, wt)],
                  masks[3], b, Ws[3])
    wu, we, wt, b = dec["d3"]
    d3 = _conv3x3([(_upsample2x(d4, usel[1]), wu), (e3, we), (t3, wt)],
                  masks[2], b, Ws[2])
    wu, we, wt, b = dec["d2"]
    d2 = _conv3x3([(_upsample2x(d3, usel[2]), wu), (e2, we), (t2, wt)],
                  masks[1], b, Ws[1])
    wu, we, wt, b = dec["d1"]
    d1 = _conv3x3([(_upsample2x(d2, usel[3]), wu), (e1, we), (t1, wt)],
                  masks[0], b, Ws[0])

    # final 1x1 conv, no ReLU: one dense, lane-wide (out_ch, M1) store
    o_ref[...] = jnp.dot(w_out[...], d1.astype(jnp.bfloat16),
                         preferred_element_type=jnp.float32) + b_out[...]


# ---------------------------------------------------------------------------
# Host-side constants (built once, passed as replicated BlockSpec inputs)
# ---------------------------------------------------------------------------

def _rep_spec(shape):
    nd = len(shape)
    return pl.BlockSpec(tuple(int(s) for s in shape),
                        lambda i, _nd=nd: (0,) * _nd)


def _conv_masks(H, W, B):
    hw = H * W
    col = jnp.arange(B * hw, dtype=jnp.int32) % hw
    h, w = col // W, col % W
    rows = []
    for k in range(9):
        dy, dx = k // 3 - 1, k % 3 - 1
        rows.append((h + dy >= 0) & (h + dy < H) & (w + dx >= 0) & (w + dx < W))
    return jnp.stack(rows, axis=0).astype(jnp.float32)           # (9, B*H*W)


def _pool_sel(H, W, B):
    Ho, Wo = H // 2, W // 2
    M, Mo = H * W, Ho * Wo
    c = jnp.arange(B * Mo, dtype=jnp.int32)
    src = (c // Mo) * M + 2 * ((c % Mo) // Wo) * W + 2 * ((c % Mo) % Wo)
    r = jnp.arange(B * M, dtype=jnp.int32)
    return (r[:, None] == src[None, :]).astype(jnp.bfloat16)     # (B*M, B*Mo)


def _up_sel(Ho, Wo, H, W, B):
    Mo, M = Ho * Wo, H * W
    c = jnp.arange(B * M, dtype=jnp.int32)
    b, i = c // M, c % M
    src = b * Mo + ((i // W) // 2) * Wo + ((i % W) // 2)
    r = jnp.arange(B * Mo, dtype=jnp.int32)
    return (r[:, None] == src[None, :]).astype(jnp.bfloat16)     # (B*Mo, B*M)


# ---------------------------------------------------------------------------
# Parameters (synthetic init; layouts documented for loading real weights)
# ---------------------------------------------------------------------------

def _prep_conv3x3(w, b, cin_pad=None):
    """torch (Cout, Cin, 3, 3) f32 + (Cout,) bias -> ((Cout, 9*Cin_pad) bf16,
    (Cout, 1) f32).  Columns are tap-major (k = kh*3 + kw), channel-minor;
    Cin zero-padded to a multiple of 8 (aligned in-kernel tap stack)."""
    cout, cin = w.shape[0], w.shape[1]
    if cin_pad is None:
        cin_pad = _ceil_to(cin, _CH_ALIGN)
    if cin_pad != cin:
        w = jnp.pad(w, ((0, 0), (0, cin_pad - cin), (0, 0), (0, 0)))
    w2 = jnp.transpose(w, (0, 2, 3, 1)).reshape(cout, 9 * cin_pad)
    return w2.astype(jnp.bfloat16), b.reshape(cout, 1).astype(jnp.float32)


def _prep_decoder_conv(w, b, cu, ce, ct):
    """Split a decoder conv weight over the concatenated input
    [upsampled | e_skip | t_skip] into three per-source stacked weights."""
    wu, bb = _prep_conv3x3(w[:, :cu], b)
    we, _ = _prep_conv3x3(w[:, cu:cu + ce], b)
    wt, _ = _prep_conv3x3(w[:, cu + ce:], b)
    return wu, we, wt, bb


def init_params(key, in_ch=3, d_ch=1, out_ch=5, ch=(8, 16, 32, 32, 32)):
    c1, c2, c3, c4, c5 = ch
    keys = iter(jax.random.split(key, 32))

    def conv_wb(cin, cout, k=3):
        kw, kb = jax.random.split(next(keys))
        fan = cin * k * k
        w = jax.random.normal(kw, (cout, cin, k, k), jnp.float32) * (2.0 / fan) ** 0.5
        b = jax.random.normal(kb, (cout,), jnp.float32) * 0.01
        return w, b

    p = {}
    p["ex1"] = _prep_conv3x3(*conv_wb(in_ch, c1))
    p["ty1"] = _prep_conv3x3(*conv_wb(d_ch, c1))
    p["ex2"] = _prep_conv3x3(*conv_wb(c1, c2))
    p["ty2"] = _prep_conv3x3(*conv_wb(c1, c2))
    p["ex3"] = _prep_conv3x3(*conv_wb(c2, c3))
    p["ty3"] = _prep_conv3x3(*conv_wb(c2, c3))
    p["ex4"] = _prep_conv3x3(*conv_wb(c3, c4))
    p["ty4"] = _prep_conv3x3(*conv_wb(c3, c4))
    p["ex5"] = _prep_conv3x3(*conv_wb(c4, c5))

    def dec(cu, ce, ct, cout):
        w, b = conv_wb(cu + ce + ct, cout)
        return _prep_decoder_conv(w, b, cu, ce, ct)

    p["d4"] = dec(c5, c4, c4, c4)
    p["d3"] = dec(c4, c3, c3, c3)
    p["d2"] = dec(c3, c2, c2, c2)
    p["d1"] = dec(c2, c1, c1, c1)

    kw, kb = jax.random.split(next(keys))
    wo = jax.random.normal(kw, (out_ch, c1), jnp.float32) * (2.0 / c1) ** 0.5
    bo = jax.random.normal(kb, (out_ch,), jnp.float32) * 0.01
    p["out"] = (wo.astype(jnp.bfloat16), bo.reshape(out_ch, 1).astype(jnp.float32))
    return p


# ---------------------------------------------------------------------------
# Host-side wrapper
# ---------------------------------------------------------------------------

def _pick_images_per_step(N, hw):
    """Fold images side-by-side along lanes so the deep UNet levels stay
    lane-dense, keep >= 2 grid steps when possible (v7x has 2 TensorCores),
    and bound the per-step activation footprint."""
    best = 1
    for b in range(1, N + 1):
        if N % b != 0:
            continue
        if N >= 2 and N // b < 2:          # keep both v7x cores busy
            continue
        if 320 * b * hw * 4 > (12 << 20):  # rough per-step activation budget
            continue
        best = b
    return best


def dual_unet_cwf(params, x_nchw, y_nchw, *, images_per_step=None):
    """NCHW in / NCHW out, matching the PyTorch module interface."""
    N, cx, H, W = x_nchw.shape
    Ny, cy, Hy, Wy = y_nchw.shape
    assert (N, H, W) == (Ny, Hy, Wy)
    assert H % 16 == 0 and W % 16 == 0, "4 pooling levels require H, W % 16 == 0"
    hw = H * W
    out_ch = params["out"][0].shape[0]

    B = images_per_step if images_per_step is not None else _pick_images_per_step(N, hw)
    assert N % B == 0
    G = N // B                                     # grid length ("parallel")

    _roll_sign()                                   # probe pltpu.roll once

    cxp, cyp = _ceil_to(cx, _CH_ALIGN), _ceil_to(cy, _CH_ALIGN)

    def fold(a, c, cp):
        a = a.reshape(N, c, hw)
        if cp != c:
            a = jnp.pad(a, ((0, 0), (0, cp - c), (0, 0)))
        # (G, B, C, HW) -> (G, C, B*HW): images side-by-side along lanes
        return a.reshape(G, B, cp, hw).transpose(0, 2, 1, 3).reshape(G, cp, B * hw)

    xf, yf = fold(x_nchw, cx, cxp), fold(y_nchw, cy, cyp)

    Hs = [H >> l for l in range(5)]
    Ws_ = [W >> l for l in range(5)]
    masks = [_conv_masks(Hs[l], Ws_[l], B) for l in range(5)]
    psels = [_pool_sel(Hs[l], Ws_[l], B) for l in range(4)]
    usels = [_up_sel(Hs[l + 1], Ws_[l + 1], Hs[l], Ws_[l], B) for l in (3, 2, 1, 0)]

    args = [xf, yf]
    in_specs = [pl.BlockSpec((None, cxp, B * hw), lambda i: (i, 0, 0)),
                pl.BlockSpec((None, cyp, B * hw), lambda i: (i, 0, 0))]

    def add(a):
        args.append(a)
        in_specs.append(_rep_spec(a.shape))

    for n in _ENC_CONVS:
        w, b = params[n]
        add(w); add(b)
    for n in _DEC_CONVS:
        wu, we, wt, b = params[n]
        add(wu); add(we); add(wt); add(b)
    add(params["out"][0]); add(params["out"][1])
    for m in masks:
        add(m)
    for s in psels:
        add(s)
    for s in usels:
        add(s)

    # Advisory cost estimate (conv MACs dominate).
    flops = 0
    for n in _ENC_CONVS:
        lvl = int(n[-1]) - 1
        w = params[n][0]
        flops += 2 * w.shape[0] * w.shape[1] * (hw >> (2 * lvl))
    for n in _DEC_CONVS:
        lvl = int(n[-1]) - 1
        wu, we, wt, _ = params[n]
        flops += 2 * wu.shape[0] * (wu.shape[1] + we.shape[1] + wt.shape[1]) * (hw >> (2 * lvl))
    flops += 2 * out_ch * params["out"][0].shape[1] * hw
    flops *= N

    const_bytes = sum(int(a.size) * a.dtype.itemsize for a in args[2:])
    bytes_acc = int(xf.size) * 4 + int(yf.size) * 4 + N * out_ch * hw * 4 + const_bytes

    # VMEM budget: per-step blocks + constants (double-buffered) + a generous
    # bound on live activations / tap stacks.  Capped at 56 MiB because v7x has
    # only 64 MiB of physical VMEM (v5e/v6e: 128 MiB).
    block_bytes = (cxp + cyp + out_ch) * B * hw * 4
    act_bytes = 320 * B * hw * 4
    vmem_limit = int(min(56 << 20,
                         max(32 << 20, 2 * (const_bytes + block_bytes) + act_bytes)))

    out = pl.pallas_call(
        functools.partial(_dual_unet_kernel, W1=W),
        out_shape=jax.ShapeDtypeStruct((G, out_ch, B * hw), jnp.float32),
        grid=(G,),
        in_specs=in_specs,
        out_specs=pl.BlockSpec((None, out_ch, B * hw), lambda i: (i, 0, 0)),
        compiler_params=pltpu.CompilerParams(
            dimension_semantics=("parallel",),
            vmem_limit_bytes=vmem_limit),
        cost_estimate=pl.CostEstimate(flops=int(flops), transcendentals=0,
                                      bytes_accessed=int(bytes_acc)),
    )(*args)

    return (out.reshape(G, out_ch, B, hw).transpose(0, 2, 1, 3)
               .reshape(N, out_ch, H, W))


# ---------------------------------------------------------------------------

if __name__ == "__main__":
    key = jax.random.PRNGKey(0)
    kx, ky, kp = jax.random.split(key, 3)
    x = jax.random.normal(kx, (2, 3, 16, 16), jnp.float32)   # RGB input   (NCHW)
    y = jax.random.normal(ky, (2, 1, 16, 16), jnp.float32)   # depth input (NCHW)
    params = init_params(kp, in_ch=3, d_ch=1, out_ch=5)

    _roll_sign()                                             # probe outside jit

    out = jax.jit(dual_unet_cwf)(params, x, y)               # per-image grid (2 steps)
    jax.block_until_ready(out)
    assert out.shape == (2, 5, 16, 16), out.shape
    assert out.dtype == jnp.float32
    assert bool(jnp.all(jnp.isfinite(out)))

    # Exercise the batch-folded path (both images in one grid step, laid out
    # side-by-side along lanes) and check it matches the per-image path.
    out2 = jax.jit(functools.partial(dual_unet_cwf, images_per_step=2))(params, x, y)
    jax.block_until_ready(out2)
    assert out2.shape == (2, 5, 16, 16)
    assert bool(jnp.allclose(out, out2, rtol=1e-3, atol=1e-3))

    print("KERNEL_OK")
</pallas_src>

<mosaic_0001>
module attributes {stable_mosaic.version = 11 : i64} {
  func.func @probe(%arg0: memref<8x128xf32, #tpu.memory_space<vmem>>, %arg1: memref<8x128xf32, #tpu.memory_space<vmem>>) attributes {dimension_semantics = [], scalar_prefetch = 0 : i64, scratch_operands = 0 : i64, tpu.core_type = #tpu.core_type<tc>} {
    %c0 = arith.constant 0 : index
    %c0_0 = arith.constant 0 : index
    %0 = vector.load %arg0[%c0, %c0_0] : memref<8x128xf32, #tpu.memory_space<vmem>>, vector<8x128xf32>
    %c1_i32 = arith.constant 1 : i32
    %1 = tpu.dynamic_rotate %0 by %c1_i32 dim 1 : vector<8x128xf32>, i32 -> vector<8x128xf32>
    %c0_1 = arith.constant 0 : index
    %c0_2 = arith.constant 0 : index
    %2 = vector.load %arg1[%c0_1, %c0_2] : memref<8x128xf32, #tpu.memory_space<vmem>>, vector<8x128xf32>
    tpu.vector_store %arg1[%c0_1, %c0_2], %1 {strides = array<i32>} : memref<8x128xf32, #tpu.memory_space<vmem>>, vector<8x128xf32>,
    return
  }
}

module attributes {stable_mosaic.version = 11 : i64} {
  func.func @_dual_unet_kernel(%arg0: i32, %arg1: memref<1x8x256xf32, #tpu.memory_space<vmem>>, %arg2: memref<1x8x256xf32, #tpu.memory_space<vmem>>, %arg3: memref<8x72xbf16, #tpu.memory_space<vmem>>, %arg4: memref<8x1xf32, #tpu.memory_space<vmem>>, %arg5: memref<8x72xbf16, #tpu.memory_space<vmem>>, %arg6: memref<8x1xf32, #tpu.memory_space<vmem>>, %arg7: memref<16x72xbf16, #tpu.memory_space<vmem>>, %arg8: memref<16x1xf32, #tpu.memory_space<vmem>>, %arg9: memref<16x72xbf16, #tpu.memory_space<vmem>>, %arg10: memref<16x1xf32, #tpu.memory_space<vmem>>, %arg11: memref<32x144xbf16, #tpu.memory_space<vmem>>, %arg12: memref<32x1xf32, #tpu.memory_space<vmem>>, %arg13: memref<32x144xbf16, #tpu.memory_space<vmem>>, %arg14: memref<32x1xf32, #tpu.memory_space<vmem>>, %arg15: memref<32x288xbf16, #tpu.memory_space<vmem>>, %arg16: memref<32x1xf32, #tpu.memory_space<vmem>>, %arg17: memref<32x288xbf16, #tpu.memory_space<vmem>>, %arg18: memref<32x1xf32, #tpu.memory_space<vmem>>, %arg19: memref<32x288xbf16, #tpu.memory_space<vmem>>, %arg20: memref<32x1xf32, #tpu.memory_space<vmem>>, %arg21: memref<32x288xbf16, #tpu.memory_space<vmem>>, %arg22: memref<32x288xbf16, #tpu.memory_space<vmem>>, %arg23: memref<32x288xbf16, #tpu.memory_space<vmem>>, %arg24: memref<32x1xf32, #tpu.memory_space<vmem>>, %arg25: memref<32x288xbf16, #tpu.memory_space<vmem>>, %arg26: memref<32x288xbf16, #tpu.memory_space<vmem>>, %arg27: memref<32x288xbf16, #tpu.memory_space<vmem>>, %arg28: memref<32x1xf32, #tpu.memory_space<vmem>>, %arg29: memref<16x288xbf16, #tpu.memory_space<vmem>>, %arg30: memref<16x144xbf16, #tpu.memory_space<vmem>>, %arg31: memref<16x144xbf16, #tpu.memory_space<vmem>>, %arg32: memref<16x1xf32, #tpu.memory_space<vmem>>, %arg33: memref<8x144xbf16, #tpu.memory_space<vmem>>, %arg34: memref<8x72xbf16, #tpu.memory_space<vmem>>, %arg35: memref<8x72xbf16, #tpu.memory_space<vmem>>, %arg36: memref<8x1xf32, #tpu.memory_space<vmem>>, %arg37: memref<5x8xbf16, #tpu.memory_space<vmem>>, %arg38: memref<5x1xf32, #tpu.memory_space<vmem>>, %arg39: memref<9x256xf32, #tpu.memory_space<vmem>>, %arg40: memref<9x64xf32, #tpu.memory_space<vmem>>, %arg41: memref<9x16xf32, #tpu.memory_space<vmem>>, %arg42: memref<9x4xf32, #tpu.memory_space<vmem>>, %arg43: memref<9x1xf32, #tpu.memory_space<vmem>>, %arg44: memref<256x64xbf16, #tpu.memory_space<vmem>>, %arg45: memref<64x16xbf16, #tpu.memory_space<vmem>>, %arg46: memref<16x4xbf16, #tpu.memory_space<vmem>>, %arg47: memref<4x1xbf16, #tpu.memory_space<vmem>>, %arg48: memref<1x4xbf16, #tpu.memory_space<vmem>>, %arg49: memref<4x16xbf16, #tpu.memory_space<vmem>>, %arg50: memref<16x64xbf16, #tpu.memory_space<vmem>>, %arg51: memref<64x256xbf16, #tpu.memory_space<vmem>>, %arg52: memref<1x5x256xf32, #tpu.memory_space<vmem>>) attributes {dimension_semantics = [#tpu.dimension_semantics<parallel>], iteration_bounds = array<i64: 2>, scalar_prefetch = 0 : i64, scratch_operands = 0 : i64, tpu.core_type = #tpu.core_type<tc>, window_params = [{transform_indices = @transform_0, window_bounds = array<i64: 1, 8, 256>}, {transform_indices = @transform_1, window_bounds = array<i64: 1, 8, 256>}, {pipeline_mode = #tpu.pipeline_mode<synchronous>, transform_indices = @transform_2, window_bounds = array<i64: 8, 72>}, {pipeline_mode = #tpu.pipeline_mode<synchronous>, transform_indices = @transform_3, window_bounds = array<i64: 8, 1>}, {pipeline_mode = #tpu.pipeline_mode<synchronous>, transform_indices = @transform_4, window_bounds = array<i64: 8, 72>}, {pipeline_mode = #tpu.pipeline_mode<synchronous>, transform_indices = @transform_5, window_bounds = array<i64: 8, 1>}, {pipeline_mode = #tpu.pipeline_mode<synchronous>, transform_indices = @transform_6, window_bounds = array<i64: 16, 72>}, {pipeline_mode = #tpu.pipeline_mode<synchronous>, transform_indices = @transform_7, window_bounds = array<i64: 16, 1>}, {pipeline_mode = #tpu.pipeline_mode<synchronous>, transform_indices = @transform_8, window_bounds = array<i64: 16, 72>}, {pipeline_mode = #tpu.pipeline_mode<synchronous>, transform_indices = @transform_9, window_bounds = array<i64: 16, 1>}, {pipeline_mode = #tpu.pipeline_mode<synchronous>, transform_indices = @transform_10, window_bounds = array<i64: 32, 144>}, {pipeline_mode = #tpu.pipeline_mode<synchronous>, transform_indices = @transform_11, window_bounds = array<i64: 32, 1>}, {pipeline_mode = #tpu.pipeline_mode<synchronous>, transform_indices = @transform_12, window_bounds = array<i64: 32, 144>}, {pipeline_mode = #tpu.pipeline_mode<synchronous>, transform_indices = @transform_13, window_bounds = array<i64: 32, 1>}, {pipeline_mode = #tpu.pipeline_mode<synchronous>, transform_indices = @transform_14, window_bounds = array<i64: 32, 288>}, {pipeline_mode = #tpu.pipeline_mode<synchronous>, transform_indices = @transform_15, window_bounds = array<i64: 32, 1>}, {pipeline_mode = #tpu.pipeline_mode<synchronous>, transform_indices = @transform_16, window_bounds = array<i64: 32, 288>}, {pipeline_mode = #tpu.pipeline_mode<synchronous>, transform_indices = @transform_17, window_bounds = array<i64: 32, 1>}, {pipeline_mode = #tpu.pipeline_mode<synchronous>, transform_indices = @transform_18, window_bounds = array<i64: 32, 288>}, {pipeline_mode = #tpu.pipeline_mode<synchronous>, transform_indices = @transform_19, window_bounds = array<i64: 32, 1>}, {pipeline_mode = #tpu.pipeline_mode<synchronous>, transform_indices = @transform_20, window_bounds = array<i64: 32, 288>}, {pipeline_mode = #tpu.pipeline_mode<synchronous>, transform_indices = @transform_21, window_bounds = array<i64: 32, 288>}, {pipeline_mode = #tpu.pipeline_mode<synchronous>, transform_indices = @transform_22, window_bounds = array<i64: 32, 288>}, {pipeline_mode = #tpu.pipeline_mode<synchronous>, transform_indices = @transform_23, window_bounds = array<i64: 32, 1>}, {pipeline_mode = #tpu.pipeline_mode<synchronous>, transform_indices = @transform_24, window_bounds = array<i64: 32, 288>}, {pipeline_mode = #tpu.pipeline_mode<synchronous>, transform_indices = @transform_25, window_bounds = array<i64: 32, 288>}, {pipeline_mode = #tpu.pipeline_mode<synchronous>, transform_indices = @transform_26, window_bounds = array<i64: 32, 288>}, {pipeline_mode = #tpu.pipeline_mode<synchronous>, transform_indices = @transform_27, window_bounds = array<i64: 32, 1>}, {pipeline_mode = #tpu.pipeline_mode<synchronous>, transform_indices = @transform_28, window_bounds = array<i64: 16, 288>}, {pipeline_mode = #tpu.pipeline_mode<synchronous>, transform_indices = @transform_29, window_bounds = array<i64: 16, 144>}, {pipeline_mode = #tpu.pipeline_mode<synchronous>, transform_indices = @transform_30, window_bounds = array<i64: 16, 144>}, {pipeline_mode = #tpu.pipeline_mode<synchronous>, transform_indices = @transform_31, window_bounds = array<i64: 16, 1>}, {pipeline_mode = #tpu.pipeline_mode<synchronous>, transform_indices = @transform_32, window_bounds = array<i64: 8, 144>}, {pipeline_mode = #tpu.pipeline_mode<synchronous>, transform_indices = @transform_33, window_bounds = array<i64: 8, 72>}, {pipeline_mode = #tpu.pipeline_mode<synchronous>, transform_indices = @transform_34, window_bounds = array<i64: 8, 72>}, {pipeline_mode = #tpu.pipeline_mode<synchronous>, transform_indices = @transform_35, window_bounds = array<i64: 8, 1>}, {pipeline_mode = #tpu.pipeline_mode<synchronous>, transform_indices = @transform_36, window_bounds = array<i64: 5, 8>}, {pipeline_mode = #tpu.pipeline_mode<synchronous>, transform_indices = @transform_37, window_bounds = array<i64: 5, 1>}, {pipeline_mode = #tpu.pipeline_mode<synchronous>, transform_indices = @transform_38, window_bounds = array<i64: 9, 256>}, {pipeline_mode = #tpu.pipeline_mode<synchronous>, transform_indices = @transform_39, window_bounds = array<i64: 9, 64>}, {pipeline_mode = #tpu.pipeline_mode<synchronous>, transform_indices = @transform_40, window_bounds = array<i64: 9, 16>}, {pipeline_mode = #tpu.pipeline_mode<synchronous>, transform_indices = @transform_41, window_bounds = array<i64: 9, 4>}, {pipeline_mode = #tpu.pipeline_mode<synchronous>, transform_indices = @transform_42, window_bounds = array<i64: 9, 1>}, {pipeline_mode = #tpu.pipeline_mode<synchronous>, transform_indices = @transform_43, window_bounds = array<i64: 256, 64>}, {pipeline_mode = #tpu.pipeline_mode<synchronous>, transform_indices = @transform_44, window_bounds = array<i64: 64, 16>}, {pipeline_mode = #tpu.pipeline_mode<synchronous>, transform_indices = @transform_45, window_bounds = array<i64: 16, 4>}, {pipeline_mode = #tpu.pipeline_mode<synchronous>, transform_indices = @transform_46, window_bounds = array<i64: 4, 1>}, {pipeline_mode = #tpu.pipeline_mode<synchronous>, transform_indices = @transform_47, window_bounds = array<i64: 1, 4>}, {pipeline_mode = #tpu.pipeline_mode<synchronous>, transform_indices = @transform_48, window_bounds = array<i64: 4, 16>}, {pipeline_mode = #tpu.pipeline_mode<synchronous>, transform_indices = @transform_49, window_bounds = array<i64: 16, 64>}, {pipeline_mode = #tpu.pipeline_mode<synchronous>, transform_indices = @transform_50, window_bounds = array<i64: 64, 256>}, {transform_indices = @transform_51, window_bounds = array<i64: 1, 5, 256>}]} {
    %c0 = arith.constant 0 : index
    %c0_0 = arith.constant 0 : index
    %0 = vector.load %arg39[%c0, %c0_0] : memref<9x256xf32, #tpu.memory_space<vmem>>, vector<9x256xf32>
    %c0_1 = arith.constant 0 : index
    %c0_2 = arith.constant 0 : index
    %1 = vector.load %arg40[%c0_1, %c0_2] : memref<9x64xf32, #tpu.memory_space<vmem>>, vector<9x64xf32>
    %c0_3 = arith.constant 0 : index
    %c0_4 = arith.constant 0 : index
    %2 = vector.load %arg41[%c0_3, %c0_4] : memref<9x16xf32, #tpu.memory_space<vmem>>, vector<9x16xf32>
    %c0_5 = arith.constant 0 : index
    %c0_6 = arith.constant 0 : index
    %3 = vector.load %arg42[%c0_5, %c0_6] : memref<9x4xf32, #tpu.memory_space<vmem>>, vector<9x4xf32>
    %c0_7 = arith.constant 0 : index
    %c0_8 = arith.constant 0 : index
    %4 = vector.load %arg43[%c0_7, %c0_8] : memref<9x1xf32, #tpu.memory_space<vmem>>, vector<9x1xf32>
    %c0_9 = arith.constant 0 : index
    %c0_10 = arith.constant 0 : index
    %c0_11 = arith.constant 0 : index
    %5 = vector.load %arg1[%c0_9, %c0_10, %c0_11] : memref<1x8x256xf32, #tpu.memory_space<vmem>>, vector<1x8x256xf32>
    %6 = vector.shape_cast %5 : vector<1x8x256xf32> to vector<8x256xf32>
    %c0_12 = arith.constant 0 : index
    %c0_13 = arith.constant 0 : index
    %c0_14 = arith.constant 0 : index
    %7 = vector.load %arg2[%c0_12, %c0_13, %c0_14] : memref<1x8x256xf32, #tpu.memory_space<vmem>>, vector<1x8x256xf32>
    %8 = vector.shape_cast %7 : vector<1x8x256xf32> to vector<8x256xf32>
    %cst = arith.constant 0.000000e+00 : f32
    %9 = vector.broadcast %cst : f32 to vector<8x17xf32>
    %10 = tpu.concatenate %9, %6, %9 in 1 : vector<8x17xf32>, vector<8x256xf32>, vector<8x17xf32> -> vector<8x290xf32>
    %11 = vector.extract_strided_slice %10 {offsets = [0, 0], sizes = [8, 256], strides = [1, 1]} : vector<8x290xf32> to vector<8x256xf32>
    %12 = vector.extract_strided_slice %0 {offsets = [0, 0], sizes = [1, 256], strides = [1, 1]} : vector<9x256xf32> to vector<1x256xf32>
    %13 = vector.broadcast %12 : vector<1x256xf32> to vector<8x256xf32>
    %14 = arith.mulf %11, %13 : vector<8x256xf32>
    %cst_15 = arith.constant 0.000000e+00 : f32
    %15 = vector.broadcast %cst_15 : f32 to vector<8x16xf32>
    %16 = tpu.concatenate %15, %6, %15 in 1 : vector<8x16xf32>, vector<8x256xf32>, vector<8x16xf32> -> vector<8x288xf32>
    %17 = vector.extract_strided_slice %16 {offsets = [0, 0], sizes = [8, 256], strides = [1, 1]} : vector<8x288xf32> to vector<8x256xf32>
    %18 = vector.extract_strided_slice %0 {offsets = [1, 0], sizes = [1, 256], strides = [1, 1]} : vector<9x256xf32> to vector<1x256xf32>
    %19 = vector.broadcast %18 : vector<1x256xf32> to vector<8x256xf32>
    %20 = arith.mulf %17, %19 : vector<8x256xf32>
    %cst_16 = arith.constant 0.000000e+00 : f32
    %21 = vector.broadcast %cst_16 : f32 to vector<8x15xf32>
    %22 = tpu.concatenate %21, %6, %21 in 1 : vector<8x15xf32>, vector<8x256xf32>, vector<8x15xf32> -> vector<8x286xf32>
    %23 = vector.extract_strided_slice %22 {offsets = [0, 0], sizes = [8, 256], strides = [1, 1]} : vector<8x286xf32> to vector<8x256xf32>
    %24 = vector.extract_strided_slice %0 {offsets = [2, 0], sizes = [1, 256], strides = [1, 1]} : vector<9x256xf32> to vector<1x256xf32>
    %25 = vector.broadcast %24 : vector<1x256xf32> to vector<8x256xf32>
    %26 = arith.mulf %23, %25 : vector<8x256xf32>
    %cst_17 = arith.constant 0.000000e+00 : f32
    %27 = vector.broadcast %cst_17 : f32 to vector<8x1xf32>
    %28 = tpu.concatenate %27, %6, %27 in 1 : vector<8x1xf32>, vector<8x256xf32>, vector<8x1xf32> -> vector<8x258xf32>
    %29 = vector.extract_strided_slice %28 {offsets = [0, 0], sizes = [8, 256], strides = [1, 1]} : vector<8x258xf32> to vector<8x256xf32>
    %30 = vector.extract_strided_slice %0 {offsets = [3, 0], sizes = [1, 256], strides = [1, 1]} : vector<9x256xf32> to vector<1x256xf32>
    %31 = vector.broadcast %30 : vector<1x256xf32> to vector<8x256xf32>
    %32 = arith.mulf %29, %31 : vector<8x256xf32>
    %cst_18 = arith.constant 0.000000e+00 : f32
    %33 = vector.broadcast %cst_18 : f32 to vector<8x1xf32>
    %34 = tpu.concatenate %33, %6, %33 in 1 : vector<8x1xf32>, vector<8x256xf32>, vector<8x1xf32> -> vector<8x258xf32>
    %35 = vector.extract_strided_slice %34 {offsets = [0, 2], sizes = [8, 256], strides = [1, 1]} : vector<8x258xf32> to vector<8x256xf32>
    %36 = vector.extract_strided_slice %0 {offsets = [5, 0], sizes = [1, 256], strides = [1, 1]} : vector<9x256xf32> to vector<1x256xf32>
    %37 = vector.broadcast %36 : vector<1x256xf32> to vector<8x256xf32>
    %38 = arith.mulf %35, %37 : vector<8x256xf32>
    %cst_19 = arith.constant 0.000000e+00 : f32
    %39 = vector.broadcast %cst_19 : f32 to vector<8x15xf32>
    %40 = tpu.concatenate %39, %6, %39 in 1 : vector<8x15xf32>, vector<8x256xf32>, vector<8x15xf32> -> vector<8x286xf32>
    %41 = vector.extract_strided_slice %40 {offsets = [0, 30], sizes = [8, 256], strides = [1, 1]} : vector<8x286xf32> to vector<8x256xf32>
    %42 = vector.extract_strided_slice %0 {offsets = [6, 0], sizes = [1, 256], strides = [1, 1]} : vector<9x256xf32> to vector<1x256xf32>
    %43 = vector.broadcast %42 : vector<1x256xf32> to vector<8x256xf32>
    %44 = arith.mulf %41, %43 : vector<8x256xf32>
    %cst_20 = arith.constant 0.000000e+00 : f32
    %45 = vector.broadcast %cst_20 : f32 to vector<8x16xf32>
    %46 = tpu.concatenate %45, %6, %45 in 1 : vector<8x16xf32>, vector<8x256xf32>, vector<8x16xf32> -> vector<8x288xf32>
    %47 = vector.extract_strided_slice %46 {offsets = [0, 32], sizes = [8, 256], strides = [1, 1]} : vector<8x288xf32> to vector<8x256xf32>
    %48 = vector.extract_strided_slice %0 {offsets = [7, 0], sizes = [1, 256], strides = [1, 1]} : vector<9x256xf32> to vector<1x256xf32>
    %49 = vector.broadcast %48 : vector<1x256xf32> to vector<8x256xf32>
    %50 = arith.mulf %47, %49 : vector<8x256xf32>
    %cst_21 = arith.constant 0.000000e+00 : f32
    %51 = vector.broadcast %cst_21 : f32 to vector<8x17xf32>
    %52 = tpu.concatenate %51, %6, %51 in 1 : vector<8x17xf32>, vector<8x256xf32>, vector<8x17xf32> -> vector<8x290xf32>
    %53 = vector.extract_strided_slice %52 {offsets = [0, 34], sizes = [8, 256], strides = [1, 1]} : vector<8x290xf32> to vector<8x256xf32>
    %54 = vector.extract_strided_slice %0 {offsets = [8, 0], sizes = [1, 256], strides = [1, 1]} : vector<9x256xf32> to vector<1x256xf32>
    %55 = vector.broadcast %54 : vector<1x256xf32> to vector<8x256xf32>
    %56 = arith.mulf %53, %55 : vector<8x256xf32>
    %57 = tpu.concatenate %14, %20, %26, %32, %6, %38, %44, %50, %56 in 0 : vector<8x256xf32>, vector<8x256xf32>, vector<8x256xf32>, vector<8x256xf32>, vector<8x256xf32>, vector<8x256xf32>, vector<8x256xf32>, vector<8x256xf32>, vector<8x256xf32> -> vector<72x256xf32>
    %58 = arith.truncf %57 : vector<72x256xf32> to vector<72x256xbf16>
    %c0_22 = arith.constant 0 : index
    %c0_23 = arith.constant 0 : index
    %59 = vector.load %arg3[%c0_22, %c0_23] : memref<8x72xbf16, #tpu.memory_space<vmem>>, vector<8x72xbf16>
    %cst_24 = arith.constant dense<0.000000e+00> : vector<8x256xf32>
    %60 = tpu.matmul %59, %58, %cst_24 {dimension_numbers = #tpu.dot_dimension_numbers<[1], [0], [0], [1], [0, 0, 1, 1], [], []>} : vector<8x72xbf16>, vector<72x256xbf16>, vector<8x256xf32> -> vector<8x256xf32>
    %c0_25 = arith.constant 0 : index
    %c0_26 = arith.constant 0 : index
    %61 = vector.load %arg4[%c0_25, %c0_26] : memref<8x1xf32, #tpu.memory_space<vmem>>, vector<8x1xf32>
    %62 = vector.broadcast %61 : vector<8x1xf32> to vector<8x256xf32>
    %63 = arith.addf %60, %62 : vector<8x256xf32>
    %cst_27 = arith.constant 0.000000e+00 : f32
    %64 = vector.broadcast %cst_27 : f32 to vector<8x256xf32>
    %65 = arith.maximumf %63, %64 : vector<8x256xf32>
    %cst_28 = arith.constant 0.000000e+00 : f32
    %66 = vector.broadcast %cst_28 : f32 to vector<8x17xf32>
    %67 = tpu.concatenate %66, %8, %66 in 1 : vector<8x17xf32>, vector<8x256xf32>, vector<8x17xf32> -> vector<8x290xf32>
    %68 = vector.extract_strided_slice %67 {offsets = [0, 0], sizes = [8, 256], strides = [1, 1]} : vector<8x290xf32> to vector<8x256xf32>
    %69 = vector.extract_strided_slice %0 {offsets = [0, 0], sizes = [1, 256], strides = [1, 1]} : vector<9x256xf32> to vector<1x256xf32>
    %70 = vector.broadcast %69 : vector<1x256xf32> to vector<8x256xf32>
    %71 = arith.mulf %68, %70 : vector<8x256xf32>
    %cst_29 = arith.constant 0.000000e+00 : f32
    %72 = vector.broadcast %cst_29 : f32 to vector<8x16xf32>
    %73 = tpu.concatenate %72, %8, %72 in 1 : vector<8x16xf32>, vector<8x256xf32>, vector<8x16xf32> -> vector<8x288xf32>
    %74 = vector.extract_strided_slice %73 {offsets = [0, 0], sizes = [8, 256], strides = [1, 1]} : vector<8x288xf32> to vector<8x256xf32>
    %75 = vector.extract_strided_slice %0 {offsets = [1, 0], sizes = [1, 256], strides = [1, 1]} : vector<9x256xf32> to vector<1x256xf32>
    %76 = vector.broadcast %75 : vector<1x256xf32> to vector<8x256xf32>
    %77 = arith.mulf %74, %76 : vector<8x256xf32>
    %cst_30 = arith.constant 0.000000e+00 : f32
    %78 = vector.broadcast %cst_30 : f32 to vector<8x15xf32>
    %79 = tpu.concatenate %78, %8, %78 in 1 : vector<8x15xf32>, vector<8x256xf32>, vector<8x15xf32> -> vector<8x286xf32>
    %80 = vector.extract_strided_slice %79 {offsets = [0, 0], sizes = [8, 256], strides = [1, 1]} : vector<8x286xf32> to vector<8x256xf32>
    %81 = vector.extract_strided_slice %0 {offsets = [2, 0], sizes = [1, 256], strides = [1, 1]} : vector<9x256xf32> to vector<1x256xf32>
    %82 = vector.broadcast %81 : vector<1x256xf32> to vector<8x256xf32>
    %83 = arith.mulf %80, %82 : vector<8x256xf32>
    %cst_31 = arith.constant 0.000000e+00 : f32
    %84 = vector.broadcast %cst_31 : f32 to vector<8x1xf32>
    %85 = tpu.concatenate %84, %8, %84 in 1 : vector<8x1xf32>, vector<8x256xf32>, vector<8x1xf32> -> vector<8x258xf32>
    %86 = vector.extract_strided_slice %85 {offsets = [0, 0], sizes = [8, 256], strides = [1, 1]} : vector<8x258xf32> to vector<8x256xf32>
    %87 = vector.extract_strided_slice %0 {offsets = [3, 0], sizes = [1, 256], strides = [1, 1]} : vector<9x256xf32> to vector<1x256xf32>
    %88 = vector.broadcast %87 : vector<1x256xf32> to vector<8x256xf32>
    %89 = arith.mulf %86, %88 : vector<8x256xf32>
    %cst_32 = arith.constant 0.000000e+00 : f32
    %90 = vector.broadcast %cst_32 : f32 to vector<8x1xf32>
    %91 = tpu.concatenate %90, %8, %90 in 1 : vector<8x1xf32>, vector<8x256xf32>, vector<8x1xf32> -> vector<8x258xf32>
    %92 = vector.extract_strided_slice %91 {offsets = [0, 2], sizes = [8, 256], strides = [1, 1]} : vector<8x258xf32> to vector<8x256xf32>
    %93 = vector.extract_strided_slice %0 {offsets = [5, 0], sizes = [1, 256], strides = [1, 1]} : vector<9x256xf32> to vector<1x256xf32>
    %94 = vector.broadcast %93 : vector<1x256xf32> to vector<8x256xf32>
    %95 = arith.mulf %92, %94 : vector<8x256xf32>
    %cst_33 = arith.constant 0.000000e+00 : f32
    %96 = vector.broadcast %cst_33 : f32 to vector<8x15xf32>
    %97 = tpu.concatenate %96, %8, %96 in 1 : vector<8x15xf32>, vector<8x256xf32>, vector<8x15xf32> -> vector<8x286xf32>
    %98 = vector.extract_strided_slice %97 {offsets = [0, 30], sizes = [8, 256], strides = [1, 1]} : vector<8x286xf32> to vector<8x256xf32>
    %99 = vector.extract_strided_slice %0 {offsets = [6, 0], sizes = [1, 256], strides = [1, 1]} : vector<9x256xf32> to vector<1x256xf32>
    %100 = vector.broadcast %99 : vector<1x256xf32> to vector<8x256xf32>
    %101 = arith.mulf %98, %100 : vector<8x256xf32>
    %cst_34 = arith.constant 0.000000e+00 : f32
    %102 = vector.broadcast %cst_34 : f32 to vector<8x16xf32>
    %103 = tpu.concatenate %102, %8, %102 in 1 : vector<8x16xf32>, vector<8x256xf32>, vector<8x16xf32> -> vector<8x288xf32>
    %104 = vector.extract_strided_slice %103 {offsets = [0, 32], sizes = [8, 256], strides = [1, 1]} : vector<8x288xf32> to vector<8x256xf32>
    %105 = vector.extract_strided_slice %0 {offsets = [7, 0], sizes = [1, 256], strides = [1, 1]} : vector<9x256xf32> to vector<1x256xf32>
    %106 = vector.broadcast %105 : vector<1x256xf32> to vector<8x256xf32>
    %107 = arith.mulf %104, %106 : vector<8x256xf32>
    %cst_35 = arith.constant 0.000000e+00 : f32
    %108 = vector.broadcast %cst_35 : f32 to vector<8x17xf32>
    %109 = tpu.concatenate %108, %8, %108 in 1 : vector<8x17xf32>, vector<8x256xf32>, vector<8x17xf32> -> vector<8x290xf32>
    %110 = vector.extract_strided_slice %109 {offsets = [0, 34], sizes = [8, 256], strides = [1, 1]} : vector<8x290xf32> to vector<8x256xf32>
    %111 = vector.extract_strided_slice %0 {offsets = [8, 0], sizes = [1, 256], strides = [1, 1]} : vector<9x256xf32> to vector<1x256xf32>
    %112 = vector.broadcast %111 : vector<1x256xf32> to vector<8x256xf32>
    %113 = arith.mulf %110, %112 : vector<8x256xf32>
    %114 = tpu.concatenate %71, %77, %83, %89, %8, %95, %101, %107, %113 in 0 : vector<8x256xf32>, vector<8x256xf32>, vector<8x256xf32>, vector<8x256xf32>, vector<8x256xf32>, vector<8x256xf32>, vector<8x256xf32>, vector<8x256xf32>, vector<8x256xf32> -> vector<72x256xf32>
    %115 = arith.truncf %114 : vector<72x256xf32> to vector<72x256xbf16>
    %c0_36 = arith.constant 0 : index
    %c0_37 = arith.constant 0 : index
    %116 = vector.load %arg5[%c0_36, %c0_37] : memref<8x72xbf16, #tpu.memory_space<vmem>>, vector<8x72xbf16>
    %cst_38 = arith.constant dense<0.000000e+00> : vector<8x256xf32>
    %117 = tpu.matmul %116, %115, %cst_38 {dimension_numbers = #tpu.dot_dimension_numbers<[1], [0], [0], [1], [0, 0, 1, 1], [], []>} : vector<8x72xbf16>, vector<72x256xbf16>, vector<8x256xf32> -> vector<8x256xf32>
    %c0_39 = arith.constant 0 : index
    %c0_40 = arith.constant 0 : index
    %118 = vector.load %arg6[%c0_39, %c0_40] : memref<8x1xf32, #tpu.memory_space<vmem>>, vector<8x1xf32>
    %119 = vector.broadcast %118 : vector<8x1xf32> to vector<8x256xf32>
    %120 = arith.addf %117, %119 : vector<8x256xf32>
    %cst_41 = arith.constant 0.000000e+00 : f32
    %121 = vector.broadcast %cst_41 : f32 to vector<8x256xf32>
    %122 = arith.maximumf %120, %121 : vector<8x256xf32>
    %123 = arith.addf %65, %122 : vector<8x256xf32>
    %cst_42 = arith.constant 0.000000e+00 : f32
    %124 = vector.broadcast %cst_42 : f32 to vector<8x1xf32>
    %125 = tpu.concatenate %124, %123, %124 in 1 : vector<8x1xf32>, vector<8x256xf32>, vector<8x1xf32> -> vector<8x258xf32>
    %126 = vector.extract_strided_slice %125 {offsets = [0, 2], sizes = [8, 256], strides = [1, 1]} : vector<8x258xf32> to vector<8x256xf32>
    %127 = arith.maximumf %123, %126 : vector<8x256xf32>
    %cst_43 = arith.constant 0.000000e+00 : f32
    %128 = vector.broadcast %cst_43 : f32 to vector<8x16xf32>
    %129 = tpu.concatenate %128, %123, %128 in 1 : vector<8x16xf32>, vector<8x256xf32>, vector<8x16xf32> -> vector<8x288xf32>
    %130 = vector.extract_strided_slice %129 {offsets = [0, 32], sizes = [8, 256], strides = [1, 1]} : vector<8x288xf32> to vector<8x256xf32>
    %cst_44 = arith.constant 0.000000e+00 : f32
    %131 = vector.broadcast %cst_44 : f32 to vector<8x17xf32>
    %132 = tpu.concatenate %131, %123, %131 in 1 : vector<8x17xf32>, vector<8x256xf32>, vector<8x17xf32> -> vector<8x290xf32>
    %133 = vector.extract_strided_slice %132 {offsets = [0, 34], sizes = [8, 256], strides = [1, 1]} : vector<8x290xf32> to vector<8x256xf32>
    %134 = arith.maximumf %130, %133 : vector<8x256xf32>
    %135 = arith.maximumf %127, %134 : vector<8x256xf32>
    %136 = arith.truncf %135 : vector<8x256xf32> to vector<8x256xbf16>
    %c0_45 = arith.constant 0 : index
    %c0_46 = arith.constant 0 : index
    %137 = vector.load %arg44[%c0_45, %c0_46] : memref<256x64xbf16, #tpu.memory_space<vmem>>, vector<256x64xbf16>
    %cst_47 = arith.constant dense<0.000000e+00> : vector<8x64xf32>
    %138 = tpu.matmul %136, %137, %cst_47 {dimension_numbers = #tpu.dot_dimension_numbers<[1], [0], [0], [1], [0, 0, 1, 1], [], []>} : vector<8x256xbf16>, vector<256x64xbf16>, vector<8x64xf32> -> vector<8x64xf32>
    %cst_48 = arith.constant 0.000000e+00 : f32
    %139 = vector.broadcast %cst_48 : f32 to vector<8x1xf32>
    %140 = tpu.concatenate %139, %122, %139 in 1 : vector<8x1xf32>, vector<8x256xf32>, vector<8x1xf32> -> vector<8x258xf32>
    %141 = vector.extract_strided_slice %140 {offsets = [0, 2], sizes = [8, 256], strides = [1, 1]} : vector<8x258xf32> to vector<8x256xf32>
    %142 = arith.maximumf %122, %141 : vector<8x256xf32>
    %cst_49 = arith.constant 0.000000e+00 : f32
    %143 = vector.broadcast %cst_49 : f32 to vector<8x16xf32>
    %144 = tpu.concatenate %143, %122, %143 in 1 : vector<8x16xf32>, vector<8x256xf32>, vector<8x16xf32> -> vector<8x288xf32>
    %145 = vector.extract_strided_slice %144 {offsets = [0, 32], sizes = [8, 256], strides = [1, 1]} : vector<8x288xf32> to vector<8x256xf32>
    %cst_50 = arith.constant 0.000000e+00 : f32
    %146 = vector.broadcast %cst_50 : f32 to vector<8x17xf32>
    %147 = tpu.concatenate %146, %122, %146 in 1 : vector<8x17xf32>, vector<8x256xf32>, vector<8x17xf32> -> vector<8x290xf32>
    %148 = vector.extract_strided_slice %147 {offsets = [0, 34], sizes = [8, 256], strides = [1, 1]} : vector<8x290xf32> to vector<8x256xf32>
    %149 = arith.maximumf %145, %148 : vector<8x256xf32>
    %150 = arith.maximumf %142, %149 : vector<8x256xf32>
    %151 = arith.truncf %150 : vector<8x256xf32> to vector<8x256xbf16>
    %c0_51 = arith.constant 0 : index
    %c0_52 = arith.constant 0 : index
    %152 = vector.load %arg44[%c0_51, %c0_52] : memref<256x64xbf16, #tpu.memory_space<vmem>>, vector<256x64xbf16>
    %cst_53 = arith.constant dense<0.000000e+00> : vector<8x64xf32>
    %153 = tpu.matmul %151, %152, %cst_53 {dimension_numbers = #tpu.dot_dimension_numbers<[1], [0], [0], [1], [0, 0, 1, 1], [], []>} : vector<8x256xbf16>, vector<256x64xbf16>, vector<8x64xf32> -> vector<8x64xf32>
    %cst_54 = arith.constant 0.000000e+00 : f32
    %154 = vector.broadcast %cst_54 : f32 to vector<8x9xf32>
    %155 = tpu.concatenate %154, %138, %154 in 1 : vector<8x9xf32>, vector<8x64xf32>, vector<8x9xf32> -> vector<8x82xf32>
    %156 = vector.extract_strided_slice %155 {offsets = [0, 0], sizes = [8, 64], strides = [1, 1]} : vector<8x82xf32> to vector<8x64xf32>
    %157 = vector.extract_strided_slice %1 {offsets = [0, 0], sizes = [1, 64], strides = [1, 1]} : vector<9x64xf32> to vector<1x64xf32>
    %158 = vector.broadcast %157 : vector<1x64xf32> to vector<8x64xf32>
    %159 = arith.mulf %156, %158 : vector<8x64xf32>
    %cst_55 = arith.constant 0.000000e+00 : f32
    %160 = vector.broadcast %cst_55 : f32 to vector<8x8xf32>
    %161 = tpu.concatenate %160, %138, %160 in 1 : vector<8x8xf32>, vector<8x64xf32>, vector<8x8xf32> -> vector<8x80xf32>
    %162 = vector.extract_strided_slice %161 {offsets = [0, 0], sizes = [8, 64], strides = [1, 1]} : vector<8x80xf32> to vector<8x64xf32>
    %163 = vector.extract_strided_slice %1 {offsets = [1, 0], sizes = [1, 64], strides = [1, 1]} : vector<9x64xf32> to vector<1x64xf32>
    %164 = vector.broadcast %163 : vector<1x64xf32> to vector<8x64xf32>
    %165 = arith.mulf %162, %164 : vector<8x64xf32>
    %cst_56 = arith.constant 0.000000e+00 : f32
    %166 = vector.broadcast %cst_56 : f32 to vector<8x7xf32>
    %167 = tpu.concatenate %166, %138, %166 in 1 : vector<8x7xf32>, vector<8x64xf32>, vector<8x7xf32> -> vector<8x78xf32>
    %168 = vector.extract_strided_slice %167 {offsets = [0, 0], sizes = [8, 64], strides = [1, 1]} : vector<8x78xf32> to vector<8x64xf32>
    %169 = vector.extract_strided_slice %1 {offsets = [2, 0], sizes = [1, 64], strides = [1, 1]} : vector<9x64xf32> to vector<1x64xf32>
    %170 = vector.broadcast %169 : vector<1x64xf32> to vector<8x64xf32>
    %171 = arith.mulf %168, %170 : vector<8x64xf32>
    %cst_57 = arith.constant 0.000000e+00 : f32
    %172 = vector.broadcast %cst_57 : f32 to vector<8x1xf32>
    %173 = tpu.concatenate %172, %138, %172 in 1 : vector<8x1xf32>, vector<8x64xf32>, vector<8x1xf32> -> vector<8x66xf32>
    %174 = vector.extract_strided_slice %173 {offsets = [0, 0], sizes = [8, 64], strides = [1, 1]} : vector<8x66xf32> to vector<8x64xf32>
    %175 = vector.extract_strided_slice %1 {offsets = [3, 0], sizes = [1, 64], strides = [1, 1]} : vector<9x64xf32> to vector<1x64xf32>
    %176 = vector.broadcast %175 : vector<1x64xf32> to vector<8x64xf32>
    %177 = arith.mulf %174, %176 : vector<8x64xf32>
    %cst_58 = arith.constant 0.000000e+00 : f32
    %178 = vector.broadcast %cst_58 : f32 to vector<8x1xf32>
    %179 = tpu.concatenate %178, %138, %178 in 1 : vector<8x1xf32>, vector<8x64xf32>, vector<8x1xf32> -> vector<8x66xf32>
    %180 = vector.extract_strided_slice %179 {offsets = [0, 2], sizes = [8, 64], strides = [1, 1]} : vector<8x66xf32> to vector<8x64xf32>
    %181 = vector.extract_strided_slice %1 {offsets = [5, 0], sizes = [1, 64], strides = [1, 1]} : vector<9x64xf32> to vector<1x64xf32>
    %182 = vector.broadcast %181 : vector<1x64xf32> to vector<8x64xf32>
    %183 = arith.mulf %180, %182 : vector<8x64xf32>
    %cst_59 = arith.constant 0.000000e+00 : f32
    %184 = vector.broadcast %cst_59 : f32 to vector<8x7xf32>
    %185 = tpu.concatenate %184, %138, %184 in 1 : vector<8x7xf32>, vector<8x64xf32>, vector<8x7xf32> -> vector<8x78xf32>
    %186 = vector.extract_strided_slice %185 {offsets = [0, 14], sizes = [8, 64], strides = [1, 1]} : vector<8x78xf32> to vector<8x64xf32>
    %187 = vector.extract_strided_slice %1 {offsets = [6, 0], sizes = [1, 64], strides = [1, 1]} : vector<9x64xf32> to vector<1x64xf32>
    %188 = vector.broadcast %187 : vector<1x64xf32> to vector<8x64xf32>
    %189 = arith.mulf %186, %188 : vector<8x64xf32>
    %cst_60 = arith.constant 0.000000e+00 : f32
    %190 = vector.broadcast %cst_60 : f32 to vector<8x8xf32>
    %191 = tpu.concatenate %190, %138, %190 in 1 : vector<8x8xf32>, vector<8x64xf32>, vector<8x8xf32> -> vector<8x80xf32>
    %192 = vector.extract_strided_slice %191 {offsets = [0, 16], sizes = [8, 64], strides = [1, 1]} : vector<8x80xf32> to vector<8x64xf32>
    %193 = vector.extract_strided_slice %1 {offsets = [7, 0], sizes = [1, 64], strides = [1, 1]} : vector<9x64xf32> to vector<1x64xf32>
    %194 = vector.broadcast %193 : vector<1x64xf32> to vector<8x64xf32>
    %195 = arith.mulf %192, %194 : vector<8x64xf32>
    %cst_61 = arith.constant 0.000000e+00 : f32
    %196 = vector.broadcast %cst_61 : f32 to vector<8x9xf32>
    %197 = tpu.concatenate %196, %138, %196 in 1 : vector<8x9xf32>, vector<8x64xf32>, vector<8x9xf32> -> vector<8x82xf32>
    %198 = vector.extract_strided_slice %197 {offsets = [0, 18], sizes = [8, 64], strides = [1, 1]} : vector<8x82xf32> to vector<8x64xf32>
    %199 = vector.extract_strided_slice %1 {offsets = [8, 0], sizes = [1, 64], strides = [1, 1]} : vector<9x64xf32> to vector<1x64xf32>
    %200 = vector.broadcast %199 : vector<1x64xf32> to vector<8x64xf32>
    %201 = arith.mulf %198, %200 : vector<8x64xf32>
    %202 = tpu.concatenate %159, %165, %171, %177, %138, %183, %189, %195, %201 in 0 : vector<8x64xf32>, vector<8x64xf32>, vector<8x64xf32>, vector<8x64xf32>, vector<8x64xf32>, vector<8x64xf32>, vector<8x64xf32>, vector<8x64xf32>, vector<8x64xf32> -> vector<72x64xf32>
    %203 = arith.truncf %202 : vector<72x64xf32> to vector<72x64xbf16>
    %c0_62 = arith.constant 0 : index
    %c0_63 = arith.constant 0 : index
    %204 = vector.load %arg7[%c0_62, %c0_63] : memref<16x72xbf16, #tpu.memory_space<vmem>>, vector<16x72xbf16>
    %cst_64 = arith.constant dense<0.000000e+00> : vector<16x64xf32>
    %205 = tpu.matmul %204, %203, %cst_64 {dimension_numbers = #tpu.dot_dimension_numbers<[1], [0], [0], [1], [0, 0, 1, 1], [], []>} : vector<16x72xbf16>, vector<72x64xbf16>, vector<16x64xf32> -> vector<16x64xf32>
    %c0_65 = arith.constant 0 : index
    %c0_66 = arith.constant 0 : index
    %206 = vector.load %arg8[%c0_65, %c0_66] : memref<16x1xf32, #tpu.memory_space<vmem>>, vector<16x1xf32>
    %207 = vector.broadcast %206 : vector<16x1xf32> to vector<16x64xf32>
    %208 = arith.addf %205, %207 : vector<16x64xf32>
    %cst_67 = arith.constant 0.000000e+00 : f32
    %209 = vector.broadcast %cst_67 : f32 to vector<16x64xf32>
    %210 = arith.maximumf %208, %209 : vector<16x64xf32>
    %cst_68 = arith.constant 0.000000e+00 : f32
    %211 = vector.broadcast %cst_68 : f32 to vector<8x9xf32>
    %212 = tpu.concatenate %211, %153, %211 in 1 : vector<8x9xf32>, vector<8x64xf32>, vector<8x9xf32> -> vector<8x82xf32>
    %213 = vector.extract_strided_slice %212 {offsets = [0, 0], sizes = [8, 64], strides = [1, 1]} : vector<8x82xf32> to vector<8x64xf32>
    %214 = vector.extract_strided_slice %1 {offsets = [0, 0], sizes = [1, 64], strides = [1, 1]} : vector<9x64xf32> to vector<1x64xf32>
    %215 = vector.broadcast %214 : vector<1x64xf32> to vector<8x64xf32>
    %216 = arith.mulf %213, %215 : vector<8x64xf32>
    %cst_69 = arith.constant 0.000000e+00 : f32
    %217 = vector.broadcast %cst_69 : f32 to vector<8x8xf32>
    %218 = tpu.concatenate %217, %153, %217 in 1 : vector<8x8xf32>, vector<8x64xf32>, vector<8x8xf32> -> vector<8x80xf32>
    %219 = vector.extract_strided_slice %218 {offsets = [0, 0], sizes = [8, 64], strides = [1, 1]} : vector<8x80xf32> to vector<8x64xf32>
    %220 = vector.extract_strided_slice %1 {offsets = [1, 0], sizes = [1, 64], strides = [1, 1]} : vector<9x64xf32> to vector<1x64xf32>
    %221 = vector.broadcast %220 : vector<1x64xf32> to vector<8x64xf32>
    %222 = arith.mulf %219, %221 : vector<8x64xf32>
    %cst_70 = arith.constant 0.000000e+00 : f32
    %223 = vector.broadcast %cst_70 : f32 to vector<8x7xf32>
    %224 = tpu.concatenate %223, %153, %223 in 1 : vector<8x7xf32>, vector<8x64xf32>, vector<8x7xf32> -> vector<8x78xf32>
    %225 = vector.extract_strided_slice %224 {offsets = [0, 0], sizes = [8, 64], strides = [1, 1]} : vector<8x78xf32> to vector<8x64xf32>
    %226 = vector.extract_strided_slice %1 {offsets = [2, 0], sizes = [1, 64], strides = [1, 1]} : vector<9x64xf32> to vector<1x64xf32>
    %227 = vector.broadcast %226 : vector<1x64xf32> to vector<8x64xf32>
    %228 = arith.mulf %225, %227 : vector<8x64xf32>
    %cst_71 = arith.constant 0.000000e+00 : f32
    %229 = vector.broadcast %cst_71 : f32 to vector<8x1xf32>
    %230 = tpu.concatenate %229, %153, %229 in 1 : vector<8x1xf32>, vector<8x64xf32>, vector<8x1xf32> -> vector<8x66xf32>
    %231 = vector.extract_strided_slice %230 {offsets = [0, 0], sizes = [8, 64], strides = [1, 1]} : vector<8x66xf32> to vector<8x64xf32>
    %232 = vector.extract_strided_slice %1 {offsets = [3, 0], sizes = [1, 64], strides = [1, 1]} : vector<9x64xf32> to vector<1x64xf32>
    %233 = vector.broadcast %232 : vector<1x64xf32> to vector<8x64xf32>
    %234 = arith.mulf %231, %233 : vector<8x64xf32>
    %cst_72 = arith.constant 0.000000e+00 : f32
    %235 = vector.broadcast %cst_72 : f32 to vector<8x1xf32>
    %236 = tpu.concatenate %235, %153, %235 in 1 : vector<8x1xf32>, vector<8x64xf32>, vector<8x1xf32> -> vector<8x66xf32>
    %237 = vector.extract_strided_slice %236 {offsets = [0, 2], sizes = [8, 64], strides = [1, 1]} : vector<8x66xf32> to vector<8x64xf32>
    %238 = vector.extract_strided_slice %1 {offsets = [5, 0], sizes = [1, 64], strides = [1, 1]} : vector<9x64xf32> to vector<1x64xf32>
    %239 = vector.broadcast %238 : vector<1x64xf32> to vector<8x64xf32>
    %240 = arith.mulf %237, %239 : vector<8x64xf32>
    %cst_73 = arith.constant 0.000000e+00 : f32
    %241 = vector.broadcast %cst_73 : f32 to vector<8x7xf32>
    %242 = tpu.concatenate %241, %153, %241 in 1 : vector<8x7xf32>, vector<8x64xf32>, vector<8x7xf32> -> vector<8x78xf32>
    %243 = vector.extract_strided_slice %242 {offsets = [0, 14], sizes = [8, 64], strides = [1, 1]} : vector<8x78xf32> to vector<8x64xf32>
    %244 = vector.extract_strided_slice %1 {offsets = [6, 0], sizes = [1, 64], strides = [1, 1]} : vector<9x64xf32> to vector<1x64xf32>
    %245 = vector.broadcast %244 : vector<1x64xf32> to vector<8x64xf32>
    %246 = arith.mulf %243, %245 : vector<8x64xf32>
    %cst_74 = arith.constant 0.000000e+00 : f32
    %247 = vector.broadcast %cst_74 : f32 to vector<8x8xf32>
    %248 = tpu.concatenate %247, %153, %247 in 1 : vector<8x8xf32>, vector<8x64xf32>, vector<8x8xf32> -> vector<8x80xf32>
    %249 = vector.extract_strided_slice %248 {offsets = [0, 16], sizes = [8, 64], strides = [1, 1]} : vector<8x80xf32> to vector<8x64xf32>
    %250 = vector.extract_strided_slice %1 {offsets = [7, 0], sizes = [1, 64], strides = [1, 1]} : vector<9x64xf32> to vector<1x64xf32>
    %251 = vector.broadcast %250 : vector<1x64xf32> to vector<8x64xf32>
    %252 = arith.mulf %249, %251 : vector<8x64xf32>
    %cst_75 = arith.constant 0.000000e+00 : f32
    %253 = vector.broadcast %cst_75 : f32 to vector<8x9xf32>
    %254 = tpu.concatenate %253, %153, %253 in 1 : vector<8x9xf32>, vector<8x64xf32>, vector<8x9xf32> -> vector<8x82xf32>
    %255 = vector.extract_strided_slice %254 {offsets = [0, 18], sizes = [8, 64], strides = [1, 1]} : vector<8x82xf32> to vector<8x64xf32>
    %256 = vector.extract_strided_slice %1 {offsets = [8, 0], sizes = [1, 64], strides = [1, 1]} : vector<9x64xf32> to vector<1x64xf32>
    %257 = vector.broadcast %256 : vector<1x64xf32> to vector<8x64xf32>
    %258 = arith.mulf %255, %257 : vector<8x64xf32>
    %259 = tpu.concatenate %216, %222, %228, %234, %153, %240, %246, %252, %258 in 0 : vector<8x64xf32>, vector<8x64xf32>, vector<8x64xf32>, vector<8x64xf32>, vector<8x64xf32>, vector<8x64xf32>, vector<8x64xf32>, vector<8x64xf32>, vector<8x64xf32> -> vector<72x64xf32>
    %260 = arith.truncf %259 : vector<72x64xf32> to vector<72x64xbf16>
    %c0_76 = arith.constant 0 : index
    %c0_77 = arith.constant 0 : index
    %261 = vector.load %arg9[%c0_76, %c0_77] : memref<16x72xbf16, #tpu.memory_space<vmem>>, vector<16x72xbf16>
    %cst_78 = arith.constant dense<0.000000e+00> : vector<16x64xf32>
    %262 = tpu.matmul %261, %260, %cst_78 {dimension_numbers = #tpu.dot_dimension_numbers<[1], [0], [0], [1], [0, 0, 1, 1], [], []>} : vector<16x72xbf16>, vector<72x64xbf16>, vector<16x64xf32> -> vector<16x64xf32>
    %c0_79 = arith.constant 0 : index
    %c0_80 = arith.constant 0 : index
    %263 = vector.load %arg10[%c0_79, %c0_80] : memref<16x1xf32, #tpu.memory_space<vmem>>, vector<16x1xf32>
    %264 = vector.broadcast %263 : vector<16x1xf32> to vector<16x64xf32>
    %265 = arith.addf %262, %264 : vector<16x64xf32>
    %cst_81 = arith.constant 0.000000e+00 : f32
    %266 = vector.broadcast %cst_81 : f32 to vector<16x64xf32>
    %267 = arith.maximumf %265, %266 : vector<16x64xf32>
    %268 = arith.addf %210, %267 : vector<16x64xf32>
    %cst_82 = arith.constant 0.000000e+00 : f32
    %269 = vector.broadcast %cst_82 : f32 to vector<16x1xf32>
    %270 = tpu.concatenate %269, %268, %269 in 1 : vector<16x1xf32>, vector<16x64xf32>, vector<16x1xf32> -> vector<16x66xf32>
    %271 = vector.extract_strided_slice %270 {offsets = [0, 2], sizes = [16, 64], strides = [1, 1]} : vector<16x66xf32> to vector<16x64xf32>
    %272 = arith.maximumf %268, %271 : vector<16x64xf32>
    %cst_83 = arith.constant 0.000000e+00 : f32
    %273 = vector.broadcast %cst_83 : f32 to vector<16x8xf32>
    %274 = tpu.concatenate %273, %268, %273 in 1 : vector<16x8xf32>, vector<16x64xf32>, vector<16x8xf32> -> vector<16x80xf32>
    %275 = vector.extract_strided_slice %274 {offsets = [0, 16], sizes = [16, 64], strides = [1, 1]} : vector<16x80xf32> to vector<16x64xf32>
    %cst_84 = arith.constant 0.000000e+00 : f32
    %276 = vector.broadcast %cst_84 : f32 to vector<16x9xf32>
    %277 = tpu.concatenate %276, %268, %276 in 1 : vector<16x9xf32>, vector<16x64xf32>, vector<16x9xf32> -> vector<16x82xf32>
    %278 = vector.extract_strided_slice %277 {offsets = [0, 18], sizes = [16, 64], strides = [1, 1]} : vector<16x82xf32> to vector<16x64xf32>
    %279 = arith.maximumf %275, %278 : vector<16x64xf32>
    %280 = arith.maximumf %272, %279 : vector<16x64xf32>
    %281 = arith.truncf %280 : vector<16x64xf32> to vector<16x64xbf16>
    %c0_85 = arith.constant 0 : index
    %c0_86 = arith.constant 0 : index
    %282 = vector.load %arg45[%c0_85, %c0_86] : memref<64x16xbf16, #tpu.memory_space<vmem>>, vector<64x16xbf16>
    %cst_87 = arith.constant dense<0.000000e+00> : vector<16x16xf32>
    %283 = tpu.matmul %281, %282, %cst_87 {dimension_numbers = #tpu.dot_dimension_numbers<[1], [0], [0], [1], [0, 0, 1, 1], [], []>} : vector<16x64xbf16>, vector<64x16xbf16>, vector<16x16xf32> -> vector<16x16xf32>
    %cst_88 = arith.constant 0.000000e+00 : f32
    %284 = vector.broadcast %cst_88 : f32 to vector<16x1xf32>
    %285 = tpu.concatenate %284, %267, %284 in 1 : vector<16x1xf32>, vector<16x64xf32>, vector<16x1xf32> -> vector<16x66xf32>
    %286 = vector.extract_strided_slice %285 {offsets = [0, 2], sizes = [16, 64], strides = [1, 1]} : vector<16x66xf32> to vector<16x64xf32>
    %287 = arith.maximumf %267, %286 : vector<16x64xf32>
    %cst_89 = arith.constant 0.000000e+00 : f32
    %288 = vector.broadcast %cst_89 : f32 to vector<16x8xf32>
    %289 = tpu.concatenate %288, %267, %288 in 1 : vector<16x8xf32>, vector<16x64xf32>, vector<16x8xf32> -> vector<16x80xf32>
    %290 = vector.extract_strided_slice %289 {offsets = [0, 16], sizes = [16, 64], strides = [1, 1]} : vector<16x80xf32> to vector<16x64xf32>
    %cst_90 = arith.constant 0.000000e+00 : f32
    %291 = vector.broadcast %cst_90 : f32 to vector<16x9xf32>
    %292 = tpu.concatenate %291, %267, %291 in 1 : vector<16x9xf32>, vector<16x64xf32>, vector<16x9xf32> -> vector<16x82xf32>
    %293 = vector.extract_strided_slice %292 {offsets = [0, 18], sizes = [16, 64], strides = [1, 1]} : vector<16x82xf32> to vector<16x64xf32>
    %294 = arith.maximumf %290, %293 : vector<16x64xf32>
    %295 = arith.maximumf %287, %294 : vector<16x64xf32>
    %296 = arith.truncf %295 : vector<16x64xf32> to vector<16x64xbf16>
    %c0_91 = arith.constant 0 : index
    %c0_92 = arith.constant 0 : index
    %297 = vector.load %arg45[%c0_91, %c0_92] : memref<64x16xbf16, #tpu.memory_space<vmem>>, vector<64x16xbf16>
    %cst_93 = arith.constant dense<0.000000e+00> : vector<16x16xf32>
    %298 = tpu.matmul %296, %297, %cst_93 {dimension_numbers = #tpu.dot_dimension_numbers<[1], [0], [0], [1], [0, 0, 1, 1], [], []>} : vector<16x64xbf16>, vector<64x16xbf16>, vector<16x16xf32> -> vector<16x16xf32>
    %cst_94 = arith.constant 0.000000e+00 : f32
    %299 = vector.broadcast %cst_94 : f32 to vector<16x5xf32>
    %300 = tpu.concatenate %299, %283, %299 in 1 : vector<16x5xf32>, vector<16x16xf32>, vector<16x5xf32> -> vector<16x26xf32>
    %301 = vector.extract_strided_slice %300 {offsets = [0, 0], sizes = [16, 16], strides = [1, 1]} : vector<16x26xf32> to vector<16x16xf32>
    %302 = vector.extract_strided_slice %2 {offsets = [0, 0], sizes = [1, 16], strides = [1, 1]} : vector<9x16xf32> to vector<1x16xf32>
    %303 = vector.broadcast %302 : vector<1x16xf32> to vector<16x16xf32>
    %304 = arith.mulf %301, %303 : vector<16x16xf32>
    %cst_95 = arith.constant 0.000000e+00 : f32
    %305 = vector.broadcast %cst_95 : f32 to vector<16x4xf32>
    %306 = tpu.concatenate %305, %283, %305 in 1 : vector<16x4xf32>, vector<16x16xf32>, vector<16x4xf32> -> vector<16x24xf32>
    %307 = vector.extract_strided_slice %306 {offsets = [0, 0], sizes = [16, 16], strides = [1, 1]} : vector<16x24xf32> to vector<16x16xf32>
    %308 = vector.extract_strided_slice %2 {offsets = [1, 0], sizes = [1, 16], strides = [1, 1]} : vector<9x16xf32> to vector<1x16xf32>
    %309 = vector.broadcast %308 : vector<1x16xf32> to vector<16x16xf32>
    %310 = arith.mulf %307, %309 : vector<16x16xf32>
    %cst_96 = arith.constant 0.000000e+00 : f32
    %311 = vector.broadcast %cst_96 : f32 to vector<16x3xf32>
    %312 = tpu.concatenate %311, %283, %311 in 1 : vector<16x3xf32>, vector<16x16xf32>, vector<16x3xf32> -> vector<16x22xf32>
    %313 = vector.extract_strided_slice %312 {offsets = [0, 0], sizes = [16, 16], strides = [1, 1]} : vector<16x22xf32> to vector<16x16xf32>
    %314 = vector.extract_strided_slice %2 {offsets = [2, 0], sizes = [1, 16], strides = [1, 1]} : vector<9x16xf32> to vector<1x16xf32>
    %315 = vector.broadcast %314 : vector<1x16xf32> to vector<16x16xf32>
    %316 = arith.mulf %313, %315 : vector<16x16xf32>
    %cst_97 = arith.constant 0.000000e+00 : f32
    %317 = vector.broadcast %cst_97 : f32 to vector<16x1xf32>
    %318 = tpu.concatenate %317, %283, %317 in 1 : vector<16x1xf32>, vector<16x16xf32>, vector<16x1xf32> -> vector<16x18xf32>
    %319 = vector.extract_strided_slice %318 {offsets = [0, 0], sizes = [16, 16], strides = [1, 1]} : vector<16x18xf32> to vector<16x16xf32>
    %320 = vector.extract_strided_slice %2 {offsets = [3, 0], sizes = [1, 16], strides = [1, 1]} : vector<9x16xf32> to vector<1x16xf32>
    %321 = vector.broadcast %320 : vector<1x16xf32> to vector<16x16xf32>
    %322 = arith.mulf %319, %321 : vector<16x16xf32>
    %cst_98 = arith.constant 0.000000e+00 : f32
    %323 = vector.broadcast %cst_98 : f32 to vector<16x1xf32>
    %324 = tpu.concatenate %323, %283, %323 in 1 : vector<16x1xf32>, vector<16x16xf32>, vector<16x1xf32> -> vector<16x18xf32>
    %325 = vector.extract_strided_slice %324 {offsets = [0, 2], sizes = [16, 16], strides = [1, 1]} : vector<16x18xf32> to vector<16x16xf32>
    %326 = vector.extract_strided_slice %2 {offsets = [5, 0], sizes = [1, 16], strides = [1, 1]} : vector<9x16xf32> to vector<1x16xf32>
    %327 = vector.broadcast %326 : vector<1x16xf32> to vector<16x16xf32>
    %328 = arith.mulf %325, %327 : vector<16x16xf32>
    %cst_99 = arith.constant 0.000000e+00 : f32
    %329 = vector.broadcast %cst_99 : f32 to vector<16x3xf32>
    %330 = tpu.concatenate %329, %283, %329 in 1 : vector<16x3xf32>, vector<16x16xf32>, vector<16x3xf32> -> vector<16x22xf32>
    %331 = vector.extract_strided_slice %330 {offsets = [0, 6], sizes = [16, 16], strides = [1, 1]} : vector<16x22xf32> to vector<16x16xf32>
    %332 = vector.extract_strided_slice %2 {offsets = [6, 0], sizes = [1, 16], strides = [1, 1]} : vector<9x16xf32> to vector<1x16xf32>
    %333 = vector.broadcast %332 : vector<1x16xf32> to vector<16x16xf32>
    %334 = arith.mulf %331, %333 : vector<16x16xf32>
    %cst_100 = arith.constant 0.000000e+00 : f32
    %335 = vector.broadcast %cst_100 : f32 to vector<16x4xf32>
    %336 = tpu.concatenate %335, %283, %335 in 1 : vector<16x4xf32>, vector<16x16xf32>, vector<16x4xf32> -> vector<16x24xf32>
    %337 = vector.extract_strided_slice %336 {offsets = [0, 8], sizes = [16, 16], strides = [1, 1]} : vector<16x24xf32> to vector<16x16xf32>
    %338 = vector.extract_strided_slice %2 {offsets = [7, 0], sizes = [1, 16], strides = [1, 1]} : vector<9x16xf32> to vector<1x16xf32>
    %339 = vector.broadcast %338 : vector<1x16xf32> to vector<16x16xf32>
    %340 = arith.mulf %337, %339 : vector<16x16xf32>
    %cst_101 = arith.constant 0.000000e+00 : f32
    %341 = vector.broadcast %cst_101 : f32 to vector<16x5xf32>
    %342 = tpu.concatenate %341, %283, %341 in 1 : vector<16x5xf32>, vector<16x16xf32>, vector<16x5xf32> -> vector<16x26xf32>
    %343 = vector.extract_strided_slice %342 {offsets = [0, 10], sizes = [16, 16], strides = [1, 1]} : vector<16x26xf32> to vector<16x16xf32>
    %344 = vector.extract_strided_slice %2 {offsets = [8, 0], sizes = [1, 16], strides = [1, 1]} : vector<9x16xf32> to vector<1x16xf32>
    %345 = vector.broadcast %344 : vector<1x16xf32> to vector<16x16xf32>
    %346 = arith.mulf %343, %345 : vector<16x16xf32>
    %347 = tpu.concatenate %304, %310, %316, %322, %283, %328, %334, %340, %346 in 0 : vector<16x16xf32>, vector<16x16xf32>, vector<16x16xf32>, vector<16x16xf32>, vector<16x16xf32>, vector<16x16xf32>, vector<16x16xf32>, vector<16x16xf32>, vector<16x16xf32> -> vector<144x16xf32>
    %348 = arith.truncf %347 : vector<144x16xf32> to vector<144x16xbf16>
    %c0_102 = arith.constant 0 : index
    %c0_103 = arith.constant 0 : index
    %349 = vector.load %arg11[%c0_102, %c0_103] : memref<32x144xbf16, #tpu.memory_space<vmem>>, vector<32x144xbf16>
    %cst_104 = arith.constant dense<0.000000e+00> : vector<32x16xf32>
    %350 = tpu.matmul %349, %348, %cst_104 {dimension_numbers = #tpu.dot_dimension_numbers<[1], [0], [0], [1], [0, 0, 1, 1], [], []>} : vector<32x144xbf16>, vector<144x16xbf16>, vector<32x16xf32> -> vector<32x16xf32>
    %c0_105 = arith.constant 0 : index
    %c0_106 = arith.constant 0 : index
    %351 = vector.load %arg12[%c0_105, %c0_106] : memref<32x1xf32, #tpu.memory_space<vmem>>, vector<32x1xf32>
    %352 = vector.broadcast %351 : vector<32x1xf32> to vector<32x16xf32>
    %353 = arith.addf %350, %352 : vector<32x16xf32>
    %cst_107 = arith.constant 0.000000e+00 : f32
    %354 = vector.broadcast %cst_107 : f32 to vector<32x16xf32>
    %355 = arith.maximumf %353, %354 : vector<32x16xf32>
    %cst_108 = arith.constant 0.000000e+00 : f32
    %356 = vector.broadcast %cst_108 : f32 to vector<16x5xf32>
    %357 = tpu.concatenate %356, %298, %356 in 1 : vector<16x5xf32>, vector<16x16xf32>, vector<16x5xf32> -> vector<16x26xf32>
    %358 = vector.extract_strided_slice %357 {offsets = [0, 0], sizes = [16, 16], strides = [1, 1]} : vector<16x26xf32> to vector<16x16xf32>
    %359 = vector.extract_strided_slice %2 {offsets = [0, 0], sizes = [1, 16], strides = [1, 1]} : vector<9x16xf32> to vector<1x16xf32>
    %360 = vector.broadcast %359 : vector<1x16xf32> to vector<16x16xf32>
    %361 = arith.mulf %358, %360 : vector<16x16xf32>
    %cst_109 = arith.constant 0.000000e+00 : f32
    %362 = vector.broadcast %cst_109 : f32 to vector<16x4xf32>
    %363 = tpu.concatenate %362, %298, %362 in 1 : vector<16x4xf32>, vector<16x16xf32>, vector<16x4xf32> -> vector<16x24xf32>
    %364 = vector.extract_strided_slice %363 {offsets = [0, 0], sizes = [16, 16], strides = [1, 1]} : vector<16x24xf32> to vector<16x16xf32>
    %365 = vector.extract_strided_slice %2 {offsets = [1, 0], sizes = [1, 16], strides = [1, 1]} : vector<9x16xf32> to vector<1x16xf32>
    %366 = vector.broadcast %365 : vector<1x16xf32> to vector<16x16xf32>
    %367 = arith.mulf %364, %366 : vector<16x16xf32>
    %cst_110 = arith.constant 0.000000e+00 : f32
    %368 = vector.broadcast %cst_110 : f32 to vector<16x3xf32>
    %369 = tpu.concatenate %368, %298, %368 in 1 : vector<16x3xf32>, vector<16x16xf32>, vector<16x3xf32> -> vector<16x22xf32>
    %370 = vector.extract_strided_slice %369 {offsets = [0, 0], sizes = [16, 16], strides = [1, 1]} : vector<16x22xf32> to vector<16x16xf32>
    %371 = vector.extract_strided_slice %2 {offsets = [2, 0], sizes = [1, 16], strides = [1, 1]} : vector<9x16xf32> to vector<1x16xf32>
    %372 = vector.broadcast %371 : vector<1x16xf32> to vector<16x16xf32>
    %373 = arith.mulf %370, %372 : vector<16x16xf32>
    %cst_111 = arith.constant 0.000000e+00 : f32
    %374 = vector.broadcast %cst_111 : f32 to vector<16x1xf32>
    %375 = tpu.concatenate %374, %298, %374 in 1 : vector<16x1xf32>, vector<16x16xf32>, vector<16x1xf32> -> vector<16x18xf32>
    %376 = vector.extract_strided_slice %375 {offsets = [0, 0], sizes = [16, 16], strides = [1, 1]} : vector<16x18xf32> to vector<16x16xf32>
    %377 = vector.extract_strided_slice %2 {offsets = [3, 0], sizes = [1, 16], strides = [1, 1]} : vector<9x16xf32> to vector<1x16xf32>
    %378 = vector.broadcast %377 : vector<1x16xf32> to vector<16x16xf32>
    %379 = arith.mulf %376, %378 : vector<16x16xf32>
    %cst_112 = arith.constant 0.000000e+00 : f32
    %380 = vector.broadcast %cst_112 : f32 to vector<16x1xf32>
    %381 = tpu.concatenate %380, %298, %380 in 1 : vector<16x1xf32>, vector<16x16xf32>, vector<16x1xf32> -> vector<16x18xf32>
    %382 = vector.extract_strided_slice %381 {offsets = [0, 2], sizes = [16, 16], strides = [1, 1]} : vector<16x18xf32> to vector<16x16xf32>
    %383 = vector.extract_strided_slice %2 {offsets = [5, 0], sizes = [1, 16], strides = [1, 1]} : vector<9x16xf32> to vector<1x16xf32>
    %384 = vector.broadcast %383 : vector<1x16xf32> to vector<16x16xf32>
    %385 = arith.mulf %382, %384 : vector<16x16xf32>
    %cst_113 = arith.constant 0.000000e+00 : f32
    %386 = vector.broadcast %cst_113 : f32 to vector<16x3xf32>
    %387 = tpu.concatenate %386, %298, %386 in 1 : vector<16x3xf32>, vector<16x16xf32>, vector<16x3xf32> -> vector<16x22xf32>
    %388 = vector.extract_strided_slice %387 {offsets = [0, 6], sizes = [16, 16], strides = [1, 1]} : vector<16x22xf32> to vector<16x16xf32>
    %389 = vector.extract_strided_slice %2 {offsets = [6, 0], sizes = [1, 16], strides = [1, 1]} : vector<9x16xf32> to vector<1x16xf32>
    %390 = vector.broadcast %389 : vector<1x16xf32> to vector<16x16xf32>
    %391 = arith.mulf %388, %390 : vector<16x16xf32>
    %cst_114 = arith.constant 0.000000e+00 : f32
    %392 = vector.broadcast %cst_114 : f32 to vector<16x4xf32>
    %393 = tpu.concatenate %392, %298, %392 in 1 : vector<16x4xf32>, vector<16x16xf32>, vector<16x4xf32> -> vector<16x24xf32>
    %394 = vector.extract_strided_slice %393 {offsets = [0, 8], sizes = [16, 16], strides = [1, 1]} : vector<16x24xf32> to vector<16x16xf32>
    %395 = vector.extract_strided_slice %2 {offsets = [7, 0], sizes = [1, 16], strides = [1, 1]} : vector<9x16xf32> to vector<1x16xf32>
    %396 = vector.broadcast %395 : vector<1x16xf32> to vector<16x16xf32>
    %397 = arith.mulf %394, %396 : vector<16x16xf32>
    %cst_115 = arith.constant 0.000000e+00 : f32
    %398 = vector.broadcast %cst_115 : f32 to vector<16x5xf32>
    %399 = tpu.concatenate %398, %298, %398 in 1 : vector<16x5xf32>, vector<16x16xf32>, vector<16x5xf32> -> vector<16x26xf32>
    %400 = vector.extract_strided_slice %399 {offsets = [0, 10], sizes = [16, 16], strides = [1, 1]} : vector<16x26xf32> to vector<16x16xf32>
    %401 = vector.extract_strided_slice %2 {offsets = [8, 0], sizes = [1, 16], strides = [1, 1]} : vector<9x16xf32> to vector<1x16xf32>
    %402 = vector.broadcast %401 : vector<1x16xf32> to vector<16x16xf32>
    %403 = arith.mulf %400, %402 : vector<16x16xf32>
    %404 = tpu.concatenate %361, %367, %373, %379, %298, %385, %391, %397, %403 in 0 : vector<16x16xf32>, vector<16x16xf32>, vector<16x16xf32>, vector<16x16xf32>, vector<16x16xf32>, vector<16x16xf32>, vector<16x16xf32>, vector<16x16xf32>, vector<16x16xf32> -> vector<144x16xf32>
    %405 = arith.truncf %404 : vector<144x16xf32> to vector<144x16xbf16>
    %c0_116 = arith.constant 0 : index
    %c0_117 = arith.constant 0 : index
    %406 = vector.load %arg13[%c0_116, %c0_117] : memref<32x144xbf16, #tpu.memory_space<vmem>>, vector<32x144xbf16>
    %cst_118 = arith.constant dense<0.000000e+00> : vector<32x16xf32>
    %407 = tpu.matmul %406, %405, %cst_118 {dimension_numbers = #tpu.dot_dimension_numbers<[1], [0], [0], [1], [0, 0, 1, 1], [], []>} : vector<32x144xbf16>, vector<144x16xbf16>, vector<32x16xf32> -> vector<32x16xf32>
    %c0_119 = arith.constant 0 : index
    %c0_120 = arith.constant 0 : index
    %408 = vector.load %arg14[%c0_119, %c0_120] : memref<32x1xf32, #tpu.memory_space<vmem>>, vector<32x1xf32>
    %409 = vector.broadcast %408 : vector<32x1xf32> to vector<32x16xf32>
    %410 = arith.addf %407, %409 : vector<32x16xf32>
    %cst_121 = arith.constant 0.000000e+00 : f32
    %411 = vector.broadcast %cst_121 : f32 to vector<32x16xf32>
    %412 = arith.maximumf %410, %411 : vector<32x16xf32>
    %413 = arith.addf %355, %412 : vector<32x16xf32>
    %cst_122 = arith.constant 0.000000e+00 : f32
    %414 = vector.broadcast %cst_122 : f32 to vector<32x1xf32>
    %415 = tpu.concatenate %414, %413, %414 in 1 : vector<32x1xf32>, vector<32x16xf32>, vector<32x1xf32> -> vector<32x18xf32>
    %416 = vector.extract_strided_slice %415 {offsets = [0, 2], sizes = [32, 16], strides = [1, 1]} : vector<32x18xf32> to vector<32x16xf32>
    %417 = arith.maximumf %413, %416 : vector<32x16xf32>
    %cst_123 = arith.constant 0.000000e+00 : f32
    %418 = vector.broadcast %cst_123 : f32 to vector<32x4xf32>
    %419 = tpu.concatenate %418, %413, %418 in 1 : vector<32x4xf32>, vector<32x16xf32>, vector<32x4xf32> -> vector<32x24xf32>
    %420 = vector.extract_strided_slice %419 {offsets = [0, 8], sizes = [32, 16], strides = [1, 1]} : vector<32x24xf32> to vector<32x16xf32>
    %cst_124 = arith.constant 0.000000e+00 : f32
    %421 = vector.broadcast %cst_124 : f32 to vector<32x5xf32>
    %422 = tpu.concatenate %421, %413, %421 in 1 : vector<32x5xf32>, vector<32x16xf32>, vector<32x5xf32> -> vector<32x26xf32>
    %423 = vector.extract_strided_slice %422 {offsets = [0, 10], sizes = [32, 16], strides = [1, 1]} : vector<32x26xf32> to vector<32x16xf32>
    %424 = arith.maximumf %420, %423 : vector<32x16xf32>
    %425 = arith.maximumf %417, %424 : vector<32x16xf32>
    %426 = arith.truncf %425 : vector<32x16xf32> to vector<32x16xbf16>
    %c0_125 = arith.constant 0 : index
    %c0_126 = arith.constant 0 : index
    %427 = vector.load %arg46[%c0_125, %c0_126] : memref<16x4xbf16, #tpu.memory_space<vmem>>, vector<16x4xbf16>
    %cst_127 = arith.constant dense<0.000000e+00> : vector<32x4xf32>
    %428 = tpu.matmul %426, %427, %cst_127 {dimension_numbers = #tpu.dot_dimension_numbers<[1], [0], [0], [1], [0, 0, 1, 1], [], []>} : vector<32x16xbf16>, vector<16x4xbf16>, vector<32x4xf32> -> vector<32x4xf32>
    %cst_128 = arith.constant 0.000000e+00 : f32
    %429 = vector.broadcast %cst_128 : f32 to vector<32x1xf32>
    %430 = tpu.concatenate %429, %412, %429 in 1 : vector<32x1xf32>, vector<32x16xf32>, vector<32x1xf32> -> vector<32x18xf32>
    %431 = vector.extract_strided_slice %430 {offsets = [0, 2], sizes = [32, 16], strides = [1, 1]} : vector<32x18xf32> to vector<32x16xf32>
    %432 = arith.maximumf %412, %431 : vector<32x16xf32>
    %cst_129 = arith.constant 0.000000e+00 : f32
    %433 = vector.broadcast %cst_129 : f32 to vector<32x4xf32>
    %434 = tpu.concatenate %433, %412, %433 in 1 : vector<32x4xf32>, vector<32x16xf32>, vector<32x4xf32> -> vector<32x24xf32>
    %435 = vector.extract_strided_slice %434 {offsets = [0, 8], sizes = [32, 16], strides = [1, 1]} : vector<32x24xf32> to vector<32x16xf32>
    %cst_130 = arith.constant 0.000000e+00 : f32
    %436 = vector.broadcast %cst_130 : f32 to vector<32x5xf32>
    %437 = tpu.concatenate %436, %412, %436 in 1 : vector<32x5xf32>, vector<32x16xf32>, vector<32x5xf32> -> vector<32x26xf32>
    %438 = vector.extract_strided_slice %437 {offsets = [0, 10], sizes = [32, 16], strides = [1, 1]} : vector<32x26xf32> to vector<32x16xf32>
    %439 = arith.maximumf %435, %438 : vector<32x16xf32>
    %440 = arith.maximumf %432, %439 : vector<32x16xf32>
    %441 = arith.truncf %440 : vector<32x16xf32> to vector<32x16xbf16>
    %c0_131 = arith.constant 0 : index
    %c0_132 = arith.constant 0 : index
    %442 = vector.load %arg46[%c0_131, %c0_132] : memref<16x4xbf16, #tpu.memory_space<vmem>>, vector<16x4xbf16>
    %cst_133 = arith.constant dense<0.000000e+00> : vector<32x4xf32>
    %443 = tpu.matmul %441, %442, %cst_133 {dimension_numbers = #tpu.dot_dimension_numbers<[1], [0], [0], [1], [0, 0, 1, 1], [], []>} : vector<32x16xbf16>, vector<16x4xbf16>, vector<32x4xf32> -> vector<32x4xf32>
    %cst_134 = arith.constant 0.000000e+00 : f32
    %444 = vector.broadcast %cst_134 : f32 to vector<32x3xf32>
    %445 = tpu.concatenate %444, %428, %444 in 1 : vector<32x3xf32>, vector<32x4xf32>, vector<32x3xf32> -> vector<32x10xf32>
    %446 = vector.extract_strided_slice %445 {offsets = [0, 0], sizes = [32, 4], strides = [1, 1]} : vector<32x10xf32> to vector<32x4xf32>
    %447 = vector.extract_strided_slice %3 {offsets = [0, 0], sizes = [1, 4], strides = [1, 1]} : vector<9x4xf32> to vector<1x4xf32>
    %448 = vector.broadcast %447 : vector<1x4xf32> to vector<32x4xf32>
    %449 = arith.mulf %446, %448 : vector<32x4xf32>
    %cst_135 = arith.constant 0.000000e+00 : f32
    %450 = vector.broadcast %cst_135 : f32 to vector<32x2xf32>
    %451 = tpu.concatenate %450, %428, %450 in 1 : vector<32x2xf32>, vector<32x4xf32>, vector<32x2xf32> -> vector<32x8xf32>
    %452 = vector.extract_strided_slice %451 {offsets = [0, 0], sizes = [32, 4], strides = [1, 1]} : vector<32x8xf32> to vector<32x4xf32>
    %453 = vector.extract_strided_slice %3 {offsets = [1, 0], sizes = [1, 4], strides = [1, 1]} : vector<9x4xf32> to vector<1x4xf32>
    %454 = vector.broadcast %453 : vector<1x4xf32> to vector<32x4xf32>
    %455 = arith.mulf %452, %454 : vector<32x4xf32>
    %cst_136 = arith.constant 0.000000e+00 : f32
    %456 = vector.broadcast %cst_136 : f32 to vector<32x1xf32>
    %457 = tpu.concatenate %456, %428, %456 in 1 : vector<32x1xf32>, vector<32x4xf32>, vector<32x1xf32> -> vector<32x6xf32>
    %458 = vector.extract_strided_slice %457 {offsets = [0, 0], sizes = [32, 4], strides = [1, 1]} : vector<32x6xf32> to vector<32x4xf32>
    %459 = vector.extract_strided_slice %3 {offsets = [2, 0], sizes = [1, 4], strides = [1, 1]} : vector<9x4xf32> to vector<1x4xf32>
    %460 = vector.broadcast %459 : vector<1x4xf32> to vector<32x4xf32>
    %461 = arith.mulf %458, %460 : vector<32x4xf32>
    %cst_137 = arith.constant 0.000000e+00 : f32
    %462 = vector.broadcast %cst_137 : f32 to vector<32x1xf32>
    %463 = tpu.concatenate %462, %428, %462 in 1 : vector<32x1xf32>, vector<32x4xf32>, vector<32x1xf32> -> vector<32x6xf32>
    %464 = vector.extract_strided_slice %463 {offsets = [0, 0], sizes = [32, 4], strides = [1, 1]} : vector<32x6xf32> to vector<32x4xf32>
    %465 = vector.extract_strided_slice %3 {offsets = [3, 0], sizes = [1, 4], strides = [1, 1]} : vector<9x4xf32> to vector<1x4xf32>
    %466 = vector.broadcast %465 : vector<1x4xf32> to vector<32x4xf32>
    %467 = arith.mulf %464, %466 : vector<32x4xf32>
    %cst_138 = arith.constant 0.000000e+00 : f32
    %468 = vector.broadcast %cst_138 : f32 to vector<32x1xf32>
    %469 = tpu.concatenate %468, %428, %468 in 1 : vector<32x1xf32>, vector<32x4xf32>, vector<32x1xf32> -> vector<32x6xf32>
    %470 = vector.extract_strided_slice %469 {offsets = [0, 2], sizes = [32, 4], strides = [1, 1]} : vector<32x6xf32> to vector<32x4xf32>
    %471 = vector.extract_strided_slice %3 {offsets = [5, 0], sizes = [1, 4], strides = [1, 1]} : vector<9x4xf32> to vector<1x4xf32>
    %472 = vector.broadcast %471 : vector<1x4xf32> to vector<32x4xf32>
    %473 = arith.mulf %470, %472 : vector<32x4xf32>
    %cst_139 = arith.constant 0.000000e+00 : f32
    %474 = vector.broadcast %cst_139 : f32 to vector<32x1xf32>
    %475 = tpu.concatenate %474, %428, %474 in 1 : vector<32x1xf32>, vector<32x4xf32>, vector<32x1xf32> -> vector<32x6xf32>
    %476 = vector.extract_strided_slice %475 {offsets = [0, 2], sizes = [32, 4], strides = [1, 1]} : vector<32x6xf32> to vector<32x4xf32>
    %477 = vector.extract_strided_slice %3 {offsets = [6, 0], sizes = [1, 4], strides = [1, 1]} : vector<9x4xf32> to vector<1x4xf32>
    %478 = vector.broadcast %477 : vector<1x4xf32> to vector<32x4xf32>
    %479 = arith.mulf %476, %478 : vector<32x4xf32>
    %cst_140 = arith.constant 0.000000e+00 : f32
    %480 = vector.broadcast %cst_140 : f32 to vector<32x2xf32>
    %481 = tpu.concatenate %480, %428, %480 in 1 : vector<32x2xf32>, vector<32x4xf32>, vector<32x2xf32> -> vector<32x8xf32>
    %482 = vector.extract_strided_slice %481 {offsets = [0, 4], sizes = [32, 4], strides = [1, 1]} : vector<32x8xf32> to vector<32x4xf32>
    %483 = vector.extract_strided_slice %3 {offsets = [7, 0], sizes = [1, 4], strides = [1, 1]} : vector<9x4xf32> to vector<1x4xf32>
    %484 = vector.broadcast %483 : vector<1x4xf32> to vector<32x4xf32>
    %485 = arith.mulf %482, %484 : vector<32x4xf32>
    %cst_141 = arith.constant 0.000000e+00 : f32
    %486 = vector.broadcast %cst_141 : f32 to vector<32x3xf32>
    %487 = tpu.concatenate %486, %428, %486 in 1 : vector<32x3xf32>, vector<32x4xf32>, vector<32x3xf32> -> vector<32x10xf32>
    %488 = vector.extract_strided_slice %487 {offsets = [0, 6], sizes = [32, 4], strides = [1, 1]} : vector<32x10xf32> to vector<32x4xf32>
    %489 = vector.extract_strided_slice %3 {offsets = [8, 0], sizes = [1, 4], strides = [1, 1]} : vector<9x4xf32> to vector<1x4xf32>
    %490 = vector.broadcast %489 : vector<1x4xf32> to vector<32x4xf32>
    %491 = arith.mulf %488, %490 : vector<32x4xf32>
    %492 = tpu.concatenate %449, %455, %461, %467, %428, %473, %479, %485, %491 in 0 : vector<32x4xf32>, vector<32x4xf32>, vector<32x4xf32>, vector<32x4xf32>, vector<32x4xf32>, vector<32x4xf32>, vector<32x4xf32>, vector<32x4xf32>, vector<32x4xf32> -> vector<288x4xf32>
    %493 = arith.truncf %492 : vector<288x4xf32> to vector<288x4xbf16>
    %c0_142 = arith.constant 0 : index
    %c0_143 = arith.constant 0 : index
    %494 = vector.load %arg15[%c0_142, %c0_143] : memref<32x288xbf16, #tpu.memory_space<vmem>>, vector<32x288xbf16>
    %cst_144 = arith.constant dense<0.000000e+00> : vector<32x4xf32>
    %495 = tpu.matmul %494, %493, %cst_144 {dimension_numbers = #tpu.dot_dimension_numbers<[1], [0], [0], [1], [0, 0, 1, 1], [], []>} : vector<32x288xbf16>, vector<288x4xbf16>, vector<32x4xf32> -> vector<32x4xf32>
    %c0_145 = arith.constant 0 : index
    %c0_146 = arith.constant 0 : index
    %496 = vector.load %arg16[%c0_145, %c0_146] : memref<32x1xf32, #tpu.memory_space<vmem>>, vector<32x1xf32>
    %497 = vector.broadcast %496 : vector<32x1xf32> to vector<32x4xf32>
    %498 = arith.addf %495, %497 : vector<32x4xf32>
    %cst_147 = arith.constant 0.000000e+00 : f32
    %499 = vector.broadcast %cst_147 : f32 to vector<32x4xf32>
    %500 = arith.maximumf %498, %499 : vector<32x4xf32>
    %cst_148 = arith.constant 0.000000e+00 : f32
    %501 = vector.broadcast %cst_148 : f32 to vector<32x3xf32>
    %502 = tpu.concatenate %501, %443, %501 in 1 : vector<32x3xf32>, vector<32x4xf32>, vector<32x3xf32> -> vector<32x10xf32>
    %503 = vector.extract_strided_slice %502 {offsets = [0, 0], sizes = [32, 4], strides = [1, 1]} : vector<32x10xf32> to vector<32x4xf32>
    %504 = vector.extract_strided_slice %3 {offsets = [0, 0], sizes = [1, 4], strides = [1, 1]} : vector<9x4xf32> to vector<1x4xf32>
    %505 = vector.broadcast %504 : vector<1x4xf32> to vector<32x4xf32>
    %506 = arith.mulf %503, %505 : vector<32x4xf32>
    %cst_149 = arith.constant 0.000000e+00 : f32
    %507 = vector.broadcast %cst_149 : f32 to vector<32x2xf32>
    %508 = tpu.concatenate %507, %443, %507 in 1 : vector<32x2xf32>, vector<32x4xf32>, vector<32x2xf32> -> vector<32x8xf32>
    %509 = vector.extract_strided_slice %508 {offsets = [0, 0], sizes = [32, 4], strides = [1, 1]} : vector<32x8xf32> to vector<32x4xf32>
    %510 = vector.extract_strided_slice %3 {offsets = [1, 0], sizes = [1, 4], strides = [1, 1]} : vector<9x4xf32> to vector<1x4xf32>
    %511 = vector.broadcast %510 : vector<1x4xf32> to vector<32x4xf32>
    %512 = arith.mulf %509, %511 : vector<32x4xf32>
    %cst_150 = arith.constant 0.000000e+00 : f32
    %513 = vector.broadcast %cst_150 : f32 to vector<32x1xf32>
    %514 = tpu.concatenate %513, %443, %513 in 1 : vector<32x1xf32>, vector<32x4xf32>, vector<32x1xf32> -> vector<32x6xf32>
    %515 = vector.extract_strided_slice %514 {offsets = [0, 0], sizes = [32, 4], strides = [1, 1]} : vector<32x6xf32> to vector<32x4xf32>
    %516 = vector.extract_strided_slice %3 {offsets = [2, 0], sizes = [1, 4], strides = [1, 1]} : vector<9x4xf32> to vector<1x4xf32>
    %517 = vector.broadcast %516 : vector<1x4xf32> to vector<32x4xf32>
    %518 = arith.mulf %515, %517 : vector<32x4xf32>
    %cst_151 = arith.constant 0.000000e+00 : f32
    %519 = vector.broadcast %cst_151 : f32 to vector<32x1xf32>
    %520 = tpu.concatenate %519, %443, %519 in 1 : vector<32x1xf32>, vector<32x4xf32>, vector<32x1xf32> -> vector<32x6xf32>
    %521 = vector.extract_strided_slice %520 {offsets = [0, 0], sizes = [32, 4], strides = [1, 1]} : vector<32x6xf32> to vector<32x4xf32>
    %522 = vector.extract_strided_slice %3 {offsets = [3, 0], sizes = [1, 4], strides = [1, 1]} : vector<9x4xf32> to vector<1x4xf32>
    %523 = vector.broadcast %522 : vector<1x4xf32> to vector<32x4xf32>
    %524 = arith.mulf %521, %523 : vector<32x4xf32>
    %cst_152 = arith.constant 0.000000e+00 : f32
    %525 = vector.broadcast %cst_152 : f32 to vector<32x1xf32>
    %526 = tpu.concatenate %525, %443, %525 in 1 : vector<32x1xf32>, vector<32x4xf32>, vector<32x1xf32> -> vector<32x6xf32>
    %527 = vector.extract_strided_slice %526 {offsets = [0, 2], sizes = [32, 4], strides = [1, 1]} : vector<32x6xf32> to vector<32x4xf32>
    %528 = vector.extract_strided_slice %3 {offsets = [5, 0], sizes = [1, 4], strides = [1, 1]} : vector<9x4xf32> to vector<1x4xf32>
    %529 = vector.broadcast %528 : vector<1x4xf32> to vector<32x4xf32>
    %530 = arith.mulf %527, %529 : vector<32x4xf32>
    %cst_153 = arith.constant 0.000000e+00 : f32
    %531 = vector.broadcast %cst_153 : f32 to vector<32x1xf32>
    %532 = tpu.concatenate %531, %443, %531 in 1 : vector<32x1xf32>, vector<32x4xf32>, vector<32x1xf32> -> vector<32x6xf32>
    %533 = vector.extract_strided_slice %532 {offsets = [0, 2], sizes = [32, 4], strides = [1, 1]} : vector<32x6xf32> to vector<32x4xf32>
    %534 = vector.extract_strided_slice %3 {offsets = [6, 0], sizes = [1, 4], strides = [1, 1]} : vector<9x4xf32> to vector<1x4xf32>
    %535 = vector.broadcast %534 : vector<1x4xf32> to vector<32x4xf32>
    %536 = arith.mulf %533, %535 : vector<32x4xf32>
    %cst_154 = arith.constant 0.000000e+00 : f32
    %537 = vector.broadcast %cst_154 : f32 to vector<32x2xf32>
    %538 = tpu.concatenate %537, %443, %537 in 1 : vector<32x2xf32>, vector<32x4xf32>, vector<32x2xf32> -> vector<32x8xf32>
    %539 = vector.extract_strided_slice %538 {offsets = [0, 4], sizes = [32, 4], strides = [1, 1]} : vector<32x8xf32> to vector<32x4xf32>
    %540 = vector.extract_strided_slice %3 {offsets = [7, 0], sizes = [1, 4], strides = [1, 1]} : vector<9x4xf32> to vector<1x4xf32>
    %541 = vector.broadcast %540 : vector<1x4xf32> to vector<32x4xf32>
    %542 = arith.mulf %539, %541 : vector<32x4xf32>
    %cst_155 = arith.constant 0.000000e+00 : f32
    %543 = vector.broadcast %cst_155 : f32 to vector<32x3xf32>
    %544 = tpu.concatenate %543, %443, %543 in 1 : vector<32x3xf32>, vector<32x4xf32>, vector<32x3xf32> -> vector<32x10xf32>
    %545 = vector.extract_strided_slice %544 {offsets = [0, 6], sizes = [32, 4], strides = [1, 1]} : vector<32x10xf32> to vector<32x4xf32>
    %546 = vector.extract_strided_slice %3 {offsets = [8, 0], sizes = [1, 4], strides = [1, 1]} : vector<9x4xf32> to vector<1x4xf32>
    %547 = vector.broadcast %546 : vector<1x4xf32> to vector<32x4xf32>
    %548 = arith.mulf %545, %547 : vector<32x4xf32>
    %549 = tpu.concatenate %506, %512, %518, %524, %443, %530, %536, %542, %548 in 0 : vector<32x4xf32>, vector<32x4xf32>, vector<32x4xf32>, vector<32x4xf32>, vector<32x4xf32>, vector<32x4xf32>, vector<32x4xf32>, vector<32x4xf32>, vector<32x4xf32> -> vector<288x4xf32>
    %550 = arith.truncf %549 : vector<288x4xf32> to vector<288x4xbf16>
    %c0_156 = arith.constant 0 : index
    %c0_157 = arith.constant 0 : index
    %551 = vector.load %arg17[%c0_156, %c0_157] : memref<32x288xbf16, #tpu.memory_space<vmem>>, vector<32x288xbf16>
    %cst_158 = arith.constant dense<0.000000e+00> : vector<32x4xf32>
    %552 = tpu.matmul %551, %550, %cst_158 {dimension_numbers = #tpu.dot_dimension_numbers<[1], [0], [0], [1], [0, 0, 1, 1], [], []>} : vector<32x288xbf16>, vector<288x4xbf16>, vector<32x4xf32> -> vector<32x4xf32>
    %c0_159 = arith.constant 0 : index
    %c0_160 = arith.constant 0 : index
    %553 = vector.load %arg18[%c0_159, %c0_160] : memref<32x1xf32, #tpu.memory_space<vmem>>, vector<32x1xf32>
    %554 = vector.broadcast %553 : vector<32x1xf32> to vector<32x4xf32>
    %555 = arith.addf %552, %554 : vector<32x4xf32>
    %cst_161 = arith.constant 0.000000e+00 : f32
    %556 = vector.broadcast %cst_161 : f32 to vector<32x4xf32>
    %557 = arith.maximumf %555, %556 : vector<32x4xf32>
    %558 = arith.addf %500, %557 : vector<32x4xf32>
    %cst_162 = arith.constant 0.000000e+00 : f32
    %559 = vector.broadcast %cst_162 : f32 to vector<32x1xf32>
    %560 = tpu.concatenate %559, %558, %559 in 1 : vector<32x1xf32>, vector<32x4xf32>, vector<32x1xf32> -> vector<32x6xf32>
    %561 = vector.extract_strided_slice %560 {offsets = [0, 2], sizes = [32, 4], strides = [1, 1]} : vector<32x6xf32> to vector<32x4xf32>
    %562 = arith.maximumf %558, %561 : vector<32x4xf32>
    %cst_163 = arith.constant 0.000000e+00 : f32
    %563 = vector.broadcast %cst_163 : f32 to vector<32x2xf32>
    %564 = tpu.concatenate %563, %558, %563 in 1 : vector<32x2xf32>, vector<32x4xf32>, vector<32x2xf32> -> vector<32x8xf32>
    %565 = vector.extract_strided_slice %564 {offsets = [0, 4], sizes = [32, 4], strides = [1, 1]} : vector<32x8xf32> to vector<32x4xf32>
    %cst_164 = arith.constant 0.000000e+00 : f32
    %566 = vector.broadcast %cst_164 : f32 to vector<32x3xf32>
    %567 = tpu.concatenate %566, %558, %566 in 1 : vector<32x3xf32>, vector<32x4xf32>, vector<32x3xf32> -> vector<32x10xf32>
    %568 = vector.extract_strided_slice %567 {offsets = [0, 6], sizes = [32, 4], strides = [1, 1]} : vector<32x10xf32> to vector<32x4xf32>
    %569 = arith.maximumf %565, %568 : vector<32x4xf32>
    %570 = arith.maximumf %562, %569 : vector<32x4xf32>
    %571 = arith.truncf %570 : vector<32x4xf32> to vector<32x4xbf16>
    %c0_165 = arith.constant 0 : index
    %c0_166 = arith.constant 0 : index
    %572 = vector.load %arg47[%c0_165, %c0_166] : memref<4x1xbf16, #tpu.memory_space<vmem>>, vector<4x1xbf16>
    %cst_167 = arith.constant dense<0.000000e+00> : vector<32x1xf32>
    %573 = tpu.matmul %571, %572, %cst_167 {dimension_numbers = #tpu.dot_dimension_numbers<[1], [0], [0], [1], [0, 0, 1, 1], [], []>} : vector<32x4xbf16>, vector<4x1xbf16>, vector<32x1xf32> -> vector<32x1xf32>
    %cst_168 = arith.constant 0.000000e+00 : f32
    %574 = vector.broadcast %cst_168 : f32 to vector<32x2xf32>
    %575 = tpu.concatenate %574, %573, %574 in 1 : vector<32x2xf32>, vector<32x1xf32>, vector<32x2xf32> -> vector<32x5xf32>
    %576 = vector.extract_strided_slice %575 {offsets = [0, 0], sizes = [32, 1], strides = [1, 1]} : vector<32x5xf32> to vector<32x1xf32>
    %577 = vector.extract_strided_slice %4 {offsets = [0, 0], sizes = [1, 1], strides = [1, 1]} : vector<9x1xf32> to vector<1x1xf32>
    %578 = vector.broadcast %577 : vector<1x1xf32> to vector<32x1xf32>
    %579 = arith.mulf %576, %578 : vector<32x1xf32>
    %cst_169 = arith.constant 0.000000e+00 : f32
    %580 = vector.broadcast %cst_169 : f32 to vector<32x1xf32>
    %581 = tpu.concatenate %580, %573, %580 in 1 : vector<32x1xf32>, vector<32x1xf32>, vector<32x1xf32> -> vector<32x3xf32>
    %582 = vector.extract_strided_slice %581 {offsets = [0, 0], sizes = [32, 1], strides = [1, 1]} : vector<32x3xf32> to vector<32x1xf32>
    %583 = vector.extract_strided_slice %4 {offsets = [1, 0], sizes = [1, 1], strides = [1, 1]} : vector<9x1xf32> to vector<1x1xf32>
    %584 = vector.broadcast %583 : vector<1x1xf32> to vector<32x1xf32>
    %585 = arith.mulf %582, %584 : vector<32x1xf32>
    %586 = vector.extract_strided_slice %4 {offsets = [2, 0], sizes = [1, 1], strides = [1, 1]} : vector<9x1xf32> to vector<1x1xf32>
    %587 = vector.broadcast %586 : vector<1x1xf32> to vector<32x1xf32>
    %588 = arith.mulf %573, %587 : vector<32x1xf32>
    %cst_170 = arith.constant 0.000000e+00 : f32
    %589 = vector.broadcast %cst_170 : f32 to vector<32x1xf32>
    %590 = tpu.concatenate %589, %573, %589 in 1 : vector<32x1xf32>, vector<32x1xf32>, vector<32x1xf32> -> vector<32x3xf32>
    %591 = vector.extract_strided_slice %590 {offsets = [0, 0], sizes = [32, 1], strides = [1, 1]} : vector<32x3xf32> to vector<32x1xf32>
    %592 = vector.extract_strided_slice %4 {offsets = [3, 0], sizes = [1, 1], strides = [1, 1]} : vector<9x1xf32> to vector<1x1xf32>
    %593 = vector.broadcast %592 : vector<1x1xf32> to vector<32x1xf32>
    %594 = arith.mulf %591, %593 : vector<32x1xf32>
    %cst_171 = arith.constant 0.000000e+00 : f32
    %595 = vector.broadcast %cst_171 : f32 to vector<32x1xf32>
    %596 = tpu.concatenate %595, %573, %595 in 1 : vector<32x1xf32>, vector<32x1xf32>, vector<32x1xf32> -> vector<32x3xf32>
    %597 = vector.extract_strided_slice %596 {offsets = [0, 2], sizes = [32, 1], strides = [1, 1]} : vector<32x3xf32> to vector<32x1xf32>
    %598 = vector.extract_strided_slice %4 {offsets = [5, 0], sizes = [1, 1], strides = [1, 1]} : vector<9x1xf32> to vector<1x1xf32>
    %599 = vector.broadcast %598 : vector<1x1xf32> to vector<32x1xf32>
    %600 = arith.mulf %597, %599 : vector<32x1xf32>
    %601 = vector.extract_strided_slice %4 {offsets = [6, 0], sizes = [1, 1], strides = [1, 1]} : vector<9x1xf32> to vector<1x1xf32>
    %602 = vector.broadcast %601 : vector<1x1xf32> to vector<32x1xf32>
    %603 = arith.mulf %573, %602 : vector<32x1xf32>
    %cst_172 = arith.constant 0.000000e+00 : f32
    %604 = vector.broadcast %cst_172 : f32 to vector<32x1xf32>
    %605 = tpu.concatenate %604, %573, %604 in 1 : vector<32x1xf32>, vector<32x1xf32>, vector<32x1xf32> -> vector<32x3xf32>
    %606 = vector.extract_strided_slice %605 {offsets = [0, 2], sizes = [32, 1], strides = [1, 1]} : vector<32x3xf32> to vector<32x1xf32>
    %607 = vector.extract_strided_slice %4 {offsets = [7, 0], sizes = [1, 1], strides = [1, 1]} : vector<9x1xf32> to vector<1x1xf32>
    %608 = vector.broadcast %607 : vector<1x1xf32> to vector<32x1xf32>
    %609 = arith.mulf %606, %608 : vector<32x1xf32>
    %cst_173 = arith.constant 0.000000e+00 : f32
    %610 = vector.broadcast %cst_173 : f32 to vector<32x2xf32>
    %611 = tpu.concatenate %610, %573, %610 in 1 : vector<32x2xf32>, vector<32x1xf32>, vector<32x2xf32> -> vector<32x5xf32>
    %612 = vector.extract_strided_slice %611 {offsets = [0, 4], sizes = [32, 1], strides = [1, 1]} : vector<32x5xf32> to vector<32x1xf32>
    %613 = vector.extract_strided_slice %4 {offsets = [8, 0], sizes = [1, 1], strides = [1, 1]} : vector<9x1xf32> to vector<1x1xf32>
    %614 = vector.broadcast %613 : vector<1x1xf32> to vector<32x1xf32>
    %615 = arith.mulf %612, %614 : vector<32x1xf32>
    %616 = tpu.concatenate %579, %585, %588, %594, %573, %600, %603, %609, %615 in 0 : vector<32x1xf32>, vector<32x1xf32>, vector<32x1xf32>, vector<32x1xf32>, vector<32x1xf32>, vector<32x1xf32>, vector<32x1xf32>, vector<32x1xf32>, vector<32x1xf32> -> vector<288x1xf32>
    %617 = arith.truncf %616 : vector<288x1xf32> to vector<288x1xbf16>
    %c0_174 = arith.constant 0 : index
    %c0_175 = arith.constant 0 : index
    %618 = vector.load %arg19[%c0_174, %c0_175] : memref<32x288xbf16, #tpu.memory_space<vmem>>, vector<32x288xbf16>
    %cst_176 = arith.constant dense<0.000000e+00> : vector<32x1xf32>
    %619 = tpu.matmul %618, %617, %cst_176 {dimension_numbers = #tpu.dot_dimension_numbers<[1], [0], [0], [1], [0, 0, 1, 1], [], []>} : vector<32x288xbf16>, vector<288x1xbf16>, vector<32x1xf32> -> vector<32x1xf32>
    %c0_177 = arith.constant 0 : index
    %c0_178 = arith.constant 0 : index
    %620 = vector.load %arg20[%c0_177, %c0_178] : memref<32x1xf32, #tpu.memory_space<vmem>>, vector<32x1xf32>
    %621 = arith.addf %619, %620 : vector<32x1xf32>
    %cst_179 = arith.constant 0.000000e+00 : f32
    %622 = vector.broadcast %cst_179 : f32 to vector<32x1xf32>
    %623 = arith.maximumf %621, %622 : vector<32x1xf32>
    %624 = arith.truncf %623 : vector<32x1xf32> to vector<32x1xbf16>
    %c0_180 = arith.constant 0 : index
    %c0_181 = arith.constant 0 : index
    %625 = vector.load %arg48[%c0_180, %c0_181] : memref<1x4xbf16, #tpu.memory_space<vmem>>, vector<1x4xbf16>
    %cst_182 = arith.constant dense<0.000000e+00> : vector<32x4xf32>
    %626 = tpu.matmul %624, %625, %cst_182 {dimension_numbers = #tpu.dot_dimension_numbers<[1], [0], [0], [1], [0, 0, 1, 1], [], []>} : vector<32x1xbf16>, vector<1x4xbf16>, vector<32x4xf32> -> vector<32x4xf32>
    %cst_183 = arith.constant 0.000000e+00 : f32
    %627 = vector.broadcast %cst_183 : f32 to vector<32x3xf32>
    %628 = tpu.concatenate %627, %626, %627 in 1 : vector<32x3xf32>, vector<32x4xf32>, vector<32x3xf32> -> vector<32x10xf32>
    %629 = vector.extract_strided_slice %628 {offsets = [0, 0], sizes = [32, 4], strides = [1, 1]} : vector<32x10xf32> to vector<32x4xf32>
    %630 = vector.extract_strided_slice %3 {offsets = [0, 0], sizes = [1, 4], strides = [1, 1]} : vector<9x4xf32> to vector<1x4xf32>
    %631 = vector.broadcast %630 : vector<1x4xf32> to vector<32x4xf32>
    %632 = arith.mulf %629, %631 : vector<32x4xf32>
    %cst_184 = arith.constant 0.000000e+00 : f32
    %633 = vector.broadcast %cst_184 : f32 to vector<32x2xf32>
    %634 = tpu.concatenate %633, %626, %633 in 1 : vector<32x2xf32>, vector<32x4xf32>, vector<32x2xf32> -> vector<32x8xf32>
    %635 = vector.extract_strided_slice %634 {offsets = [0, 0], sizes = [32, 4], strides = [1, 1]} : vector<32x8xf32> to vector<32x4xf32>
    %636 = vector.extract_strided_slice %3 {offsets = [1, 0], sizes = [1, 4], strides = [1, 1]} : vector<9x4xf32> to vector<1x4xf32>
    %637 = vector.broadcast %636 : vector<1x4xf32> to vector<32x4xf32>
    %638 = arith.mulf %635, %637 : vector<32x4xf32>
    %cst_185 = arith.constant 0.000000e+00 : f32
    %639 = vector.broadcast %cst_185 : f32 to vector<32x1xf32>
    %640 = tpu.concatenate %639, %626, %639 in 1 : vector<32x1xf32>, vector<32x4xf32>, vector<32x1xf32> -> vector<32x6xf32>
    %641 = vector.extract_strided_slice %640 {offsets = [0, 0], sizes = [32, 4], strides = [1, 1]} : vector<32x6xf32> to vector<32x4xf32>
    %642 = vector.extract_strided_slice %3 {offsets = [2, 0], sizes = [1, 4], strides = [1, 1]} : vector<9x4xf32> to vector<1x4xf32>
    %643 = vector.broadcast %642 : vector<1x4xf32> to vector<32x4xf32>
    %644 = arith.mulf %641, %643 : vector<32x4xf32>
    %cst_186 = arith.constant 0.000000e+00 : f32
    %645 = vector.broadcast %cst_186 : f32 to vector<32x1xf32>
    %646 = tpu.concatenate %645, %626, %645 in 1 : vector<32x1xf32>, vector<32x4xf32>, vector<32x1xf32> -> vector<32x6xf32>
    %647 = vector.extract_strided_slice %646 {offsets = [0, 0], sizes = [32, 4], strides = [1, 1]} : vector<32x6xf32> to vector<32x4xf32>
    %648 = vector.extract_strided_slice %3 {offsets = [3, 0], sizes = [1, 4], strides = [1, 1]} : vector<9x4xf32> to vector<1x4xf32>
    %649 = vector.broadcast %648 : vector<1x4xf32> to vector<32x4xf32>
    %650 = arith.mulf %647, %649 : vector<32x4xf32>
    %cst_187 = arith.constant 0.000000e+00 : f32
    %651 = vector.broadcast %cst_187 : f32 to vector<32x1xf32>
    %652 = tpu.concatenate %651, %626, %651 in 1 : vector<32x1xf32>, vector<32x4xf32>, vector<32x1xf32> -> vector<32x6xf32>
    %653 = vector.extract_strided_slice %652 {offsets = [0, 2], sizes = [32, 4], strides = [1, 1]} : vector<32x6xf32> to vector<32x4xf32>
    %654 = vector.extract_strided_slice %3 {offsets = [5, 0], sizes = [1, 4], strides = [1, 1]} : vector<9x4xf32> to vector<1x4xf32>
    %655 = vector.broadcast %654 : vector<1x4xf32> to vector<32x4xf32>
    %656 = arith.mulf %653, %655 : vector<32x4xf32>
    %cst_188 = arith.constant 0.000000e+00 : f32
    %657 = vector.broadcast %cst_188 : f32 to vector<32x1xf32>
    %658 = tpu.concatenate %657, %626, %657 in 1 : vector<32x1xf32>, vector<32x4xf32>, vector<32x1xf32> -> vector<32x6xf32>
    %659 = vector.extract_strided_slice %658 {offsets = [0, 2], sizes = [32, 4], strides = [1, 1]} : vector<32x6xf32> to vector<32x4xf32>
    %660 = vector.extract_strided_slice %3 {offsets = [6, 0], sizes = [1, 4], strides = [1, 1]} : vector<9x4xf32> to vector<1x4xf32>
    %661 = vector.broadcast %660 : vector<1x4xf32> to vector<32x4xf32>
    %662 = arith.mulf %659, %661 : vector<32x4xf32>
    %cst_189 = arith.constant 0.000000e+00 : f32
    %663 = vector.broadcast %cst_189 : f32 to vector<32x2xf32>
    %664 = tpu.concatenate %663, %626, %663 in 1 : vector<32x2xf32>, vector<32x4xf32>, vector<32x2xf32> -> vector<32x8xf32>
    %665 = vector.extract_strided_slice %664 {offsets = [0, 4], sizes = [32, 4], strides = [1, 1]} : vector<32x8xf32> to vector<32x4xf32>
    %666 = vector.extract_strided_slice %3 {offsets = [7, 0], sizes = [1, 4], strides = [1, 1]} : vector<9x4xf32> to vector<1x4xf32>
    %667 = vector.broadcast %666 : vector<1x4xf32> to vector<32x4xf32>
    %668 = arith.mulf %665, %667 : vector<32x4xf32>
    %cst_190 = arith.constant 0.000000e+00 : f32
    %669 = vector.broadcast %cst_190 : f32 to vector<32x3xf32>
    %670 = tpu.concatenate %669, %626, %669 in 1 : vector<32x3xf32>, vector<32x4xf32>, vector<32x3xf32> -> vector<32x10xf32>
    %671 = vector.extract_strided_slice %670 {offsets = [0, 6], sizes = [32, 4], strides = [1, 1]} : vector<32x10xf32> to vector<32x4xf32>
    %672 = vector.extract_strided_slice %3 {offsets = [8, 0], sizes = [1, 4], strides = [1, 1]} : vector<9x4xf32> to vector<1x4xf32>
    %673 = vector.broadcast %672 : vector<1x4xf32> to vector<32x4xf32>
    %674 = arith.mulf %671, %673 : vector<32x4xf32>
    %675 = tpu.concatenate %632, %638, %644, %650, %626, %656, %662, %668, %674 in 0 : vector<32x4xf32>, vector<32x4xf32>, vector<32x4xf32>, vector<32x4xf32>, vector<32x4xf32>, vector<32x4xf32>, vector<32x4xf32>, vector<32x4xf32>, vector<32x4xf32> -> vector<288x4xf32>
    %676 = arith.truncf %675 : vector<288x4xf32> to vector<288x4xbf16>
    %c0_191 = arith.constant 0 : index
    %c0_192 = arith.constant 0 : index
    %677 = vector.load %arg21[%c0_191, %c0_192] : memref<32x288xbf16, #tpu.memory_space<vmem>>, vector<32x288xbf16>
    %cst_193 = arith.constant dense<0.000000e+00> : vector<32x4xf32>
    %678 = tpu.matmul %677, %676, %cst_193 {dimension_numbers = #tpu.dot_dimension_numbers<[1], [0], [0], [1], [0, 0, 1, 1], [], []>} : vector<32x288xbf16>, vector<288x4xbf16>, vector<32x4xf32> -> vector<32x4xf32>
    %cst_194 = arith.constant 0.000000e+00 : f32
    %679 = vector.broadcast %cst_194 : f32 to vector<32x3xf32>
    %680 = tpu.concatenate %679, %500, %679 in 1 : vector<32x3xf32>, vector<32x4xf32>, vector<32x3xf32> -> vector<32x10xf32>
    %681 = vector.extract_strided_slice %680 {offsets = [0, 0], sizes = [32, 4], strides = [1, 1]} : vector<32x10xf32> to vector<32x4xf32>
    %682 = vector.extract_strided_slice %3 {offsets = [0, 0], sizes = [1, 4], strides = [1, 1]} : vector<9x4xf32> to vector<1x4xf32>
    %683 = vector.broadcast %682 : vector<1x4xf32> to vector<32x4xf32>
    %684 = arith.mulf %681, %683 : vector<32x4xf32>
    %cst_195 = arith.constant 0.000000e+00 : f32
    %685 = vector.broadcast %cst_195 : f32 to vector<32x2xf32>
    %686 = tpu.concatenate %685, %500, %685 in 1 : vector<32x2xf32>, vector<32x4xf32>, vector<32x2xf32> -> vector<32x8xf32>
    %687 = vector.extract_strided_slice %686 {offsets = [0, 0], sizes = [32, 4], strides = [1, 1]} : vector<32x8xf32> to vector<32x4xf32>
    %688 = vector.extract_strided_slice %3 {offsets = [1, 0], sizes = [1, 4], strides = [1, 1]} : vector<9x4xf32> to vector<1x4xf32>
    %689 = vector.broadcast %688 : vector<1x4xf32> to vector<32x4xf32>
    %690 = arith.mulf %687, %689 : vector<32x4xf32>
    %cst_196 = arith.constant 0.000000e+00 : f32
    %691 = vector.broadcast %cst_196 : f32 to vector<32x1xf32>
    %692 = tpu.concatenate %691, %500, %691 in 1 : vector<32x1xf32>, vector<32x4xf32>, vector<32x1xf32> -> vector<32x6xf32>
    %693 = vector.extract_strided_slice %692 {offsets = [0, 0], sizes = [32, 4], strides = [1, 1]} : vector<32x6xf32> to vector<32x4xf32>
    %694 = vector.extract_strided_slice %3 {offsets = [2, 0], sizes = [1, 4], strides = [1, 1]} : vector<9x4xf32> to vector<1x4xf32>
    %695 = vector.broadcast %694 : vector<1x4xf32> to vector<32x4xf32>
    %696 = arith.mulf %693, %695 : vector<32x4xf32>
    %cst_197 = arith.constant 0.000000e+00 : f32
    %697 = vector.broadcast %cst_197 : f32 to vector<32x1xf32>
    %698 = tpu.concatenate %697, %500, %697 in 1 : vector<32x1xf32>, vector<32x4xf32>, vector<32x1xf32> -> vector<32x6xf32>
    %699 = vector.extract_strided_slice %698 {offsets = [0, 0], sizes = [32, 4], strides = [1, 1]} : vector<32x6xf32> to vector<32x4xf32>
    %700 = vector.extract_strided_slice %3 {offsets = [3, 0], sizes = [1, 4], strides = [1, 1]} : vector<9x4xf32> to vector<1x4xf32>
    %701 = vector.broadcast %700 : vector<1x4xf32> to vector<32x4xf32>
    %702 = arith.mulf %699, %701 : vector<32x4xf32>
    %cst_198 = arith.constant 0.000000e+00 : f32
    %703 = vector.broadcast %cst_198 : f32 to vector<32x1xf32>
    %704 = tpu.concatenate %703, %500, %703 in 1 : vector<32x1xf32>, vector<32x4xf32>, vector<32x1xf32> -> vector<32x6xf32>
    %705 = vector.extract_strided_slice %704 {offsets = [0, 2], sizes = [32, 4], strides = [1, 1]} : vector<32x6xf32> to vector<32x4xf32>
    %706 = vector.extract_strided_slice %3 {offsets = [5, 0], sizes = [1, 4], strides = [1, 1]} : vector<9x4xf32> to vector<1x4xf32>
    %707 = vector.broadcast %706 : vector<1x4xf32> to vector<32x4xf32>
    %708 = arith.mulf %705, %707 : vector<32x4xf32>
    %cst_199 = arith.constant 0.000000e+00 : f32
    %709 = vector.broadcast %cst_199 : f32 to vector<32x1xf32>
    %710 = tpu.concatenate %709, %500, %709 in 1 : vector<32x1xf32>, vector<32x4xf32>, vector<32x1xf32> -> vector<32x6xf32>
    %711 = vector.extract_strided_slice %710 {offsets = [0, 2], sizes = [32, 4], strides = [1, 1]} : vector<32x6xf32> to vector<32x4xf32>
    %712 = vector.extract_strided_slice %3 {offsets = [6, 0], sizes = [1, 4], strides = [1, 1]} : vector<9x4xf32> to vector<1x4xf32>
    %713 = vector.broadcast %712 : vector<1x4xf32> to vector<32x4xf32>
    %714 = arith.mulf %711, %713 : vector<32x4xf32>
    %cst_200 = arith.constant 0.000000e+00 : f32
    %715 = vector.broadcast %cst_200 : f32 to vector<32x2xf32>
    %716 = tpu.concatenate %715, %500, %715 in 1 : vector<32x2xf32>, vector<32x4xf32>, vector<32x2xf32> -> vector<32x8xf32>
    %717 = vector.extract_strided_slice %716 {offsets = [0, 4], sizes = [32, 4], strides = [1, 1]} : vector<32x8xf32> to vector<32x4xf32>
    %718 = vector.extract_strided_slice %3 {offsets = [7, 0], sizes = [1, 4], strides = [1, 1]} : vector<9x4xf32> to vector<1x4xf32>
    %719 = vector.broadcast %718 : vector<1x4xf32> to vector<32x4xf32>
    %720 = arith.mulf %717, %719 : vector<32x4xf32>
    %cst_201 = arith.constant 0.000000e+00 : f32
    %721 = vector.broadcast %cst_201 : f32 to vector<32x3xf32>
    %722 = tpu.concatenate %721, %500, %721 in 1 : vector<32x3xf32>, vector<32x4xf32>, vector<32x3xf32> -> vector<32x10xf32>
    %723 = vector.extract_strided_slice %722 {offsets = [0, 6], sizes = [32, 4], strides = [1, 1]} : vector<32x10xf32> to vector<32x4xf32>
    %724 = vector.extract_strided_slice %3 {offsets = [8, 0], sizes = [1, 4], strides = [1, 1]} : vector<9x4xf32> to vector<1x4xf32>
    %725 = vector.broadcast %724 : vector<1x4xf32> to vector<32x4xf32>
    %726 = arith.mulf %723, %725 : vector<32x4xf32>
    %727 = tpu.concatenate %684, %690, %696, %702, %500, %708, %714, %720, %726 in 0 : vector<32x4xf32>, vector<32x4xf32>, vector<32x4xf32>, vector<32x4xf32>, vector<32x4xf32>, vector<32x4xf32>, vector<32x4xf32>, vector<32x4xf32>, vector<32x4xf32> -> vector<288x4xf32>
    %728 = arith.truncf %727 : vector<288x4xf32> to vector<288x4xbf16>
    %c0_202 = arith.constant 0 : index
    %c0_203 = arith.constant 0 : index
    %729 = vector.load %arg22[%c0_202, %c0_203] : memref<32x288xbf16, #tpu.memory_space<vmem>>, vector<32x288xbf16>
    %cst_204 = arith.constant dense<0.000000e+00> : vector<32x4xf32>
    %730 = tpu.matmul %729, %728, %cst_204 {dimension_numbers = #tpu.dot_dimension_numbers<[1], [0], [0], [1], [0, 0, 1, 1], [], []>} : vector<32x288xbf16>, vector<288x4xbf16>, vector<32x4xf32> -> vector<32x4xf32>
    %731 = arith.addf %678, %730 : vector<32x4xf32>
    %cst_205 = arith.constant 0.000000e+00 : f32
    %732 = vector.broadcast %cst_205 : f32 to vector<32x3xf32>
    %733 = tpu.concatenate %732, %557, %732 in 1 : vector<32x3xf32>, vector<32x4xf32>, vector<32x3xf32> -> vector<32x10xf32>
    %734 = vector.extract_strided_slice %733 {offsets = [0, 0], sizes = [32, 4], strides = [1, 1]} : vector<32x10xf32> to vector<32x4xf32>
    %735 = vector.extract_strided_slice %3 {offsets = [0, 0], sizes = [1, 4], strides = [1, 1]} : vector<9x4xf32> to vector<1x4xf32>
    %736 = vector.broadcast %735 : vector<1x4xf32> to vector<32x4xf32>
    %737 = arith.mulf %734, %736 : vector<32x4xf32>
    %cst_206 = arith.constant 0.000000e+00 : f32
    %738 = vector.broadcast %cst_206 : f32 to vector<32x2xf32>
    %739 = tpu.concatenate %738, %557, %738 in 1 : vector<32x2xf32>, vector<32x4xf32>, vector<32x2xf32> -> vector<32x8xf32>
    %740 = vector.extract_strided_slice %739 {offsets = [0, 0], sizes = [32, 4], strides = [1, 1]} : vector<32x8xf32> to vector<32x4xf32>
    %741 = vector.extract_strided_slice %3 {offsets = [1, 0], sizes = [1, 4], strides = [1, 1]} : vector<9x4xf32> to vector<1x4xf32>
    %742 = vector.broadcast %741 : vector<1x4xf32> to vector<32x4xf32>
    %743 = arith.mulf %740, %742 : vector<32x4xf32>
    %cst_207 = arith.constant 0.000000e+00 : f32
    %744 = vector.broadcast %cst_207 : f32 to vector<32x1xf32>
    %745 = tpu.concatenate %744, %557, %744 in 1 : vector<32x1xf32>, vector<32x4xf32>, vector<32x1xf32> -> vector<32x6xf32>
    %746 = vector.extract_strided_slice %745 {offsets = [0, 0], sizes = [32, 4], strides = [1, 1]} : vector<32x6xf32> to vector<32x4xf32>
    %747 = vector.extract_strided_slice %3 {offsets = [2, 0], sizes = [1, 4], strides = [1, 1]} : vector<9x4xf32> to vector<1x4xf32>
    %748 = vector.broadcast %747 : vector<1x4xf32> to vector<32x4xf32>
    %749 = arith.mulf %746, %748 : vector<32x4xf32>
    %cst_208 = arith.constant 0.000000e+00 : f32
    %750 = vector.broadcast %cst_208 : f32 to vector<32x1xf32>
    %751 = tpu.concatenate %750, %557, %750 in 1 : vector<32x1xf32>, vector<32x4xf32>, vector<32x1xf32> -> vector<32x6xf32>
    %752 = vector.extract_strided_slice %751 {offsets = [0, 0], sizes = [32, 4], strides = [1, 1]} : vector<32x6xf32> to vector<32x4xf32>
    %753 = vector.extract_strided_slice %3 {offsets = [3, 0], sizes = [1, 4], strides = [1, 1]} : vector<9x4xf32> to vector<1x4xf32>
    %754 = vector.broadcast %753 : vector<1x4xf32> to vector<32x4xf32>
    %755 = arith.mulf %752, %754 : vector<32x4xf32>
    %cst_209 = arith.constant 0.000000e+00 : f32
    %756 = vector.broadcast %cst_209 : f32 to vector<32x1xf32>
    %757 = tpu.concatenate %756, %557, %756 in 1 : vector<32x1xf32>, vector<32x4xf32>, vector<32x1xf32> -> vector<32x6xf32>
    %758 = vector.extract_strided_slice %757 {offsets = [0, 2], sizes = [32, 4], strides = [1, 1]} : vector<32x6xf32> to vector<32x4xf32>
    %759 = vector.extract_strided_slice %3 {offsets = [5, 0], sizes = [1, 4], strides = [1, 1]} : vector<9x4xf32> to vector<1x4xf32>
    %760 = vector.broadcast %759 : vector<1x4xf32> to vector<32x4xf32>
    %761 = arith.mulf %758, %760 : vector<32x4xf32>
    %cst_210 = arith.constant 0.000000e+00 : f32
    %762 = vector.broadcast %cst_210 : f32 to vector<32x1xf32>
    %763 = tpu.concatenate %762, %557, %762 in 1 : vector<32x1xf32>, vector<32x4xf32>, vector<32x1xf32> -> vector<32x6xf32>
    %764 = vector.extract_strided_slice %763 {offsets = [0, 2], sizes = [32, 4], strides = [1, 1]} : vector<32x6xf32> to vector<32x4xf32>
    %765 = vector.extract_strided_slice %3 {offsets = [6, 0], sizes = [1, 4], strides = [1, 1]} : vector<9x4xf32> to vector<1x4xf32>
    %766 = vector.broadcast %765 : vector<1x4xf32> to vector<32x4xf32>
    %767 = arith.mulf %764, %766 : vector<32x4xf32>
    %cst_211 = arith.constant 0.000000e+00 : f32
    %768 = vector.broadcast %cst_211 : f32 to vector<32x2xf32>
    %769 = tpu.concatenate %768, %557, %768 in 1 : vector<32x2xf32>, vector<32x4xf32>, vector<32x2xf32> -> vector<32x8xf32>
    %770 = vector.extract_strided_slice %769 {offsets = [0, 4], sizes = [32, 4], strides = [1, 1]} : vector<32x8xf32> to vector<32x4xf32>
    %771 = vector.extract_strided_slice %3 {offsets = [7, 0], sizes = [1, 4], strides = [1, 1]} : vector<9x4xf32> to vector<1x4xf32>
    %772 = vector.broadcast %771 : vector<1x4xf32> to vector<32x4xf32>
    %773 = arith.mulf %770, %772 : vector<32x4xf32>
    %cst_212 = arith.constant 0.000000e+00 : f32
    %774 = vector.broadcast %cst_212 : f32 to vector<32x3xf32>
    %775 = tpu.concatenate %774, %557, %774 in 1 : vector<32x3xf32>, vector<32x4xf32>, vector<32x3xf32> -> vector<32x10xf32>
    %776 = vector.extract_strided_slice %775 {offsets = [0, 6], sizes = [32, 4], strides = [1, 1]} : vector<32x10xf32> to vector<32x4xf32>
    %777 = vector.extract_strided_slice %3 {offsets = [8, 0], sizes = [1, 4], strides = [1, 1]} : vector<9x4xf32> to vector<1x4xf32>
    %778 = vector.broadcast %777 : vector<1x4xf32> to vector<32x4xf32>
    %779 = arith.mulf %776, %778 : vector<32x4xf32>
    %780 = tpu.concatenate %737, %743, %749, %755, %557, %761, %767, %773, %779 in 0 : vector<32x4xf32>, vector<32x4xf32>, vector<32x4xf32>, vector<32x4xf32>, vector<32x4xf32>, vector<32x4xf32>, vector<32x4xf32>, vector<32x4xf32>, vector<32x4xf32> -> vector<288x4xf32>
    %781 = arith.truncf %780 : vector<288x4xf32> to vector<288x4xbf16>
    %c0_213 = arith.constant 0 : index
    %c0_214 = arith.constant 0 : index
    %782 = vector.load %arg23[%c0_213, %c0_214] : memref<32x288xbf16, #tpu.memory_space<vmem>>, vector<32x288xbf16>
    %cst_215 = arith.constant dense<0.000000e+00> : vector<32x4xf32>
    %783 = tpu.matmul %782, %781, %cst_215 {dimension_numbers = #tpu.dot_dimension_numbers<[1], [0], [0], [1], [0, 0, 1, 1], [], []>} : vector<32x288xbf16>, vector<288x4xbf16>, vector<32x4xf32> -> vector<32x4xf32>
    %784 = arith.addf %731, %783 : vector<32x4xf32>
    %c0_216 = arith.constant 0 : index
    %c0_217 = arith.constant 0 : index
    %785 = vector.load %arg24[%c0_216, %c0_217] : memref<32x1xf32, #tpu.memory_space<vmem>>, vector<32x1xf32>
    %786 = vector.broadcast %785 : vector<32x1xf32> to vector<32x4xf32>
    %787 = arith.addf %784, %786 : vector<32x4xf32>
    %cst_218 = arith.constant 0.000000e+00 : f32
    %788 = vector.broadcast %cst_218 : f32 to vector<32x4xf32>
    %789 = arith.maximumf %787, %788 : vector<32x4xf32>
    %790 = arith.truncf %789 : vector<32x4xf32> to vector<32x4xbf16>
    %c0_219 = arith.constant 0 : index
    %c0_220 = arith.constant 0 : index
    %791 = vector.load %arg49[%c0_219, %c0_220] : memref<4x16xbf16, #tpu.memory_space<vmem>>, vector<4x16xbf16>
    %cst_221 = arith.constant dense<0.000000e+00> : vector<32x16xf32>
    %792 = tpu.matmul %790, %791, %cst_221 {dimension_numbers = #tpu.dot_dimension_numbers<[1], [0], [0], [1], [0, 0, 1, 1], [], []>} : vector<32x4xbf16>, vector<4x16xbf16>, vector<32x16xf32> -> vector<32x16xf32>
    %cst_222 = arith.constant 0.000000e+00 : f32
    %793 = vector.broadcast %cst_222 : f32 to vector<32x5xf32>
    %794 = tpu.concatenate %793, %792, %793 in 1 : vector<32x5xf32>, vector<32x16xf32>, vector<32x5xf32> -> vector<32x26xf32>
    %795 = vector.extract_strided_slice %794 {offsets = [0, 0], sizes = [32, 16], strides = [1, 1]} : vector<32x26xf32> to vector<32x16xf32>
    %796 = vector.extract_strided_slice %2 {offsets = [0, 0], sizes = [1, 16], strides = [1, 1]} : vector<9x16xf32> to vector<1x16xf32>
    %797 = vector.broadcast %796 : vector<1x16xf32> to vector<32x16xf32>
    %798 = arith.mulf %795, %797 : vector<32x16xf32>
    %cst_223 = arith.constant 0.000000e+00 : f32
    %799 = vector.broadcast %cst_223 : f32 to vector<32x4xf32>
    %800 = tpu.concatenate %799, %792, %799 in 1 : vector<32x4xf32>, vector<32x16xf32>, vector<32x4xf32> -> vector<32x24xf32>
    %801 = vector.extract_strided_slice %800 {offsets = [0, 0], sizes = [32, 16], strides = [1, 1]} : vector<32x24xf32> to vector<32x16xf32>
    %802 = vector.extract_strided_slice %2 {offsets = [1, 0], sizes = [1, 16], strides = [1, 1]} : vector<9x16xf32> to vector<1x16xf32>
    %803 = vector.broadcast %802 : vector<1x16xf32> to vector<32x16xf32>
    %804 = arith.mulf %801, %803 : vector<32x16xf32>
    %cst_224 = arith.constant 0.000000e+00 : f32
    %805 = vector.broadcast %cst_224 : f32 to vector<32x3xf32>
    %806 = tpu.concatenate %805, %792, %805 in 1 : vector<32x3xf32>, vector<32x16xf32>, vector<32x3xf32> -> vector<32x22xf32>
    %807 = vector.extract_strided_slice %806 {offsets = [0, 0], sizes = [32, 16], strides = [1, 1]} : vector<32x22xf32> to vector<32x16xf32>
    %808 = vector.extract_strided_slice %2 {offsets = [2, 0], sizes = [1, 16], strides = [1, 1]} : vector<9x16xf32> to vector<1x16xf32>
    %809 = vector.broadcast %808 : vector<1x16xf32> to vector<32x16xf32>
    %810 = arith.mulf %807, %809 : vector<32x16xf32>
    %cst_225 = arith.constant 0.000000e+00 : f32
    %811 = vector.broadcast %cst_225 : f32 to vector<32x1xf32>
    %812 = tpu.concatenate %811, %792, %811 in 1 : vector<32x1xf32>, vector<32x16xf32>, vector<32x1xf32> -> vector<32x18xf32>
    %813 = vector.extract_strided_slice %812 {offsets = [0, 0], sizes = [32, 16], strides = [1, 1]} : vector<32x18xf32> to vector<32x16xf32>
    %814 = vector.extract_strided_slice %2 {offsets = [3, 0], sizes = [1, 16], strides = [1, 1]} : vector<9x16xf32> to vector<1x16xf32>
    %815 = vector.broadcast %814 : vector<1x16xf32> to vector<32x16xf32>
    %816 = arith.mulf %813, %815 : vector<32x16xf32>
    %cst_226 = arith.constant 0.000000e+00 : f32
    %817 = vector.broadcast %cst_226 : f32 to vector<32x1xf32>
    %818 = tpu.concatenate %817, %792, %817 in 1 : vector<32x1xf32>, vector<32x16xf32>, vector<32x1xf32> -> vector<32x18xf32>
    %819 = vector.extract_strided_slice %818 {offsets = [0, 2], sizes = [32, 16], strides = [1, 1]} : vector<32x18xf32> to vector<32x16xf32>
    %820 = vector.extract_strided_slice %2 {offsets = [5, 0], sizes = [1, 16], strides = [1, 1]} : vector<9x16xf32> to vector<1x16xf32>
    %821 = vector.broadcast %820 : vector<1x16xf32> to vector<32x16xf32>
    %822 = arith.mulf %819, %821 : vector<32x16xf32>
    %cst_227 = arith.constant 0.000000e+00 : f32
    %823 = vector.broadcast %cst_227 : f32 to vector<32x3xf32>
    %824 = tpu.concatenate %823, %792, %823 in 1 : vector<32x3xf32>, vector<32x16xf32>, vector<32x3xf32> -> vector<32x22xf32>
    %825 = vector.extract_strided_slice %824 {offsets = [0, 6], sizes = [32, 16], strides = [1, 1]} : vector<32x22xf32> to vector<32x16xf32>
    %826 = vector.extract_strided_slice %2 {offsets = [6, 0], sizes = [1, 16], strides = [1, 1]} : vector<9x16xf32> to vector<1x16xf32>
    %827 = vector.broadcast %826 : vector<1x16xf32> to vector<32x16xf32>
    %828 = arith.mulf %825, %827 : vector<32x16xf32>
    %cst_228 = arith.constant 0.000000e+00 : f32
    %829 = vector.broadcast %cst_228 : f32 to vector<32x4xf32>
    %830 = tpu.concatenate %829, %792, %829 in 1 : vector<32x4xf32>, vector<32x16xf32>, vector<32x4xf32> -> vector<32x24xf32>
    %831 = vector.extract_strided_slice %830 {offsets = [0, 8], sizes = [32, 16], strides = [1, 1]} : vector<32x24xf32> to vector<32x16xf32>
    %832 = vector.extract_strided_slice %2 {offsets = [7, 0], sizes = [1, 16], strides = [1, 1]} : vector<9x16xf32> to vector<1x16xf32>
    %833 = vector.broadcast %832 : vector<1x16xf32> to vector<32x16xf32>
    %834 = arith.mulf %831, %833 : vector<32x16xf32>
    %cst_229 = arith.constant 0.000000e+00 : f32
    %835 = vector.broadcast %cst_229 : f32 to vector<32x5xf32>
    %836 = tpu.concatenate %835, %792, %835 in 1 : vector<32x5xf32>, vector<32x16xf32>, vector<32x5xf32> -> vector<32x26xf32>
    %837 = vector.extract_strided_slice %836 {offsets = [0, 10], sizes = [32, 16], strides = [1, 1]} : vector<32x26xf32> to vector<32x16xf32>
    %838 = vector.extract_strided_slice %2 {offsets = [8, 0], sizes = [1, 16], strides = [1, 1]} : vector<9x16xf32> to vector<1x16xf32>
    %839 = vector.broadcast %838 : vector<1x16xf32> to vector<32x16xf32>
    %840 = arith.mulf %837, %839 : vector<32x16xf32>
    %841 = tpu.concatenate %798, %804, %810, %816, %792, %822, %828, %834, %840 in 0 : vector<32x16xf32>, vector<32x16xf32>, vector<32x16xf32>, vector<32x16xf32>, vector<32x16xf32>, vector<32x16xf32>, vector<32x16xf32>, vector<32x16xf32>, vector<32x16xf32> -> vector<288x16xf32>
    %842 = arith.truncf %841 : vector<288x16xf32> to vector<288x16xbf16>
    %c0_230 = arith.constant 0 : index
    %c0_231 = arith.constant 0 : index
    %843 = vector.load %arg25[%c0_230, %c0_231] : memref<32x288xbf16, #tpu.memory_space<vmem>>, vector<32x288xbf16>
    %cst_232 = arith.constant dense<0.000000e+00> : vector<32x16xf32>
    %844 = tpu.matmul %843, %842, %cst_232 {dimension_numbers = #tpu.dot_dimension_numbers<[1], [0], [0], [1], [0, 0, 1, 1], [], []>} : vector<32x288xbf16>, vector<288x16xbf16>, vector<32x16xf32> -> vector<32x16xf32>
    %cst_233 = arith.constant 0.000000e+00 : f32
    %845 = vector.broadcast %cst_233 : f32 to vector<32x5xf32>
    %846 = tpu.concatenate %845, %355, %845 in 1 : vector<32x5xf32>, vector<32x16xf32>, vector<32x5xf32> -> vector<32x26xf32>
    %847 = vector.extract_strided_slice %846 {offsets = [0, 0], sizes = [32, 16], strides = [1, 1]} : vector<32x26xf32> to vector<32x16xf32>
    %848 = vector.extract_strided_slice %2 {offsets = [0, 0], sizes = [1, 16], strides = [1, 1]} : vector<9x16xf32> to vector<1x16xf32>
    %849 = vector.broadcast %848 : vector<1x16xf32> to vector<32x16xf32>
    %850 = arith.mulf %847, %849 : vector<32x16xf32>
    %cst_234 = arith.constant 0.000000e+00 : f32
    %851 = vector.broadcast %cst_234 : f32 to vector<32x4xf32>
    %852 = tpu.concatenate %851, %355, %851 in 1 : vector<32x4xf32>, vector<32x16xf32>, vector<32x4xf32> -> vector<32x24xf32>
    %853 = vector.extract_strided_slice %852 {offsets = [0, 0], sizes = [32, 16], strides = [1, 1]} : vector<32x24xf32> to vector<32x16xf32>
    %854 = vector.extract_strided_slice %2 {offsets = [1, 0], sizes = [1, 16], strides = [1, 1]} : vector<9x16xf32> to vector<1x16xf32>
    %855 = vector.broadcast %854 : vector<1x16xf32> to vector<32x16xf32>
    %856 = arith.mulf %853, %855 : vector<32x16xf32>
    %cst_235 = arith.constant 0.000000e+00 : f32
    %857 = vector.broadcast %cst_235 : f32 to vector<32x3xf32>
    %858 = tpu.concatenate %857, %355, %857 in 1 : vector<32x3xf32>, vector<32x16xf32>, vector<32x3xf32> -> vector<32x22xf32>
    %859 = vector.extract_strided_slice %858 {offsets = [0, 0], sizes = [32, 16], strides = [1, 1]} : vector<32x22xf32> to vector<32x16xf32>
    %860 = vector.extract_strided_slice %2 {offsets = [2, 0], sizes = [1, 16], strides = [1, 1]} : vector<9x16xf32> to vector<1x16xf32>
    %861 = vector.broadcast %860 : vector<1x16xf32> to vector<32x16xf32>
    %862 = arith.mulf %859, %861 : vector<32x16xf32>
    %cst_236 = arith.constant 0.000000e+00 : f32
    %863 = vector.broadcast %cst_236 : f32 to vector<32x1xf32>
    %864 = tpu.concatenate %863, %355, %863 in 1 : vector<32x1xf32>, vector<32x16xf32>, vector<32x1xf32> -> vector<32x18xf32>
    %865 = vector.extract_strided_slice %864 {offsets = [0, 0], sizes = [32, 16], strides = [1, 1]} : vector<32x18xf32> to vector<32x16xf32>
    %866 = vector.extract_strided_slice %2 {offsets = [3, 0], sizes = [1, 16], strides = [1, 1]} : vector<9x16xf32> to vector<1x16xf32>
    %867 = vector.broadcast %866 : vector<1x16xf32> to vector<32x16xf32>
    %868 = arith.mulf %865, %867 : vector<32x16xf32>
    %cst_237 = arith.constant 0.000000e+00 : f32
    %869 = vector.broadcast %cst_237 : f32 to vector<32x1xf32>
    %870 = tpu.concatenate %869, %355, %869 in 1 : vector<32x1xf32>, vector<32x16xf32>, vector<32x1xf32> -> vector<32x18xf32>
    %871 = vector.extract_strided_slice %870 {offsets = [0, 2], sizes = [32, 16], strides = [1, 1]} : vector<32x18xf32> to vector<32x16xf32>
    %872 = vector.extract_strided_slice %2 {offsets = [5, 0], sizes = [1, 16], strides = [1, 1]} : vector<9x16xf32> to vector<1x16xf32>
    %873 = vector.broadcast %872 : vector<1x16xf32> to vector<32x16xf32>
    %874 = arith.mulf %871, %873 : vector<32x16xf32>
    %cst_238 = arith.constant 0.000000e+00 : f32
    %875 = vector.broadcast %cst_238 : f32 to vector<32x3xf32>
    %876 = tpu.concatenate %875, %355, %875 in 1 : vector<32x3xf32>, vector<32x16xf32>, vector<32x3xf32> -> vector<32x22xf32>
    %877 = vector.extract_strided_slice %876 {offsets = [0, 6], sizes = [32, 16], strides = [1, 1]} : vector<32x22xf32> to vector<32x16xf32>
    %878 = vector.extract_strided_slice %2 {offsets = [6, 0], sizes = [1, 16], strides = [1, 1]} : vector<9x16xf32> to vector<1x16xf32>
    %879 = vector.broadcast %878 : vector<1x16xf32> to vector<32x16xf32>
    %880 = arith.mulf %877, %879 : vector<32x16xf32>
    %cst_239 = arith.constant 0.000000e+00 : f32
    %881 = vector.broadcast %cst_239 : f32 to vector<32x4xf32>
    %882 = tpu.concatenate %881, %355, %881 in 1 : vector<32x4xf32>, vector<32x16xf32>, vector<32x4xf32> -> vector<32x24xf32>
    %883 = vector.extract_strided_slice %882 {offsets = [0, 8], sizes = [32, 16], strides = [1, 1]} : vector<32x24xf32> to vector<32x16xf32>
    %884 = vector.extract_strided_slice %2 {offsets = [7, 0], sizes = [1, 16], strides = [1, 1]} : vector<9x16xf32> to vector<1x16xf32>
    %885 = vector.broadcast %884 : vector<1x16xf32> to vector<32x16xf32>
    %886 = arith.mulf %883, %885 : vector<32x16xf32>
    %cst_240 = arith.constant 0.000000e+00 : f32
    %887 = vector.broadcast %cst_240 : f32 to vector<32x5xf32>
    %888 = tpu.concatenate %887, %355, %887 in 1 : vector<32x5xf32>, vector<32x16xf32>, vector<32x5xf32> -> vector<32x26xf32>
    %889 = vector.extract_strided_slice %888 {offsets = [0, 10], sizes = [32, 16], strides = [1, 1]} : vector<32x26xf32> to vector<32x16xf32>
    %890 = vector.extract_strided_slice %2 {offsets = [8, 0], sizes = [1, 16], strides = [1, 1]} : vector<9x16xf32> to vector<1x16xf32>
    %891 = vector.broadcast %890 : vector<1x16xf32> to vector<32x16xf32>
    %892 = arith.mulf %889, %891 : vector<32x16xf32>
    %893 = tpu.concatenate %850, %856, %862, %868, %355, %874, %880, %886, %892 in 0 : vector<32x16xf32>, vector<32x16xf32>, vector<32x16xf32>, vector<32x16xf32>, vector<32x16xf32>, vector<32x16xf32>, vector<32x16xf32>, vector<32x16xf32>, vector<32x16xf32> -> vector<288x16xf32>
    %894 = arith.truncf %893 : vector<288x16xf32> to vector<288x16xbf16>
    %c0_241 = arith.constant 0 : index
    %c0_242 = arith.constant 0 : index
    %895 = vector.load %arg26[%c0_241, %c0_242] : memref<32x288xbf16, #tpu.memory_space<vmem>>, vector<32x288xbf16>
    %cst_243 = arith.constant dense<0.000000e+00> : vector<32x16xf32>
    %896 = tpu.matmul %895, %894, %cst_243 {dimension_numbers = #tpu.dot_dimension_numbers<[1], [0], [0], [1], [0, 0, 1, 1], [], []>} : vector<32x288xbf16>, vector<288x16xbf16>, vector<32x16xf32> -> vector<32x16xf32>
    %897 = arith.addf %844, %896 : vector<32x16xf32>
    %cst_244 = arith.constant 0.000000e+00 : f32
    %898 = vector.broadcast %cst_244 : f32 to vector<32x5xf32>
    %899 = tpu.concatenate %898, %412, %898 in 1 : vector<32x5xf32>, vector<32x16xf32>, vector<32x5xf32> -> vector<32x26xf32>
    %900 = vector.extract_strided_slice %899 {offsets = [0, 0], sizes = [32, 16], strides = [1, 1]} : vector<32x26xf32> to vector<32x16xf32>
    %901 = vector.extract_strided_slice %2 {offsets = [0, 0], sizes = [1, 16], strides = [1, 1]} : vector<9x16xf32> to vector<1x16xf32>
    %902 = vector.broadcast %901 : vector<1x16xf32> to vector<32x16xf32>
    %903 = arith.mulf %900, %902 : vector<32x16xf32>
    %cst_245 = arith.constant 0.000000e+00 : f32
    %904 = vector.broadcast %cst_245 : f32 to vector<32x4xf32>
    %905 = tpu.concatenate %904, %412, %904 in 1 : vector<32x4xf32>, vector<32x16xf32>, vector<32x4xf32> -> vector<32x24xf32>
    %906 = vector.extract_strided_slice %905 {offsets = [0, 0], sizes = [32, 16], strides = [1, 1]} : vector<32x24xf32> to vector<32x16xf32>
    %907 = vector.extract_strided_slice %2 {offsets = [1, 0], sizes = [1, 16], strides = [1, 1]} : vector<9x16xf32> to vector<1x16xf32>
    %908 = vector.broadcast %907 : vector<1x16xf32> to vector<32x16xf32>
    %909 = arith.mulf %906, %908 : vector<32x16xf32>
    %cst_246 = arith.constant 0.000000e+00 : f32
    %910 = vector.broadcast %cst_246 : f32 to vector<32x3xf32>
    %911 = tpu.concatenate %910, %412, %910 in 1 : vector<32x3xf32>, vector<32x16xf32>, vector<32x3xf32> -> vector<32x22xf32>
    %912 = vector.extract_strided_slice %911 {offsets = [0, 0], sizes = [32, 16], strides = [1, 1]} : vector<32x22xf32> to vector<32x16xf32>
    %913 = vector.extract_strided_slice %2 {offsets = [2, 0], sizes = [1, 16], strides = [1, 1]} : vector<9x16xf32> to vector<1x16xf32>
    %914 = vector.broadcast %913 : vector<1x16xf32> to vector<32x16xf32>
    %915 = arith.mulf %912, %914 : vector<32x16xf32>
    %cst_247 = arith.constant 0.000000e+00 : f32
    %916 = vector.broadcast %cst_247 : f32 to vector<32x1xf32>
    %917 = tpu.concatenate %916, %412, %916 in 1 : vector<32x1xf32>, vector<32x16xf32>, vector<32x1xf32> -> vector<32x18xf32>
    %918 = vector.extract_strided_slice %917 {offsets = [0, 0], sizes = [32, 16], strides = [1, 1]} : vector<32x18xf32> to vector<32x16xf32>
    %919 = vector.extract_strided_slice %2 {offsets = [3, 0], sizes = [1, 16], strides = [1, 1]} : vector<9x16xf32> to vector<1x16xf32>
    %920 = vector.broadcast %919 : vector<1x16xf32> to vector<32x16xf32>
    %921 = arith.mulf %918, %920 : vector<32x16xf32>
    %cst_248 = arith.constant 0.000000e+00 : f32
    %922 = vector.broadcast %cst_248 : f32 to vector<32x1xf32>
    %923 = tpu.concatenate %922, %412, %922 in 1 : vector<32x1xf32>, vector<32x16xf32>, vector<32x1xf32> -> vector<32x18xf32>
    %924 = vector.extract_strided_slice %923 {offsets = [0, 2], sizes = [32, 16], strides = [1, 1]} : vector<32x18xf32> to vector<32x16xf32>
    %925 = vector.extract_strided_slice %2 {offsets = [5, 0], sizes = [1, 16], strides = [1, 1]} : vector<9x16xf32> to vector<1x16xf32>
    %926 = vector.broadcast %925 : vector<1x16xf32> to vector<32x16xf32>
    %927 = arith.mulf %924, %926 : vector<32x16xf32>
    %cst_249 = arith.constant 0.000000e+00 : f32
    %928 = vector.broadcast %cst_249 : f32 to vector<32x3xf32>
    %929 = tpu.concatenate %928, %412, %928 in 1 : vector<32x3xf32>, vector<32x16xf32>, vector<32x3xf32> -> vector<32x22xf32>
    %930 = vector.extract_strided_slice %929 {offsets = [0, 6], sizes = [32, 16], strides = [1, 1]} : vector<32x22xf32> to vector<32x16xf32>
    %931 = vector.extract_strided_slice %2 {offsets = [6, 0], sizes = [1, 16], strides = [1, 1]} : vector<9x16xf32> to vector<1x16xf32>
    %932 = vector.broadcast %931 : vector<1x16xf32> to vector<32x16xf32>
    %933 = arith.mulf %930, %932 : vector<32x16xf32>
    %cst_250 = arith.constant 0.000000e+00 : f32
    %934 = vector.broadcast %cst_250 : f32 to vector<32x4xf32>
    %935 = tpu.concatenate %934, %412, %934 in 1 : vector<32x4xf32>, vector<32x16xf32>, vector<32x4xf32> -> vector<32x24xf32>
    %936 = vector.extract_strided_slice %935 {offsets = [0, 8], sizes = [32, 16], strides = [1, 1]} : vector<32x24xf32> to vector<32x16xf32>
    %937 = vector.extract_strided_slice %2 {offsets = [7, 0], sizes = [1, 16], strides = [1, 1]} : vector<9x16xf32> to vector<1x16xf32>
    %938 = vector.broadcast %937 : vector<1x16xf32> to vector<32x16xf32>
    %939 = arith.mulf %936, %938 : vector<32x16xf32>
    %cst_251 = arith.constant 0.000000e+00 : f32
    %940 = vector.broadcast %cst_251 : f32 to vector<32x5xf32>
    %941 = tpu.concatenate %940, %412, %940 in 1 : vector<32x5xf32>, vector<32x16xf32>, vector<32x5xf32> -> vector<32x26xf32>
    %942 = vector.extract_strided_slice %941 {offsets = [0, 10], sizes = [32, 16], strides = [1, 1]} : vector<32x26xf32> to vector<32x16xf32>
    %943 = vector.extract_strided_slice %2 {offsets = [8, 0], sizes = [1, 16], strides = [1, 1]} : vector<9x16xf32> to vector<1x16xf32>
    %944 = vector.broadcast %943 : vector<1x16xf32> to vector<32x16xf32>
    %945 = arith.mulf %942, %944 : vector<32x16xf32>
    %946 = tpu.concatenate %903, %909, %915, %921, %412, %927, %933, %939, %945 in 0 : vector<32x16xf32>, vector<32x16xf32>, vector<32x16xf32>, vector<32x16xf32>, vector<32x16xf32>, vector<32x16xf32>, vector<32x16xf32>, vector<32x16xf32>, vector<32x16xf32> -> vector<288x16xf32>
    %947 = arith.truncf %946 : vector<288x16xf32> to vector<288x16xbf16>
    %c0_252 = arith.constant 0 : index
    %c0_253 = arith.constant 0 : index
    %948 = vector.load %arg27[%c0_252, %c0_253] : memref<32x288xbf16, #tpu.memory_space<vmem>>, vector<32x288xbf16>
    %cst_254 = arith.constant dense<0.000000e+00> : vector<32x16xf32>
    %949 = tpu.matmul %948, %947, %cst_254 {dimension_numbers = #tpu.dot_dimension_numbers<[1], [0], [0], [1], [0, 0, 1, 1], [], []>} : vector<32x288xbf16>, vector<288x16xbf16>, vector<32x16xf32> -> vector<32x16xf32>
    %950 = arith.addf %897, %949 : vector<32x16xf32>
    %c0_255 = arith.constant 0 : index
    %c0_256 = arith.constant 0 : index
    %951 = vector.load %arg28[%c0_255, %c0_256] : memref<32x1xf32, #tpu.memory_space<vmem>>, vector<32x1xf32>
    %952 = vector.broadcast %951 : vector<32x1xf32> to vector<32x16xf32>
    %953 = arith.addf %950, %952 : vector<32x16xf32>
    %cst_257 = arith.constant 0.000000e+00 : f32
    %954 = vector.broadcast %cst_257 : f32 to vector<32x16xf32>
    %955 = arith.maximumf %953, %954 : vector<32x16xf32>
    %956 = arith.truncf %955 : vector<32x16xf32> to vector<32x16xbf16>
    %c0_258 = arith.constant 0 : index
    %c0_259 = arith.constant 0 : index
    %957 = vector.load %arg50[%c0_258, %c0_259] : memref<16x64xbf16, #tpu.memory_space<vmem>>, vector<16x64xbf16>
    %cst_260 = arith.constant dense<0.000000e+00> : vector<32x64xf32>
    %958 = tpu.matmul %956, %957, %cst_260 {dimension_numbers = #tpu.dot_dimension_numbers<[1], [0], [0], [1], [0, 0, 1, 1], [], []>} : vector<32x16xbf16>, vector<16x64xbf16>, vector<32x64xf32> -> vector<32x64xf32>
    %cst_261 = arith.constant 0.000000e+00 : f32
    %959 = vector.broadcast %cst_261 : f32 to vector<32x9xf32>
    %960 = tpu.concatenate %959, %958, %959 in 1 : vector<32x9xf32>, vector<32x64xf32>, vector<32x9xf32> -> vector<32x82xf32>
    %961 = vector.extract_strided_slice %960 {offsets = [0, 0], sizes = [32, 64], strides = [1, 1]} : vector<32x82xf32> to vector<32x64xf32>
    %962 = vector.extract_strided_slice %1 {offsets = [0, 0], sizes = [1, 64], strides = [1, 1]} : vector<9x64xf32> to vector<1x64xf32>
    %963 = vector.broadcast %962 : vector<1x64xf32> to vector<32x64xf32>
    %964 = arith.mulf %961, %963 : vector<32x64xf32>
    %cst_262 = arith.constant 0.000000e+00 : f32
    %965 = vector.broadcast %cst_262 : f32 to vector<32x8xf32>
    %966 = tpu.concatenate %965, %958, %965 in 1 : vector<32x8xf32>, vector<32x64xf32>, vector<32x8xf32> -> vector<32x80xf32>
    %967 = vector.extract_strided_slice %966 {offsets = [0, 0], sizes = [32, 64], strides = [1, 1]} : vector<32x80xf32> to vector<32x64xf32>
    %968 = vector.extract_strided_slice %1 {offsets = [1, 0], sizes = [1, 64], strides = [1, 1]} : vector<9x64xf32> to vector<1x64xf32>
    %969 = vector.broadcast %968 : vector<1x64xf32> to vector<32x64xf32>
    %970 = arith.mulf %967, %969 : vector<32x64xf32>
    %cst_263 = arith.constant 0.000000e+00 : f32
    %971 = vector.broadcast %cst_263 : f32 to vector<32x7xf32>
    %972 = tpu.concatenate %971, %958, %971 in 1 : vector<32x7xf32>, vector<32x64xf32>, vector<32x7xf32> -> vector<32x78xf32>
    %973 = vector.extract_strided_slice %972 {offsets = [0, 0], sizes = [32, 64], strides = [1, 1]} : vector<32x78xf32> to vector<32x64xf32>
    %974 = vector.extract_strided_slice %1 {offsets = [2, 0], sizes = [1, 64], strides = [1, 1]} : vector<9x64xf32> to vector<1x64xf32>
    %975 = vector.broadcast %974 : vector<1x64xf32> to vector<32x64xf32>
    %976 = arith.mulf %973, %975 : vector<32x64xf32>
    %cst_264 = arith.constant 0.000000e+00 : f32
    %977 = vector.broadcast %cst_264 : f32 to vector<32x1xf32>
    %978 = tpu.concatenate %977, %958, %977 in 1 : vector<32x1xf32>, vector<32x64xf32>, vector<32x1xf32> -> vector<32x66xf32>
    %979 = vector.extract_strided_slice %978 {offsets = [0, 0], sizes = [32, 64], strides = [1, 1]} : vector<32x66xf32> to vector<32x64xf32>
    %980 = vector.extract_strided_slice %1 {offsets = [3, 0], sizes = [1, 64], strides = [1, 1]} : vector<9x64xf32> to vector<1x64xf32>
    %981 = vector.broadcast %980 : vector<1x64xf32> to vector<32x64xf32>
    %982 = arith.mulf %979, %981 : vector<32x64xf32>
    %cst_265 = arith.constant 0.000000e+00 : f32
    %983 = vector.broadcast %cst_265 : f32 to vector<32x1xf32>
    %984 = tpu.concatenate %983, %958, %983 in 1 : vector<32x1xf32>, vector<32x64xf32>, vector<32x1xf32> -> vector<32x66xf32>
    %985 = vector.extract_strided_slice %984 {offsets = [0, 2], sizes = [32, 64], strides = [1, 1]} : vector<32x66xf32> to vector<32x64xf32>
    %986 = vector.extract_strided_slice %1 {offsets = [5, 0], sizes = [1, 64], strides = [1, 1]} : vector<9x64xf32> to vector<1x64xf32>
    %987 = vector.broadcast %986 : vector<1x64xf32> to vector<32x64xf32>
    %988 = arith.mulf %985, %987 : vector<32x64xf32>
    %cst_266 = arith.constant 0.000000e+00 : f32
    %989 = vector.broadcast %cst_266 : f32 to vector<32x7xf32>
    %990 = tpu.concatenate %989, %958, %989 in 1 : vector<32x7xf32>, vector<32x64xf32>, vector<32x7xf32> -> vector<32x78xf32>
    %991 = vector.extract_strided_slice %990 {offsets = [0, 14], sizes = [32, 64], strides = [1, 1]} : vector<32x78xf32> to vector<32x64xf32>
    %992 = vector.extract_strided_slice %1 {offsets = [6, 0], sizes = [1, 64], strides = [1, 1]} : vector<9x64xf32> to vector<1x64xf32>
    %993 = vector.broadcast %992 : vector<1x64xf32> to vector<32x64xf32>
    %994 = arith.mulf %991, %993 : vector<32x64xf32>
    %cst_267 = arith.constant 0.000000e+00 : f32
    %995 = vector.broadcast %cst_267 : f32 to vector<32x8xf32>
    %996 = tpu.concatenate %995, %958, %995 in 1 : vector<32x8xf32>, vector<32x64xf32>, vector<32x8xf32> -> vector<32x80xf32>
    %997 = vector.extract_strided_slice %996 {offsets = [0, 16], sizes = [32, 64], strides = [1, 1]} : vector<32x80xf32> to vector<32x64xf32>
    %998 = vector.extract_strided_slice %1 {offsets = [7, 0], sizes = [1, 64], strides = [1, 1]} : vector<9x64xf32> to vector<1x64xf32>
    %999 = vector.broadcast %998 : vector<1x64xf32> to vector<32x64xf32>
    %1000 = arith.mulf %997, %999 : vector<32x64xf32>
    %cst_268 = arith.constant 0.000000e+00 : f32
    %1001 = vector.broadcast %cst_268 : f32 to vector<32x9xf32>
    %1002 = tpu.concatenate %1001, %958, %1001 in 1 : vector<32x9xf32>, vector<32x64xf32>, vector<32x9xf32> -> vector<32x82xf32>
    %1003 = vector.extract_strided_slice %1002 {offsets = [0, 18], sizes = [32, 64], strides = [1, 1]} : vector<32x82xf32> to vector<32x64xf32>
    %1004 = vector.extract_strided_slice %1 {offsets = [8, 0], sizes = [1, 64], strides = [1, 1]} : vector<9x64xf32> to vector<1x64xf32>
    %1005 = vector.broadcast %1004 : vector<1x64xf32> to vector<32x64xf32>
    %1006 = arith.mulf %1003, %1005 : vector<32x64xf32>
    %1007 = tpu.concatenate %964, %970, %976, %982, %958, %988, %994, %1000, %1006 in 0 : vector<32x64xf32>, vector<32x64xf32>, vector<32x64xf32>, vector<32x64xf32>, vector<32x64xf32>, vector<32x64xf32>, vector<32x64xf32>, vector<32x64xf32>, vector<32x64xf32> -> vector<288x64xf32>
    %1008 = arith.truncf %1007 : vector<288x64xf32> to vector<288x64xbf16>
    %c0_269 = arith.constant 0 : index
    %c0_270 = arith.constant 0 : index
    %1009 = vector.load %arg29[%c0_269, %c0_270] : memref<16x288xbf16, #tpu.memory_space<vmem>>, vector<16x288xbf16>
    %cst_271 = arith.constant dense<0.000000e+00> : vector<16x64xf32>
    %1010 = tpu.matmul %1009, %1008, %cst_271 {dimension_numbers = #tpu.dot_dimension_numbers<[1], [0], [0], [1], [0, 0, 1, 1], [], []>} : vector<16x288xbf16>, vector<288x64xbf16>, vector<16x64xf32> -> vector<16x64xf32>
    %cst_272 = arith.constant 0.000000e+00 : f32
    %1011 = vector.broadcast %cst_272 : f32 to vector<16x9xf32>
    %1012 = tpu.concatenate %1011, %210, %1011 in 1 : vector<16x9xf32>, vector<16x64xf32>, vector<16x9xf32> -> vector<16x82xf32>
    %1013 = vector.extract_strided_slice %1012 {offsets = [0, 0], sizes = [16, 64], strides = [1, 1]} : vector<16x82xf32> to vector<16x64xf32>
    %1014 = vector.extract_strided_slice %1 {offsets = [0, 0], sizes = [1, 64], strides = [1, 1]} : vector<9x64xf32> to vector<1x64xf32>
    %1015 = vector.broadcast %1014 : vector<1x64xf32> to vector<16x64xf32>
    %1016 = arith.mulf %1013, %1015 : vector<16x64xf32>
    %cst_273 = arith.constant 0.000000e+00 : f32
    %1017 = vector.broadcast %cst_273 : f32 to vector<16x8xf32>
    %1018 = tpu.concatenate %1017, %210, %1017 in 1 : vector<16x8xf32>, vector<16x64xf32>, vector<16x8xf32> -> vector<16x80xf32>
    %1019 = vector.extract_strided_slice %1018 {offsets = [0, 0], sizes = [16, 64], strides = [1, 1]} : vector<16x80xf32> to vector<16x64xf32>
    %1020 = vector.extract_strided_slice %1 {offsets = [1, 0], sizes = [1, 64], strides = [1, 1]} : vector<9x64xf32> to vector<1x64xf32>
    %1021 = vector.broadcast %1020 : vector<1x64xf32> to vector<16x64xf32>
    %1022 = arith.mulf %1019, %1021 : vector<16x64xf32>
    %cst_274 = arith.constant 0.000000e+00 : f32
    %1023 = vector.broadcast %cst_274 : f32 to vector<16x7xf32>
    %1024 = tpu.concatenate %1023, %210, %1023 in 1 : vector<16x7xf32>, vector<16x64xf32>, vector<16x7xf32> -> vector<16x78xf32>
    %1025 = vector.extract_strided_slice %1024 {offsets = [0, 0], sizes = [16, 64], strides = [1, 1]} : vector<16x78xf32> to vector<16x64xf32>
    %1026 = vector.extract_strided_slice %1 {offsets = [2, 0], sizes = [1, 64], strides = [1, 1]} : vector<9x64xf32> to vector<1x64xf32>
    %1027 = vector.broadcast %1026 : vector<1x64xf32> to vector<16x64xf32>
    %1028 = arith.mulf %1025, %1027 : vector<16x64xf32>
    %cst_275 = arith.constant 0.000000e+00 : f32
    %1029 = vector.broadcast %cst_275 : f32 to vector<16x1xf32>
    %1030 = tpu.concatenate %1029, %210, %1029 in 1 : vector<16x1xf32>, vector<16x64xf32>, vector<16x1xf32> -> vector<16x66xf32>
    %1031 = vector.extract_strided_slice %1030 {offsets = [0, 0], sizes = [16, 64], strides = [1, 1]} : vector<16x66xf32> to vector<16x64xf32>
    %1032 = vector.extract_strided_slice %1 {offsets = [3, 0], sizes = [1, 64], strides = [1, 1]} : vector<9x64xf32> to vector<1x64xf32>
    %1033 = vector.broadcast %1032 : vector<1x64xf32> to vector<16x64xf32>
    %1034 = arith.mulf %1031, %1033 : vector<16x64xf32>
    %cst_276 = arith.constant 0.000000e+00 : f32
    %1035 = vector.broadcast %cst_276 : f32 to vector<16x1xf32>
    %1036 = tpu.concatenate %1035, %210, %1035 in 1 : vector<16x1xf32>, vector<16x64xf32>, vector<16x1xf32> -> vector<16x66xf32>
    %1037 = vector.extract_strided_slice %1036 {offsets = [0, 2], sizes = [16, 64], strides = [1, 1]} : vector<16x66xf32> to vector<16x64xf32>
    %1038 = vector.extract_strided_slice %1 {offsets = [5, 0], sizes = [1, 64], strides = [1, 1]} : vector<9x64xf32> to vector<1x64xf32>
    %1039 = vector.broadcast %1038 : vector<1x64xf32> to vector<16x64xf32>
    %1040 = arith.mulf %1037, %1039 : vector<16x64xf32>
    %cst_277 = arith.constant 0.000000e+00 : f32
    %1041 = vector.broadcast %cst_277 : f32 to vector<16x7xf32>
    %1042 = tpu.concatenate %1041, %210, %1041 in 1 : vector<16x7xf32>, vector<16x64xf32>, vector<16x7xf32> -> vector<16x78xf32>
    %1043 = vector.extract_strided_slice %1042 {offsets = [0, 14], sizes = [16, 64], strides = [1, 1]} : vector<16x78xf32> to vector<16x64xf32>
    %1044 = vector.extract_strided_slice %1 {offsets = [6, 0], sizes = [1, 64], strides = [1, 1]} : vector<9x64xf32> to vector<1x64xf32>
    %1045 = vector.broadcast %1044 : vector<1x64xf32> to vector<16x64xf32>
    %1046 = arith.mulf %1043, %1045 : vector<16x64xf32>
    %cst_278 = arith.constant 0.000000e+00 : f32
    %1047 = vector.broadcast %cst_278 : f32 to vector<16x8xf32>
    %1048 = tpu.concatenate %1047, %210, %1047 in 1 : vector<16x8xf32>, vector<16x64xf32>, vector<16x8xf32> -> vector<16x80xf32>
    %1049 = vector.extract_strided_slice %1048 {offsets = [0, 16], sizes = [16, 64], strides = [1, 1]} : vector<16x80xf32> to vector<16x64xf32>
    %1050 = vector.extract_strided_slice %1 {offsets = [7, 0], sizes = [1, 64], strides = [1, 1]} : vector<9x64xf32> to vector<1x64xf32>
    %1051 = vector.broadcast %1050 : vector<1x64xf32> to vector<16x64xf32>
    %1052 = arith.mulf %1049, %1051 : vector<16x64xf32>
    %cst_279 = arith.constant 0.000000e+00 : f32
    %1053 = vector.broadcast %cst_279 : f32 to vector<16x9xf32>
    %1054 = tpu.concatenate %1053, %210, %1053 in 1 : vector<16x9xf32>, vector<16x64xf32>, vector<16x9xf32> -> vector<16x82xf32>
    %1055 = vector.extract_strided_slice %1054 {offsets = [0, 18], sizes = [16, 64], strides = [1, 1]} : vector<16x82xf32> to vector<16x64xf32>
    %1056 = vector.extract_strided_slice %1 {offsets = [8, 0], sizes = [1, 64], strides = [1, 1]} : vector<9x64xf32> to vector<1x64xf32>
    %1057 = vector.broadcast %1056 : vector<1x64xf32> to vector<16x64xf32>
    %1058 = arith.mulf %1055, %1057 : vector<16x64xf32>
    %1059 = tpu.concatenate %1016, %1022, %1028, %1034, %210, %1040, %1046, %1052, %1058 in 0 : vector<16x64xf32>, vector<16x64xf32>, vector<16x64xf32>, vector<16x64xf32>, vector<16x64xf32>, vector<16x64xf32>, vector<16x64xf32>, vector<16x64xf32>, vector<16x64xf32> -> vector<144x64xf32>
    %1060 = arith.truncf %1059 : vector<144x64xf32> to vector<144x64xbf16>
    %c0_280 = arith.constant 0 : index
    %c0_281 = arith.constant 0 : index
    %1061 = vector.load %arg30[%c0_280, %c0_281] : memref<16x144xbf16, #tpu.memory_space<vmem>>, vector<16x144xbf16>
    %cst_282 = arith.constant dense<0.000000e+00> : vector<16x64xf32>
    %1062 = tpu.matmul %1061, %1060, %cst_282 {dimension_numbers = #tpu.dot_dimension_numbers<[1], [0], [0], [1], [0, 0, 1, 1], [], []>} : vector<16x144xbf16>, vector<144x64xbf16>, vector<16x64xf32> -> vector<16x64xf32>
    %1063 = arith.addf %1010, %1062 : vector<16x64xf32>
    %cst_283 = arith.constant 0.000000e+00 : f32
    %1064 = vector.broadcast %cst_283 : f32 to vector<16x9xf32>
    %1065 = tpu.concatenate %1064, %267, %1064 in 1 : vector<16x9xf32>, vector<16x64xf32>, vector<16x9xf32> -> vector<16x82xf32>
    %1066 = vector.extract_strided_slice %1065 {offsets = [0, 0], sizes = [16, 64], strides = [1, 1]} : vector<16x82xf32> to vector<16x64xf32>
    %1067 = vector.extract_strided_slice %1 {offsets = [0, 0], sizes = [1, 64], strides = [1, 1]} : vector<9x64xf32> to vector<1x64xf32>
    %1068 = vector.broadcast %1067 : vector<1x64xf32> to vector<16x64xf32>
    %1069 = arith.mulf %1066, %1068 : vector<16x64xf32>
    %cst_284 = arith.constant 0.000000e+00 : f32
    %1070 = vector.broadcast %cst_284 : f32 to vector<16x8xf32>
    %1071 = tpu.concatenate %1070, %267, %1070 in 1 : vector<16x8xf32>, vector<16x64xf32>, vector<16x8xf32> -> vector<16x80xf32>
    %1072 = vector.extract_strided_slice %1071 {offsets = [0, 0], sizes = [16, 64], strides = [1, 1]} : vector<16x80xf32> to vector<16x64xf32>
    %1073 = vector.extract_strided_slice %1 {offsets = [1, 0], sizes = [1, 64], strides = [1, 1]} : vector<9x64xf32> to vector<1x64xf32>
    %1074 = vector.broadcast %1073 : vector<1x64xf32> to vector<16x64xf32>
    %1075 = arith.mulf %1072, %1074 : vector<16x64xf32>
    %cst_285 = arith.constant 0.000000e+00 : f32
    %1076 = vector.broadcast %cst_285 : f32 to vector<16x7xf32>
    %1077 = tpu.concatenate %1076, %267, %1076 in 1 : vector<16x7xf32>, vector<16x64xf32>, vector<16x7xf32> -> vector<16x78xf32>
    %1078 = vector.extract_strided_slice %1077 {offsets = [0, 0], sizes = [16, 64], strides = [1, 1]} : vector<16x78xf32> to vector<16x64xf32>
    %1079 = vector.extract_strided_slice %1 {offsets = [2, 0], sizes = [1, 64], strides = [1, 1]} : vector<9x64xf32> to vector<1x64xf32>
    %1080 = vector.broadcast %1079 : vector<1x64xf32> to vector<16x64xf32>
    %1081 = arith.mulf %1078, %1080 : vector<16x64xf32>
    %cst_286 = arith.constant 0.000000e+00 : f32
    %1082 = vector.broadcast %cst_286 : f32 to vector<16x1xf32>
    %1083 = tpu.concatenate %1082, %267, %1082 in 1 : vector<16x1xf32>, vector<16x64xf32>, vector<16x1xf32> -> vector<16x66xf32>
    %1084 = vector.extract_strided_slice %1083 {offsets = [0, 0], sizes = [16, 64], strides = [1, 1]} : vector<16x66xf32> to vector<16x64xf32>
    %1085 = vector.extract_strided_slice %1 {offsets = [3, 0], sizes = [1, 64], strides = [1, 1]} : vector<9x64xf32> to vector<1x64xf32>
    %1086 = vector.broadcast %1085 : vector<1x64xf32> to vector<16x64xf32>
    %1087 = arith.mulf %1084, %1086 : vector<16x64xf32>
    %cst_287 = arith.constant 0.000000e+00 : f32
    %1088 = vector.broadcast %cst_287 : f32 to vector<16x1xf32>
    %1089 = tpu.concatenate %1088, %267, %1088 in 1 : vector<16x1xf32>, vector<16x64xf32>, vector<16x1xf32> -> vector<16x66xf32>
    %1090 = vector.extract_strided_slice %1089 {offsets = [0, 2], sizes = [16, 64], strides = [1, 1]} : vector<16x66xf32> to vector<16x64xf32>
    %1091 = vector.extract_strided_slice %1 {offsets = [5, 0], sizes = [1, 64], strides = [1, 1]} : vector<9x64xf32> to vector<1x64xf32>
    %1092 = vector.broadcast %1091 : vector<1x64xf32> to vector<16x64xf32>
    %1093 = arith.mulf %1090, %1092 : vector<16x64xf32>
    %cst_288 = arith.constant 0.000000e+00 : f32
    %1094 = vector.broadcast %cst_288 : f32 to vector<16x7xf32>
    %1095 = tpu.concatenate %1094, %267, %1094 in 1 : vector<16x7xf32>, vector<16x64xf32>, vector<16x7xf32> -> vector<16x78xf32>
    %1096 = vector.extract_strided_slice %1095 {offsets = [0, 14], sizes = [16, 64], strides = [1, 1]} : vector<16x78xf32> to vector<16x64xf32>
    %1097 = vector.extract_strided_slice %1 {offsets = [6, 0], sizes = [1, 64], strides = [1, 1]} : vector<9x64xf32> to vector<1x64xf32>
    %1098 = vector.broadcast %1097 : vector<1x64xf32> to vector<16x64xf32>
    %1099 = arith.mulf %1096, %1098 : vector<16x64xf32>
    %cst_289 = arith.constant 0.000000e+00 : f32
    %1100 = vector.broadcast %cst_289 : f32 to vector<16x8xf32>
    %1101 = tpu.concatenate %1100, %267, %1100 in 1 : vector<16x8xf32>, vector<16x64xf32>, vector<16x8xf32> -> vector<16x80xf32>
    %1102 = vector.extract_strided_slice %1101 {offsets = [0, 16], sizes = [16, 64], strides = [1, 1]} : vector<16x80xf32> to vector<16x64xf32>
    %1103 = vector.extract_strided_slice %1 {offsets = [7, 0], sizes = [1, 64], strides = [1, 1]} : vector<9x64xf32> to vector<1x64xf32>
    %1104 = vector.broadcast %1103 : vector<1x64xf32> to vector<16x64xf32>
    %1105 = arith.mulf %1102, %1104 : vector<16x64xf32>
    %cst_290 = arith.constant 0.000000e+00 : f32
    %1106 = vector.broadcast %cst_290 : f32 to vector<16x9xf32>
    %1107 = tpu.concatenate %1106, %267, %1106 in 1 : vector<16x9xf32>, vector<16x64xf32>, vector<16x9xf32> -> vector<16x82xf32>
    %1108 = vector.extract_strided_slice %1107 {offsets = [0, 18], sizes = [16, 64], strides = [1, 1]} : vector<16x82xf32> to vector<16x64xf32>
    %1109 = vector.extract_strided_slice %1 {offsets = [8, 0], sizes = [1, 64], strides = [1, 1]} : vector<9x64xf32> to vector<1x64xf32>
    %1110 = vector.broadcast %1109 : vector<1x64xf32> to vector<16x64xf32>
    %1111 = arith.mulf %1108, %1110 : vector<16x64xf32>
    %1112 = tpu.concatenate %1069, %1075, %1081, %1087, %267, %1093, %1099, %1105, %1111 in 0 : vector<16x64xf32>, vector<16x64xf32>, vector<16x64xf32>, vector<16x64xf32>, vector<16x64xf32>, vector<16x64xf32>, vector<16x64xf32>, vector<16x64xf32>, vector<16x64xf32> -> vector<144x64xf32>
    %1113 = arith.truncf %1112 : vector<144x64xf32> to vector<144x64xbf16>
    %c0_291 = arith.constant 0 : index
    %c0_292 = arith.constant 0 : index
    %1114 = vector.load %arg31[%c0_291, %c0_292] : memref<16x144xbf16, #tpu.memory_space<vmem>>, vector<16x144xbf16>
    %cst_293 = arith.constant dense<0.000000e+00> : vector<16x64xf32>
    %1115 = tpu.matmul %1114, %1113, %cst_293 {dimension_numbers = #tpu.dot_dimension_numbers<[1], [0], [0], [1], [0, 0, 1, 1], [], []>} : vector<16x144xbf16>, vector<144x64xbf16>, vector<16x64xf32> -> vector<16x64xf32>
    %1116 = arith.addf %1063, %1115 : vector<16x64xf32>
    %c0_294 = arith.constant 0 : index
    %c0_295 = arith.constant 0 : index
    %1117 = vector.load %arg32[%c0_294, %c0_295] : memref<16x1xf32, #tpu.memory_space<vmem>>, vector<16x1xf32>
    %1118 = vector.broadcast %1117 : vector<16x1xf32> to vector<16x64xf32>
    %1119 = arith.addf %1116, %1118 : vector<16x64xf32>
    %cst_296 = arith.constant 0.000000e+00 : f32
    %1120 = vector.broadcast %cst_296 : f32 to vector<16x64xf32>
    %1121 = arith.maximumf %1119, %1120 : vector<16x64xf32>
    %1122 = arith.truncf %1121 : vector<16x64xf32> to vector<16x64xbf16>
    %c0_297 = arith.constant 0 : index
    %c0_298 = arith.constant 0 : index
    %1123 = vector.load %arg51[%c0_297, %c0_298] : memref<64x256xbf16, #tpu.memory_space<vmem>>, vector<64x256xbf16>
    %cst_299 = arith.constant dense<0.000000e+00> : vector<16x256xf32>
    %1124 = tpu.matmul %1122, %1123, %cst_299 {dimension_numbers = #tpu.dot_dimension_numbers<[1], [0], [0], [1], [0, 0, 1, 1], [], []>} : vector<16x64xbf16>, vector<64x256xbf16>, vector<16x256xf32> -> vector<16x256xf32>
    %cst_300 = arith.constant 0.000000e+00 : f32
    %1125 = vector.broadcast %cst_300 : f32 to vector<16x17xf32>
    %1126 = tpu.concatenate %1125, %1124, %1125 in 1 : vector<16x17xf32>, vector<16x256xf32>, vector<16x17xf32> -> vector<16x290xf32>
    %1127 = vector.extract_strided_slice %1126 {offsets = [0, 0], sizes = [16, 256], strides = [1, 1]} : vector<16x290xf32> to vector<16x256xf32>
    %1128 = vector.extract_strided_slice %0 {offsets = [0, 0], sizes = [1, 256], strides = [1, 1]} : vector<9x256xf32> to vector<1x256xf32>
    %1129 = vector.broadcast %1128 : vector<1x256xf32> to vector<16x256xf32>
    %1130 = arith.mulf %1127, %1129 : vector<16x256xf32>
    %cst_301 = arith.constant 0.000000e+00 : f32
    %1131 = vector.broadcast %cst_301 : f32 to vector<16x16xf32>
    %1132 = tpu.concatenate %1131, %1124, %1131 in 1 : vector<16x16xf32>, vector<16x256xf32>, vector<16x16xf32> -> vector<16x288xf32>
    %1133 = vector.extract_strided_slice %1132 {offsets = [0, 0], sizes = [16, 256], strides = [1, 1]} : vector<16x288xf32> to vector<16x256xf32>
    %1134 = vector.extract_strided_slice %0 {offsets = [1, 0], sizes = [1, 256], strides = [1, 1]} : vector<9x256xf32> to vector<1x256xf32>
    %1135 = vector.broadcast %1134 : vector<1x256xf32> to vector<16x256xf32>
    %1136 = arith.mulf %1133, %1135 : vector<16x256xf32>
    %cst_302 = arith.constant 0.000000e+00 : f32
    %1137 = vector.broadcast %cst_302 : f32 to vector<16x15xf32>
    %1138 = tpu.concatenate %1137, %1124, %1137 in 1 : vector<16x15xf32>, vector<16x256xf32>, vector<16x15xf32> -> vector<16x286xf32>
    %1139 = vector.extract_strided_slice %1138 {offsets = [0, 0], sizes = [16, 256], strides = [1, 1]} : vector<16x286xf32> to vector<16x256xf32>
    %1140 = vector.extract_strided_slice %0 {offsets = [2, 0], sizes = [1, 256], strides = [1, 1]} : vector<9x256xf32> to vector<1x256xf32>
    %1141 = vector.broadcast %1140 : vector<1x256xf32> to vector<16x256xf32>
    %1142 = arith.mulf %1139, %1141 : vector<16x256xf32>
    %cst_303 = arith.constant 0.000000e+00 : f32
    %1143 = vector.broadcast %cst_303 : f32 to vector<16x1xf32>
    %1144 = tpu.concatenate %1143, %1124, %1143 in 1 : vector<16x1xf32>, vector<16x256xf32>, vector<16x1xf32> -> vector<16x258xf32>
    %1145 = vector.extract_strided_slice %1144 {offsets = [0, 0], sizes = [16, 256], strides = [1, 1]} : vector<16x258xf32> to vector<16x256xf32>
    %1146 = vector.extract_strided_slice %0 {offsets = [3, 0], sizes = [1, 256], strides = [1, 1]} : vector<9x256xf32> to vector<1x256xf32>
    %1147 = vector.broadcast %1146 : vector<1x256xf32> to vector<16x256xf32>
    %1148 = arith.mulf %1145, %1147 : vector<16x256xf32>
    %cst_304 = arith.constant 0.000000e+00 : f32
    %1149 = vector.broadcast %cst_304 : f32 to vector<16x1xf32>
    %1150 = tpu.concatenate %1149, %1124, %1149 in 1 : vector<16x1xf32>, vector<16x256xf32>, vector<16x1xf32> -> vector<16x258xf32>
    %1151 = vector.extract_strided_slice %1150 {offsets = [0, 2], sizes = [16, 256], strides = [1, 1]} : vector<16x258xf32> to vector<16x256xf32>
    %1152 = vector.extract_strided_slice %0 {offsets = [5, 0], sizes = [1, 256], strides = [1, 1]} : vector<9x256xf32> to vector<1x256xf32>
    %1153 = vector.broadcast %1152 : vector<1x256xf32> to vector<16x256xf32>
    %1154 = arith.mulf %1151, %1153 : vector<16x256xf32>
    %cst_305 = arith.constant 0.000000e+00 : f32
    %1155 = vector.broadcast %cst_305 : f32 to vector<16x15xf32>
    %1156 = tpu.concatenate %1155, %1124, %1155 in 1 : vector<16x15xf32>, vector<16x256xf32>, vector<16x15xf32> -> vector<16x286xf32>
    %1157 = vector.extract_strided_slice %1156 {offsets = [0, 30], sizes = [16, 256], strides = [1, 1]} : vector<16x286xf32> to vector<16x256xf32>
    %1158 = vector.extract_strided_slice %0 {offsets = [6, 0], sizes = [1, 256], strides = [1, 1]} : vector<9x256xf32> to vector<1x256xf32>
    %1159 = vector.broadcast %1158 : vector<1x256xf32> to vector<16x256xf32>
    %1160 = arith.mulf %1157, %1159 : vector<16x256xf32>
    %cst_306 = arith.constant 0.000000e+00 : f32
    %1161 = vector.broadcast %cst_306 : f32 to vector<16x16xf32>
    %1162 = tpu.concatenate %1161, %1124, %1161 in 1 : vector<16x16xf32>, vector<16x256xf32>, vector<16x16xf32> -> vector<16x288xf32>
    %1163 = vector.extract_strided_slice %1162 {offsets = [0, 32], sizes = [16, 256], strides = [1, 1]} : vector<16x288xf32> to vector<16x256xf32>
    %1164 = vector.extract_strided_slice %0 {offsets = [7, 0], sizes = [1, 256], strides = [1, 1]} : vector<9x256xf32> to vector<1x256xf32>
    %1165 = vector.broadcast %1164 : vector<1x256xf32> to vector<16x256xf32>
    %1166 = arith.mulf %1163, %1165 : vector<16x256xf32>
    %cst_307 = arith.constant 0.000000e+00 : f32
    %1167 = vector.broadcast %cst_307 : f32 to vector<16x17xf32>
    %1168 = tpu.concatenate %1167, %1124, %1167 in 1 : vector<16x17xf32>, vector<16x256xf32>, vector<16x17xf32> -> vector<16x290xf32>
    %1169 = vector.extract_strided_slice %1168 {offsets = [0, 34], sizes = [16, 256], strides = [1, 1]} : vector<16x290xf32> to vector<16x256xf32>
    %1170 = vector.extract_strided_slice %0 {offsets = [8, 0], sizes = [1, 256], strides = [1, 1]} : vector<9x256xf32> to vector<1x256xf32>
    %1171 = vector.broadcast %1170 : vector<1x256xf32> to vector<16x256xf32>
    %1172 = arith.mulf %1169, %1171 : vector<16x256xf32>
    %1173 = tpu.concatenate %1130, %1136, %1142, %1148, %1124, %1154, %1160, %1166, %1172 in 0 : vector<16x256xf32>, vector<16x256xf32>, vector<16x256xf32>, vector<16x256xf32>, vector<16x256xf32>, vector<16x256xf32>, vector<16x256xf32>, vector<16x256xf32>, vector<16x256xf32> -> vector<144x256xf32>
    %1174 = arith.truncf %1173 : vector<144x256xf32> to vector<144x256xbf16>
    %c0_308 = arith.constant 0 : index
    %c0_309 = arith.constant 0 : index
    %1175 = vector.load %arg33[%c0_308, %c0_309] : memref<8x144xbf16, #tpu.memory_space<vmem>>, vector<8x144xbf16>
    %cst_310 = arith.constant dense<0.000000e+00> : vector<8x256xf32>
    %1176 = tpu.matmul %1175, %1174, %cst_310 {dimension_numbers = #tpu.dot_dimension_numbers<[1], [0], [0], [1], [0, 0, 1, 1], [], []>} : vector<8x144xbf16>, vector<144x256xbf16>, vector<8x256xf32> -> vector<8x256xf32>
    %cst_311 = arith.constant 0.000000e+00 : f32
    %1177 = vector.broadcast %cst_311 : f32 to vector<8x17xf32>
    %1178 = tpu.concatenate %1177, %65, %1177 in 1 : vector<8x17xf32>, vector<8x256xf32>, vector<8x17xf32> -> vector<8x290xf32>
    %1179 = vector.extract_strided_slice %1178 {offsets = [0, 0], sizes = [8, 256], strides = [1, 1]} : vector<8x290xf32> to vector<8x256xf32>
    %1180 = vector.extract_strided_slice %0 {offsets = [0, 0], sizes = [1, 256], strides = [1, 1]} : vector<9x256xf32> to vector<1x256xf32>
    %1181 = vector.broadcast %1180 : vector<1x256xf32> to vector<8x256xf32>
    %1182 = arith.mulf %1179, %1181 : vector<8x256xf32>
    %cst_312 = arith.constant 0.000000e+00 : f32
    %1183 = vector.broadcast %cst_312 : f32 to vector<8x16xf32>
    %1184 = tpu.concatenate %1183, %65, %1183 in 1 : vector<8x16xf32>, vector<8x256xf32>, vector<8x16xf32> -> vector<8x288xf32>
    %1185 = vector.extract_strided_slice %1184 {offsets = [0, 0], sizes = [8, 256], strides = [1, 1]} : vector<8x288xf32> to vector<8x256xf32>
    %1186 = vector.extract_strided_slice %0 {offsets = [1, 0], sizes = [1, 256], strides = [1, 1]} : vector<9x256xf32> to vector<1x256xf32>
    %1187 = vector.broadcast %1186 : vector<1x256xf32> to vector<8x256xf32>
    %1188 = arith.mulf %1185, %1187 : vector<8x256xf32>
    %cst_313 = arith.constant 0.000000e+00 : f32
    %1189 = vector.broadcast %cst_313 : f32 to vector<8x15xf32>
    %1190 = tpu.concatenate %1189, %65, %1189 in 1 : vector<8x15xf32>, vector<8x256xf32>, vector<8x15xf32> -> vector<8x286xf32>
    %1191 = vector.extract_strided_slice %1190 {offsets = [0, 0], sizes = [8, 256], strides = [1, 1]} : vector<8x286xf32> to vector<8x256xf32>
    %1192 = vector.extract_strided_slice %0 {offsets = [2, 0], sizes = [1, 256], strides = [1, 1]} : vector<9x256xf32> to vector<1x256xf32>
    %1193 = vector.broadcast %1192 : vector<1x256xf32> to vector<8x256xf32>
    %1194 = arith.mulf %1191, %1193 : vector<8x256xf32>
    %cst_314 = arith.constant 0.000000e+00 : f32
    %1195 = vector.broadcast %cst_314 : f32 to vector<8x1xf32>
    %1196 = tpu.concatenate %1195, %65, %1195 in 1 : vector<8x1xf32>, vector<8x256xf32>, vector<8x1xf32> -> vector<8x258xf32>
    %1197 = vector.extract_strided_slice %1196 {offsets = [0, 0], sizes = [8, 256], strides = [1, 1]} : vector<8x258xf32> to vector<8x256xf32>
    %1198 = vector.extract_strided_slice %0 {offsets = [3, 0], sizes = [1, 256], strides = [1, 1]} : vector<9x256xf32> to vector<1x256xf32>
    %1199 = vector.broadcast %1198 : vector<1x256xf32> to vector<8x256xf32>
    %1200 = arith.mulf %1197, %1199 : vector<8x256xf32>
    %cst_315 = arith.constant 0.000000e+00 : f32
    %1201 = vector.broadcast %cst_315 : f32 to vector<8x1xf32>
    %1202 = tpu.concatenate %1201, %65, %1201 in 1 : vector<8x1xf32>, vector<8x256xf32>, vector<8x1xf32> -> vector<8x258xf32>
    %1203 = vector.extract_strided_slice %1202 {offsets = [0, 2], sizes = [8, 256], strides = [1, 1]} : vector<8x258xf32> to vector<8x256xf32>
    %1204 = vector.extract_strided_slice %0 {offsets = [5, 0], sizes = [1, 256], strides = [1, 1]} : vector<9x256xf32> to vector<1x256xf32>
    %1205 = vector.broadcast %1204 : vector<1x256xf32> to vector<8x256xf32>
    %1206 = arith.mulf %1203, %1205 : vector<8x256xf32>
    %cst_316 = arith.constant 0.000000e+00 : f32
    %1207 = vector.broadcast %cst_316 : f32 to vector<8x15xf32>
    %1208 = tpu.concatenate %1207, %65, %1207 in 1 : vector<8x15xf32>, vector<8x256xf32>, vector<8x15xf32> -> vector<8x286xf32>
    %1209 = vector.extract_strided_slice %1208 {offsets = [0, 30], sizes = [8, 256], strides = [1, 1]} : vector<8x286xf32> to vector<8x256xf32>
    %1210 = vector.extract_strided_slice %0 {offsets = [6, 0], sizes = [1, 256], strides = [1, 1]} : vector<9x256xf32> to vector<1x256xf32>
    %1211 = vector.broadcast %1210 : vector<1x256xf32> to vector<8x256xf32>
    %1212 = arith.mulf %1209, %1211 : vector<8x256xf32>
    %cst_317 = arith.constant 0.000000e+00 : f32
    %1213 = vector.broadcast %cst_317 : f32 to vector<8x16xf32>
    %1214 = tpu.concatenate %1213, %65, %1213 in 1 : vector<8x16xf32>, vector<8x256xf32>, vector<8x16xf32> -> vector<8x288xf32>
    %1215 = vector.extract_strided_slice %1214 {offsets = [0, 32], sizes = [8, 256], strides = [1, 1]} : vector<8x288xf32> to vector<8x256xf32>
    %1216 = vector.extract_strided_slice %0 {offsets = [7, 0], sizes = [1, 256], strides = [1, 1]} : vector<9x256xf32> to vector<1x256xf32>
    %1217 = vector.broadcast %1216 : vector<1x256xf32> to vector<8x256xf32>
    %1218 = arith.mulf %1215, %1217 : vector<8x256xf32>
    %cst_318 = arith.constant 0.000000e+00 : f32
    %1219 = vector.broadcast %cst_318 : f32 to vector<8x17xf32>
    %1220 = tpu.concatenate %1219, %65, %1219 in 1 : vector<8x17xf32>, vector<8x256xf32>, vector<8x17xf32> -> vector<8x290xf32>
    %1221 = vector.extract_strided_slice %1220 {offsets = [0, 34], sizes = [8, 256], strides = [1, 1]} : vector<8x290xf32> to vector<8x256xf32>
    %1222 = vector.extract_strided_slice %0 {offsets = [8, 0], sizes = [1, 256], strides = [1, 1]} : vector<9x256xf32> to vector<1x256xf32>
    %1223 = vector.broadcast %1222 : vector<1x256xf32> to vector<8x256xf32>
    %1224 = arith.mulf %1221, %1223 : vector<8x256xf32>
    %1225 = tpu.concatenate %1182, %1188, %1194, %1200, %65, %1206, %1212, %1218, %1224 in 0 : vector<8x256xf32>, vector<8x256xf32>, vector<8x256xf32>, vector<8x256xf32>, vector<8x256xf32>, vector<8x256xf32>, vector<8x256xf32>, vector<8x256xf32>, vector<8x256xf32> -> vector<72x256xf32>
    %1226 = arith.truncf %1225 : vector<72x256xf32> to vector<72x256xbf16>
    %c0_319 = arith.constant 0 : index
    %c0_320 = arith.constant 0 : index
    %1227 = vector.load %arg34[%c0_319, %c0_320] : memref<8x72xbf16, #tpu.memory_space<vmem>>, vector<8x72xbf16>
    %cst_321 = arith.constant dense<0.000000e+00> : vector<8x256xf32>
    %1228 = tpu.matmul %1227, %1226, %cst_321 {dimension_numbers = #tpu.dot_dimension_numbers<[1], [0], [0], [1], [0, 0, 1, 1], [], []>} : vector<8x72xbf16>, vector<72x256xbf16>, vector<8x256xf32> -> vector<8x256xf32>
    %1229 = arith.addf %1176, %1228 : vector<8x256xf32>
    %cst_322 = arith.constant 0.000000e+00 : f32
    %1230 = vector.broadcast %cst_322 : f32 to vector<8x17xf32>
    %1231 = tpu.concatenate %1230, %122, %1230 in 1 : vector<8x17xf32>, vector<8x256xf32>, vector<8x17xf32> -> vector<8x290xf32>
    %1232 = vector.extract_strided_slice %1231 {offsets = [0, 0], sizes = [8, 256], strides = [1, 1]} : vector<8x290xf32> to vector<8x256xf32>
    %1233 = vector.extract_strided_slice %0 {offsets = [0, 0], sizes = [1, 256], strides = [1, 1]} : vector<9x256xf32> to vector<1x256xf32>
    %1234 = vector.broadcast %1233 : vector<1x256xf32> to vector<8x256xf32>
    %1235 = arith.mulf %1232, %1234 : vector<8x256xf32>
    %cst_323 = arith.constant 0.000000e+00 : f32
    %1236 = vector.broadcast %cst_323 : f32 to vector<8x16xf32>
    %1237 = tpu.concatenate %1236, %122, %1236 in 1 : vector<8x16xf32>, vector<8x256xf32>, vector<8x16xf32> -> vector<8x288xf32>
    %1238 = vector.extract_strided_slice %1237 {offsets = [0, 0], sizes = [8, 256], strides = [1, 1]} : vector<8x288xf32> to vector<8x256xf32>
    %1239 = vector.extract_strided_slice %0 {offsets = [1, 0], sizes = [1, 256], strides = [1, 1]} : vector<9x256xf32> to vector<1x256xf32>
    %1240 = vector.broadcast %1239 : vector<1x256xf32> to vector<8x256xf32>
    %1241 = arith.mulf %1238, %1240 : vector<8x256xf32>
    %cst_324 = arith.constant 0.000000e+00 : f32
    %1242 = vector.broadcast %cst_324 : f32 to vector<8x15xf32>
    %1243 = tpu.concatenate %1242, %122, %1242 in 1 : vector<8x15xf32>, vector<8x256xf32>, vector<8x15xf32> -> vector<8x286xf32>
    %1244 = vector.extract_strided_slice %1243 {offsets = [0, 0], sizes = [8, 256], strides = [1, 1]} : vector<8x286xf32> to vector<8x256xf32>
    %1245 = vector.extract_strided_slice %0 {offsets = [2, 0], sizes = [1, 256], strides = [1, 1]} : vector<9x256xf32> to vector<1x256xf32>
    %1246 = vector.broadcast %1245 : vector<1x256xf32> to vector<8x256xf32>
    %1247 = arith.mulf %1244, %1246 : vector<8x256xf32>
    %cst_325 = arith.constant 0.000000e+00 : f32
    %1248 = vector.broadcast %cst_325 : f32 to vector<8x1xf32>
    %1249 = tpu.concatenate %1248, %122, %1248 in 1 : vector<8x1xf32>, vector<8x256xf32>, vector<8x1xf32> -> vector<8x258xf32>
    %1250 = vector.extract_strided_slice %1249 {offsets = [0, 0], sizes = [8, 256], strides = [1, 1]} : vector<8x258xf32> to vector<8x256xf32>
    %1251 = vector.extract_strided_slice %0 {offsets = [3, 0], sizes = [1, 256], strides = [1, 1]} : vector<9x256xf32> to vector<1x256xf32>
    %1252 = vector.broadcast %1251 : vector<1x256xf32> to vector<8x256xf32>
    %1253 = arith.mulf %1250, %1252 : vector<8x256xf32>
    %cst_326 = arith.constant 0.000000e+00 : f32
    %1254 = vector.broadcast %cst_326 : f32 to vector<8x1xf32>
    %1255 = tpu.concatenate %1254, %122, %1254 in 1 : vector<8x1xf32>, vector<8x256xf32>, vector<8x1xf32> -> vector<8x258xf32>
    %1256 = vector.extract_strided_slice %1255 {offsets = [0, 2], sizes = [8, 256], strides = [1, 1]} : vector<8x258xf32> to vector<8x256xf32>
    %1257 = vector.extract_strided_slice %0 {offsets = [5, 0], sizes = [1, 256], strides = [1, 1]} : vector<9x256xf32> to vector<1x256xf32>
    %1258 = vector.broadcast %1257 : vector<1x256xf32> to vector<8x256xf32>
    %1259 = arith.mulf %1256, %1258 : vector<8x256xf32>
    %cst_327 = arith.constant 0.000000e+00 : f32
    %1260 = vector.broadcast %cst_327 : f32 to vector<8x15xf32>
    %1261 = tpu.concatenate %1260, %122, %1260 in 1 : vector<8x15xf32>, vector<8x256xf32>, vector<8x15xf32> -> vector<8x286xf32>
    %1262 = vector.extract_strided_slice %1261 {offsets = [0, 30], sizes = [8, 256], strides = [1, 1]} : vector<8x286xf32> to vector<8x256xf32>
    %1263 = vector.extract_strided_slice %0 {offsets = [6, 0], sizes = [1, 256], strides = [1, 1]} : vector<9x256xf32> to vector<1x256xf32>
    %1264 = vector.broadcast %1263 : vector<1x256xf32> to vector<8x256xf32>
    %1265 = arith.mulf %1262, %1264 : vector<8x256xf32>
    %cst_328 = arith.constant 0.000000e+00 : f32
    %1266 = vector.broadcast %cst_328 : f32 to vector<8x16xf32>
    %1267 = tpu.concatenate %1266, %122, %1266 in 1 : vector<8x16xf32>, vector<8x256xf32>, vector<8x16xf32> -> vector<8x288xf32>
    %1268 = vector.extract_strided_slice %1267 {offsets = [0, 32], sizes = [8, 256], strides = [1, 1]} : vector<8x288xf32> to vector<8x256xf32>
    %1269 = vector.extract_strided_slice %0 {offsets = [7, 0], sizes = [1, 256], strides = [1, 1]} : vector<9x256xf32> to vector<1x256xf32>
    %1270 = vector.broadcast %1269 : vector<1x256xf32> to vector<8x256xf32>
    %1271 = arith.mulf %1268, %1270 : vector<8x256xf32>
    %cst_329 = arith.constant 0.000000e+00 : f32
    %1272 = vector.broadcast %cst_329 : f32 to vector<8x17xf32>
    %1273 = tpu.concatenate %1272, %122, %1272 in 1 : vector<8x17xf32>, vector<8x256xf32>, vector<8x17xf32> -> vector<8x290xf32>
    %1274 = vector.extract_strided_slice %1273 {offsets = [0, 34], sizes = [8, 256], strides = [1, 1]} : vector<8x290xf32> to vector<8x256xf32>
    %1275 = vector.extract_strided_slice %0 {offsets = [8, 0], sizes = [1, 256], strides = [1, 1]} : vector<9x256xf32> to vector<1x256xf32>
    %1276 = vector.broadcast %1275 : vector<1x256xf32> to vector<8x256xf32>
    %1277 = arith.mulf %1274, %1276 : vector<8x256xf32>
    %1278 = tpu.concatenate %1235, %1241, %1247, %1253, %122, %1259, %1265, %1271, %1277 in 0 : vector<8x256xf32>, vector<8x256xf32>, vector<8x256xf32>, vector<8x256xf32>, vector<8x256xf32>, vector<8x256xf32>, vector<8x256xf32>, vector<8x256xf32>, vector<8x256xf32> -> vector<72x256xf32>
    %1279 = arith.truncf %1278 : vector<72x256xf32> to vector<72x256xbf16>
    %c0_330 = arith.constant 0 : index
    %c0_331 = arith.constant 0 : index
    %1280 = vector.load %arg35[%c0_330, %c0_331] : memref<8x72xbf16, #tpu.memory_space<vmem>>, vector<8x72xbf16>
    %cst_332 = arith.constant dense<0.000000e+00> : vector<8x256xf32>
    %1281 = tpu.matmul %1280, %1279, %cst_332 {dimension_numbers = #tpu.dot_dimension_numbers<[1], [0], [0], [1], [0, 0, 1, 1], [], []>} : vector<8x72xbf16>, vector<72x256xbf16>, vector<8x256xf32> -> vector<8x256xf32>
    %1282 = arith.addf %1229, %1281 : vector<8x256xf32>
    %c0_333 = arith.constant 0 : index
    %c0_334 = arith.constant 0 : index
    %1283 = vector.load %arg36[%c0_333, %c0_334] : memref<8x1xf32, #tpu.memory_space<vmem>>, vector<8x1xf32>
    %1284 = vector.broadcast %1283 : vector<8x1xf32> to vector<8x256xf32>
    %1285 = arith.addf %1282, %1284 : vector<8x256xf32>
    %cst_335 = arith.constant 0.000000e+00 : f32
    %1286 = vector.broadcast %cst_335 : f32 to vector<8x256xf32>
    %1287 = arith.maximumf %1285, %1286 : vector<8x256xf32>
    %c0_336 = arith.constant 0 : index
    %c0_337 = arith.constant 0 : index
    %1288 = vector.load %arg37[%c0_336, %c0_337] : memref<5x8xbf16, #tpu.memory_space<vmem>>, vector<5x8xbf16>
    %1289 = arith.truncf %1287 : vector<8x256xf32> to vector<8x256xbf16>
    %cst_338 = arith.constant dense<0.000000e+00> : vector<5x256xf32>
    %1290 = tpu.matmul %1288, %1289, %cst_338 {dimension_numbers = #tpu.dot_dimension_numbers<[1], [0], [0], [1], [0, 0, 1, 1], [], []>} : vector<5x8xbf16>, vector<8x256xbf16>, vector<5x256xf32> -> vector<5x256xf32>
    %c0_339 = arith.constant 0 : index
    %c0_340 = arith.constant 0 : index
    %1291 = vector.load %arg38[%c0_339, %c0_340] : memref<5x1xf32, #tpu.memory_space<vmem>>, vector<5x1xf32>
    %1292 = vector.broadcast %1291 : vector<5x1xf32> to vector<5x256xf32>
    %1293 = arith.addf %1290, %1292 : vector<5x256xf32>
    %c0_341 = arith.constant 0 : index
    %c0_342 = arith.constant 0 : index
    %c0_343 = arith.constant 0 : index
    %1294 = vector.load %arg52[%c0_341, %c0_342, %c0_343] : memref<1x5x256xf32, #tpu.memory_space<vmem>>, vector<1x5x256xf32>
    %1295 = vector.shape_cast %1294 : vector<1x5x256xf32> to vector<5x256xf32>
    %1296 = vector.shape_cast %1293 : vector<5x256xf32> to vector<1x5x256xf32>
    tpu.vector_store %arg52[%c0_341, %c0_342, %c0_343], %1296 {strides = array<i32>} : memref<1x5x256xf32, #tpu.memory_space<vmem>>, vector<1x5x256xf32>,
    return
  }
  func.func @transform_0(%arg0: i32) -> (i32, i32, i32) {
    %c0_i32 = arith.constant 0 : i32
    %c0_i32_0 = arith.constant 0 : i32
    %c0_i32_1 = arith.constant 0 : i32
    return %arg0, %c0_i32, %c0_i32_0 : i32, i32, i32
  }
  func.func @transform_1(%arg0: i32) -> (i32, i32, i32) {
    %c0_i32 = arith.constant 0 : i32
    %c0_i32_0 = arith.constant 0 : i32
    %c0_i32_1 = arith.constant 0 : i32
    return %arg0, %c0_i32, %c0_i32_0 : i32, i32, i32
  }
  func.func @transform_2(%arg0: i32) -> (i32, i32) {
    %c0_i32 = arith.constant 0 : i32
    %c0_i32_0 = arith.constant 0 : i32
    %c0_i32_1 = arith.constant 0 : i32
    return %c0_i32, %c0_i32_0 : i32, i32
  }
  func.func @transform_3(%arg0: i32) -> (i32, i32) {
    %c0_i32 = arith.constant 0 : i32
    %c0_i32_0 = arith.constant 0 : i32
    %c0_i32_1 = arith.constant 0 : i32
    return %c0_i32, %c0_i32_0 : i32, i32
  }
  func.func @transform_4(%arg0: i32) -> (i32, i32) {
    %c0_i32 = arith.constant 0 : i32
    %c0_i32_0 = arith.constant 0 : i32
    %c0_i32_1 = arith.constant 0 : i32
    return %c0_i32, %c0_i32_0 : i32, i32
  }
  func.func @transform_5(%arg0: i32) -> (i32, i32) {
    %c0_i32 = arith.constant 0 : i32
    %c0_i32_0 = arith.constant 0 : i32
    %c0_i32_1 = arith.constant 0 : i32
    return %c0_i32, %c0_i32_0 : i32, i32
  }
  func.func @transform_6(%arg0: i32) -> (i32, i32) {
    %c0_i32 = arith.constant 0 : i32
    %c0_i32_0 = arith.constant 0 : i32
    %c0_i32_1 = arith.constant 0 : i32
    return %c0_i32, %c0_i32_0 : i32, i32
  }
  func.func @transform_7(%arg0: i32) -> (i32, i32) {
    %c0_i32 = arith.constant 0 : i32
    %c0_i32_0 = arith.constant 0 : i32
    %c0_i32_1 = arith.constant 0 : i32
    return %c0_i32, %c0_i32_0 : i32, i32
  }
  func.func @transform_8(%arg0: i32) -> (i32, i32) {
    %c0_i32 = arith.constant 0 : i32
    %c0_i32_0 = arith.constant 0 : i32
    %c0_i32_1 = arith.constant 0 : i32
    return %c0_i32, %c0_i32_0 : i32, i32
  }
  func.func @transform_9(%arg0: i32) -> (i32, i32) {
    %c0_i32 = arith.constant 0 : i32
    %c0_i32_0 = arith.constant 0 : i32
    %c0_i32_1 = arith.constant 0 : i32
    return %c0_i32, %c0_i32_0 : i32, i32
  }
  func.func @transform_10(%arg0: i32) -> (i32, i32) {
    %c0_i32 = arith.constant 0 : i32
    %c0_i32_0 = arith.constant 0 : i32
    %c0_i32_1 = arith.constant 0 : i32
    return %c0_i32, %c0_i32_0 : i32, i32
  }
  func.func @transform_11(%arg0: i32) -> (i32, i32) {
    %c0_i32 = arith.constant 0 : i32
    %c0_i32_0 = arith.constant 0 : i32
    %c0_i32_1 = arith.constant 0 : i32
    return %c0_i32, %c0_i32_0 : i32, i32
  }
  func.func @transform_12(%arg0: i32) -> (i32, i32) {
    %c0_i32 = arith.constant 0 : i32
    %c0_i32_0 = arith.constant 0 : i32
    %c0_i32_1 = arith.constant 0 : i32
    return %c0_i32, %c0_i32_0 : i32, i32
  }
  func.func @transform_13(%arg0: i32) -> (i32, i32) {
    %c0_i32 = arith.constant 0 : i32
    %c0_i32_0 = arith.constant 0 : i32
    %c0_i32_1 = arith.constant 0 : i32
    return %c0_i32, %c0_i32_0 : i32, i32
  }
  func.func @transform_14(%arg0: i32) -> (i32, i32) {
    %c0_i32 = arith.constant 0 : i32
    %c0_i32_0 = arith.constant 0 : i32
    %c0_i32_1 = arith.constant 0 : i32
    return %c0_i32, %c0_i32_0 : i32, i32
  }
  func.func @transform_15(%arg0: i32) -> (i32, i32) {
    %c0_i32 = arith.constant 0 : i32
    %c0_i32_0 = arith.constant 0 : i32
    %c0_i32_1 = arith.constant 0 : i32
    return %c0_i32, %c0_i32_0 : i32, i32
  }
  func.func @transform_16(%arg0: i32) -> (i32, i32) {
    %c0_i32 = arith.constant 0 : i32
    %c0_i32_0 = arith.constant 0 : i32
    %c0_i32_1 = arith.constant 0 : i32
    return %c0_i32, %c0_i32_0 : i32, i32
  }
  func.func @transform_17(%arg0: i32) -> (i32, i32) {
    %c0_i32 = arith.constant 0 : i32
    %c0_i32_0 = arith.constant 0 : i32
    %c0_i32_1 = arith.constant 0 : i32
    return %c0_i32, %c0_i32_0 : i32, i32
  }
  func.func @transform_18(%arg0: i32) -> (i32, i32) {
    %c0_i32 = arith.constant 0 : i32
    %c0_i32_0 = arith.constant 0 : i32
    %c0_i32_1 = arith.constant 0 : i32
    return %c0_i32, %c0_i32_0 : i32, i32
  }
  func.func @transform_19(%arg0: i32) -> (i32, i32) {
    %c0_i32 = arith.constant 0 : i32
    %c0_i32_0 = arith.constant 0 : i32
    %c0_i32_1 = arith.constant 0 : i32
    return %c0_i32, %c0_i32_0 : i32, i32
  }
  func.func @transform_20(%arg0: i32) -> (i32, i32) {
    %c0_i32 = arith.constant 0 : i32
    %c0_i32_0 = arith.constant 0 : i32
    %c0_i32_1 = arith.constant 0 : i32
    return %c0_i32, %c0_i32_0 : i32, i32
  }
  func.func @transform_21(%arg0: i32) -> (i32, i32) {
    %c0_i32 = arith.constant 0 : i32
    %c0_i32_0 = arith.constant 0 : i32
    %c0_i32_1 = arith.constant 0 : i32
    return %c0_i32, %c0_i32_0 : i32, i32
  }
  func.func @transform_22(%arg0: i32) -> (i32, i32) {
    %c0_i32 = arith.constant 0 : i32
    %c0_i32_0 = arith.constant 0 : i32
    %c0_i32_1 = arith.constant 0 : i32
    return %c0_i32, %c0_i32_0 : i32, i32
  }
  func.func @transform_23(%arg0: i32) -> (i32, i32) {
    %c0_i32 = arith.constant 0 : i32
    %c0_i32_0 = arith.constant 0 : i32
    %c0_i32_1 = arith.constant 0 : i32
    return %c0_i32, %c0_i32_0 : i32, i32
  }
  func.func @transform_24(%arg0: i32) -> (i32, i32) {
    %c0_i32 = arith.constant 0 : i32
    %c0_i32_0 = arith.constant 0 : i32
    %c0_i32_1 = arith.constant 0 : i32
    return %c0_i32, %c0_i32_0 : i32, i32
  }
  func.func @transform_25(%arg0: i32) -> (i32, i32) {
    %c0_i32 = arith.constant 0 : i32
    %c0_i32_0 = arith.constant 0 : i32
    %c0_i32_1 = arith.constant 0 : i32
    return %c0_i32, %c0_i32_0 : i32, i32
  }
  func.func @transform_26(%arg0: i32) -> (i32, i32) {
    %c0_i32 = arith.constant 0 : i32
    %c0_i32_0 = arith.constant 0 : i32
    %c0_i32_1 = arith.constant 0 : i32
    return %c0_i32, %c0_i32_0 : i32, i32
  }
  func.func @transform_27(%arg0: i32) -> (i32, i32) {
    %c0_i32 = arith.constant 0 : i32
    %c0_i32_0 = arith.constant 0 : i32
    %c0_i32_1 = arith.constant 0 : i32
    return %c0_i32, %c0_i32_0 : i32, i32
  }
  func.func @transform_28(%arg0: i32) -> (i32, i32) {
    %c0_i32 = arith.constant 0 : i32
    %c0_i32_0 = arith.constant 0 : i32
    %c0_i32_1 = arith.constant 0 : i32
    return %c0_i32, %c0_i32_0 : i32, i32
  }
  func.func @transform_29(%arg0: i32) -> (i32, i32) {
    %c0_i32 = arith.constant 0 : i32
    %c0_i32_0 = arith.constant 0 : i32
    %c0_i32_1 = arith.constant 0 : i32
    return %c0_i32, %c0_i32_0 : i32, i32
  }
  func.func @transform_30(%arg0: i32) -> (i32, i32) {
    %c0_i32 = arith.constant 0 : i32
    %c0_i32_0 = arith.constant 0 : i32
    %c0_i32_1 = arith.constant 0 : i32
    return %c0_i32, %c0_i32_0 : i32, i32
  }
  func.func @transform_31(%arg0: i32) -> (i32, i32) {
    %c0_i32 = arith.constant 0 : i32
    %c0_i32_0 = arith.constant 0 : i32
    %c0_i32_1 = arith.constant 0 : i32
    return %c0_i32, %c0_i32_0 : i32, i32
  }
  func.func @transform_32(%arg0: i32) -> (i32, i32) {
    %c0_i32 = arith.constant 0 : i32
    %c0_i32_0 = arith.constant 0 : i32
    %c0_i32_1 = arith.constant 0 : i32
    return %c0_i32, %c0_i32_0 : i32, i32
  }
  func.func @transform_33(%arg0: i32) -> (i32, i32) {
    %c0_i32 = arith.constant 0 : i32
    %c0_i32_0 = arith.constant 0 : i32
    %c0_i32_1 = arith.constant 0 : i32
    return %c0_i32, %c0_i32_0 : i32, i32
  }
  func.func @transform_34(%arg0: i32) -> (i32, i32) {
    %c0_i32 = arith.constant 0 : i32
    %c0_i32_0 = arith.constant 0 : i32
    %c0_i32_1 = arith.constant 0 : i32
    return %c0_i32, %c0_i32_0 : i32, i32
  }
  func.func @transform_35(%arg0: i32) -> (i32, i32) {
    %c0_i32 = arith.constant 0 : i32
    %c0_i32_0 = arith.constant 0 : i32
    %c0_i32_1 = arith.constant 0 : i32
    return %c0_i32, %c0_i32_0 : i32, i32
  }
  func.func @transform_36(%arg0: i32) -> (i32, i32) {
    %c0_i32 = arith.constant 0 : i32
    %c0_i32_0 = arith.constant 0 : i32
    %c0_i32_1 = arith.constant 0 : i32
    return %c0_i32, %c0_i32_0 : i32, i32
  }
  func.func @transform_37(%arg0: i32) -> (i32, i32) {
    %c0_i32 = arith.constant 0 : i32
    %c0_i32_0 = arith.constant 0 : i32
    %c0_i32_1 = arith.constant 0 : i32
    return %c0_i32, %c0_i32_0 : i32, i32
  }
  func.func @transform_38(%arg0: i32) -> (i32, i32) {
    %c0_i32 = arith.constant 0 : i32
    %c0_i32_0 = arith.constant 0 : i32
    %c0_i32_1 = arith.constant 0 : i32
    return %c0_i32, %c0_i32_0 : i32, i32
  }
  func.func @transform_39(%arg0: i32) -> (i32, i32) {
    %c0_i32 = arith.constant 0 : i32
    %c0_i32_0 = arith.constant 0 : i32
    %c0_i32_1 = arith.constant 0 : i32
    return %c0_i32, %c0_i32_0 : i32, i32
  }
  func.func @transform_40(%arg0: i32) -> (i32, i32) {
    %c0_i32 = arith.constant 0 : i32
    %c0_i32_0 = arith.constant 0 : i32
    %c0_i32_1 = arith.constant 0 : i32
    return %c0_i32, %c0_i32_0 : i32, i32
  }
  func.func @transform_41(%arg0: i32) -> (i32, i32) {
    %c0_i32 = arith.constant 0 : i32
    %c0_i32_0 = arith.constant 0 : i32
    %c0_i32_1 = arith.constant 0 : i32
    return %c0_i32, %c0_i32_0 : i32, i32
  }
  func.func @transform_42(%arg0: i32) -> (i32, i32) {
    %c0_i32 = arith.constant 0 : i32
    %c0_i32_0 = arith.constant 0 : i32
    %c0_i32_1 = arith.constant 0 : i32
    return %c0_i32, %c0_i32_0 : i32, i32
  }
  func.func @transform_43(%arg0: i32) -> (i32, i32) {
    %c0_i32 = arith.constant 0 : i32
    %c0_i32_0 = arith.constant 0 : i32
    %c0_i32_1 = arith.constant 0 : i32
    return %c0_i32, %c0_i32_0 : i32, i32
  }
  func.func @transform_44(%arg0: i32) -> (i32, i32) {
    %c0_i32 = arith.constant 0 : i32
    %c0_i32_0 = arith.constant 0 : i32
    %c0_i32_1 = arith.constant 0 : i32
    return %c0_i32, %c0_i32_0 : i32, i32
  }
  func.func @transform_45(%arg0: i32) -> (i32, i32) {
    %c0_i32 = arith.constant 0 : i32
    %c0_i32_0 = arith.constant 0 : i32
    %c0_i32_1 = arith.constant 0 : i32
    return %c0_i32, %c0_i32_0 : i32, i32
  }
  func.func @transform_46(%arg0: i32) -> (i32, i32) {
    %c0_i32 = arith.constant 0 : i32
    %c0_i32_0 = arith.constant 0 : i32
    %c0_i32_1 = arith.constant 0 : i32
    return %c0_i32, %c0_i32_0 : i32, i32
  }
  func.func @transform_47(%arg0: i32) -> (i32, i32) {
    %c0_i32 = arith.constant 0 : i32
    %c0_i32_0 = arith.constant 0 : i32
    %c0_i32_1 = arith.constant 0 : i32
    return %c0_i32, %c0_i32_0 : i32, i32
  }
  func.func @transform_48(%arg0: i32) -> (i32, i32) {
    %c0_i32 = arith.constant 0 : i32
    %c0_i32_0 = arith.constant 0 : i32
    %c0_i32_1 = arith.constant 0 : i32
    return %c0_i32, %c0_i32_0 : i32, i32
  }
  func.func @transform_49(%arg0: i32) -> (i32, i32) {
    %c0_i32 = arith.constant 0 : i32
    %c0_i32_0 = arith.constant 0 : i32
    %c0_i32_1 = arith.constant 0 : i32
    return %c0_i32, %c0_i32_0 : i32, i32
  }
  func.func @transform_50(%arg0: i32) -> (i32, i32) {
    %c0_i32 = arith.constant 0 : i32
    %c0_i32_0 = arith.constant 0 : i32
    %c0_i32_1 = arith.constant 0 : i32
    return %c0_i32, %c0_i32_0 : i32, i32
  }
  func.func @transform_51(%arg0: i32) -> (i32, i32, i32) {
    %c0_i32 = arith.constant 0 : i32
    %c0_i32_0 = arith.constant 0 : i32
    %c0_i32_1 = arith.constant 0 : i32
    return %arg0, %c0_i32, %c0_i32_0 : i32, i32, i32
  }
}

</mosaic_0001>

<llo_original>
// kernel: tpu_custom_call.1
$region0: #{tpu_custom_call.1}
  #allocation0 [shape = 'u32[]', space=smem, size = 0x4, offset = 0x4, fixed_abs, tag = 'smem constant byte address 0x4 - core index']
  #allocation1 [shape = 'u32[144,128]{1,0:T(1,128)}', space=vmem, size = 0x12000, scoped, tag = 'internal scratch']
  %s0 = inlined_call_operand.hbm [shape: f32[8,128], index: 0, kind: input, shape index: {}]
  %s1 = inlined_call_operand.hbm [shape: f32[8,128], index: 1, kind: output, shape index: {}]
  %s2 = sld [smem:[#allocation0]]
  $region18: #{tpu_custom_call.1} parent=0
    _
  %s4 = ssub.s32 1, %s2
  %s5 = scalar_select 0, %s4, %s2
  $region1: #{tpu_custom_call.1} parent=0
    #allocation2 [shape = 'u8[4096]{0}', space=vmem, size = 0x1000, scoped, tag = 'input window, operand 0, single buffered']
    #allocation3 [shape = 's32[1]{0}', space=sflag, size = 0x4, scoped, tag = 'scoped memory for tpu_custom_call.1']
    #allocation4 [shape = 's32[1]{0}', space=sflag, size = 0x4, scoped, tag = 'scoped memory for tpu_custom_call.1']
    #allocation5 [shape = 'u8[4096]{0}', space=vmem, size = 0x1000, scoped, tag = 'output window, operand 0, single buffered']
    %6 = vsyncpa [#allocation3], 0
    %7 = vsyncpa [#allocation4], 0
    // Predicated region
    $region2: #{tpu_custom_call.1} parent=1 // pred_check
      _
    $region3: #{tpu_custom_call.1} parent=1 // pred_check_branch
      %9 = sbr.rel (0) target = $region5
    $region4: #{tpu_custom_call.1} parent=1 // pred_region
      %s11 = ssub.s32 128, 128
      %12 = vsyncadd [#allocation3], %s11
      %s14 = sshll.u32 [#allocation2], 4
      %s15 = int_to_ptr.vmem [resolvable:$true] %s14
      %17 = dma.hbm_to_vmem [thread:$0]  %s0, 128, %s15, [#allocation3]
    $region5: #{tpu_custom_call.1} parent=1 // pred_fallthru
      _
    // Predicated region
    $region6: #{tpu_custom_call.1} parent=1 // pred_check
      _
    $region7: #{tpu_custom_call.1} parent=1 // pred_check_branch
      %19 = sbr.rel (0) target = $region9
    $region8: #{tpu_custom_call.1} parent=1 // pred_region
      %20 = dma.done [#allocation3], 128
    $region9: #{tpu_custom_call.1} parent=1 // pred_fallthru
      _
    %v21 = vld [vmem:[#allocation2] sm:$0xff]
    %22 = vrot.lane.b32.xlu0 %v21, 1
    %v23 = vpop.permute.xlu0 %22
    %24 = vst [vmem:[#allocation5] sm:$0xff] %v23
    // Predicated region
    $region10: #{tpu_custom_call.1} parent=1 // pred_check
      _
    $region11: #{tpu_custom_call.1} parent=1 // pred_check_branch
      %26 = sbr.rel (0) target = $region13
    $region12: #{tpu_custom_call.1} parent=1 // pred_region
      %s28 = ssub.s32 128, 128
      %29 = vsyncadd [#allocation4], %s28
      %s31 = sshll.u32 [#allocation5], 4
      %s32 = int_to_ptr.vmem [resolvable:$true] %s31
      %34 = dma.vmem_to_hbm [thread:$0]  %s32, 128, %s1, [#allocation4]
    $region13: #{tpu_custom_call.1} parent=1 // pred_fallthru
      _
    // Predicated region
    $region14: #{tpu_custom_call.1} parent=1 // pred_check
      _
    $region15: #{tpu_custom_call.1} parent=1 // pred_check_branch
      %36 = sbr.rel (0) target = $region17
    $region16: #{tpu_custom_call.1} parent=1 // pred_region
      %37 = dma.done [#allocation4], 128
    $region17: #{tpu_custom_call.1} parent=1 // pred_fallthru
      _
    %38 = vsyncpa [#allocation3], 1
    %39 = vsyncpa [#allocation4], 1

// kernel: dual_unet_cwf.1
$region0: #{dual_unet_cwf.1}
  #allocation0 [shape = 'u32[]', space=smem, size = 0x4, offset = 0x4, fixed_abs, tag = 'smem constant byte address 0x4 - core index']
  #allocation1 [shape = 'u32[144,128]{1,0:T(1,128)}', space=vmem, size = 0x12000, scoped, tag = 'internal scratch']
  %s0 = inlined_call_operand.smem [shape: u32[52], index: -1, kind: input, shape index: {}]
  %s1 = sld [smem:[%s0]]
  %s2 = scalar_lea.smem %s0, 1
  %s3 = sld [smem:[%s2]]
  %s4 = scalar_lea.smem %s0, 2
  %s5 = sld [smem:[%s4]]
  %s6 = scalar_lea.smem %s0, 3
  %s7 = sld [smem:[%s6]]
  %s8 = scalar_lea.smem %s0, 4
  %s9 = sld [smem:[%s8]]
  %s10 = scalar_lea.smem %s0, 5
  %s11 = sld [smem:[%s10]]
  %s12 = scalar_lea.smem %s0, 6
  %s13 = sld [smem:[%s12]]
  %s14 = scalar_lea.smem %s0, 7
  %s15 = sld [smem:[%s14]]
  %s16 = scalar_lea.smem %s0, 8
  %s17 = sld [smem:[%s16]]
  %s18 = scalar_lea.smem %s0, 9
  %s19 = sld [smem:[%s18]]
  %s20 = scalar_lea.smem %s0, 10
  %s21 = sld [smem:[%s20]]
  %s22 = scalar_lea.smem %s0, 11
  %s23 = sld [smem:[%s22]]
  %s24 = scalar_lea.smem %s0, 12
  %s25 = sld [smem:[%s24]]
  %s26 = scalar_lea.smem %s0, 13
  %s27 = sld [smem:[%s26]]
  %s28 = scalar_lea.smem %s0, 14
  %s29 = sld [smem:[%s28]]
  %s30 = scalar_lea.smem %s0, 15
  %s31 = sld [smem:[%s30]]
  %s32 = scalar_lea.smem %s0, 16
  %s33 = sld [smem:[%s32]]
  %s34 = scalar_lea.smem %s0, 17
  %s35 = sld [smem:[%s34]]
  %s36 = scalar_lea.smem %s0, 18
  %s37 = sld [smem:[%s36]]
  %s38 = scalar_lea.smem %s0, 19
  %s39 = sld [smem:[%s38]]
  %s40 = scalar_lea.smem %s0, 20
  %s41 = sld [smem:[%s40]]
  %s42 = scalar_lea.smem %s0, 21
  %s43 = sld [smem:[%s42]]
  %s44 = scalar_lea.smem %s0, 22
  %s45 = sld [smem:[%s44]]
  %s46 = scalar_lea.smem %s0, 23
  %s47 = sld [smem:[%s46]]
  %s48 = scalar_lea.smem %s0, 24
  %s49 = sld [smem:[%s48]]
  %s50 = scalar_lea.smem %s0, 25
  %s51 = sld [smem:[%s50]]
  %s52 = scalar_lea.smem %s0, 26
  %s53 = sld [smem:[%s52]]
  %s54 = scalar_lea.smem %s0, 27
  %s55 = sld [smem:[%s54]]
  %s56 = scalar_lea.smem %s0, 28
  %s57 = sld [smem:[%s56]]
  %s58 = scalar_lea.smem %s0, 29
  %s59 = sld [smem:[%s58]]
  %s60 = scalar_lea.smem %s0, 30
  %s61 = sld [smem:[%s60]]
  %s62 = scalar_lea.smem %s0, 31
  %s63 = sld [smem:[%s62]]
  %s64 = scalar_lea.smem %s0, 32
  %s65 = sld [smem:[%s64]]
  %s66 = scalar_lea.smem %s0, 33
  %s67 = sld [smem:[%s66]]
  %s68 = scalar_lea.smem %s0, 34
  %s69 = sld [smem:[%s68]]
  %s70 = scalar_lea.smem %s0, 35
  %s71 = sld [smem:[%s70]]
  %s72 = scalar_lea.smem %s0, 36
  %s73 = sld [smem:[%s72]]
  %s74 = scalar_lea.smem %s0, 37
  %s75 = sld [smem:[%s74]]
  %s76 = scalar_lea.smem %s0, 38
  %s77 = sld [smem:[%s76]]
  %s78 = scalar_lea.smem %s0, 39
  %s79 = sld [smem:[%s78]]
  %s80 = scalar_lea.smem %s0, 40
  %s81 = sld [smem:[%s80]]
  %s82 = scalar_lea.smem %s0, 41
  %s83 = sld [smem:[%s82]]
  %s84 = scalar_lea.smem %s0, 42
  %s85 = sld [smem:[%s84]]
  %s86 = scalar_lea.smem %s0, 43
  %s87 = sld [smem:[%s86]]
  %s88 = scalar_lea.smem %s0, 44
  %s89 = sld [smem:[%s88]]
  %s90 = scalar_lea.smem %s0, 45
  %s91 = sld [smem:[%s90]]
  %s92 = scalar_lea.smem %s0, 46
  %s93 = sld [smem:[%s92]]
  %s94 = scalar_lea.smem %s0, 47
  %s95 = sld [smem:[%s94]]
  %s96 = scalar_lea.smem %s0, 48
  %s97 = sld [smem:[%s96]]
  %s98 = scalar_lea.smem %s0, 49
  %s99 = sld [smem:[%s98]]
  %s100 = scalar_lea.smem %s0, 50
  %s101 = sld [smem:[%s100]]
  %s102 = scalar_lea.smem %s0, 51
  %s103 = sld [smem:[%s102]]
  %s104 = sld [smem:[#allocation0]]
  $region237: #{dual_unet_cwf.1} parent=0
    _
  %s106 = ssub.s32 1, %s104
  %s107 = scalar_select 0, %s106, %s104
  loop: start=0, step=1, limit=4
  $region2: #{dual_unet_cwf.1} parent=0 // loop_pre_header
    _
  $region3: #{dual_unet_cwf.1} parent=0 // loop_header
    %s109 = sphi 0, %s113
    %p110 = scmp.ge.s32.totalorder %s109, 4
    %s119 = sphi 0, %s121
    %s122 = sphi 0, %s119
    %s123 = sphi 0, %s122
    %s139 = sphi 0, %s123
    %s145 = sphi 0, %s147
    %s148 = sphi 0, %s145
    %s149 = sphi 0, %s148
    %s165 = sphi 0, %s149
    %s169 = sphi 0, %s169
    %s171 = sphi 0, %s169
    %s172 = sphi 0, %s171
    %s186 = sphi 0, %s172
    %s190 = sphi 0, %s190
    %s192 = sphi 0, %s190
    %s193 = sphi 0, %s192
    %s207 = sphi 0, %s193
    %s211 = sphi 0, %s211
    %s213 = sphi 0, %s211
    %s214 = sphi 0, %s213
    %s228 = sphi 0, %s214
    %s232 = sphi 0, %s232
    %s234 = sphi 0, %s232
    %s235 = sphi 0, %s234
    %s249 = sphi 0, %s235
    %s253 = sphi 0, %s253
    %s255 = sphi 0, %s253
    %s256 = sphi 0, %s255
    %s270 = sphi 0, %s256
    %s274 = sphi 0, %s274
    %s276 = sphi 0, %s274
    %s277 = sphi 0, %s276
    %s291 = sphi 0, %s277
    %s295 = sphi 0, %s295
    %s297 = sphi 0, %s295
    %s298 = sphi 0, %s297
    %s312 = sphi 0, %s298
    %s316 = sphi 0, %s316
    %s318 = sphi 0, %s316
    %s319 = sphi 0, %s318
    %s333 = sphi 0, %s319
    %s337 = sphi 0, %s337
    %s339 = sphi 0, %s337
    %s340 = sphi 0, %s339
    %s354 = sphi 0, %s340
    %s358 = sphi 0, %s358
    %s360 = sphi 0, %s358
    %s361 = sphi 0, %s360
    %s375 = sphi 0, %s361
    %s379 = sphi 0, %s379
    %s381 = sphi 0, %s379
    %s382 = sphi 0, %s381
    %s396 = sphi 0, %s382
    %s400 = sphi 0, %s400
    %s402 = sphi 0, %s400
    %s403 = sphi 0, %s402
    %s417 = sphi 0, %s403
    %s421 = sphi 0, %s421
    %s423 = sphi 0, %s421
    %s424 = sphi 0, %s423
    %s438 = sphi 0, %s424
    %s442 = sphi 0, %s442
    %s444 = sphi 0, %s442
    %s445 = sphi 0, %s444
    %s459 = sphi 0, %s445
    %s463 = sphi 0, %s463
    %s465 = sphi 0, %s463
    %s466 = sphi 0, %s465
    %s480 = sphi 0, %s466
    %s484 = sphi 0, %s484
    %s486 = sphi 0, %s484
    %s487 = sphi 0, %s486
    %s501 = sphi 0, %s487
    %s505 = sphi 0, %s505
    %s507 = sphi 0, %s505
    %s508 = sphi 0, %s507
    %s522 = sphi 0, %s508
    %s526 = sphi 0, %s526
    %s528 = sphi 0, %s526
    %s529 = sphi 0, %s528
    %s543 = sphi 0, %s529
    %s547 = sphi 0, %s547
    %s549 = sphi 0, %s547
    %s550 = sphi 0, %s549
    %s564 = sphi 0, %s550
    %s568 = sphi 0, %s568
    %s570 = sphi 0, %s568
    %s571 = sphi 0, %s570
    %s585 = sphi 0, %s571
    %s589 = sphi 0, %s589
    %s591 = sphi 0, %s589
    %s592 = sphi 0, %s591
    %s606 = sphi 0, %s592
    %s610 = sphi 0, %s610
    %s612 = sphi 0, %s610
    %s613 = sphi 0, %s612
    %s627 = sphi 0, %s613
    %s631 = sphi 0, %s631
    %s633 = sphi 0, %s631
    %s634 = sphi 0, %s633
    %s648 = sphi 0, %s634
    %s652 = sphi 0, %s652
    %s654 = sphi 0, %s652
    %s655 = sphi 0, %s654
    %s669 = sphi 0, %s655
    %s673 = sphi 0, %s673
    %s675 = sphi 0, %s673
    %s676 = sphi 0, %s675
    %s690 = sphi 0, %s676
    %s694 = sphi 0, %s694
    %s696 = sphi 0, %s694
    %s697 = sphi 0, %s696
    %s711 = sphi 0, %s697
    %s715 = sphi 0, %s715
    %s717 = sphi 0, %s715
    %s718 = sphi 0, %s717
    %s732 = sphi 0, %s718
    %s736 = sphi 0, %s736
    %s738 = sphi 0, %s736
    %s739 = sphi 0, %s738
    %s753 = sphi 0, %s739
    %s757 = sphi 0, %s757
    %s759 = sphi 0, %s757
    %s760 = sphi 0, %s759
    %s774 = sphi 0, %s760
    %s778 = sphi 0, %s778
    %s780 = sphi 0, %s778
    %s781 = sphi 0, %s780
    %s795 = sphi 0, %s781
    %s799 = sphi 0, %s799
    %s801 = sphi 0, %s799
    %s802 = sphi 0, %s801
    %s816 = sphi 0, %s802
    %s820 = sphi 0, %s820
    %s822 = sphi 0, %s820
    %s823 = sphi 0, %s822
    %s837 = sphi 0, %s823
    %s841 = sphi 0, %s841
    %s843 = sphi 0, %s841
    %s844 = sphi 0, %s843
    %s858 = sphi 0, %s844
    %s862 = sphi 0, %s862
    %s864 = sphi 0, %s862
    %s865 = sphi 0, %s864
    %s879 = sphi 0, %s865
    %s883 = sphi 0, %s883
    %s885 = sphi 0, %s883
    %s886 = sphi 0, %s885
    %s900 = sphi 0, %s886
    %s904 = sphi 0, %s904
    %s906 = sphi 0, %s904
    %s907 = sphi 0, %s906
    %s921 = sphi 0, %s907
    %s925 = sphi 0, %s925
    %s927 = sphi 0, %s925
    %s928 = sphi 0, %s927
    %s942 = sphi 0, %s928
    %s946 = sphi 0, %s946
    %s948 = sphi 0, %s946
    %s949 = sphi 0, %s948
    %s963 = sphi 0, %s949
    %s967 = sphi 0, %s967
    %s969 = sphi 0, %s967
    %s970 = sphi 0, %s969
    %s984 = sphi 0, %s970
    %s988 = sphi 0, %s988
    %s990 = sphi 0, %s988
    %s991 = sphi 0, %s990
    %s1005 = sphi 0, %s991
    %s1009 = sphi 0, %s1009
    %s1011 = sphi 0, %s1009
    %s1012 = sphi 0, %s1011
    %s1026 = sphi 0, %s1012
    %s1030 = sphi 0, %s1030
    %s1032 = sphi 0, %s1030
    %s1033 = sphi 0, %s1032
    %s1047 = sphi 0, %s1033
    %s1051 = sphi 0, %s1051
    %s1053 = sphi 0, %s1051
    %s1054 = sphi 0, %s1053
    %s1068 = sphi 0, %s1054
    %s1072 = sphi 0, %s1072
    %s1074 = sphi 0, %s1072
    %s1075 = sphi 0, %s1074
    %s1089 = sphi 0, %s1075
    %s1093 = sphi 0, %s1093
    %s1095 = sphi 0, %s1093
    %s1096 = sphi 0, %s1095
    %s1110 = sphi 0, %s1096
    %s1114 = sphi 0, %s1114
    %s1116 = sphi 0, %s1114
    %s1117 = sphi 0, %s1116
    %s1131 = sphi 0, %s1117
    %s1135 = sphi 0, %s1135
    %s1137 = sphi 0, %s1135
    %s1138 = sphi 0, %s1137
    %s1152 = sphi 0, %s1138
    %s1156 = sphi 0, %s1156
    %s1158 = sphi 0, %s1156
    %s1159 = sphi 0, %s1158
    %s1173 = sphi 0, %s1159
    %s1177 = sphi 0, %s1177
    %s1179 = sphi 0, %s1177
    %s1180 = sphi 0, %s1179
    %s1194 = sphi 0, %s1180
    %s1200 = sphi 0, %s1202
    %s1203 = sphi 0, %s1200
    %s1204 = sphi 0, %s1203
    %s1220 = sphi 0, %s1204
  $region4: #{dual_unet_cwf.1} parent=0 // loop_header_branch
    %112 = sbr.rel (%p110) target = $region8
  $region5: #{dual_unet_cwf.1} parent=0 // loop_body
    %s114 = ssub.s32 %s109, 1
    %s115 = ssub.s32 %s109, 2
    %s116 = sadd.s32 %s109, 1
    %s117 = ssub.s32 %s109, %s116
    %p118 = scmp.eq.s32.totalorder %s117, 0
    %s120 = sadd.s32 %s119, 1
    %s121 = scalar_select %p118, %s119, %s120
    %p124 = pneg %p118
    %p125 = scmp.eq.s32.totalorder %s109, 1
    %p126 = por %p124, %p125
    %p127 = scmp.ne.s32.totalorder %s119, %s122
    %p128 = scmp.eq.s32.totalorder %s109, 0
    %p129 = por %p127, %p128
    %p130 = scmp.ne.s32.totalorder %s119, %s122
    %p131 = scmp.eq.s32.totalorder %s114, 1
    %p132 = por %p130, %p131
    %p133 = scmp.ne.s32.totalorder %s122, %s123
    %p134 = scmp.eq.s32.totalorder %s114, 0
    %p135 = por %p133, %p134
    %p136 = scmp.ne.s32.totalorder %s122, %s123
    %p137 = scmp.eq.s32.totalorder %s115, 1
    %p138 = por %p136, %p137
    %p140 = scmp.ne.s32.totalorder %s123, %s139
    %p141 = scmp.eq.s32.totalorder %s115, 0
    %p142 = por %p140, %p141
    %s143 = ssub.s32 %s109, %s116
    %p144 = scmp.eq.s32.totalorder %s143, 0
    %s146 = sadd.s32 %s145, 1
    %s147 = scalar_select %p144, %s145, %s146
    %p150 = pneg %p144
    %p151 = scmp.eq.s32.totalorder %s109, 1
    %p152 = por %p150, %p151
    %p153 = scmp.ne.s32.totalorder %s145, %s148
    %p154 = scmp.eq.s32.totalorder %s109, 0
    %p155 = por %p153, %p154
    %p156 = scmp.ne.s32.totalorder %s145, %s148
    %p157 = scmp.eq.s32.totalorder %s114, 1
    %p158 = por %p156, %p157
    %p159 = scmp.ne.s32.totalorder %s148, %s149
    %p160 = scmp.eq.s32.totalorder %s114, 0
    %p161 = por %p159, %p160
    %p162 = scmp.ne.s32.totalorder %s148, %s149
    %p163 = scmp.eq.s32.totalorder %s115, 1
    %p164 = por %p162, %p163
    %p166 = scmp.ne.s32.totalorder %s149, %s165
    %p167 = scmp.eq.s32.totalorder %s115, 0
    %p168 = por %p166, %p167
    %s170 = sadd.s32 %s169, 1
    %p173 = scmp.eq.s32.totalorder %s109, 1
    %p174 = scmp.ne.s32.totalorder %s169, %s171
    %p175 = scmp.eq.s32.totalorder %s109, 0
    %p176 = por %p174, %p175
    %p177 = scmp.ne.s32.totalorder %s169, %s171
    %p178 = scmp.eq.s32.totalorder %s114, 1
    %p179 = por %p177, %p178
    %p180 = scmp.ne.s32.totalorder %s171, %s172
    %p181 = scmp.eq.s32.totalorder %s114, 0
    %p182 = por %p180, %p181
    %p183 = scmp.ne.s32.totalorder %s171, %s172
    %p184 = scmp.eq.s32.totalorder %s115, 1
    %p185 = por %p183, %p184
    %p187 = scmp.ne.s32.totalorder %s172, %s186
    %p188 = scmp.eq.s32.totalorder %s115, 0
    %p189 = por %p187, %p188
    %s191 = sadd.s32 %s190, 1
    %p194 = scmp.eq.s32.totalorder %s109, 1
    %p195 = scmp.ne.s32.totalorder %s190, %s192
    %p196 = scmp.eq.s32.totalorder %s109, 0
    %p197 = por %p195, %p196
    %p198 = scmp.ne.s32.totalorder %s190, %s192
    %p199 = scmp.eq.s32.totalorder %s114, 1
    %p200 = por %p198, %p199
    %p201 = scmp.ne.s32.totalorder %s192, %s193
    %p202 = scmp.eq.s32.totalorder %s114, 0
    %p203 = por %p201, %p202
    %p204 = scmp.ne.s32.totalorder %s192, %s193
    %p205 = scmp.eq.s32.totalorder %s115, 1
    %p206 = por %p204, %p205
    %p208 = scmp.ne.s32.totalorder %s193, %s207
    %p209 = scmp.eq.s32.totalorder %s115, 0
    %p210 = por %p208, %p209
    %s212 = sadd.s32 %s211, 1
    %p215 = scmp.eq.s32.totalorder %s109, 1
    %p216 = scmp.ne.s32.totalorder %s211, %s213
    %p217 = scmp.eq.s32.totalorder %s109, 0
    %p218 = por %p216, %p217
    %p219 = scmp.ne.s32.totalorder %s211, %s213
    %p220 = scmp.eq.s32.totalorder %s114, 1
    %p221 = por %p219, %p220
    %p222 = scmp.ne.s32.totalorder %s213, %s214
    %p223 = scmp.eq.s32.totalorder %s114, 0
    %p224 = por %p222, %p223
    %p225 = scmp.ne.s32.totalorder %s213, %s214
    %p226 = scmp.eq.s32.totalorder %s115, 1
    %p227 = por %p225, %p226
    %p229 = scmp.ne.s32.totalorder %s214, %s228
    %p230 = scmp.eq.s32.totalorder %s115, 0
    %p231 = por %p229, %p230
    %s233 = sadd.s32 %s232, 1
    %p236 = scmp.eq.s32.totalorder %s109, 1
    %p237 = scmp.ne.s32.totalorder %s232, %s234
    %p238 = scmp.eq.s32.totalorder %s109, 0
    %p239 = por %p237, %p238
    %p240 = scmp.ne.s32.totalorder %s232, %s234
    %p241 = scmp.eq.s32.totalorder %s114, 1
    %p242 = por %p240, %p241
    %p243 = scmp.ne.s32.totalorder %s234, %s235
    %p244 = scmp.eq.s32.totalorder %s114, 0
    %p245 = por %p243, %p244
    %p246 = scmp.ne.s32.totalorder %s234, %s235
    %p247 = scmp.eq.s32.totalorder %s115, 1
    %p248 = por %p246, %p247
    %p250 = scmp.ne.s32.totalorder %s235, %s249
    %p251 = scmp.eq.s32.totalorder %s115, 0
    %p252 = por %p250, %p251
    %s254 = sadd.s32 %s253, 1
    %p257 = scmp.eq.s32.totalorder %s109, 1
    %p258 = scmp.ne.s32.totalorder %s253, %s255
    %p259 = scmp.eq.s32.totalorder %s109, 0
    %p260 = por %p258, %p259
    %p261 = scmp.ne.s32.totalorder %s253, %s255
    %p262 = scmp.eq.s32.totalorder %s114, 1
    %p263 = por %p261, %p262
    %p264 = scmp.ne.s32.totalorder %s255, %s256
    %p265 = scmp.eq.s32.totalorder %s114, 0
    %p266 = por %p264, %p265
    %p267 = scmp.ne.s32.totalorder %s255, %s256
    %p268 = scmp.eq.s32.totalorder %s115, 1
    %p269 = por %p267, %p268
    %p271 = scmp.ne.s32.totalorder %s256, %s270
    %p272 = scmp.eq.s32.totalorder %s115, 0
    %p273 = por %p271, %p272
    %s275 = sadd.s32 %s274, 1
    %p278 = scmp.eq.s32.totalorder %s109, 1
    %p279 = scmp.ne.s32.totalorder %s274, %s276
    %p280 = scmp.eq.s32.totalorder %s109, 0
    %p281 = por %p279, %p280
    %p282 = scmp.ne.s32.totalorder %s274, %s276
    %p283 = scmp.eq.s32.totalorder %s114, 1
    %p284 = por %p282, %p283
    %p285 = scmp.ne.s32.totalorder %s276, %s277
    %p286 = scmp.eq.s32.totalorder %s114, 0
    %p287 = por %p285, %p286
    %p288 = scmp.ne.s32.totalorder %s276, %s277
    %p289 = scmp.eq.s32.totalorder %s115, 1
    %p290 = por %p288, %p289
    %p292 = scmp.ne.s32.totalorder %s277, %s291
    %p293 = scmp.eq.s32.totalorder %s115, 0
    %p294 = por %p292, %p293
    %s296 = sadd.s32 %s295, 1
    %p299 = scmp.eq.s32.totalorder %s109, 1
    %p300 = scmp.ne.s32.totalorder %s295, %s297
    %p301 = scmp.eq.s32.totalorder %s109, 0
    %p302 = por %p300, %p301
    %p303 = scmp.ne.s32.totalorder %s295, %s297
    %p304 = scmp.eq.s32.totalorder %s114, 1
    %p305 = por %p303, %p304
    %p306 = scmp.ne.s32.totalorder %s297, %s298
    %p307 = scmp.eq.s32.totalorder %s114, 0
    %p308 = por %p306, %p307
    %p309 = scmp.ne.s32.totalorder %s297, %s298
    %p310 = scmp.eq.s32.totalorder %s115, 1
    %p311 = por %p309, %p310
    %p313 = scmp.ne.s32.totalorder %s298, %s312
    %p314 = scmp.eq.s32.totalorder %s115, 0
    %p315 = por %p313, %p314
    %s317 = sadd.s32 %s316, 1
    %p320 = scmp.eq.s32.totalorder %s109, 1
    %p321 = scmp.ne.s32.totalorder %s316, %s318
    %p322 = scmp.eq.s32.totalorder %s109, 0
    %p323 = por %p321, %p322
    %p324 = scmp.ne.s32.totalorder %s316, %s318
    %p325 = scmp.eq.s32.totalorder %s114, 1
    %p326 = por %p324, %p325
    %p327 = scmp.ne.s32.totalorder %s318, %s319
    %p328 = scmp.eq.s32.totalorder %s114, 0
    %p329 = por %p327, %p328
    %p330 = scmp.ne.s32.totalorder %s318, %s319
    %p331 = scmp.eq.s32.totalorder %s115, 1
    %p332 = por %p330, %p331
    %p334 = scmp.ne.s32.totalorder %s319, %s333
    %p335 = scmp.eq.s32.totalorder %s115, 0
    %p336 = por %p334, %p335
    %s338 = sadd.s32 %s337, 1
    %p341 = scmp.eq.s32.totalorder %s109, 1
    %p342 = scmp.ne.s32.totalorder %s337, %s339
    %p343 = scmp.eq.s32.totalorder %s109, 0
    %p344 = por %p342, %p343
    %p345 = scmp.ne.s32.totalorder %s337, %s339
    %p346 = scmp.eq.s32.totalorder %s114, 1
    %p347 = por %p345, %p346
    %p348 = scmp.ne.s32.totalorder %s339, %s340
    %p349 = scmp.eq.s32.totalorder %s114, 0
    %p350 = por %p348, %p349
    %p351 = scmp.ne.s32.totalorder %s339, %s340
    %p352 = scmp.eq.s32.totalorder %s115, 1
    %p353 = por %p351, %p352
    %p355 = scmp.ne.s32.totalorder %s340, %s354
    %p356 = scmp.eq.s32.totalorder %s115, 0
    %p357 = por %p355, %p356
    %s359 = sadd.s32 %s358, 1
    %p362 = scmp.eq.s32.totalorder %s109, 1
    %p363 = scmp.ne.s32.totalorder %s358, %s360
    %p364 = scmp.eq.s32.totalorder %s109, 0
    %p365 = por %p363, %p364
    %p366 = scmp.ne.s32.totalorder %s358, %s360
    %p367 = scmp.eq.s32.totalorder %s114, 1
    %p368 = por %p366, %p367
    %p369 = scmp.ne.s32.totalorder %s360, %s361
    %p370 = scmp.eq.s32.totalorder %s114, 0
    %p371 = por %p369, %p370
    %p372 = scmp.ne.s32.totalorder %s360, %s361
    %p373 = scmp.eq.s32.totalorder %s115, 1
    %p374 = por %p372, %p373
    %p376 = scmp.ne.s32.totalorder %s361, %s375
    %p377 = scmp.eq.s32.totalorder %s115, 0
    %p378 = por %p376, %p377
    %s380 = sadd.s32 %s379, 1
    %p383 = scmp.eq.s32.totalorder %s109, 1
    %p384 = scmp.ne.s32.totalorder %s379, %s381
    %p385 = scmp.eq.s32.totalorder %s109, 0
    %p386 = por %p384, %p385
    %p387 = scmp.ne.s32.totalorder %s379, %s381
    %p388 = scmp.eq.s32.totalorder %s114, 1
    %p389 = por %p387, %p388
    %p390 = scmp.ne.s32.totalorder %s381, %s382
    %p391 = scmp.eq.s32.totalorder %s114, 0
    %p392 = por %p390, %p391
    %p393 = scmp.ne.s32.totalorder %s381, %s382
    %p394 = scmp.eq.s32.totalorder %s115, 1
    %p395 = por %p393, %p394
    %p397 = scmp.ne.s32.totalorder %s382, %s396
    %p398 = scmp.eq.s32.totalorder %s115, 0
    %p399 = por %p397, %p398
    %s401 = sadd.s32 %s400, 1
    %p404 = scmp.eq.s32.totalorder %s109, 1
    %p405 = scmp.ne.s32.totalorder %s400, %s402
    %p406 = scmp.eq.s32.totalorder %s109, 0
    %p407 = por %p405, %p406
    %p408 = scmp.ne.s32.totalorder %s400, %s402
    %p409 = scmp.eq.s32.totalorder %s114, 1
    %p410 = por %p408, %p409
    %p411 = scmp.ne.s32.totalorder %s402, %s403
    %p412 = scmp.eq.s32.totalorder %s114, 0
    %p413 = por %p411, %p412
    %p414 = scmp.ne.s32.totalorder %s402, %s403
    %p415 = scmp.eq.s32.totalorder %s115, 1
    %p416 = por %p414, %p415
    %p418 = scmp.ne.s32.totalorder %s403, %s417
    %p419 = scmp.eq.s32.totalorder %s115, 0
    %p420 = por %p418, %p419
    %s422 = sadd.s32 %s421, 1
    %p425 = scmp.eq.s32.totalorder %s109, 1
    %p426 = scmp.ne.s32.totalorder %s421, %s423
    %p427 = scmp.eq.s32.totalorder %s109, 0
    %p428 = por %p426, %p427
    %p429 = scmp.ne.s32.totalorder %s421, %s423
    %p430 = scmp.eq.s32.totalorder %s114, 1
    %p431 = por %p429, %p430
    %p432 = scmp.ne.s32.totalorder %s423, %s424
    %p433 = scmp.eq.s32.totalorder %s114, 0
    %p434 = por %p432, %p433
    %p435 = scmp.ne.s32.totalorder %s423, %s424
    %p436 = scmp.eq.s32.totalorder %s115, 1
    %p437 = por %p435, %p436
    %p439 = scmp.ne.s32.totalorder %s424, %s438
    %p440 = scmp.eq.s32.totalorder %s115, 0
    %p441 = por %p439, %p440
    %s443 = sadd.s32 %s442, 1
    %p446 = scmp.eq.s32.totalorder %s109, 1
    %p447 = scmp.ne.s32.totalorder %s442, %s444
    %p448 = scmp.eq.s32.totalorder %s109, 0
    %p449 = por %p447, %p448
    %p450 = scmp.ne.s32.totalorder %s442, %s444
    %p451 = scmp.eq.s32.totalorder %s114, 1
    %p452 = por %p450, %p451
    %p453 = scmp.ne.s32.totalorder %s444, %s445
    %p454 = scmp.eq.s32.totalorder %s114, 0
    %p455 = por %p453, %p454
    %p456 = scmp.ne.s32.totalorder %s444, %s445
    %p457 = scmp.eq.s32.totalorder %s115, 1
    %p458 = por %p456, %p457
    %p460 = scmp.ne.s32.totalorder %s445, %s459
    %p461 = scmp.eq.s32.totalorder %s115, 0
    %p462 = por %p460, %p461
    %s464 = sadd.s32 %s463, 1
    %p467 = scmp.eq.s32.totalorder %s109, 1
    %p468 = scmp.ne.s32.totalorder %s463, %s465
    %p469 = scmp.eq.s32.totalorder %s109, 0
    %p470 = por %p468, %p469
    %p471 = scmp.ne.s32.totalorder %s463, %s465
    %p472 = scmp.eq.s32.totalorder %s114, 1
    %p473 = por %p471, %p472
    %p474 = scmp.ne.s32.totalorder %s465, %s466
    %p475 = scmp.eq.s32.totalorder %s114, 0
    %p476 = por %p474, %p475
    %p477 = scmp.ne.s32.totalorder %s465, %s466
    %p478 = scmp.eq.s32.totalorder %s115, 1
    %p479 = por %p477, %p478
    %p481 = scmp.ne.s32.totalorder %s466, %s480
    %p482 = scmp.eq.s32.totalorder %s115, 0
    %p483 = por %p481, %p482
    %s485 = sadd.s32 %s484, 1
    %p488 = scmp.eq.s32.totalorder %s109, 1
    %p489 = scmp.ne.s32.totalorder %s484, %s486
    %p490 = scmp.eq.s32.totalorder %s109, 0
    %p491 = por %p489, %p490
    %p492 = scmp.ne.s32.totalorder %s484, %s486
    %p493 = scmp.eq.s32.totalorder %s114, 1
    %p494 = por %p492, %p493
    %p495 = scmp.ne.s32.totalorder %s486, %s487
    %p496 = scmp.eq.s32.totalorder %s114, 0
    %p497 = por %p495, %p496
    %p498 = scmp.ne.s32.totalorder %s486, %s487
    %p499 = scmp.eq.s32.totalorder %s115, 1
    %p500 = por %p498, %p499
    %p502 = scmp.ne.s32.totalorder %s487, %s501
    %p503 = scmp.eq.s32.totalorder %s115, 0
    %p504 = por %p502, %p503
    %s506 = sadd.s32 %s505, 1
    %p509 = scmp.eq.s32.totalorder %s109, 1
    %p510 = scmp.ne.s32.totalorder %s505, %s507
    %p511 = scmp.eq.s32.totalorder %s109, 0
    %p512 = por %p510, %p511
    %p513 = scmp.ne.s32.totalorder %s505, %s507
    %p514 = scmp.eq.s32.totalorder %s114, 1
    %p515 = por %p513, %p514
    %p516 = scmp.ne.s32.totalorder %s507, %s508
    %p517 = scmp.eq.s32.totalorder %s114, 0
    %p518 = por %p516, %p517
    %p519 = scmp.ne.s32.totalorder %s507, %s508
    %p520 = scmp.eq.s32.totalorder %s115, 1
    %p521 = por %p519, %p520
    %p523 = scmp.ne.s32.totalorder %s508, %s522
    %p524 = scmp.eq.s32.totalorder %s115, 0
    %p525 = por %p523, %p524
    %s527 = sadd.s32 %s526, 1
    %p530 = scmp.eq.s32.totalorder %s109, 1
    %p531 = scmp.ne.s32.totalorder %s526, %s528
    %p532 = scmp.eq.s32.totalorder %s109, 0
    %p533 = por %p531, %p532
    %p534 = scmp.ne.s32.totalorder %s526, %s528
    %p535 = scmp.eq.s32.totalorder %s114, 1
    %p536 = por %p534, %p535
    %p537 = scmp.ne.s32.totalorder %s528, %s529
    %p538 = scmp.eq.s32.totalorder %s114, 0
    %p539 = por %p537, %p538
    %p540 = scmp.ne.s32.totalorder %s528, %s529
    %p541 = scmp.eq.s32.totalorder %s115, 1
    %p542 = por %p540, %p541
    %p544 = scmp.ne.s32.totalorder %s529, %s543
    %p545 = scmp.eq.s32.totalorder %s115, 0
    %p546 = por %p544, %p545
    %s548 = sadd.s32 %s547, 1
    %p551 = scmp.eq.s32.totalorder %s109, 1
    %p552 = scmp.ne.s32.totalorder %s547, %s549
    %p553 = scmp.eq.s32.totalorder %s109, 0
    %p554 = por %p552, %p553
    %p555 = scmp.ne.s32.totalorder %s547, %s549
    %p556 = scmp.eq.s32.totalorder %s114, 1
    %p557 = por %p555, %p556
    %p558 = scmp.ne.s32.totalorder %s549, %s550
    %p559 = scmp.eq.s32.totalorder %s114, 0
    %p560 = por %p558, %p559
    %p561 = scmp.ne.s32.totalorder %s549, %s550
    %p562 = scmp.eq.s32.totalorder %s115, 1
    %p563 = por %p561, %p562
    %p565 = scmp.ne.s32.totalorder %s550, %s564
    %p566 = scmp.eq.s32.totalorder %s115, 0
    %p567 = por %p565, %p566
    %s569 = sadd.s32 %s568, 1
    %p572 = scmp.eq.s32.totalorder %s109, 1
    %p573 = scmp.ne.s32.totalorder %s568, %s570
    %p574 = scmp.eq.s32.totalorder %s109, 0
    %p575 = por %p573, %p574
    %p576 = scmp.ne.s32.totalorder %s568, %s570
    %p577 = scmp.eq.s32.totalorder %s114, 1
    %p578 = por %p576, %p577
    %p579 = scmp.ne.s32.totalorder %s570, %s571
    %p580 = scmp.eq.s32.totalorder %s114, 0
    %p581 = por %p579, %p580
    %p582 = scmp.ne.s32.totalorder %s570, %s571
    %p583 = scmp.eq.s32.totalorder %s115, 1
    %p584 = por %p582, %p583
    %p586 = scmp.ne.s32.totalorder %s571, %s585
    %p587 = scmp.eq.s32.totalorder %s115, 0
    %p588 = por %p586, %p587
    %s590 = sadd.s32 %s589, 1
    %p593 = scmp.eq.s32.totalorder %s109, 1
    %p594 = scmp.ne.s32.totalorder %s589, %s591
    %p595 = scmp.eq.s32.totalorder %s109, 0
    %p596 = por %p594, %p595
    %p597 = scmp.ne.s32.totalorder %s589, %s591
    %p598 = scmp.eq.s32.totalorder %s114, 1
    %p599 = por %p597, %p598
    %p600 = scmp.ne.s32.totalorder %s591, %s592
    %p601 = scmp.eq.s32.totalorder %s114, 0
    %p602 = por %p600, %p601
    %p603 = scmp.ne.s32.totalorder %s591, %s592
    %p604 = scmp.eq.s32.totalorder %s115, 1
    %p605 = por %p603, %p604
    %p607 = scmp.ne.s32.totalorder %s592, %s606
    %p608 = scmp.eq.s32.totalorder %s115, 0
    %p609 = por %p607, %p608
    %s611 = sadd.s32 %s610, 1
    %p614 = scmp.eq.s32.totalorder %s109, 1
    %p615 = scmp.ne.s32.totalorder %s610, %s612
    %p616 = scmp.eq.s32.totalorder %s109, 0
    %p617 = por %p615, %p616
    %p618 = scmp.ne.s32.totalorder %s610, %s612
    %p619 = scmp.eq.s32.totalorder %s114, 1
    %p620 = por %p618, %p619
    %p621 = scmp.ne.s32.totalorder %s612, %s613
    %p622 = scmp.eq.s32.totalorder %s114, 0
    %p623 = por %p621, %p622
    %p624 = scmp.ne.s32.totalorder %s612, %s613
    %p625 = scmp.eq.s32.totalorder %s115, 1
    %p626 = por %p624, %p625
    %p628 = scmp.ne.s32.totalorder %s613, %s627
    %p629 = scmp.eq.s32.totalorder %s115, 0
    %p630 = por %p628, %p629
    %s632 = sadd.s32 %s631, 1
    %p635 = scmp.eq.s32.totalorder %s109, 1
    %p636 = scmp.ne.s32.totalorder %s631, %s633
    %p637 = scmp.eq.s32.totalorder %s109, 0
    %p638 = por %p636, %p637
    %p639 = scmp.ne.s32.totalorder %s631, %s633
    %p640 = scmp.eq.s32.totalorder %s114, 1
    %p641 = por %p639, %p640
    %p642 = scmp.ne.s32.totalorder %s633, %s634
    %p643 = scmp.eq.s32.totalorder %s114, 0
    %p644 = por %p642, %p643
    %p645 = scmp.ne.s32.totalorder %s633, %s634
    %p646 = scmp.eq.s32.totalorder %s115, 1
    %p647 = por %p645, %p646
    %p649 = scmp.ne.s32.totalorder %s634, %s648
    %p650 = scmp.eq.s32.totalorder %s115, 0
    %p651 = por %p649, %p650
    %s653 = sadd.s32 %s652, 1
    %p656 = scmp.eq.s32.totalorder %s109, 1
    %p657 = scmp.ne.s32.totalorder %s652, %s654
    %p658 = scmp.eq.s32.totalorder %s109, 0
    %p659 = por %p657, %p658
    %p660 = scmp.ne.s32.totalorder %s652, %s654
    %p661 = scmp.eq.s32.totalorder %s114, 1
    %p662 = por %p660, %p661
    %p663 = scmp.ne.s32.totalorder %s654, %s655
    %p664 = scmp.eq.s32.totalorder %s114, 0
    %p665 = por %p663, %p664
    %p666 = scmp.ne.s32.totalorder %s654, %s655
    %p667 = scmp.eq.s32.totalorder %s115, 1
    %p668 = por %p666, %p667
    %p670 = scmp.ne.s32.totalorder %s655, %s669
    %p671 = scmp.eq.s32.totalorder %s115, 0
    %p672 = por %p670, %p671
    %s674 = sadd.s32 %s673, 1
    %p677 = scmp.eq.s32.totalorder %s109, 1
    %p678 = scmp.ne.s32.totalorder %s673, %s675
    %p679 = scmp.eq.s32.totalorder %s109, 0
    %p680 = por %p678, %p679
    %p681 = scmp.ne.s32.totalorder %s673, %s675
    %p682 = scmp.eq.s32.totalorder %s114, 1
    %p683 = por %p681, %p682
    %p684 = scmp.ne.s32.totalorder %s675, %s676
    %p685 = scmp.eq.s32.totalorder %s114, 0
    %p686 = por %p684, %p685
    %p687 = scmp.ne.s32.totalorder %s675, %s676
    %p688 = scmp.eq.s32.totalorder %s115, 1
    %p689 = por %p687, %p688
    %p691 = scmp.ne.s32.totalorder %s676, %s690
    %p692 = scmp.eq.s32.totalorder %s115, 0
    %p693 = por %p691, %p692
    %s695 = sadd.s32 %s694, 1
    %p698 = scmp.eq.s32.totalorder %s109, 1
    %p699 = scmp.ne.s32.totalorder %s694, %s696
    %p700 = scmp.eq.s32.totalorder %s109, 0
    %p701 = por %p699, %p700
    %p702 = scmp.ne.s32.totalorder %s694, %s696
    %p703 = scmp.eq.s32.totalorder %s114, 1
    %p704 = por %p702, %p703
    %p705 = scmp.ne.s32.totalorder %s696, %s697
    %p706 = scmp.eq.s32.totalorder %s114, 0
    %p707 = por %p705, %p706
    %p708 = scmp.ne.s32.totalorder %s696, %s697
    %p709 = scmp.eq.s32.totalorder %s115, 1
    %p710 = por %p708, %p709
    %p712 = scmp.ne.s32.totalorder %s697, %s711
    %p713 = scmp.eq.s32.totalorder %s115, 0
    %p714 = por %p712, %p713
    %s716 = sadd.s32 %s715, 1
    %p719 = scmp.eq.s32.totalorder %s109, 1
    %p720 = scmp.ne.s32.totalorder %s715, %s717
    %p721 = scmp.eq.s32.totalorder %s109, 0
    %p722 = por %p720, %p721
    %p723 = scmp.ne.s32.totalorder %s715, %s717
    %p724 = scmp.eq.s32.totalorder %s114, 1
    %p725 = por %p723, %p724
    %p726 = scmp.ne.s32.totalorder %s717, %s718
    %p727 = scmp.eq.s32.totalorder %s114, 0
    %p728 = por %p726, %p727
    %p729 = scmp.ne.s32.totalorder %s717, %s718
    %p730 = scmp.eq.s32.totalorder %s115, 1
    %p731 = por %p729, %p730
    %p733 = scmp.ne.s32.totalorder %s718, %s732
    %p734 = scmp.eq.s32.totalorder %s115, 0
    %p735 = por %p733, %p734
    %s737 = sadd.s32 %s736, 1
    %p740 = scmp.eq.s32.totalorder %s109, 1
    %p741 = scmp.ne.s32.totalorder %s736, %s738
    %p742 = scmp.eq.s32.totalorder %s109, 0
    %p743 = por %p741, %p742
    %p744 = scmp.ne.s32.totalorder %s736, %s738
    %p745 = scmp.eq.s32.totalorder %s114, 1
    %p746 = por %p744, %p745
    %p747 = scmp.ne.s32.totalorder %s738, %s739
    %p748 = scmp.eq.s32.totalorder %s114, 0
    %p749 = por %p747, %p748
    %p750 = scmp.ne.s32.totalorder %s738, %s739
    %p751 = scmp.eq.s32.totalorder %s115, 1
    %p752 = por %p750, %p751
    %p754 = scmp.ne.s32.totalorder %s739, %s753
    %p755 = scmp.eq.s32.totalorder %s115, 0
    %p756 = por %p754, %p755
    %s758 = sadd.s32 %s757, 1
    %p761 = scmp.eq.s32.totalorder %s109, 1
    %p762 = scmp.ne.s32.totalorder %s757, %s759
    %p763 = scmp.eq.s32.totalorder %s109, 0
    %p764 = por %p762, %p763
    %p765 = scmp.ne.s32.totalorder %s757, %s759
    %p766 = scmp.eq.s32.totalorder %s114, 1
    %p767 = por %p765, %p766
    %p768 = scmp.ne.s32.totalorder %s759, %s760
    %p769 = scmp.eq.s32.totalorder %s114, 0
    %p770 = por %p768, %p769
    %p771 = scmp.ne.s32.totalorder %s759, %s760
    %p772 = scmp.eq.s32.totalorder %s115, 1
    %p773 = por %p771, %p772
    %p775 = scmp.ne.s32.totalorder %s760, %s774
    %p776 = scmp.eq.s32.totalorder %s115, 0
    %p777 = por %p775, %p776
    %s779 = sadd.s32 %s778, 1
    %p782 = scmp.eq.s32.totalorder %s109, 1
    %p783 = scmp.ne.s32.totalorder %s778, %s780
    %p784 = scmp.eq.s32.totalorder %s109, 0
    %p785 = por %p783, %p784
    %p786 = scmp.ne.s32.totalorder %s778, %s780
    %p787 = scmp.eq.s32.totalorder %s114, 1
    %p788 = por %p786, %p787
    %p789 = scmp.ne.s32.totalorder %s780, %s781
    %p790 = scmp.eq.s32.totalorder %s114, 0
    %p791 = por %p789, %p790
    %p792 = scmp.ne.s32.totalorder %s780, %s781
    %p793 = scmp.eq.s32.totalorder %s115, 1
    %p794 = por %p792, %p793
    %p796 = scmp.ne.s32.totalorder %s781, %s795
    %p797 = scmp.eq.s32.totalorder %s115, 0
    %p798 = por %p796, %p797
    %s800 = sadd.s32 %s799, 1
    %p803 = scmp.eq.s32.totalorder %s109, 1
    %p804 = scmp.ne.s32.totalorder %s799, %s801
    %p805 = scmp.eq.s32.totalorder %s109, 0
    %p806 = por %p804, %p805
    %p807 = scmp.ne.s32.totalorder %s799, %s801
    %p808 = scmp.eq.s32.totalorder %s114, 1
    %p809 = por %p807, %p808
    %p810 = scmp.ne.s32.totalorder %s801, %s802
    %p811 = scmp.eq.s32.totalorder %s114, 0
    %p812 = por %p810, %p811
    %p813 = scmp.ne.s32.totalorder %s801, %s802
    %p814 = scmp.eq.s32.totalorder %s115, 1
    %p815 = por %p813, %p814
    %p817 = scmp.ne.s32.totalorder %s802, %s816
    %p818 = scmp.eq.s32.totalorder %s115, 0
    %p819 = por %p817, %p818
    %s821 = sadd.s32 %s820, 1
    %p824 = scmp.eq.s32.totalorder %s109, 1
    %p825 = scmp.ne.s32.totalorder %s820, %s822
    %p826 = scmp.eq.s32.totalorder %s109, 0
    %p827 = por %p825, %p826
    %p828 = scmp.ne.s32.totalorder %s820, %s822
    %p829 = scmp.eq.s32.totalorder %s114, 1
    %p830 = por %p828, %p829
    %p831 = scmp.ne.s32.totalorder %s822, %s823
    %p832 = scmp.eq.s32.totalorder %s114, 0
    %p833 = por %p831, %p832
    %p834 = scmp.ne.s32.totalorder %s822, %s823
    %p835 = scmp.eq.s32.totalorder %s115, 1
    %p836 = por %p834, %p835
    %p838 = scmp.ne.s32.totalorder %s823, %s837
    %p839 = scmp.eq.s32.totalorder %s115, 0
    %p840 = por %p838, %p839
    %s842 = sadd.s32 %s841, 1
    %p845 = scmp.eq.s32.totalorder %s109, 1
    %p846 = scmp.ne.s32.totalorder %s841, %s843
    %p847 = scmp.eq.s32.totalorder %s109, 0
    %p848 = por %p846, %p847
    %p849 = scmp.ne.s32.totalorder %s841, %s843
    %p850 = scmp.eq.s32.totalorder %s114, 1
    %p851 = por %p849, %p850
    %p852 = scmp.ne.s32.totalorder %s843, %s844
    %p853 = scmp.eq.s32.totalorder %s114, 0
    %p854 = por %p852, %p853
    %p855 = scmp.ne.s32.totalorder %s843, %s844
    %p856 = scmp.eq.s32.totalorder %s115, 1
    %p857 = por %p855, %p856
    %p859 = scmp.ne.s32.totalorder %s844, %s858
    %p860 = scmp.eq.s32.totalorder %s115, 0
    %p861 = por %p859, %p860
    %s863 = sadd.s32 %s862, 1
    %p866 = scmp.eq.s32.totalorder %s109, 1
    %p867 = scmp.ne.s32.totalorder %s862, %s864
    %p868 = scmp.eq.s32.totalorder %s109, 0
    %p869 = por %p867, %p868
    %p870 = scmp.ne.s32.totalorder %s862, %s864
    %p871 = scmp.eq.s32.totalorder %s114, 1
    %p872 = por %p870, %p871
    %p873 = scmp.ne.s32.totalorder %s864, %s865
    %p874 = scmp.eq.s32.totalorder %s114, 0
    %p875 = por %p873, %p874
    %p876 = scmp.ne.s32.totalorder %s864, %s865
    %p877 = scmp.eq.s32.totalorder %s115, 1
    %p878 = por %p876, %p877
    %p880 = scmp.ne.s32.totalorder %s865, %s879
    %p881 = scmp.eq.s32.totalorder %s115, 0
    %p882 = por %p880, %p881
    %s884 = sadd.s32 %s883, 1
    %p887 = scmp.eq.s32.totalorder %s109, 1
    %p888 = scmp.ne.s32.totalorder %s883, %s885
    %p889 = scmp.eq.s32.totalorder %s109, 0
    %p890 = por %p888, %p889
    %p891 = scmp.ne.s32.totalorder %s883, %s885
    %p892 = scmp.eq.s32.totalorder %s114, 1
    %p893 = por %p891, %p892
    %p894 = scmp.ne.s32.totalorder %s885, %s886
    %p895 = scmp.eq.s32.totalorder %s114, 0
    %p896 = por %p894, %p895
    %p897 = scmp.ne.s32.totalorder %s885, %s886
    %p898 = scmp.eq.s32.totalorder %s115, 1
    %p899 = por %p897, %p898
    %p901 = scmp.ne.s32.totalorder %s886, %s900
    %p902 = scmp.eq.s32.totalorder %s115, 0
    %p903 = por %p901, %p902
    %s905 = sadd.s32 %s904, 1
    %p908 = scmp.eq.s32.totalorder %s109, 1
    %p909 = scmp.ne.s32.totalorder %s904, %s906
    %p910 = scmp.eq.s32.totalorder %s109, 0
    %p911 = por %p909, %p910
    %p912 = scmp.ne.s32.totalorder %s904, %s906
    %p913 = scmp.eq.s32.totalorder %s114, 1
    %p914 = por %p912, %p913
    %p915 = scmp.ne.s32.totalorder %s906, %s907
    %p916 = scmp.eq.s32.totalorder %s114, 0
    %p917 = por %p915, %p916
    %p918 = scmp.ne.s32.totalorder %s906, %s907
    %p919 = scmp.eq.s32.totalorder %s115, 1
    %p920 = por %p918, %p919
    %p922 = scmp.ne.s32.totalorder %s907, %s921
    %p923 = scmp.eq.s32.totalorder %s115, 0
    %p924 = por %p922, %p923
    %s926 = sadd.s32 %s925, 1
    %p929 = scmp.eq.s32.totalorder %s109, 1
    %p930 = scmp.ne.s32.totalorder %s925, %s927
    %p931 = scmp.eq.s32.totalorder %s109, 0
    %p932 = por %p930, %p931
    %p933 = scmp.ne.s32.totalorder %s925, %s927
    %p934 = scmp.eq.s32.totalorder %s114, 1
    %p935 = por %p933, %p934
    %p936 = scmp.ne.s32.totalorder %s927, %s928
    %p937 = scmp.eq.s32.totalorder %s114, 0
    %p938 = por %p936, %p937
    %p939 = scmp.ne.s32.totalorder %s927, %s928
    %p940 = scmp.eq.s32.totalorder %s115, 1
    %p941 = por %p939, %p940
    %p943 = scmp.ne.s32.totalorder %s928, %s942
    %p944 = scmp.eq.s32.totalorder %s115, 0
    %p945 = por %p943, %p944
    %s947 = sadd.s32 %s946, 1
    %p950 = scmp.eq.s32.totalorder %s109, 1
    %p951 = scmp.ne.s32.totalorder %s946, %s948
    %p952 = scmp.eq.s32.totalorder %s109, 0
    %p953 = por %p951, %p952
    %p954 = scmp.ne.s32.totalorder %s946, %s948
    %p955 = scmp.eq.s32.totalorder %s114, 1
    %p956 = por %p954, %p955
    %p957 = scmp.ne.s32.totalorder %s948, %s949
    %p958 = scmp.eq.s32.totalorder %s114, 0
    %p959 = por %p957, %p958
    %p960 = scmp.ne.s32.totalorder %s948, %s949
    %p961 = scmp.eq.s32.totalorder %s115, 1
    %p962 = por %p960, %p961
    %p964 = scmp.ne.s32.totalorder %s949, %s963
    %p965 = scmp.eq.s32.totalorder %s115, 0
    %p966 = por %p964, %p965
    %s968 = sadd.s32 %s967, 1
    %p971 = scmp.eq.s32.totalorder %s109, 1
    %p972 = scmp.ne.s32.totalorder %s967, %s969
    %p973 = scmp.eq.s32.totalorder %s109, 0
    %p974 = por %p972, %p973
    %p975 = scmp.ne.s32.totalorder %s967, %s969
    %p976 = scmp.eq.s32.totalorder %s114, 1
    %p977 = por %p975, %p976
    %p978 = scmp.ne.s32.totalorder %s969, %s970
    %p979 = scmp.eq.s32.totalorder %s114, 0
    %p980 = por %p978, %p979
    %p981 = scmp.ne.s32.totalorder %s969, %s970
    %p982 = scmp.eq.s32.totalorder %s115, 1
    %p983 = por %p981, %p982
    %p985 = scmp.ne.s32.totalorder %s970, %s984
    %p986 = scmp.eq.s32.totalorder %s115, 0
    %p987 = por %p985, %p986
    %s989 = sadd.s32 %s988, 1
    %p992 = scmp.eq.s32.totalorder %s109, 1
    %p993 = scmp.ne.s32.totalorder %s988, %s990
    %p994 = scmp.eq.s32.totalorder %s109, 0
    %p995 = por %p993, %p994
    %p996 = scmp.ne.s32.totalorder %s988, %s990
    %p997 = scmp.eq.s32.totalorder %s114, 1
    %p998 = por %p996, %p997
    %p999 = scmp.ne.s32.totalorder %s990, %s991
    %p1000 = scmp.eq.s32.totalorder %s114, 0
    %p1001 = por %p999, %p1000
    %p1002 = scmp.ne.s32.totalorder %s990, %s991
    %p1003 = scmp.eq.s32.totalorder %s115, 1
    %p1004 = por %p1002, %p1003
    %p1006 = scmp.ne.s32.totalorder %s991, %s1005
    %p1007 = scmp.eq.s32.totalorder %s115, 0
    %p1008 = por %p1006, %p1007
    %s1010 = sadd.s32 %s1009, 1
    %p1013 = scmp.eq.s32.totalorder %s109, 1
    %p1014 = scmp.ne.s32.totalorder %s1009, %s1011
    %p1015 = scmp.eq.s32.totalorder %s109, 0
    %p1016 = por %p1014, %p1015
    %p1017 = scmp.ne.s32.totalorder %s1009, %s1011
    %p1018 = scmp.eq.s32.totalorder %s114, 1
    %p1019 = por %p1017, %p1018
    %p1020 = scmp.ne.s32.totalorder %s1011, %s1012
    %p1021 = scmp.eq.s32.totalorder %s114, 0
    %p1022 = por %p1020, %p1021
    %p1023 = scmp.ne.s32.totalorder %s1011, %s1012
    %p1024 = scmp.eq.s32.totalorder %s115, 1
    %p1025 = por %p1023, %p1024
    %p1027 = scmp.ne.s32.totalorder %s1012, %s1026
    %p1028 = scmp.eq.s32.totalorder %s115, 0
    %p1029 = por %p1027, %p1028
    %s1031 = sadd.s32 %s1030, 1
    %p1034 = scmp.eq.s32.totalorder %s109, 1
    %p1035 = scmp.ne.s32.totalorder %s1030, %s1032
    %p1036 = scmp.eq.s32.totalorder %s109, 0
    %p1037 = por %p1035, %p1036
    %p1038 = scmp.ne.s32.totalorder %s1030, %s1032
    %p1039 = scmp.eq.s32.totalorder %s114, 1
    %p1040 = por %p1038, %p1039
    %p1041 = scmp.ne.s32.totalorder %s1032, %s1033
    %p1042 = scmp.eq.s32.totalorder %s114, 0
    %p1043 = por %p1041, %p1042
    %p1044 = scmp.ne.s32.totalorder %s1032, %s1033
    %p1045 = scmp.eq.s32.totalorder %s115, 1
    %p1046 = por %p1044, %p1045
    %p1048 = scmp.ne.s32.totalorder %s1033, %s1047
    %p1049 = scmp.eq.s32.totalorder %s115, 0
    %p1050 = por %p1048, %p1049
    %s1052 = sadd.s32 %s1051, 1
    %p1055 = scmp.eq.s32.totalorder %s109, 1
    %p1056 = scmp.ne.s32.totalorder %s1051, %s1053
    %p1057 = scmp.eq.s32.totalorder %s109, 0
    %p1058 = por %p1056, %p1057
    %p1059 = scmp.ne.s32.totalorder %s1051, %s1053
    %p1060 = scmp.eq.s32.totalorder %s114, 1
    %p1061 = por %p1059, %p1060
    %p1062 = scmp.ne.s32.totalorder %s1053, %s1054
    %p1063 = scmp.eq.s32.totalorder %s114, 0
    %p1064 = por %p1062, %p1063
    %p1065 = scmp.ne.s32.totalorder %s1053, %s1054
    %p1066 = scmp.eq.s32.totalorder %s115, 1
    %p1067 = por %p1065, %p1066
    %p1069 = scmp.ne.s32.totalorder %s1054, %s1068
    %p1070 = scmp.eq.s32.totalorder %s115, 0
    %p1071 = por %p1069, %p1070
    %s1073 = sadd.s32 %s1072, 1
    %p1076 = scmp.eq.s32.totalorder %s109, 1
    %p1077 = scmp.ne.s32.totalorder %s1072, %s1074
    %p1078 = scmp.eq.s32.totalorder %s109, 0
    %p1079 = por %p1077, %p1078
    %p1080 = scmp.ne.s32.totalorder %s1072, %s1074
    %p1081 = scmp.eq.s32.totalorder %s114, 1
    %p1082 = por %p1080, %p1081
    %p1083 = scmp.ne.s32.totalorder %s1074, %s1075
    %p1084 = scmp.eq.s32.totalorder %s114, 0
    %p1085 = por %p1083, %p1084
    %p1086 = scmp.ne.s32.totalorder %s1074, %s1075
    %p1087 = scmp.eq.s32.totalorder %s115, 1
    %p1088 = por %p1086, %p1087
    %p1090 = scmp.ne.s32.totalorder %s1075, %s1089
    %p1091 = scmp.eq.s32.totalorder %s115, 0
    %p1092 = por %p1090, %p1091
    %s1094 = sadd.s32 %s1093, 1
    %p1097 = scmp.eq.s32.totalorder %s109, 1
    %p1098 = scmp.ne.s32.totalorder %s1093, %s1095
    %p1099 = scmp.eq.s32.totalorder %s109, 0
    %p1100 = por %p1098, %p1099
    %p1101 = scmp.ne.s32.totalorder %s1093, %s1095
    %p1102 = scmp.eq.s32.totalorder %s114, 1
    %p1103 = por %p1101, %p1102
    %p1104 = scmp.ne.s32.totalorder %s1095, %s1096
    %p1105 = scmp.eq.s32.totalorder %s114, 0
    %p1106 = por %p1104, %p1105
    %p1107 = scmp.ne.s32.totalorder %s1095, %s1096
    %p1108 = scmp.eq.s32.totalorder %s115, 1
    %p1109 = por %p1107, %p1108
    %p1111 = scmp.ne.s32.totalorder %s1096, %s1110
    %p1112 = scmp.eq.s32.totalorder %s115, 0
    %p1113 = por %p1111, %p1112
    %s1115 = sadd.s32 %s1114, 1
    %p1118 = scmp.eq.s32.totalorder %s109, 1
    %p1119 = scmp.ne.s32.totalorder %s1114, %s1116
    %p1120 = scmp.eq.s32.totalorder %s109, 0
    %p1121 = por %p1119, %p1120
    %p1122 = scmp.ne.s32.totalorder %s1114, %s1116
    %p1123 = scmp.eq.s32.totalorder %s114, 1
    %p1124 = por %p1122, %p1123
    %p1125 = scmp.ne.s32.totalorder %s1116, %s1117
    %p1126 = scmp.eq.s32.totalorder %s114, 0
    %p1127 = por %p1125, %p1126
    %p1128 = scmp.ne.s32.totalorder %s1116, %s1117
    %p1129 = scmp.eq.s32.totalorder %s115, 1
    %p1130 = por %p1128, %p1129
    %p1132 = scmp.ne.s32.totalorder %s1117, %s1131
    %p1133 = scmp.eq.s32.totalorder %s115, 0
    %p1134 = por %p1132, %p1133
    %s1136 = sadd.s32 %s1135, 1
    %p1139 = scmp.eq.s32.totalorder %s109, 1
    %p1140 = scmp.ne.s32.totalorder %s1135, %s1137
    %p1141 = scmp.eq.s32.totalorder %s109, 0
    %p1142 = por %p1140, %p1141
    %p1143 = scmp.ne.s32.totalorder %s1135, %s1137
    %p1144 = scmp.eq.s32.totalorder %s114, 1
    %p1145 = por %p1143, %p1144
    %p1146 = scmp.ne.s32.totalorder %s1137, %s1138
    %p1147 = scmp.eq.s32.totalorder %s114, 0
    %p1148 = por %p1146, %p1147
    %p1149 = scmp.ne.s32.totalorder %s1137, %s1138
    %p1150 = scmp.eq.s32.totalorder %s115, 1
    %p1151 = por %p1149, %p1150
    %p1153 = scmp.ne.s32.totalorder %s1138, %s1152
    %p1154 = scmp.eq.s32.totalorder %s115, 0
    %p1155 = por %p1153, %p1154
    %s1157 = sadd.s32 %s1156, 1
    %p1160 = scmp.eq.s32.totalorder %s109, 1
    %p1161 = scmp.ne.s32.totalorder %s1156, %s1158
    %p1162 = scmp.eq.s32.totalorder %s109, 0
    %p1163 = por %p1161, %p1162
    %p1164 = scmp.ne.s32.totalorder %s1156, %s1158
    %p1165 = scmp.eq.s32.totalorder %s114, 1
    %p1166 = por %p1164, %p1165
    %p1167 = scmp.ne.s32.totalorder %s1158, %s1159
    %p1168 = scmp.eq.s32.totalorder %s114, 0
    %p1169 = por %p1167, %p1168
    %p1170 = scmp.ne.s32.totalorder %s1158, %s1159
    %p1171 = scmp.eq.s32.totalorder %s115, 1
    %p1172 = por %p1170, %p1171
    %p1174 = scmp.ne.s32.totalorder %s1159, %s1173
    %p1175 = scmp.eq.s32.totalorder %s115, 0
    %p1176 = por %p1174, %p1175
    %s1178 = sadd.s32 %s1177, 1
    %p1181 = scmp.eq.s32.totalorder %s109, 1
    %p1182 = scmp.ne.s32.totalorder %s1177, %s1179
    %p1183 = scmp.eq.s32.totalorder %s109, 0
    %p1184 = por %p1182, %p1183
    %p1185 = scmp.ne.s32.totalorder %s1177, %s1179
    %p1186 = scmp.eq.s32.totalorder %s114, 1
    %p1187 = por %p1185, %p1186
    %p1188 = scmp.ne.s32.totalorder %s1179, %s1180
    %p1189 = scmp.eq.s32.totalorder %s114, 0
    %p1190 = por %p1188, %p1189
    %p1191 = scmp.ne.s32.totalorder %s1179, %s1180
    %p1192 = scmp.eq.s32.totalorder %s115, 1
    %p1193 = por %p1191, %p1192
    %p1195 = scmp.ne.s32.totalorder %s1180, %s1194
    %p1196 = scmp.eq.s32.totalorder %s115, 0
    %p1197 = por %p1195, %p1196
    %s1198 = ssub.s32 %s109, %s116
    %p1199 = scmp.eq.s32.totalorder %s1198, 0
    %s1201 = sadd.s32 %s1200, 1
    %s1202 = scalar_select %p1199, %s1200, %s1201
    %p1205 = pneg %p1199
    %p1206 = scmp.eq.s32.totalorder %s109, 1
    %p1207 = por %p1205, %p1206
    %p1208 = scmp.ne.s32.totalorder %s1200, %s1203
    %p1209 = scmp.eq.s32.totalorder %s109, 0
    %p1210 = por %p1208, %p1209
    %p1211 = scmp.ne.s32.totalorder %s1200, %s1203
    %p1212 = scmp.eq.s32.totalorder %s114, 1
    %p1213 = por %p1211, %p1212
    %p1214 = scmp.ne.s32.totalorder %s1203, %s1204
    %p1215 = scmp.eq.s32.totalorder %s114, 0
    %p1216 = por %p1214, %p1215
    %p1217 = scmp.ne.s32.totalorder %s1203, %s1204
    %p1218 = scmp.eq.s32.totalorder %s115, 1
    %p1219 = por %p1217, %p1218
    %p1221 = scmp.ne.s32.totalorder %s1204, %s1220
    %p1222 = scmp.eq.s32.totalorder %s115, 0
    %p1223 = por %p1221, %p1222
    %p1224 = scmp.le.s32.totalorder 1, %s109
    %p1225 = scmp.lt.s32.totalorder %s109, 3
    %p1226 = pnand %p1224, %p1225
    %p1227 = pneg %p1226
    // Predicated region
    $region9: #{dual_unet_cwf.1} parent=5 // pred_check
      _
    $region10: #{dual_unet_cwf.1} parent=5 // pred_check_branch
      %1229 = sbr.rel (%p1226) target = $region12
    $region11: #{dual_unet_cwf.1} parent=5 // pred_region
      %s1230 = ssub.s32 %s109, 1
      // Predicated region
      $region13: #{dual_unet_cwf.1} parent=11 // pred_check
        %p1231 = pneg %p182
      $region14: #{dual_unet_cwf.1} parent=11 // pred_check_branch
        %1233 = sbr.rel (%p1231) target = $region16
      $region15: #{dual_unet_cwf.1} parent=11 // pred_region
        _
      $region16: #{dual_unet_cwf.1} parent=11 // pred_fallthru
        _
      // Predicated region
      $region17: #{dual_unet_cwf.1} parent=11 // pred_check
        %p1234 = pneg %p203
      $region18: #{dual_unet_cwf.1} parent=11 // pred_check_branch
        %1236 = sbr.rel (%p1234) target = $region20
      $region19: #{dual_unet_cwf.1} parent=11 // pred_region
        _
      $region20: #{dual_unet_cwf.1} parent=11 // pred_fallthru
        _
      // Predicated region
      $region21: #{dual_unet_cwf.1} parent=11 // pred_check
        %p1237 = pneg %p224
      $region22: #{dual_unet_cwf.1} parent=11 // pred_check_branch
        %1239 = sbr.rel (%p1237) target = $region24
      $region23: #{dual_unet_cwf.1} parent=11 // pred_region
        _
      $region24: #{dual_unet_cwf.1} parent=11 // pred_fallthru
        _
      // Predicated region
      $region25: #{dual_unet_cwf.1} parent=11 // pred_check
        %p1240 = pneg %p245
      $region26: #{dual_unet_cwf.1} parent=11 // pred_check_branch
        %1242 = sbr.rel (%p1240) target = $region28
      $region27: #{dual_unet_cwf.1} parent=11 // pred_region
        _
      $region28: #{dual_unet_cwf.1} parent=11 // pred_fallthru
        _
      // Predicated region
      $region29: #{dual_unet_cwf.1} parent=11 // pred_check
        %p1243 = pneg %p266
      $region30: #{dual_unet_cwf.1} parent=11 // pred_check_branch
        %1245 = sbr.rel (%p1243) target = $region32
      $region31: #{dual_unet_cwf.1} parent=11 // pred_region
        _
      $region32: #{dual_unet_cwf.1} parent=11 // pred_fallthru
        _
      // Predicated region
      $region33: #{dual_unet_cwf.1} parent=11 // pred_check
        %p1246 = pneg %p287
      $region34: #{dual_unet_cwf.1} parent=11 // pred_check_branch
        %1248 = sbr.rel (%p1246) target = $region36
      $region35: #{dual_unet_cwf.1} parent=11 // pred_region
        _
      $region36: #{dual_unet_cwf.1} parent=11 // pred_fallthru
        _
      // Predicated region
      $region37: #{dual_unet_cwf.1} parent=11 // pred_check
        %p1249 = pneg %p308
      $region38: #{dual_unet_cwf.1} parent=11 // pred_check_branch
        %1251 = sbr.rel (%p1249) target = $region40
      $region39: #{dual_unet_cwf.1} parent=11 // pred_region
        _
      $region40: #{dual_unet_cwf.1} parent=11 // pred_fallthru
        _
      // Predicated region
      $region41: #{dual_unet_cwf.1} parent=11 // pred_check
        %p1252 = pneg %p329
      $region42: #{dual_unet_cwf.1} parent=11 // pred_check_branch
        %1254 = sbr.rel (%p1252) target = $region44
      $region43: #{dual_unet_cwf.1} parent=11 // pred_region
        _
      $region44: #{dual_unet_cwf.1} parent=11 // pred_fallthru
        _
      // Predicated region
      $region45: #{dual_unet_cwf.1} parent=11 // pred_check
        %p1255 = pneg %p350
      $region46: #{dual_unet_cwf.1} parent=11 // pred_check_branch
        %1257 = sbr.rel (%p1255) target = $region48
      $region47: #{dual_unet_cwf.1} parent=11 // pred_region
        _
      $region48: #{dual_unet_cwf.1} parent=11 // pred_fallthru
        _
      // Predicated region
      $region49: #{dual_unet_cwf.1} parent=11 // pred_check
        %p1258 = pneg %p371
      $region50: #{dual_unet_cwf.1} parent=11 // pred_check_branch
        %1260 = sbr.rel (%p1258) target = $region52
      $region51: #{dual_unet_cwf.1} parent=11 // pred_region
        _
      $region52: #{dual_unet_cwf.1} parent=11 // pred_fallthru
        _
      // Predicated region
      $region53: #{dual_unet_cwf.1} parent=11 // pred_check
        %p1261 = pneg %p392
      $region54: #{dual_unet_cwf.1} parent=11 // pred_check_branch
        %1263 = sbr.rel (%p1261) target = $region56
      $region55: #{dual_unet_cwf.1} parent=11 // pred_region
        _
      $region56: #{dual_unet_cwf.1} parent=11 // pred_fallthru
        _
      // Predicated region
      $region57: #{dual_unet_cwf.1} parent=11 // pred_check
        %p1264 = pneg %p413
      $region58: #{dual_unet_cwf.1} parent=11 // pred_check_branch
        %1266 = sbr.rel (%p1264) target = $region60
      $region59: #{dual_unet_cwf.1} parent=11 // pred_region
        _
      $region60: #{dual_unet_cwf.1} parent=11 // pred_fallthru
        _
      // Predicated region
      $region61: #{dual_unet_cwf.1} parent=11 // pred_check
        %p1267 = pneg %p434
      $region62: #{dual_unet_cwf.1} parent=11 // pred_check_branch
        %1269 = sbr.rel (%p1267) target = $region64
      $region63: #{dual_unet_cwf.1} parent=11 // pred_region
        _
      $region64: #{dual_unet_cwf.1} parent=11 // pred_fallthru
        _
      // Predicated region
      $region65: #{dual_unet_cwf.1} parent=11 // pred_check
        %p1270 = pneg %p455
      $region66: #{dual_unet_cwf.1} parent=11 // pred_check_branch
        %1272 = sbr.rel (%p1270) target = $region68
      $region67: #{dual_unet_cwf.1} parent=11 // pred_region
        _
      $region68: #{dual_unet_cwf.1} parent=11 // pred_fallthru
        _
      // Predicated region
      $region69: #{dual_unet_cwf.1} parent=11 // pred_check
        %p1273 = pneg %p476
      $region70: #{dual_unet_cwf.1} parent=11 // pred_check_branch
        %1275 = sbr.rel (%p1273) target = $region72
      $region71: #{dual_unet_cwf.1} parent=11 // pred_region
        _
      $region72: #{dual_unet_cwf.1} parent=11 // pred_fallthru
        _
      // Predicated region
      $region73: #{dual_unet_cwf.1} parent=11 // pred_check
        %p1276 = pneg %p497
      $region74: #{dual_unet_cwf.1} parent=11 // pred_check_branch
        %1278 = sbr.rel (%p1276) target = $region76
      $region75: #{dual_unet_cwf.1} parent=11 // pred_region
        _
      $region76: #{dual_unet_cwf.1} parent=11 // pred_fallthru
        _
      // Predicated region
      $region77: #{dual_unet_cwf.1} parent=11 // pred_check
        %p1279 = pneg %p518
      $region78: #{dual_unet_cwf.1} parent=11 // pred_check_branch
        %1281 = sbr.rel (%p1279) target = $region80
      $region79: #{dual_unet_cwf.1} parent=11 // pred_region
        _
      $region80: #{dual_unet_cwf.1} parent=11 // pred_fallthru
        _
      // Predicated region
      $region81: #{dual_unet_cwf.1} parent=11 // pred_check
        %p1282 = pneg %p539
      $region82: #{dual_unet_cwf.1} parent=11 // pred_check_branch
        %1284 = sbr.rel (%p1282) target = $region84
      $region83: #{dual_unet_cwf.1} parent=11 // pred_region
        _
      $region84: #{dual_unet_cwf.1} parent=11 // pred_fallthru
        _
      // Predicated region
      $region85: #{dual_unet_cwf.1} parent=11 // pred_check
        %p1285 = pneg %p560
      $region86: #{dual_unet_cwf.1} parent=11 // pred_check_branch
        %1287 = sbr.rel (%p1285) target = $region88
      $region87: #{dual_unet_cwf.1} parent=11 // pred_region
        _
      $region88: #{dual_unet_cwf.1} parent=11 // pred_fallthru
        _
      // Predicated region
      $region89: #{dual_unet_cwf.1} parent=11 // pred_check
        %p1288 = pneg %p581
      $region90: #{dual_unet_cwf.1} parent=11 // pred_check_branch
        %1290 = sbr.rel (%p1288) target = $region92
      $region91: #{dual_unet_cwf.1} parent=11 // pred_region
        _
      $region92: #{dual_unet_cwf.1} parent=11 // pred_fallthru
        _
      // Predicated region
      $region93: #{dual_unet_cwf.1} parent=11 // pred_check
        %p1291 = pneg %p602
      $region94: #{dual_unet_cwf.1} parent=11 // pred_check_branch
        %1293 = sbr.rel (%p1291) target = $region96
      $region95: #{dual_unet_cwf.1} parent=11 // pred_region
        _
      $region96: #{dual_unet_cwf.1} parent=11 // pred_fallthru
        _
      // Predicated region
      $region97: #{dual_unet_cwf.1} parent=11 // pred_check
        %p1294 = pneg %p623
      $region98: #{dual_unet_cwf.1} parent=11 // pred_check_branch
        %1296 = sbr.rel (%p1294) target = $region100
      $region99: #{dual_unet_cwf.1} parent=11 // pred_region
        _
      $region100: #{dual_unet_cwf.1} parent=11 // pred_fallthru
        _
      // Predicated region
      $region101: #{dual_unet_cwf.1} parent=11 // pred_check
        %p1297 = pneg %p644
      $region102: #{dual_unet_cwf.1} parent=11 // pred_check_branch
        %1299 = sbr.rel (%p1297) target = $region104
      $region103: #{dual_unet_cwf.1} parent=11 // pred_region
        _
      $region104: #{dual_unet_cwf.1} parent=11 // pred_fallthru
        _
      // Predicated region
      $region105: #{dual_unet_cwf.1} parent=11 // pred_check
        %p1300 = pneg %p665
      $region106: #{dual_unet_cwf.1} parent=11 // pred_check_branch
        %1302 = sbr.rel (%p1300) target = $region108
      $region107: #{dual_unet_cwf.1} parent=11 // pred_region
        _
      $region108: #{dual_unet_cwf.1} parent=11 // pred_fallthru
        _
      // Predicated region
      $region109: #{dual_unet_cwf.1} parent=11 // pred_check
        %p1303 = pneg %p686
      $region110: #{dual_unet_cwf.1} parent=11 // pred_check_branch
        %1305 = sbr.rel (%p1303) target = $region112
      $region111: #{dual_unet_cwf.1} parent=11 // pred_region
        _
      $region112: #{dual_unet_cwf.1} parent=11 // pred_fallthru
        _
      // Predicated region
      $region113: #{dual_unet_cwf.1} parent=11 // pred_check
        %p1306 = pneg %p707
      $region114: #{dual_unet_cwf.1} parent=11 // pred_check_branch
        %1308 = sbr.rel (%p1306) target = $region116
      $region115: #{dual_unet_cwf.1} parent=11 // pred_region
        _
      $region116: #{dual_unet_cwf.1} parent=11 // pred_fallthru
        _
      // Predicated region
      $region117: #{dual_unet_cwf.1} parent=11 // pred_check
        %p1309 = pneg %p728
      $region118: #{dual_unet_cwf.1} parent=11 // pred_check_branch
        %1311 = sbr.rel (%p1309) target = $region120
      $region119: #{dual_unet_cwf.1} parent=11 // pred_region
        _
      $region120: #{dual_unet_cwf.1} parent=11 // pred_fallthru
        _
      // Predicated region
      $region121: #{dual_unet_cwf.1} parent=11 // pred_check
        %p1312 = pneg %p749
      $region122: #{dual_unet_cwf.1} parent=11 // pred_check_branch
        %1314 = sbr.rel (%p1312) target = $region124
      $region123: #{dual_unet_cwf.1} parent=11 // pred_region
        _
      $region124: #{dual_unet_cwf.1} parent=11 // pred_fallthru
        _
      // Predicated region
      $region125: #{dual_unet_cwf.1} parent=11 // pred_check
        %p1315 = pneg %p770
      $region126: #{dual_unet_cwf.1} parent=11 // pred_check_branch
        %1317 = sbr.rel (%p1315) target = $region128
      $region127: #{dual_unet_cwf.1} parent=11 // pred_region
        _
      $region128: #{dual_unet_cwf.1} parent=11 // pred_fallthru
        _
      // Predicated region
      $region129: #{dual_unet_cwf.1} parent=11 // pred_check
        %p1318 = pneg %p791
      $region130: #{dual_unet_cwf.1} parent=11 // pred_check_branch
        %1320 = sbr.rel (%p1318) target = $region132
      $region131: #{dual_unet_cwf.1} parent=11 // pred_region
        _
      $region132: #{dual_unet_cwf.1} parent=11 // pred_fallthru
        _
      // Predicated region
      $region133: #{dual_unet_cwf.1} parent=11 // pred_check
        %p1321 = pneg %p812
      $region134: #{dual_unet_cwf.1} parent=11 // pred_check_branch
        %1323 = sbr.rel (%p1321) target = $region136
      $region135: #{dual_unet_cwf.1} parent=11 // pred_region
        _
      $region136: #{dual_unet_cwf.1} parent=11 // pred_fallthru
        _
      // Predicated region
      $region137: #{dual_unet_cwf.1} parent=11 // pred_check
        %p1324 = pneg %p833
      $region138: #{dual_unet_cwf.1} parent=11 // pred_check_branch
        %1326 = sbr.rel (%p1324) target = $region140
      $region139: #{dual_unet_cwf.1} parent=11 // pred_region
        _
      $region140: #{dual_unet_cwf.1} parent=11 // pred_fallthru
        _
      // Predicated region
      $region141: #{dual_unet_cwf.1} parent=11 // pred_check
        %p1327 = pneg %p854
      $region142: #{dual_unet_cwf.1} parent=11 // pred_check_branch
        %1329 = sbr.rel (%p1327) target = $region144
      $region143: #{dual_unet_cwf.1} parent=11 // pred_region
        _
      $region144: #{dual_unet_cwf.1} parent=11 // pred_fallthru
        _
      // Predicated region
      $region145: #{dual_unet_cwf.1} parent=11 // pred_check
        %p1330 = pneg %p875
      $region146: #{dual_unet_cwf.1} parent=11 // pred_check_branch
        %1332 = sbr.rel (%p1330) target = $region148
      $region147: #{dual_unet_cwf.1} parent=11 // pred_region
        _
      $region148: #{dual_unet_cwf.1} parent=11 // pred_fallthru
        _
      // Predicated region
      $region149: #{dual_unet_cwf.1} parent=11 // pred_check
        %p1333 = pneg %p896
      $region150: #{dual_unet_cwf.1} parent=11 // pred_check_branch
        %1335 = sbr.rel (%p1333) target = $region152
      $region151: #{dual_unet_cwf.1} parent=11 // pred_region
        _
      $region152: #{dual_unet_cwf.1} parent=11 // pred_fallthru
        _
      // Predicated region
      $region153: #{dual_unet_cwf.1} parent=11 // pred_check
        %p1336 = pneg %p917
      $region154: #{dual_unet_cwf.1} parent=11 // pred_check_branch
        %1338 = sbr.rel (%p1336) target = $region156
      $region155: #{dual_unet_cwf.1} parent=11 // pred_region
        _
      $region156: #{dual_unet_cwf.1} parent=11 // pred_fallthru
        _
      // Predicated region
      $region157: #{dual_unet_cwf.1} parent=11 // pred_check
        %p1339 = pneg %p938
      $region158: #{dual_unet_cwf.1} parent=11 // pred_check_branch
        %1341 = sbr.rel (%p1339) target = $region160
      $region159: #{dual_unet_cwf.1} parent=11 // pred_region
        _
      $region160: #{dual_unet_cwf.1} parent=11 // pred_fallthru
        _
      // Predicated region
      $region161: #{dual_unet_cwf.1} parent=11 // pred_check
        %p1342 = pneg %p959
      $region162: #{dual_unet_cwf.1} parent=11 // pred_check_branch
        %1344 = sbr.rel (%p1342) target = $region164
      $region163: #{dual_unet_cwf.1} parent=11 // pred_region
        _
      $region164: #{dual_unet_cwf.1} parent=11 // pred_fallthru
        _
      // Predicated region
      $region165: #{dual_unet_cwf.1} parent=11 // pred_check
        %p1345 = pneg %p980
      $region166: #{dual_unet_cwf.1} parent=11 // pred_check_branch
        %1347 = sbr.rel (%p1345) target = $region168
      $region167: #{dual_unet_cwf.1} parent=11 // pred_region
        _
      $region168: #{dual_unet_cwf.1} parent=11 // pred_fallthru
        _
      // Predicated region
      $region169: #{dual_unet_cwf.1} parent=11 // pred_check
        %p1348 = pneg %p1001
      $region170: #{dual_unet_cwf.1} parent=11 // pred_check_branch
        %1350 = sbr.rel (%p1348) target = $region172
      $region171: #{dual_unet_cwf.1} parent=11 // pred_region
        _
      $region172: #{dual_unet_cwf.1} parent=11 // pred_fallthru
        _
      // Predicated region
      $region173: #{dual_unet_cwf.1} parent=11 // pred_check
        %p1351 = pneg %p1022
      $region174: #{dual_unet_cwf.1} parent=11 // pred_check_branch
        %1353 = sbr.rel (%p1351) target = $region176
      $region175: #{dual_unet_cwf.1} parent=11 // pred_region
        _
      $region176: #{dual_unet_cwf.1} parent=11 // pred_fallthru
        _
      // Predicated region
      $region177: #{dual_unet_cwf.1} parent=11 // pred_check
        %p1354 = pneg %p1043
      $region178: #{dual_unet_cwf.1} parent=11 // pred_check_branch
        %1356 = sbr.rel (%p1354) target = $region180
      $region179: #{dual_unet_cwf.1} parent=11 // pred_region
        _
      $region180: #{dual_unet_cwf.1} parent=11 // pred_fallthru
        _
      // Predicated region
      $region181: #{dual_unet_cwf.1} parent=11 // pred_check
        %p1357 = pneg %p1064
      $region182: #{dual_unet_cwf.1} parent=11 // pred_check_branch
        %1359 = sbr.rel (%p1357) target = $region184
      $region183: #{dual_unet_cwf.1} parent=11 // pred_region
        _
      $region184: #{dual_unet_cwf.1} parent=11 // pred_fallthru
        _
      // Predicated region
      $region185: #{dual_unet_cwf.1} parent=11 // pred_check
        %p1360 = pneg %p1085
      $region186: #{dual_unet_cwf.1} parent=11 // pred_check_branch
        %1362 = sbr.rel (%p1360) target = $region188
      $region187: #{dual_unet_cwf.1} parent=11 // pred_region
        _
      $region188: #{dual_unet_cwf.1} parent=11 // pred_fallthru
        _
      // Predicated region
      $region189: #{dual_unet_cwf.1} parent=11 // pred_check
        %p1363 = pneg %p1106
      $region190: #{dual_unet_cwf.1} parent=11 // pred_check_branch
        %1365 = sbr.rel (%p1363) target = $region192
      $region191: #{dual_unet_cwf.1} parent=11 // pred_region
        _
      $region192: #{dual_unet_cwf.1} parent=11 // pred_fallthru
        _
      // Predicated region
      $region193: #{dual_unet_cwf.1} parent=11 // pred_check
        %p1366 = pneg %p1127
      $region194: #{dual_unet_cwf.1} parent=11 // pred_check_branch
        %1368 = sbr.rel (%p1366) target = $region196
      $region195: #{dual_unet_cwf.1} parent=11 // pred_region
        _
      $region196: #{dual_unet_cwf.1} parent=11 // pred_fallthru
        _
      // Predicated region
      $region197: #{dual_unet_cwf.1} parent=11 // pred_check
        %p1369 = pneg %p1148
      $region198: #{dual_unet_cwf.1} parent=11 // pred_check_branch
        %1371 = sbr.rel (%p1369) target = $region200
      $region199: #{dual_unet_cwf.1} parent=11 // pred_region
        _
      $region200: #{dual_unet_cwf.1} parent=11 // pred_fallthru
        _
      // Predicated region
      $region201: #{dual_unet_cwf.1} parent=11 // pred_check
        %p1372 = pneg %p1169
      $region202: #{dual_unet_cwf.1} parent=11 // pred_check_branch
        %1374 = sbr.rel (%p1372) target = $region204
      $region203: #{dual_unet_cwf.1} parent=11 // pred_region
        _
      $region204: #{dual_unet_cwf.1} parent=11 // pred_fallthru
        _
      // Predicated region
      $region205: #{dual_unet_cwf.1} parent=11 // pred_check
        %p1375 = pneg %p1190
      $region206: #{dual_unet_cwf.1} parent=11 // pred_check_branch
        %1377 = sbr.rel (%p1375) target = $region208
      $region207: #{dual_unet_cwf.1} parent=11 // pred_region
        _
      $region208: #{dual_unet_cwf.1} parent=11 // pred_fallthru
        _
    $region12: #{dual_unet_cwf.1} parent=5 // pred_fallthru
      _
    %p1378 = scmp.lt.s32.totalorder %s109, 2
    // Predicated region
    $region209: #{dual_unet_cwf.1} parent=5 // pred_check
      %p1379 = pneg %p1378
    $region210: #{dual_unet_cwf.1} parent=5 // pred_check_branch
      %1381 = sbr.rel (%p1379) target = $region212
    $region211: #{dual_unet_cwf.1} parent=5 // pred_region
      // Predicated region
      $region213: #{dual_unet_cwf.1} parent=211 // pred_check
        %p1382 = pneg %p129
      $region214: #{dual_unet_cwf.1} parent=211 // pred_check_branch
        %1384 = sbr.rel (%p1382) target = $region216
      $region215: #{dual_unet_cwf.1} parent=211 // pred_region
        %p1385 = scmp.lt.s32.totalorder %s109, 1
        %s1386 = scalar_select %p1385, %s109, 1
        %s1387 = smul.addr %s1386, 2
        %s1388 = smul.addr %s1387, 8
        %s1389 = scalar_lea.vmem %s1, %s1388
      $region216: #{dual_unet_cwf.1} parent=211 // pred_fallthru
        _
      // Predicated region
      $region217: #{dual_unet_cwf.1} parent=211 // pred_check
        %p1390 = pneg %p155
      $region218: #{dual_unet_cwf.1} parent=211 // pred_check_branch
        %1392 = sbr.rel (%p1390) target = $region220
      $region219: #{dual_unet_cwf.1} parent=211 // pred_region
        %p1393 = scmp.lt.s32.totalorder %s109, 1
        %s1394 = scalar_select %p1393, %s109, 1
        %s1395 = smul.addr %s1394, 2
        %s1396 = smul.addr %s1395, 8
        %s1397 = scalar_lea.vmem %s3, %s1396
      $region220: #{dual_unet_cwf.1} parent=211 // pred_fallthru
        _
    $region212: #{dual_unet_cwf.1} parent=5 // pred_fallthru
      _
    %p1398 = scmp.le.s32.totalorder 1, %s109
    %p1399 = scmp.lt.s32.totalorder %s109, 3
    %p1400 = pnand %p1398, %p1399
    %p1401 = pneg %p1400
    // Predicated region
    $region221: #{dual_unet_cwf.1} parent=5 // pred_check
      _
    $region222: #{dual_unet_cwf.1} parent=5 // pred_check_branch
      %1403 = sbr.rel (%p1400) target = $region224
    $region223: #{dual_unet_cwf.1} parent=5 // pred_region
      %s1404 = ssub.s32 %s109, 1
      %p1405 = scmp.lt.s32.totalorder %s114, 1
      %s1406 = scalar_select %p1405, %s114, 1
      %s1407 = smul.addr %s1406, 2
      %s1408 = smul.addr %s1407, 8
      %s1409 = scalar_lea.vmem %s1, %s1408
      %p1410 = pneg %p135
      %p1411 = pneg %p132
      %p1412 = scmp.lt.s32.totalorder %s114, 1
      %s1413 = scalar_select %p1412, %s114, 1
      %s1414 = smul.addr %s1413, 2
      %s1415 = smul.addr %s1414, 8
      %s1416 = scalar_lea.vmem %s3, %s1415
      %p1417 = pneg %p161
      %p1418 = pneg %p158
      %p1419 = pneg %p182
      %p1420 = pneg %p179
      %p1421 = pneg %p203
      %p1422 = pneg %p200
      %p1423 = pneg %p224
      %p1424 = pneg %p221
      %p1425 = pneg %p245
      %p1426 = pneg %p242
      %p1427 = pneg %p266
      %p1428 = pneg %p263
      %p1429 = pneg %p287
      %p1430 = pneg %p284
      %p1431 = pneg %p308
      %p1432 = pneg %p305
      %p1433 = pneg %p329
      %p1434 = pneg %p326
      %p1435 = pneg %p350
      %p1436 = pneg %p347
      %p1437 = pneg %p371
      %p1438 = pneg %p368
      %p1439 = pneg %p392
      %p1440 = pneg %p389
      %p1441 = pneg %p413
      %p1442 = pneg %p410
      %p1443 = pneg %p434
      %p1444 = pneg %p431
      %p1445 = pneg %p455
      %p1446 = pneg %p452
      %p1447 = pneg %p476
      %p1448 = pneg %p473
      %p1449 = pneg %p497
      %p1450 = pneg %p494
      %p1451 = pneg %p518
      %p1452 = pneg %p515
      %p1453 = pneg %p539
      %p1454 = pneg %p536
      %p1455 = pneg %p560
      %p1456 = pneg %p557
      %p1457 = pneg %p581
      %p1458 = pneg %p578
      %p1459 = pneg %p602
      %p1460 = pneg %p599
      %p1461 = pneg %p623
      %p1462 = pneg %p620
      %p1463 = pneg %p644
      %p1464 = pneg %p641
      %p1465 = pneg %p665
      %p1466 = pneg %p662
      %p1467 = pneg %p686
      %p1468 = pneg %p683
      %p1469 = pneg %p707
      %p1470 = pneg %p704
      %p1471 = pneg %p728
      %p1472 = pneg %p725
      %p1473 = pneg %p749
      %p1474 = pneg %p746
      %p1475 = pneg %p770
      %p1476 = pneg %p767
      %p1477 = pneg %p791
      %p1478 = pneg %p788
      %p1479 = pneg %p812
      %p1480 = pneg %p809
      %p1481 = pneg %p833
      %p1482 = pneg %p830
      %p1483 = pneg %p854
      %p1484 = pneg %p851
      %p1485 = pneg %p875
      %p1486 = pneg %p872
      %p1487 = pneg %p896
      %p1488 = pneg %p893
      %p1489 = pneg %p917
      %p1490 = pneg %p914
      %p1491 = pneg %p938
      %p1492 = pneg %p935
      %p1493 = pneg %p959
      %p1494 = pneg %p956
      %p1495 = pneg %p980
      %p1496 = pneg %p977
      %p1497 = pneg %p1001
      %p1498 = pneg %p998
      %p1499 = pneg %p1022
      %p1500 = pneg %p1019
      %p1501 = pneg %p1043
      %p1502 = pneg %p1040
      %p1503 = pneg %p1064
      %p1504 = pneg %p1061
      %p1505 = pneg %p1085
      %p1506 = pneg %p1082
      %p1507 = pneg %p1106
      %p1508 = pneg %p1103
      %p1509 = pneg %p1127
      %p1510 = pneg %p1124
      %p1511 = pneg %p1148
      %p1512 = pneg %p1145
      %p1513 = pneg %p1169
      %p1514 = pneg %p1166
      %p1515 = pneg %p1190
      %p1516 = pneg %p1187
      %p1517 = pneg %p1216
      %p1518 = pneg %p1213
      %p1519 = scmp.lt.s32.totalorder %s114, 1
      %s1520 = scalar_select %p1519, %s114, 1
      %s1521 = smul.addr %s1520, 2
      %s1522 = smul.addr %s1521, 8
      %s1523 = scalar_lea.vmem %s103, %s1522
      %p1524 = scmp.lt.s32.totalorder %s114, 1
      %s1525 = scalar_select %p1524, %s114, 1
      %s1526 = smul.addr %s1525, 2
      %s1527 = smul.addr %s1526, 8
      %s1528 = scalar_lea.vmem %s1, %s1527
      %p1529 = scmp.lt.s32.totalorder %s114, 1
      %s1530 = scalar_select %p1529, %s114, 1
      %s1531 = smul.addr %s1530, 2
      %s1532 = smul.addr %s1531, 8
      %s1533 = scalar_lea.vmem %s3, %s1532
      %p1534 = scmp.lt.s32.totalorder %s114, 1
      %s1535 = scalar_select %p1534, %s114, 1
      %s1536 = smul.addr %s1535, 2
      %s1537 = smul.addr %s1536, 8
      %s1538 = scalar_lea.vmem %s103, %s1537
      %v1540 = vld [vmem:[%s77] sm:$0xff]
      %v1541 = vld [vmem:[%s77 + $0x8] sm:$0xff]
      %v1542 = vld [vmem:[%s77 + $0x10] sm:$0x1]
      %v1543 = vld [vmem:[%s77 + $0x18] sm:$0x1]
      %v1544 = vld [vmem:[%s79] sm:$0xff]
      %v1545 = vld [vmem:[%s79 + $0x8] sm:$0x1]
      %v1546 = vld [vmem:[%s81] sm:$0xff]
      %v1547 = vld [vmem:[%s81 + $0x8] sm:$0x1]
      %v1548 = vld [vmem:[%s83] sm:$0xff]
      %v1549 = vld [vmem:[%s83 + $0x8] sm:$0x1]
      %v1550 = vld [vmem:[%s85] sm:$0xff]
      %v1551 = vld [vmem:[%s85 + $0x8] sm:$0x1]
      %v1552 = vld [vmem:[%s1528] sm:$0xff]
      %v1553 = vld [vmem:[%s1528 + $0x8] sm:$0xff]
      %v1554 = vld [vmem:[%s1533] sm:$0xff]
      %v1555 = vld [vmem:[%s1533 + $0x8] sm:$0xff]
      %1558 = vrot.lane.b32.xlu0 %v1552, 17
      %v1559 = vpop.permute.xlu0 %1558
      %1560 = vrot.lane.b32.xlu0 %v1553, 17
      %v1561 = vpop.permute.xlu0 %1560
      %vm1562 = vcmask 138240
      %v1563 = vsel %vm1562, %v1559, %v1561
      %v1567 = vsel %vm1562, 0.0, %v1559
      %v1568 = vsel %vm1562, %v1561, 0.0
      %v1569 = vlaneseq
      %v1570 = vshrl.u32 %v1569, 7
      %v1571 = vsub.s32 0, %v1570
      %v1572 = vrot.slane %v1540, %v1571
      %v1573 = vlaneseq
      %v1574 = vshrl.u32 %v1573, 7
      %v1575 = vsub.s32 0, %v1574
      %v1576 = vrot.slane %v1541, %v1575
      %v1577 = vmul.f32 %v1567, %v1572
      %v1578 = vmul.f32 %v1563, %v1576
      %1579 = vrot.lane.b32.xlu0 %v1552, 16
      %v1580 = vpop.permute.xlu0 %1579
      %1581 = vrot.lane.b32.xlu0 %v1553, 16
      %v1582 = vpop.permute.xlu0 %1581
      %vm1583 = vcmask 130048
      %v1584 = vsel %vm1583, %v1580, %v1582
      %v1588 = vsel %vm1583, 0.0, %v1580
      %v1589 = vsel %vm1583, %v1582, 0.0
      %v1590 = vlaneseq
      %v1591 = vshrl.u32 %v1590, 7
      %v1592 = vsub.s32 1, %v1591
      %v1593 = vrot.slane %v1540, %v1592
      %v1594 = vlaneseq
      %v1595 = vshrl.u32 %v1594, 7
      %v1596 = vsub.s32 1, %v1595
      %v1597 = vrot.slane %v1541, %v1596
      %v1598 = vmul.f32 %v1588, %v1593
      %v1599 = vmul.f32 %v1584, %v1597
      %1600 = vrot.lane.b32.xlu0 %v1552, 15
      %v1601 = vpop.permute.xlu0 %1600
      %1602 = vrot.lane.b32.xlu0 %v1553, 15
      %v1603 = vpop.permute.xlu0 %1602
      %vm1604 = vcmask 121856
      %v1605 = vsel %vm1604, %v1601, %v1603
      %v1609 = vsel %vm1604, 0.0, %v1601
      %v1610 = vsel %vm1604, %v1603, 0.0
      %v1611 = vlaneseq
      %v1612 = vshrl.u32 %v1611, 7
      %v1613 = vsub.s32 2, %v1612
      %v1614 = vrot.slane %v1540, %v1613
      %v1615 = vlaneseq
      %v1616 = vshrl.u32 %v1615, 7
      %v1617 = vsub.s32 2, %v1616
      %v1618 = vrot.slane %v1541, %v1617
      %v1619 = vmul.f32 %v1609, %v1614
      %v1620 = vmul.f32 %v1605, %v1618
      %1621 = vrot.lane.b32.xlu0 %v1552, 1
      %v1622 = vpop.permute.xlu0 %1621
      %1623 = vrot.lane.b32.xlu0 %v1553, 1
      %v1624 = vpop.permute.xlu0 %1623
      %vm1625 = vcmask 7168
      %v1626 = vsel %vm1625, %v1622, %v1624
      %v1630 = vsel %vm1625, 0.0, %v1622
      %v1631 = vsel %vm1625, %v1624, 0.0
      %v1632 = vlaneseq
      %v1633 = vshrl.u32 %v1632, 7
      %v1634 = vsub.s32 3, %v1633
      %v1635 = vrot.slane %v1540, %v1634
      %v1636 = vlaneseq
      %v1637 = vshrl.u32 %v1636, 7
      %v1638 = vsub.s32 3, %v1637
      %v1639 = vrot.slane %v1541, %v1638
      %v1640 = vmul.f32 %v1630, %v1635
      %v1641 = vmul.f32 %v1626, %v1639
      %v1642 = vlaneseq
      %v1643 = vshrl.u32 %v1642, 7
      %v1644 = vsub.s32 5, %v1643
      %v1645 = vrot.slane %v1540, %v1644
      %v1646 = vlaneseq
      %v1647 = vshrl.u32 %v1646, 7
      %v1648 = vsub.s32 5, %v1647
      %v1649 = vrot.slane %v1541, %v1648
      %1652 = vrot.lane.b32.xlu0 %v1645, 2
      %v1653 = vpop.permute.xlu0 %1652
      %1654 = vrot.lane.b32.xlu0 %v1649, 2
      %v1655 = vpop.permute.xlu0 %1654
      %vm1656 = vcmask 15360
      %v1657 = vsel %vm1656, %v1653, %v1655
      %v1661 = vmul.f32 %v1630, %v1653
      %v1662 = vmul.f32 %v1626, %v1657
      %v1663 = vmul.f32 %v1631, %v1655
      %v1664 = vlaneseq
      %v1665 = vshrl.u32 %v1664, 7
      %v1666 = vsub.s32 6, %v1665
      %v1667 = vrot.slane %v1540, %v1666
      %v1668 = vlaneseq
      %v1669 = vshrl.u32 %v1668, 7
      %v1670 = vsub.s32 6, %v1669
      %v1671 = vrot.slane %v1541, %v1670
      %1674 = vrot.lane.b32.xlu0 %v1667, 30
      %v1675 = vpop.permute.xlu0 %1674
      %1676 = vrot.lane.b32.xlu0 %v1671, 30
      %v1677 = vpop.permute.xlu0 %1676
      %vm1678 = vcmask 244736
      %v1679 = vsel %vm1678, %v1675, %v1677
      %v1683 = vmul.f32 %v1609, %v1675
      %v1684 = vmul.f32 %v1605, %v1679
      %v1685 = vmul.f32 %v1610, %v1677
      %v1686 = vlaneseq
      %v1687 = vshrl.u32 %v1686, 7
      %v1688 = vsub.s32 7, %v1687
      %v1689 = vrot.slane %v1540, %v1688
      %v1690 = vlaneseq
      %v1691 = vshrl.u32 %v1690, 7
      %v1692 = vsub.s32 7, %v1691
      %v1693 = vrot.slane %v1541, %v1692
      %1696 = vrot.lane.b32.xlu0 %v1689, 32
      %v1697 = vpop.permute.xlu0 %1696
      %1698 = vrot.lane.b32.xlu0 %v1693, 32
      %v1699 = vpop.permute.xlu0 %1698
      %vm1700 = vcmask 261120
      %v1701 = vsel %vm1700, %v1697, %v1699
      %v1705 = vmul.f32 %v1588, %v1697
      %v1706 = vmul.f32 %v1584, %v1701
      %v1707 = vmul.f32 %v1589, %v1699
      %v1708 = vlaneseq
      %v1709 = vshrl.u32 %v1708, 7
      %v1710 = vsub.s32 0, %v1709
      %v1711 = vrot.slane %v1542, %v1710
      %v1712 = vlaneseq
      %v1713 = vshrl.u32 %v1712, 7
      %v1714 = vsub.s32 0, %v1713
      %v1715 = vrot.slane %v1543, %v1714
      %1718 = vrot.lane.b32.xlu0 %v1711, 34
      %v1719 = vpop.permute.xlu0 %1718
      %1720 = vrot.lane.b32.xlu0 %v1715, 34
      %v1721 = vpop.permute.xlu0 %1720
      %vm1722 = vcmask 277504
      %v1723 = vsel %vm1722, %v1719, %v1721
      %v1727 = vmul.f32 %v1567, %v1719
      %v1728 = vmul.f32 %v1563, %v1723
      %v1729 = vmul.f32 %v1568, %v1721
      %1733 = vrot.lane.b32.xlu0 %v1661, 126
      %v1734 = vpop.permute.xlu0 %1733
      %1735 = vrot.lane.b32.xlu0 %v1662, 126
      %v1736 = vpop.permute.xlu0 %1735
      %1737 = vrot.lane.b32.xlu0 %v1663, 126
      %v1738 = vpop.permute.xlu0 %1737
      %vm1739 = vcmask 1031168
      %v1740 = vsel %vm1739, %v1734, %v1736
      %v1741 = vsel %vm1739, %v1736, %v1738
      %1747 = vrot.lane.b32.xlu0 %v1683, 98
      %v1748 = vpop.permute.xlu0 %1747
      %1749 = vrot.lane.b32.xlu0 %v1684, 98
      %v1750 = vpop.permute.xlu0 %1749
      %1751 = vrot.lane.b32.xlu0 %v1685, 98
      %v1752 = vpop.permute.xlu0 %1751
      %vm1753 = vcmask 801792
      %v1754 = vsel %vm1753, %v1748, %v1750
      %v1755 = vsel %vm1753, %v1750, %v1752
      %1761 = vrot.lane.b32.xlu0 %v1705, 96
      %v1762 = vpop.permute.xlu0 %1761
      %1763 = vrot.lane.b32.xlu0 %v1706, 96
      %v1764 = vpop.permute.xlu0 %1763
      %1765 = vrot.lane.b32.xlu0 %v1707, 96
      %v1766 = vpop.permute.xlu0 %1765
      %vm1767 = vcmask 785408
      %v1768 = vsel %vm1767, %v1762, %v1764
      %v1769 = vsel %vm1767, %v1764, %v1766
      %1775 = vrot.lane.b32.xlu0 %v1727, 94
      %v1776 = vpop.permute.xlu0 %1775
      %1777 = vrot.lane.b32.xlu0 %v1728, 94
      %v1778 = vpop.permute.xlu0 %1777
      %1779 = vrot.lane.b32.xlu0 %v1729, 94
      %v1780 = vpop.permute.xlu0 %1779
      %vm1781 = vcmask 769024
      %v1782 = vsel %vm1781, %v1776, %v1778
      %v1783 = vsel %vm1781, %v1778, %v1780
      %v1786 = vpack.c.bf16 %v1598, %v1577
      %v1787 = vpack.c.bf16 %v1599, %v1578
      %v1788 = vpack.c.bf16 %v1640, %v1619
      %v1789 = vpack.c.bf16 %v1641, %v1620
      %v1790 = vpack.c.bf16 %v1740, %v1552
      %v1791 = vpack.c.bf16 %v1741, %v1553
      %v1792 = vpack.c.bf16 %v1768, %v1754
      %v1793 = vpack.c.bf16 %v1769, %v1755
      %v1794 = vpack.c.bf16 %v1782, %v1782
      %v1795 = vpack.c.bf16 %v1783, %v1783
      %v1796 = vld [vmem:[%s5] sm:$0xf]
      %v1797 = vld [vmem:[%s7] sm:$0xff]
      %1799 = vset.pattern.permute.xlu0 0
      %1800 = vperm.xlu0 %1799, %v1797
      %v1801 = vpop.permute.xlu0 %1800
      %vm1803 = vcmask 588800
      %v1805 = vsel %vm1803, %v1796, 0
      %vm1807 = vcmask 1043456
      %v1809 = vsel %vm1807, %v1794, 0
      %v1812 = vsel %vm1807, %v1795, 0
      %1814 = vmatprep.subr.bf16.mxu0 0
      %1815 = vmatpush1.bf16.msra.mxu0 0
      %1816 = vmatprep.subr.bf16.mxu0 0
      %1817 = vmatpush1.bf16.msra.mxu0 0
      %1818 = vmatprep.subr.bf16.mxu0 0
      %1819 = vmatpush1.bf16.msra.mxu0 0
      %1820 = vmatprep.subr.bf16.mxu0 %v1812
      %1821 = vmatpush1.bf16.msra.mxu0 %v1809
      %1822 = vmatprep.subr.bf16.mxu0 %v1793
      %1823 = vmatpush1.bf16.msra.mxu0 %v1792
      %1824 = vmatprep.subr.bf16.mxu0 %v1791
      %1825 = vmatpush1.bf16.msra.mxu0 %v1790
      %1826 = vmatprep.subr.bf16.mxu0 %v1789
      %1827 = vmatpush1.bf16.msra.mxu0 %v1788
      %1828 = vmatprep.subr.bf16.mxu0 %v1787
      %1829 = vmatpush1.bf16.msra.mxu0 %v1786
      %1830 = vmatprep.subr.bf16.mxu0 0
      %1831 = vmatpush2.bf16.msra.mxu0 0
      %1832 = vmatprep.subr.bf16.mxu0 0
      %1833 = vmatpush2.bf16.msra.mxu0 0
      %1834 = vmatprep.subr.bf16.mxu0 0
      %1835 = vmatpush2.bf16.msra.mxu0 0
      %1836 = vmatprep.subr.bf16.mxu0 0
      %1837 = vmatpush2.bf16.msra.mxu0 0
      %1838 = vmatprep.subr.bf16.mxu0 0
      %1839 = vmatpush2.bf16.msra.mxu0 0
      %1840 = vmatprep.subr.bf16.mxu0 0
      %1841 = vmatpush2.bf16.msra.mxu0 0
      %1842 = vmatprep.subr.bf16.mxu0 0
      %1843 = vmatpush2.bf16.msra.mxu0 0
      %1844 = vmatprep.subr.bf16.mxu0 0
      %1845 = vmatpush2.bf16.msra.mxu0 0
      %1846 = vmatprep.mubr.bf16.mxu0 0
      %1847 = vmatmul.mubr.bf16.gmra.mxu0 %v1805
      %v1848 = vpop.f32.mrf.mxu0
      %v1849 = vadd.f32 %v1801, %v1848
      %v1850 = vpop.f32.mrf.mxu0
      %v1851 = vadd.f32 %v1801, %v1850
      %v1852 = vpop.f32.mrf.mxu0
      %v1853 = vpop.f32.mrf.mxu0
      %1854 = vdwg.mxu0
      %v1855 = vmax.f32 %v1849, 0.0
      %v1856 = vmax.f32 %v1851, 0.0
      %1859 = vrot.lane.b32.xlu0 %v1554, 17
      %v1860 = vpop.permute.xlu0 %1859
      %1861 = vrot.lane.b32.xlu0 %v1555, 17
      %v1862 = vpop.permute.xlu0 %1861
      %v1863 = vsel %vm1562, %v1860, %v1862
      %v1867 = vsel %vm1562, 0.0, %v1860
      %v1868 = vsel %vm1562, %v1862, 0.0
      %v1869 = vmul.f32 %v1867, %v1572
      %v1870 = vmul.f32 %v1863, %v1576
      %1871 = vrot.lane.b32.xlu0 %v1554, 16
      %v1872 = vpop.permute.xlu0 %1871
      %1873 = vrot.lane.b32.xlu0 %v1555, 16
      %v1874 = vpop.permute.xlu0 %1873
      %v1875 = vsel %vm1583, %v1872, %v1874
      %v1879 = vsel %vm1583, 0.0, %v1872
      %v1880 = vsel %vm1583, %v1874, 0.0
      %v1881 = vmul.f32 %v1879, %v1593
      %v1882 = vmul.f32 %v1875, %v1597
      %1883 = vrot.lane.b32.xlu0 %v1554, 15
      %v1884 = vpop.permute.xlu0 %1883
      %1885 = vrot.lane.b32.xlu0 %v1555, 15
      %v1886 = vpop.permute.xlu0 %1885
      %v1887 = vsel %vm1604, %v1884, %v1886
      %v1891 = vsel %vm1604, 0.0, %v1884
      %v1892 = vsel %vm1604, %v1886, 0.0
      %v1893 = vmul.f32 %v1891, %v1614
      %v1894 = vmul.f32 %v1887, %v1618
      %1895 = vrot.lane.b32.xlu0 %v1554, 1
      %v1896 = vpop.permute.xlu0 %1895
      %1897 = vrot.lane.b32.xlu0 %v1555, 1
      %v1898 = vpop.permute.xlu0 %1897
      %v1899 = vsel %vm1625, %v1896, %v1898
      %v1903 = vsel %vm1625, 0.0, %v1896
      %v1904 = vsel %vm1625, %v1898, 0.0
      %v1905 = vmul.f32 %v1903, %v1635
      %v1906 = vmul.f32 %v1899, %v1639
      %v1907 = vmul.f32 %v1903, %v1653
      %v1908 = vmul.f32 %v1899, %v1657
      %v1909 = vmul.f32 %v1904, %v1655
      %v1910 = vmul.f32 %v1891, %v1675
      %v1911 = vmul.f32 %v1887, %v1679
      %v1912 = vmul.f32 %v1892, %v1677
      %v1913 = vmul.f32 %v1879, %v1697
      %v1914 = vmul.f32 %v1875, %v1701
      %v1915 = vmul.f32 %v1880, %v1699
      %v1916 = vmul.f32 %v1867, %v1719
      %v1917 = vmul.f32 %v1863, %v1723
      %v1918 = vmul.f32 %v1868, %v1721
      %1922 = vrot.lane.b32.xlu0 %v1907, 126
      %v1923 = vpop.permute.xlu0 %1922
      %1924 = vrot.lane.b32.xlu0 %v1908, 126
      %v1925 = vpop.permute.xlu0 %1924
      %1926 = vrot.lane.b32.xlu0 %v1909, 126
      %v1927 = vpop.permute.xlu0 %1926
      %v1928 = vsel %vm1739, %v1923, %v1925
      %v1929 = vsel %vm1739, %v1925, %v1927
      %1935 = vrot.lane.b32.xlu0 %v1910, 98
      %v1936 = vpop.permute.xlu0 %1935
      %1937 = vrot.lane.b32.xlu0 %v1911, 98
      %v1938 = vpop.permute.xlu0 %1937
      %1939 = vrot.lane.b32.xlu0 %v1912, 98
      %v1940 = vpop.permute.xlu0 %1939
      %v1941 = vsel %vm1753, %v1936, %v1938
      %v1942 = vsel %vm1753, %v1938, %v1940
      %1948 = vrot.lane.b32.xlu0 %v1913, 96
      %v1949 = vpop.permute.xlu0 %1948
      %1950 = vrot.lane.b32.xlu0 %v1914, 96
      %v1951 = vpop.permute.xlu0 %1950
      %1952 = vrot.lane.b32.xlu0 %v1915, 96
      %v1953 = vpop.permute.xlu0 %1952
      %v1954 = vsel %vm1767, %v1949, %v1951
      %v1955 = vsel %vm1767, %v1951, %v1953
      %1961 = vrot.lane.b32.xlu0 %v1916, 94
      %v1962 = vpop.permute.xlu0 %1961
      %1963 = vrot.lane.b32.xlu0 %v1917, 94
      %v1964 = vpop.permute.xlu0 %1963
      %1965 = vrot.lane.b32.xlu0 %v1918, 94
      %v1966 = vpop.permute.xlu0 %1965
      %v1967 = vsel %vm1781, %v1962, %v1964
      %v1968 = vsel %vm1781, %v1964, %v1966
      %v1971 = vpack.c.bf16 %v1881, %v1869
      %v1972 = vpack.c.bf16 %v1882, %v1870
      %v1973 = vpack.c.bf16 %v1905, %v1893
      %v1974 = vpack.c.bf16 %v1906, %v1894
      %v1975 = vpack.c.bf16 %v1928, %v1554
      %v1976 = vpack.c.bf16 %v1929, %v1555
      %v1977 = vpack.c.bf16 %v1954, %v1941
      %v1978 = vpack.c.bf16 %v1955, %v1942
      %v1979 = vpack.c.bf16 %v1967, %v1967
      %v1980 = vpack.c.bf16 %v1968, %v1968
      %v1981 = vld [vmem:[%s9] sm:$0xf]
      %v1982 = vld [vmem:[%s11] sm:$0xff]
      %1984 = vset.pattern.permute.xlu0 0
      %1985 = vperm.xlu0 %1984, %v1982
      %v1986 = vpop.permute.xlu0 %1985
      %v1989 = vsel %vm1803, %v1981, 0
      %v1992 = vsel %vm1807, %v1979, 0
      %v1995 = vsel %vm1807, %v1980, 0
      %1997 = vmatprep.subr.bf16.mxu0 0
      %1998 = vmatpush1.bf16.msra.mxu0 0
      %1999 = vmatprep.subr.bf16.mxu0 0
      %2000 = vmatpush1.bf16.msra.mxu0 0
      %2001 = vmatprep.subr.bf16.mxu0 0
      %2002 = vmatpush1.bf16.msra.mxu0 0
      %2003 = vmatprep.subr.bf16.mxu0 %v1995
      %2004 = vmatpush1.bf16.msra.mxu0 %v1992
      %2005 = vmatprep.subr.bf16.mxu0 %v1978
      %2006 = vmatpush1.bf16.msra.mxu0 %v1977
      %2007 = vmatprep.subr.bf16.mxu0 %v1976
      %2008 = vmatpush1.bf16.msra.mxu0 %v1975
      %2009 = vmatprep.subr.bf16.mxu0 %v1974
      %2010 = vmatpush1.bf16.msra.mxu0 %v1973
      %2011 = vmatprep.subr.bf16.mxu0 %v1972
      %2012 = vmatpush1.bf16.msra.mxu0 %v1971
      %2013 = vmatprep.subr.bf16.mxu0 0
      %2014 = vmatpush2.bf16.msra.mxu0 0
      %2015 = vmatprep.subr.bf16.mxu0 0
      %2016 = vmatpush2.bf16.msra.mxu0 0
      %2017 = vmatprep.subr.bf16.mxu0 0
      %2018 = vmatpush2.bf16.msra.mxu0 0
      %2019 = vmatprep.subr.bf16.mxu0 0
      %2020 = vmatpush2.bf16.msra.mxu0 0
      %2021 = vmatprep.subr.bf16.mxu0 0
      %2022 = vmatpush2.bf16.msra.mxu0 0
      %2023 = vmatprep.subr.bf16.mxu0 0
      %2024 = vmatpush2.bf16.msra.mxu0 0
      %2025 = vmatprep.subr.bf16.mxu0 0
      %2026 = vmatpush2.bf16.msra.mxu0 0
      %2027 = vmatprep.subr.bf16.mxu0 0
      %2028 = vmatpush2.bf16.msra.mxu0 0
      %2029 = vmatprep.mubr.bf16.mxu0 0
      %2030 = vmatmul.mubr.bf16.gmra.mxu0 %v1989
      %v2031 = vpop.f32.mrf.mxu0
      %v2032 = vadd.f32 %v1986, %v2031
      %v2033 = vpop.f32.mrf.mxu0
      %v2034 = vadd.f32 %v1986, %v2033
      %v2035 = vpop.f32.mrf.mxu0
      %v2036 = vpop.f32.mrf.mxu0
      %2037 = vdwg.mxu0
      %v2038 = vmax.f32 %v2032, 0.0
      %v2039 = vmax.f32 %v2034, 0.0
      %v2040 = vadd.f32 %v1855, %v2038
      %v2041 = vadd.f32 %v1856, %v2039
      %2044 = vrot.lane.b32.xlu0 %v2040, 1
      %v2045 = vpop.permute.xlu0 %2044
      %2046 = vrot.lane.b32.xlu0 %v2041, 1
      %v2047 = vpop.permute.xlu0 %2046
      %v2048 = vsel %vm1625, %v2045, %v2047
      %v2051 = vsel %vm1625, 0.0, %v2045
      %v2052 = vsel %vm1625, %v2047, 0.0
      %2055 = vrot.lane.b32.xlu0 %v2051, 126
      %v2056 = vpop.permute.xlu0 %2055
      %2057 = vrot.lane.b32.xlu0 %v2048, 126
      %v2058 = vpop.permute.xlu0 %2057
      %2059 = vrot.lane.b32.xlu0 %v2052, 126
      %v2060 = vpop.permute.xlu0 %2059
      %v2061 = vsel %vm1739, %v2056, %v2058
      %v2062 = vsel %vm1739, %v2058, %v2060
      %v2065 = vmax.f32 %v2040, %v2061
      %v2066 = vmax.f32 %v2041, %v2062
      %2067 = vrot.lane.b32.xlu0 %v2040, 16
      %v2068 = vpop.permute.xlu0 %2067
      %2069 = vrot.lane.b32.xlu0 %v2041, 16
      %v2070 = vpop.permute.xlu0 %2069
      %v2071 = vsel %vm1583, %v2068, %v2070
      %v2075 = vsel %vm1583, 0.0, %v2068
      %v2076 = vsel %vm1583, %v2070, 0.0
      %2077 = vrot.lane.b32.xlu0 %v2040, 17
      %v2078 = vpop.permute.xlu0 %2077
      %2079 = vrot.lane.b32.xlu0 %v2041, 17
      %v2080 = vpop.permute.xlu0 %2079
      %v2081 = vsel %vm1562, %v2078, %v2080
      %v2084 = vsel %vm1562, 0.0, %v2078
      %v2085 = vsel %vm1562, %v2080, 0.0
      %2088 = vrot.lane.b32.xlu0 %v2084, 126
      %v2089 = vpop.permute.xlu0 %2088
      %2090 = vrot.lane.b32.xlu0 %v2081, 126
      %v2091 = vpop.permute.xlu0 %2090
      %2092 = vrot.lane.b32.xlu0 %v2085, 126
      %v2093 = vpop.permute.xlu0 %2092
      %v2094 = vsel %vm1739, %v2089, %v2091
      %v2095 = vsel %vm1739, %v2091, %v2093
      %v2099 = vmax.f32 %v2075, %v2094
      %v2100 = vmax.f32 %v2071, %v2095
      %v2101 = vmax.f32 %v2076, %v2093
      %2105 = vrot.lane.b32.xlu0 %v2099, 96
      %v2106 = vpop.permute.xlu0 %2105
      %2107 = vrot.lane.b32.xlu0 %v2100, 96
      %v2108 = vpop.permute.xlu0 %2107
      %2109 = vrot.lane.b32.xlu0 %v2101, 96
      %v2110 = vpop.permute.xlu0 %2109
      %v2111 = vsel %vm1767, %v2106, %v2108
      %v2112 = vsel %vm1767, %v2108, %v2110
      %v2115 = vmax.f32 %v2065, %v2111
      %v2116 = vmax.f32 %v2066, %v2112
      %v2117 = vpack.c.bf16 %v2115, %v2115
      %v2118 = vpack.c.bf16 %v2116, %v2116
      %v2119 = vld [vmem:[%s87] sm:$0xf]
      %v2120 = vld [vmem:[%s87 + $0x4] sm:$0xf]
      %v2121 = vld [vmem:[%s87 + $0x8] sm:$0xf]
      %v2122 = vld [vmem:[%s87 + $0xc] sm:$0xf]
      %v2123 = vld [vmem:[%s87 + $0x10] sm:$0xf]
      %v2124 = vld [vmem:[%s87 + $0x14] sm:$0xf]
      %v2125 = vld [vmem:[%s87 + $0x18] sm:$0xf]
      %v2126 = vld [vmem:[%s87 + $0x1c] sm:$0xf]
      %v2127 = vld [vmem:[%s87 + $0x20] sm:$0xf]
      %v2128 = vld [vmem:[%s87 + $0x24] sm:$0xf]
      %v2129 = vld [vmem:[%s87 + $0x28] sm:$0xf]
      %v2130 = vld [vmem:[%s87 + $0x2c] sm:$0xf]
      %v2131 = vld [vmem:[%s87 + $0x30] sm:$0xf]
      %v2132 = vld [vmem:[%s87 + $0x34] sm:$0xf]
      %v2133 = vld [vmem:[%s87 + $0x38] sm:$0xf]
      %v2134 = vld [vmem:[%s87 + $0x3c] sm:$0xf]
      %v2135 = vld [vmem:[%s87 + $0x40] sm:$0xf]
      %v2136 = vld [vmem:[%s87 + $0x44] sm:$0xf]
      %v2137 = vld [vmem:[%s87 + $0x48] sm:$0xf]
      %v2138 = vld [vmem:[%s87 + $0x4c] sm:$0xf]
      %v2139 = vld [vmem:[%s87 + $0x50] sm:$0xf]
      %v2140 = vld [vmem:[%s87 + $0x54] sm:$0xf]
      %v2141 = vld [vmem:[%s87 + $0x58] sm:$0xf]
      %v2142 = vld [vmem:[%s87 + $0x5c] sm:$0xf]
      %v2143 = vld [vmem:[%s87 + $0x60] sm:$0xf]
      %v2144 = vld [vmem:[%s87 + $0x64] sm:$0xf]
      %v2145 = vld [vmem:[%s87 + $0x68] sm:$0xf]
      %v2146 = vld [vmem:[%s87 + $0x6c] sm:$0xf]
      %v2147 = vld [vmem:[%s87 + $0x70] sm:$0xf]
      %v2148 = vld [vmem:[%s87 + $0x74] sm:$0xf]
      %v2149 = vld [vmem:[%s87 + $0x78] sm:$0xf]
      %v2150 = vld [vmem:[%s87 + $0x7c] sm:$0xf]
      %v2183 = vunpack.c.l.b16 %v2119
      %v2184 = vunpack.c.l.b16 %v2120
      %v2185 = vunpack.c.l.b16 %v2121
      %v2186 = vunpack.c.l.b16 %v2122
      %v2187 = vunpack.c.l.b16 %v2123
      %v2188 = vunpack.c.l.b16 %v2124
      %v2189 = vunpack.c.l.b16 %v2125
      %v2190 = vunpack.c.l.b16 %v2126
      %v2191 = vunpack.c.l.b16 %v2127
      %v2192 = vunpack.c.l.b16 %v2128
      %v2193 = vunpack.c.l.b16 %v2129
      %v2194 = vunpack.c.l.b16 %v2130
      %v2195 = vunpack.c.l.b16 %v2131
      %v2196 = vunpack.c.l.b16 %v2132
      %v2197 = vunpack.c.l.b16 %v2133
      %v2198 = vunpack.c.l.b16 %v2134
      %v2199 = vunpack.c.l.b16 %v2135
      %v2200 = vunpack.c.l.b16 %v2136
      %v2201 = vunpack.c.l.b16 %v2137
      %v2202 = vunpack.c.l.b16 %v2138
      %v2203 = vunpack.c.l.b16 %v2139
      %v2204 = vunpack.c.l.b16 %v2140
      %v2205 = vunpack.c.l.b16 %v2141
      %v2206 = vunpack.c.l.b16 %v2142
      %v2207 = vunpack.c.l.b16 %v2143
      %v2208 = vunpack.c.l.b16 %v2144
      %v2209 = vunpack.c.l.b16 %v2145
      %v2210 = vunpack.c.l.b16 %v2146
      %v2211 = vunpack.c.l.b16 %v2147
      %v2212 = vunpack.c.l.b16 %v2148
      %v2213 = vunpack.c.l.b16 %v2149
      %v2214 = vunpack.c.l.b16 %v2150
      %v2215 = vpack.c.b16 %v2184, %v2183
      %v2216 = vpack.c.b16 %v2186, %v2185
      %v2217 = vpack.c.b16 %v2188, %v2187
      %v2218 = vpack.c.b16 %v2190, %v2189
      %v2219 = vpack.c.b16 %v2192, %v2191
      %v2220 = vpack.c.b16 %v2194, %v2193
      %v2221 = vpack.c.b16 %v2196, %v2195
      %v2222 = vpack.c.b16 %v2198, %v2197
      %v2223 = vpack.c.b16 %v2200, %v2199
      %v2224 = vpack.c.b16 %v2202, %v2201
      %v2225 = vpack.c.b16 %v2204, %v2203
      %v2226 = vpack.c.b16 %v2206, %v2205
      %v2227 = vpack.c.b16 %v2208, %v2207
      %v2228 = vpack.c.b16 %v2210, %v2209
      %v2229 = vpack.c.b16 %v2212, %v2211
      %v2230 = vpack.c.b16 %v2214, %v2213
      %2247 = vmatprep.subr.bf16.mxu0 0
      %2248 = vmatpush1.bf16.msra.mxu0 %v2222
      %2249 = vmatprep.subr.bf16.mxu0 0
      %2250 = vmatpush1.bf16.msra.mxu0 %v2221
      %2251 = vmatprep.subr.bf16.mxu0 0
      %2252 = vmatpush1.bf16.msra.mxu0 %v2220
      %2253 = vmatprep.subr.bf16.mxu0 0
      %2254 = vmatpush1.bf16.msra.mxu0 %v2219
      %2255 = vmatprep.subr.bf16.mxu0 0
      %2256 = vmatpush1.bf16.msra.mxu0 %v2218
      %2257 = vmatprep.subr.bf16.mxu0 0
      %2258 = vmatpush1.bf16.msra.mxu0 %v2217
      %2259 = vmatprep.subr.bf16.mxu0 0
      %2260 = vmatpush1.bf16.msra.mxu0 %v2216
      %2261 = vmatprep.subr.bf16.mxu0 0
      %2262 = vmatpush1.bf16.msra.mxu0 %v2215
      %2263 = vmatprep.subr.bf16.mxu0 0
      %2264 = vmatpush2.bf16.msra.mxu0 %v2230
      %2265 = vmatprep.subr.bf16.mxu0 0
      %2266 = vmatpush2.bf16.msra.mxu0 %v2229
      %2267 = vmatprep.subr.bf16.mxu0 0
      %2268 = vmatpush2.bf16.msra.mxu0 %v2228
      %2269 = vmatprep.subr.bf16.mxu0 0
      %2270 = vmatpush2.bf16.msra.mxu0 %v2227
      %2271 = vmatprep.subr.bf16.mxu0 0
      %2272 = vmatpush2.bf16.msra.mxu0 %v2226
      %2273 = vmatprep.subr.bf16.mxu0 0
      %2274 = vmatpush2.bf16.msra.mxu0 %v2225
      %2275 = vmatprep.subr.bf16.mxu0 0
      %2276 = vmatpush2.bf16.msra.mxu0 %v2224
      %2277 = vmatprep.subr.bf16.mxu0 0
      %2278 = vmatpush2.bf16.msra.mxu0 %v2223
      %2279 = vmatprep.mubr.bf16.mxu0 %v2118
      %2280 = vmatmul.mubr.bf16.gmra.mxu0 %v2117
      %v2281 = vpop.f32.mrf.mxu0
      %v2282 = vadd.f32 0.0, %v2281
      %v2283 = vpop.f32.mrf.mxu0
      %v2284 = vpop.f32.mrf.mxu0
      %v2285 = vpop.f32.mrf.mxu0
      %2286 = vdwg.mxu0
      %2289 = vrot.lane.b32.xlu0 %v2038, 1
      %v2290 = vpop.permute.xlu0 %2289
      %2291 = vrot.lane.b32.xlu0 %v2039, 1
      %v2292 = vpop.permute.xlu0 %2291
      %v2293 = vsel %vm1625, %v2290, %v2292
      %v2297 = vsel %vm1625, 0.0, %v2290
      %v2298 = vsel %vm1625, %v2292, 0.0
      %2301 = vrot.lane.b32.xlu0 %v2297, 126
      %v2302 = vpop.permute.xlu0 %2301
      %2303 = vrot.lane.b32.xlu0 %v2293, 126
      %v2304 = vpop.permute.xlu0 %2303
      %2305 = vrot.lane.b32.xlu0 %v2298, 126
      %v2306 = vpop.permute.xlu0 %2305
      %v2307 = vsel %vm1739, %v2302, %v2304
      %v2308 = vsel %vm1739, %v2304, %v2306
      %v2311 = vmax.f32 %v2038, %v2307
      %v2312 = vmax.f32 %v2039, %v2308
      %2313 = vrot.lane.b32.xlu0 %v2038, 16
      %v2314 = vpop.permute.xlu0 %2313
      %2315 = vrot.lane.b32.xlu0 %v2039, 16
      %v2316 = vpop.permute.xlu0 %2315
      %v2317 = vsel %vm1583, %v2314, %v2316
      %v2321 = vsel %vm1583, 0.0, %v2314
      %v2322 = vsel %vm1583, %v2316, 0.0
      %2323 = vrot.lane.b32.xlu0 %v2038, 17
      %v2324 = vpop.permute.xlu0 %2323
      %2325 = vrot.lane.b32.xlu0 %v2039, 17
      %v2326 = vpop.permute.xlu0 %2325
      %v2327 = vsel %vm1562, %v2324, %v2326
      %v2331 = vsel %vm1562, 0.0, %v2324
      %v2332 = vsel %vm1562, %v2326, 0.0
      %2335 = vrot.lane.b32.xlu0 %v2331, 126
      %v2336 = vpop.permute.xlu0 %2335
      %2337 = vrot.lane.b32.xlu0 %v2327, 126
      %v2338 = vpop.permute.xlu0 %2337
      %2339 = vrot.lane.b32.xlu0 %v2332, 126
      %v2340 = vpop.permute.xlu0 %2339
      %v2341 = vsel %vm1739, %v2336, %v2338
      %v2342 = vsel %vm1739, %v2338, %v2340
      %v2346 = vmax.f32 %v2321, %v2341
      %v2347 = vmax.f32 %v2317, %v2342
      %v2348 = vmax.f32 %v2322, %v2340
      %2352 = vrot.lane.b32.xlu0 %v2346, 96
      %v2353 = vpop.permute.xlu0 %2352
      %2354 = vrot.lane.b32.xlu0 %v2347, 96
      %v2355 = vpop.permute.xlu0 %2354
      %2356 = vrot.lane.b32.xlu0 %v2348, 96
      %v2357 = vpop.permute.xlu0 %2356
      %v2358 = vsel %vm1767, %v2353, %v2355
      %v2359 = vsel %vm1767, %v2355, %v2357
      %v2362 = vmax.f32 %v2311, %v2358
      %v2363 = vmax.f32 %v2312, %v2359
      %v2364 = vpack.c.bf16 %v2362, %v2362
      %v2365 = vpack.c.bf16 %v2363, %v2363
      %2366 = vmatprep.subr.bf16.mxu0 0
      %2367 = vmatpush1.bf16.msra.mxu0 %v2222
      %2368 = vmatprep.subr.bf16.mxu0 0
      %2369 = vmatpush1.bf16.msra.mxu0 %v2221
      %2370 = vmatprep.subr.bf16.mxu0 0
      %2371 = vmatpush1.bf16.msra.mxu0 %v2220
      %2372 = vmatprep.subr.bf16.mxu0 0
      %2373 = vmatpush1.bf16.msra.mxu0 %v2219
      %2374 = vmatprep.subr.bf16.mxu0 0
      %2375 = vmatpush1.bf16.msra.mxu0 %v2218
      %2376 = vmatprep.subr.bf16.mxu0 0
      %2377 = vmatpush1.bf16.msra.mxu0 %v2217
      %2378 = vmatprep.subr.bf16.mxu0 0
      %2379 = vmatpush1.bf16.msra.mxu0 %v2216
      %2380 = vmatprep.subr.bf16.mxu0 0
      %2381 = vmatpush1.bf16.msra.mxu0 %v2215
      %2382 = vmatprep.subr.bf16.mxu0 0
      %2383 = vmatpush2.bf16.msra.mxu0 %v2230
      %2384 = vmatprep.subr.bf16.mxu0 0
      %2385 = vmatpush2.bf16.msra.mxu0 %v2229
      %2386 = vmatprep.subr.bf16.mxu0 0
      %2387 = vmatpush2.bf16.msra.mxu0 %v2228
      %2388 = vmatprep.subr.bf16.mxu0 0
      %2389 = vmatpush2.bf16.msra.mxu0 %v2227
      %2390 = vmatprep.subr.bf16.mxu0 0
      %2391 = vmatpush2.bf16.msra.mxu0 %v2226
      %2392 = vmatprep.subr.bf16.mxu0 0
      %2393 = vmatpush2.bf16.msra.mxu0 %v2225
      %2394 = vmatprep.subr.bf16.mxu0 0
      %2395 = vmatpush2.bf16.msra.mxu0 %v2224
      %2396 = vmatprep.subr.bf16.mxu0 0
      %2397 = vmatpush2.bf16.msra.mxu0 %v2223
      %2398 = vmatprep.mubr.bf16.mxu0 %v2365
      %2399 = vmatmul.mubr.bf16.gmra.mxu0 %v2364
      %v2400 = vpop.f32.mrf.mxu0
      %v2401 = vadd.f32 0.0, %v2400
      %v2402 = vpop.f32.mrf.mxu0
      %v2403 = vpop.f32.mrf.mxu0
      %v2404 = vpop.f32.mrf.mxu0
      %2405 = vdwg.mxu0
      %2407 = vrot.lane.b32.xlu0 %v2282, 9
      %v2408 = vpop.permute.xlu0 %2407
      %vm2410 = vcmask 72704
      %v2411 = vsel %vm2410, 0.0, %v2408
      %vm2412 = vcmask 596992
      %v2413 = vsel %vm2412, %v2411, 0.0
      %v2414 = vlaneseq
      %v2415 = vshrl.u32 %v2414, 7
      %v2416 = vsub.s32 0, %v2415
      %v2417 = vrot.slane %v1544, %v2416
      %v2418 = vmul.f32 %v2413, %v2417
      %2419 = vrot.lane.b32.xlu0 %v2282, 8
      %v2420 = vpop.permute.xlu0 %2419
      %vm2422 = vcmask 64512
      %v2423 = vsel %vm2422, 0.0, %v2420
      %v2424 = vsel %vm1803, %v2423, 0.0
      %v2425 = vlaneseq
      %v2426 = vshrl.u32 %v2425, 7
      %v2427 = vsub.s32 1, %v2426
      %v2428 = vrot.slane %v1544, %v2427
      %v2429 = vmul.f32 %v2424, %v2428
      %2430 = vrot.lane.b32.xlu0 %v2282, 7
      %v2431 = vpop.permute.xlu0 %2430
      %vm2433 = vcmask 56320
      %v2434 = vsel %vm2433, 0.0, %v2431
      %vm2435 = vcmask 580608
      %v2436 = vsel %vm2435, %v2434, 0.0
      %v2437 = vlaneseq
      %v2438 = vshrl.u32 %v2437, 7
      %v2439 = vsub.s32 2, %v2438
      %v2440 = vrot.slane %v1544, %v2439
      %v2441 = vmul.f32 %v2436, %v2440
      %2442 = vrot.lane.b32.xlu0 %v2282, 1
      %v2443 = vpop.permute.xlu0 %2442
      %v2445 = vsel %vm1625, 0.0, %v2443
      %vm2446 = vcmask 531456
      %v2447 = vsel %vm2446, %v2445, 0.0
      %v2448 = vlaneseq
      %v2449 = vshrl.u32 %v2448, 7
      %v2450 = vsub.s32 3, %v2449
      %v2451 = vrot.slane %v1544, %v2450
      %v2452 = vmul.f32 %v2447, %v2451
      %v2453 = vlaneseq
      %v2454 = vshrl.u32 %v2453, 7
      %v2455 = vsub.s32 5, %v2454
      %v2456 = vrot.slane %v1544, %v2455
      %2458 = vrot.lane.b32.xlu0 %v2456, 2
      %v2459 = vpop.permute.xlu0 %2458
      %v2461 = vmul.f32 %v2447, %v2459
      %v2462 = vlaneseq
      %v2463 = vshrl.u32 %v2462, 7
      %v2464 = vsub.s32 6, %v2463
      %v2465 = vrot.slane %v1544, %v2464
      %2467 = vrot.lane.b32.xlu0 %v2465, 14
      %v2468 = vpop.permute.xlu0 %2467
      %v2470 = vmul.f32 %v2436, %v2468
      %v2471 = vlaneseq
      %v2472 = vshrl.u32 %v2471, 7
      %v2473 = vsub.s32 7, %v2472
      %v2474 = vrot.slane %v1544, %v2473
      %2476 = vrot.lane.b32.xlu0 %v2474, 16
      %v2477 = vpop.permute.xlu0 %2476
      %v2479 = vmul.f32 %v2424, %v2477
      %v2480 = vlaneseq
      %v2481 = vshrl.u32 %v2480, 7
      %v2482 = vsub.s32 0, %v2481
      %v2483 = vrot.slane %v1545, %v2482
      %2485 = vrot.lane.b32.xlu0 %v2483, 18
      %v2486 = vpop.permute.xlu0 %2485
      %v2488 = vmul.f32 %v2413, %v2486
      %2490 = vrot.lane.b32.xlu0 %v2461, 126
      %v2491 = vpop.permute.xlu0 %2490
      %2494 = vrot.lane.b32.xlu0 %v2470, 114
      %v2495 = vpop.permute.xlu0 %2494
      %2498 = vrot.lane.b32.xlu0 %v2479, 112
      %v2499 = vpop.permute.xlu0 %2498
      %2502 = vrot.lane.b32.xlu0 %v2488, 110
      %v2503 = vpop.permute.xlu0 %2502
      %v2505 = vpack.c.bf16 %v2429, %v2418
      %v2506 = vpack.c.bf16 %v2452, %v2441
      %v2507 = vpack.c.bf16 %v2491, %v2282
      %v2508 = vpack.c.bf16 %v2499, %v2495
      %v2509 = vpack.c.bf16 %v2503, %v2503
      %v2510 = vld [vmem:[%s13] sm:$0xf]
      %v2511 = vld [vmem:[%s13 + $0x4] sm:$0xf]
      %v2512 = vld [vmem:[%s15] sm:$0xff]
      %v2513 = vld [vmem:[%s15 + $0x8] sm:$0xff]
      %2515 = vset.pattern.permute.xlu0 0
      %2516 = vperm.xlu0 %2515, %v2512
      %v2517 = vpop.permute.xlu0 %2516
      %2520 = vset.pattern.permute.xlu0 0
      %2521 = vperm.xlu0 %2520, %v2513
      %v2522 = vpop.permute.xlu0 %2521
      %v2526 = vunpack.c.l.b16 %v2510
      %v2527 = vunpack.c.l.b16 %v2511
      %v2528 = vpack.c.b16 %v2527, %v2526
      %v2530 = vsel %vm1803, %v2528, 0
      %v2533 = vsel %vm1807, %v2509, 0
      %2535 = vmatprep.subr.bf16.mxu0 0
      %2536 = vmatpush1.bf16.msra.mxu0 0
      %2537 = vmatprep.subr.bf16.mxu0 0
      %2538 = vmatpush1.bf16.msra.mxu0 0
      %2539 = vmatprep.subr.bf16.mxu0 0
      %2540 = vmatpush1.bf16.msra.mxu0 0
      %2541 = vmatprep.subr.bf16.mxu0 0
      %2542 = vmatpush1.bf16.msra.mxu0 %v2533
      %2543 = vmatprep.subr.bf16.mxu0 0
      %2544 = vmatpush1.bf16.msra.mxu0 %v2508
      %2545 = vmatprep.subr.bf16.mxu0 0
      %2546 = vmatpush1.bf16.msra.mxu0 %v2507
      %2547 = vmatprep.subr.bf16.mxu0 0
      %2548 = vmatpush1.bf16.msra.mxu0 %v2506
      %2549 = vmatprep.subr.bf16.mxu0 0
      %2550 = vmatpush1.bf16.msra.mxu0 %v2505
      %2551 = vmatprep.subr.bf16.mxu0 0
      %2552 = vmatpush2.bf16.msra.mxu0 0
      %2553 = vmatprep.subr.bf16.mxu0 0
      %2554 = vmatpush2.bf16.msra.mxu0 0
      %2555 = vmatprep.subr.bf16.mxu0 0
      %2556 = vmatpush2.bf16.msra.mxu0 0
      %2557 = vmatprep.subr.bf16.mxu0 0
      %2558 = vmatpush2.bf16.msra.mxu0 0
      %2559 = vmatprep.subr.bf16.mxu0 0
      %2560 = vmatpush2.bf16.msra.mxu0 0
      %2561 = vmatprep.subr.bf16.mxu0 0
      %2562 = vmatpush2.bf16.msra.mxu0 0
      %2563 = vmatprep.subr.bf16.mxu0 0
      %2564 = vmatpush2.bf16.msra.mxu0 0
      %2565 = vmatprep.subr.bf16.mxu0 0
      %2566 = vmatpush2.bf16.msra.mxu0 0
      %2567 = vmatprep.mubr.bf16.mxu0 0
      %2568 = vmatmul.mubr.bf16.gmra.mxu0 %v2530
      %v2569 = vpop.f32.mrf.mxu0
      %v2570 = vadd.f32 %v2517, %v2569
      %v2571 = vpop.f32.mrf.mxu0
      %v2572 = vpop.f32.mrf.mxu0
      %v2573 = vadd.f32 %v2522, %v2572
      %v2574 = vpop.f32.mrf.mxu0
      %2575 = vdwg.mxu0
      %v2576 = vmax.f32 %v2570, 0.0
      %v2577 = vmax.f32 %v2573, 0.0
      %2579 = vrot.lane.b32.xlu0 %v2401, 9
      %v2580 = vpop.permute.xlu0 %2579
      %v2582 = vsel %vm2410, 0.0, %v2580
      %v2583 = vsel %vm2412, %v2582, 0.0
      %v2584 = vmul.f32 %v2583, %v2417
      %2585 = vrot.lane.b32.xlu0 %v2401, 8
      %v2586 = vpop.permute.xlu0 %2585
      %v2588 = vsel %vm2422, 0.0, %v2586
      %v2589 = vsel %vm1803, %v2588, 0.0
      %v2590 = vmul.f32 %v2589, %v2428
      %2591 = vrot.lane.b32.xlu0 %v2401, 7
      %v2592 = vpop.permute.xlu0 %2591
      %v2594 = vsel %vm2433, 0.0, %v2592
      %v2595 = vsel %vm2435, %v2594, 0.0
      %v2596 = vmul.f32 %v2595, %v2440
      %2597 = vrot.lane.b32.xlu0 %v2401, 1
      %v2598 = vpop.permute.xlu0 %2597
      %v2600 = vsel %vm1625, 0.0, %v2598
      %v2601 = vsel %vm2446, %v2600, 0.0
      %v2602 = vmul.f32 %v2601, %v2451
      %v2603 = vmul.f32 %v2601, %v2459
      %v2604 = vmul.f32 %v2595, %v2468
      %v2605 = vmul.f32 %v2589, %v2477
      %v2606 = vmul.f32 %v2583, %v2486
      %2608 = vrot.lane.b32.xlu0 %v2603, 126
      %v2609 = vpop.permute.xlu0 %2608
      %2612 = vrot.lane.b32.xlu0 %v2604, 114
      %v2613 = vpop.permute.xlu0 %2612
      %2616 = vrot.lane.b32.xlu0 %v2605, 112
      %v2617 = vpop.permute.xlu0 %2616
      %2620 = vrot.lane.b32.xlu0 %v2606, 110
      %v2621 = vpop.permute.xlu0 %2620
      %v2623 = vpack.c.bf16 %v2590, %v2584
      %v2624 = vpack.c.bf16 %v2602, %v2596
      %v2625 = vpack.c.bf16 %v2609, %v2401
      %v2626 = vpack.c.bf16 %v2617, %v2613
      %v2627 = vpack.c.bf16 %v2621, %v2621
      %v2628 = vld [vmem:[%s17] sm:$0xf]
      %v2629 = vld [vmem:[%s17 + $0x4] sm:$0xf]
      %v2630 = vld [vmem:[%s19] sm:$0xff]
      %v2631 = vld [vmem:[%s19 + $0x8] sm:$0xff]
      %2633 = vset.pattern.permute.xlu0 0
      %2634 = vperm.xlu0 %2633, %v2630
      %v2635 = vpop.permute.xlu0 %2634
      %2638 = vset.pattern.permute.xlu0 0
      %2639 = vperm.xlu0 %2638, %v2631
      %v2640 = vpop.permute.xlu0 %2639
      %v2644 = vunpack.c.l.b16 %v2628
      %v2645 = vunpack.c.l.b16 %v2629
      %v2646 = vpack.c.b16 %v2645, %v2644
      %v2648 = vsel %vm1803, %v2646, 0
      %v2651 = vsel %vm1807, %v2627, 0
      %2653 = vmatprep.subr.bf16.mxu0 0
      %2654 = vmatpush1.bf16.msra.mxu0 0
      %2655 = vmatprep.subr.bf16.mxu0 0
      %2656 = vmatpush1.bf16.msra.mxu0 0
      %2657 = vmatprep.subr.bf16.mxu0 0
      %2658 = vmatpush1.bf16.msra.mxu0 0
      %2659 = vmatprep.subr.bf16.mxu0 0
      %2660 = vmatpush1.bf16.msra.mxu0 %v2651
      %2661 = vmatprep.subr.bf16.mxu0 0
      %2662 = vmatpush1.bf16.msra.mxu0 %v2626
      %2663 = vmatprep.subr.bf16.mxu0 0
      %2664 = vmatpush1.bf16.msra.mxu0 %v2625
      %2665 = vmatprep.subr.bf16.mxu0 0
      %2666 = vmatpush1.bf16.msra.mxu0 %v2624
      %2667 = vmatprep.subr.bf16.mxu0 0
      %2668 = vmatpush1.bf16.msra.mxu0 %v2623
      %2669 = vmatprep.subr.bf16.mxu0 0
      %2670 = vmatpush2.bf16.msra.mxu0 0
      %2671 = vmatprep.subr.bf16.mxu0 0
      %2672 = vmatpush2.bf16.msra.mxu0 0
      %2673 = vmatprep.subr.bf16.mxu0 0
      %2674 = vmatpush2.bf16.msra.mxu0 0
      %2675 = vmatprep.subr.bf16.mxu0 0
      %2676 = vmatpush2.bf16.msra.mxu0 0
      %2677 = vmatprep.subr.bf16.mxu0 0
      %2678 = vmatpush2.bf16.msra.mxu0 0
      %2679 = vmatprep.subr.bf16.mxu0 0
      %2680 = vmatpush2.bf16.msra.mxu0 0
      %2681 = vmatprep.subr.bf16.mxu0 0
      %2682 = vmatpush2.bf16.msra.mxu0 0
      %2683 = vmatprep.subr.bf16.mxu0 0
      %2684 = vmatpush2.bf16.msra.mxu0 0
      %2685 = vmatprep.mubr.bf16.mxu0 0
      %2686 = vmatmul.mubr.bf16.gmra.mxu0 %v2648
      %v2687 = vpop.f32.mrf.mxu0
      %v2688 = vadd.f32 %v2635, %v2687
      %v2689 = vpop.f32.mrf.mxu0
      %v2690 = vpop.f32.mrf.mxu0
      %v2691 = vadd.f32 %v2640, %v2690
      %v2692 = vpop.f32.mrf.mxu0
      %2693 = vdwg.mxu0
      %v2694 = vmax.f32 %v2688, 0.0
      %v2695 = vmax.f32 %v2691, 0.0
      %v2696 = vadd.f32 %v2576, %v2694
      %v2697 = vadd.f32 %v2577, %v2695
      %2700 = vrot.lane.b32.xlu0 %v2696, 1
      %v2701 = vpop.permute.xlu0 %2700
      %2702 = vrot.lane.b32.xlu0 %v2697, 1
      %v2703 = vpop.permute.xlu0 %2702
      %v2706 = vsel %vm1625, 0.0, %v2701
      %v2707 = vsel %vm1625, 0.0, %v2703
      %v2708 = vsel %vm2446, %v2706, 0.0
      %v2709 = vsel %vm2446, %v2707, 0.0
      %2712 = vrot.lane.b32.xlu0 %v2708, 126
      %v2713 = vpop.permute.xlu0 %2712
      %2714 = vrot.lane.b32.xlu0 %v2709, 126
      %v2715 = vpop.permute.xlu0 %2714
      %v2718 = vmax.f32 %v2696, %v2713
      %v2719 = vmax.f32 %v2697, %v2715
      %2720 = vrot.lane.b32.xlu0 %v2696, 8
      %v2721 = vpop.permute.xlu0 %2720
      %2722 = vrot.lane.b32.xlu0 %v2697, 8
      %v2723 = vpop.permute.xlu0 %2722
      %v2726 = vsel %vm2422, 0.0, %v2721
      %v2727 = vsel %vm2422, 0.0, %v2723
      %v2728 = vsel %vm1803, %v2726, 0.0
      %v2729 = vsel %vm1803, %v2727, 0.0
      %2730 = vrot.lane.b32.xlu0 %v2696, 9
      %v2731 = vpop.permute.xlu0 %2730
      %2732 = vrot.lane.b32.xlu0 %v2697, 9
      %v2733 = vpop.permute.xlu0 %2732
      %v2736 = vsel %vm2410, 0.0, %v2731
      %v2737 = vsel %vm2410, 0.0, %v2733
      %v2738 = vsel %vm2412, %v2736, 0.0
      %v2739 = vsel %vm2412, %v2737, 0.0
      %2742 = vrot.lane.b32.xlu0 %v2738, 126
      %v2743 = vpop.permute.xlu0 %2742
      %2744 = vrot.lane.b32.xlu0 %v2739, 126
      %v2745 = vpop.permute.xlu0 %2744
      %v2748 = vmax.f32 %v2728, %v2743
      %v2749 = vmax.f32 %v2729, %v2745
      %2752 = vrot.lane.b32.xlu0 %v2748, 112
      %v2753 = vpop.permute.xlu0 %2752
      %2754 = vrot.lane.b32.xlu0 %v2749, 112
      %v2755 = vpop.permute.xlu0 %2754
      %v2758 = vmax.f32 %v2718, %v2753
      %v2759 = vmax.f32 %v2719, %v2755
      %v2760 = vpack.c.bf16 %v2759, %v2758
      %v2761 = vld [vmem:[%s89] sm:$0xf]
      %v2762 = vld [vmem:[%s89 + $0x4] sm:$0xf]
      %v2763 = vld [vmem:[%s89 + $0x8] sm:$0xf]
      %v2764 = vld [vmem:[%s89 + $0xc] sm:$0xf]
      %v2765 = vld [vmem:[%s89 + $0x10] sm:$0xf]
      %v2766 = vld [vmem:[%s89 + $0x14] sm:$0xf]
      %v2767 = vld [vmem:[%s89 + $0x18] sm:$0xf]
      %v2768 = vld [vmem:[%s89 + $0x1c] sm:$0xf]
      %v2777 = vunpack.c.l.b16 %v2761
      %v2778 = vunpack.c.l.b16 %v2762
      %v2779 = vunpack.c.l.b16 %v2763
      %v2780 = vunpack.c.l.b16 %v2764
      %v2781 = vunpack.c.l.b16 %v2765
      %v2782 = vunpack.c.l.b16 %v2766
      %v2783 = vunpack.c.l.b16 %v2767
      %v2784 = vunpack.c.l.b16 %v2768
      %v2785 = vpack.c.b16 %v2778, %v2777
      %v2786 = vpack.c.b16 %v2780, %v2779
      %v2787 = vpack.c.b16 %v2782, %v2781
      %v2788 = vpack.c.b16 %v2784, %v2783
      %vm2793 = vcmask 523264
      %v2795 = vsel %vm2793, %v2760, 0
      %2797 = vmatprep.subr.bf16.mxu0 0
      %2798 = vmatpush1.bf16.msra.mxu0 0
      %2799 = vmatprep.subr.bf16.mxu0 0
      %2800 = vmatpush1.bf16.msra.mxu0 0
      %2801 = vmatprep.subr.bf16.mxu0 0
      %2802 = vmatpush1.bf16.msra.mxu0 0
      %2803 = vmatprep.subr.bf16.mxu0 0
      %2804 = vmatpush1.bf16.msra.mxu0 0
      %2805 = vmatprep.subr.bf16.mxu0 0
      %2806 = vmatpush1.bf16.msra.mxu0 %v2788
      %2807 = vmatprep.subr.bf16.mxu0 0
      %2808 = vmatpush1.bf16.msra.mxu0 %v2787
      %2809 = vmatprep.subr.bf16.mxu0 0
      %2810 = vmatpush1.bf16.msra.mxu0 %v2786
      %2811 = vmatprep.subr.bf16.mxu0 0
      %2812 = vmatpush1.bf16.msra.mxu0 %v2785
      %2813 = vmatprep.subr.bf16.mxu0 0
      %2814 = vmatpush2.bf16.msra.mxu0 0
      %2815 = vmatprep.subr.bf16.mxu0 0
      %2816 = vmatpush2.bf16.msra.mxu0 0
      %2817 = vmatprep.subr.bf16.mxu0 0
      %2818 = vmatpush2.bf16.msra.mxu0 0
      %2819 = vmatprep.subr.bf16.mxu0 0
      %2820 = vmatpush2.bf16.msra.mxu0 0
      %2821 = vmatprep.subr.bf16.mxu0 0
      %2822 = vmatpush2.bf16.msra.mxu0 0
      %2823 = vmatprep.subr.bf16.mxu0 0
      %2824 = vmatpush2.bf16.msra.mxu0 0
      %2825 = vmatprep.subr.bf16.mxu0 0
      %2826 = vmatpush2.bf16.msra.mxu0 0
      %2827 = vmatprep.subr.bf16.mxu0 0
      %2828 = vmatpush2.bf16.msra.mxu0 0
      %2829 = vmatprep.mubr.bf16.mxu0 0
      %2830 = vmatmul.mubr.bf16.gmra.mxu0 %v2795
      %v2831 = vpop.f32.mrf.mxu0
      %v2832 = vadd.f32 0.0, %v2831
      %v2833 = vpop.f32.mrf.mxu0
      %v2834 = vpop.f32.mrf.mxu0
      %v2835 = vadd.f32 0.0, %v2834
      %v2836 = vpop.f32.mrf.mxu0
      %2837 = vdwg.mxu0
      %2840 = vrot.lane.b32.xlu0 %v2694, 1
      %v2841 = vpop.permute.xlu0 %2840
      %2842 = vrot.lane.b32.xlu0 %v2695, 1
      %v2843 = vpop.permute.xlu0 %2842
      %v2846 = vsel %vm1625, 0.0, %v2841
      %v2847 = vsel %vm1625, 0.0, %v2843
      %v2848 = vsel %vm2446, %v2846, 0.0
      %v2849 = vsel %vm2446, %v2847, 0.0
      %2852 = vrot.lane.b32.xlu0 %v2848, 126
      %v2853 = vpop.permute.xlu0 %2852
      %2854 = vrot.lane.b32.xlu0 %v2849, 126
      %v2855 = vpop.permute.xlu0 %2854
      %v2858 = vmax.f32 %v2694, %v2853
      %v2859 = vmax.f32 %v2695, %v2855
      %2860 = vrot.lane.b32.xlu0 %v2694, 8
      %v2861 = vpop.permute.xlu0 %2860
      %2862 = vrot.lane.b32.xlu0 %v2695, 8
      %v2863 = vpop.permute.xlu0 %2862
      %v2866 = vsel %vm2422, 0.0, %v2861
      %v2867 = vsel %vm2422, 0.0, %v2863
      %v2868 = vsel %vm1803, %v2866, 0.0
      %v2869 = vsel %vm1803, %v2867, 0.0
      %2870 = vrot.lane.b32.xlu0 %v2694, 9
      %v2871 = vpop.permute.xlu0 %2870
      %2872 = vrot.lane.b32.xlu0 %v2695, 9
      %v2873 = vpop.permute.xlu0 %2872
      %v2876 = vsel %vm2410, 0.0, %v2871
      %v2877 = vsel %vm2410, 0.0, %v2873
      %v2878 = vsel %vm2412, %v2876, 0.0
      %v2879 = vsel %vm2412, %v2877, 0.0
      %2882 = vrot.lane.b32.xlu0 %v2878, 126
      %v2883 = vpop.permute.xlu0 %2882
      %2884 = vrot.lane.b32.xlu0 %v2879, 126
      %v2885 = vpop.permute.xlu0 %2884
      %v2888 = vmax.f32 %v2868, %v2883
      %v2889 = vmax.f32 %v2869, %v2885
      %2892 = vrot.lane.b32.xlu0 %v2888, 112
      %v2893 = vpop.permute.xlu0 %2892
      %2894 = vrot.lane.b32.xlu0 %v2889, 112
      %v2895 = vpop.permute.xlu0 %2894
      %v2898 = vmax.f32 %v2858, %v2893
      %v2899 = vmax.f32 %v2859, %v2895
      %v2900 = vpack.c.bf16 %v2899, %v2898
      %v2902 = vsel %vm2793, %v2900, 0
      %2904 = vmatprep.subr.bf16.mxu0 0
      %2905 = vmatpush1.bf16.msra.mxu0 0
      %2906 = vmatprep.subr.bf16.mxu0 0
      %2907 = vmatpush1.bf16.msra.mxu0 0
      %2908 = vmatprep.subr.bf16.mxu0 0
      %2909 = vmatpush1.bf16.msra.mxu0 0
      %2910 = vmatprep.subr.bf16.mxu0 0
      %2911 = vmatpush1.bf16.msra.mxu0 0
      %2912 = vmatprep.subr.bf16.mxu0 0
      %2913 = vmatpush1.bf16.msra.mxu0 %v2788
      %2914 = vmatprep.subr.bf16.mxu0 0
      %2915 = vmatpush1.bf16.msra.mxu0 %v2787
      %2916 = vmatprep.subr.bf16.mxu0 0
      %2917 = vmatpush1.bf16.msra.mxu0 %v2786
      %2918 = vmatprep.subr.bf16.mxu0 0
      %2919 = vmatpush1.bf16.msra.mxu0 %v2785
      %2920 = vmatprep.subr.bf16.mxu0 0
      %2921 = vmatpush2.bf16.msra.mxu0 0
      %2922 = vmatprep.subr.bf16.mxu0 0
      %2923 = vmatpush2.bf16.msra.mxu0 0
      %2924 = vmatprep.subr.bf16.mxu0 0
      %2925 = vmatpush2.bf16.msra.mxu0 0
      %2926 = vmatprep.subr.bf16.mxu0 0
      %2927 = vmatpush2.bf16.msra.mxu0 0
      %2928 = vmatprep.subr.bf16.mxu0 0
      %2929 = vmatpush2.bf16.msra.mxu0 0
      %2930 = vmatprep.subr.bf16.mxu0 0
      %2931 = vmatpush2.bf16.msra.mxu0 0
      %2932 = vmatprep.subr.bf16.mxu0 0
      %2933 = vmatpush2.bf16.msra.mxu0 0
      %2934 = vmatprep.subr.bf16.mxu0 0
      %2935 = vmatpush2.bf16.msra.mxu0 0
      %2936 = vmatprep.mubr.bf16.mxu0 0
      %2937 = vmatmul.mubr.bf16.gmra.mxu0 %v2902
      %v2938 = vpop.f32.mrf.mxu0
      %v2939 = vadd.f32 0.0, %v2938
      %v2940 = vpop.f32.mrf.mxu0
      %v2941 = vpop.f32.mrf.mxu0
      %v2942 = vadd.f32 0.0, %v2941
      %v2943 = vpop.f32.mrf.mxu0
      %2944 = vdwg.mxu0
      %2947 = vrot.lane.b32.xlu0 %v2832, 5
      %v2948 = vpop.permute.xlu0 %2947
      %2949 = vrot.lane.b32.xlu0 %v2835, 5
      %v2950 = vpop.permute.xlu0 %2949
      %vm2953 = vcmask 39936
      %v2954 = vsel %vm2953, 0.0, %v2948
      %v2955 = vsel %vm2953, 0.0, %v2950
      %vm2956 = vcmask 171008
      %v2957 = vsel %vm2956, %v2954, 0.0
      %v2958 = vsel %vm2956, %v2955, 0.0
      %v2959 = vlaneseq
      %v2960 = vshrl.u32 %v2959, 7
      %v2961 = vsub.s32 0, %v2960
      %v2962 = vrot.slane %v1546, %v2961
      %v2963 = vmul.f32 %v2957, %v2962
      %v2964 = vmul.f32 %v2958, %v2962
      %2965 = vrot.lane.b32.xlu0 %v2832, 4
      %v2966 = vpop.permute.xlu0 %2965
      %2967 = vrot.lane.b32.xlu0 %v2835, 4
      %v2968 = vpop.permute.xlu0 %2967
      %vm2971 = vcmask 31744
      %v2972 = vsel %vm2971, 0.0, %v2966
      %v2973 = vsel %vm2971, 0.0, %v2968
      %vm2974 = vcmask 162816
      %v2975 = vsel %vm2974, %v2972, 0.0
      %v2976 = vsel %vm2974, %v2973, 0.0
      %v2977 = vlaneseq
      %v2978 = vshrl.u32 %v2977, 7
      %v2979 = vsub.s32 1, %v2978
      %v2980 = vrot.slane %v1546, %v2979
      %v2981 = vmul.f32 %v2975, %v2980
      %v2982 = vmul.f32 %v2976, %v2980
      %2983 = vrot.lane.b32.xlu0 %v2832, 3
      %v2984 = vpop.permute.xlu0 %2983
      %2985 = vrot.lane.b32.xlu0 %v2835, 3
      %v2986 = vpop.permute.xlu0 %2985
      %vm2989 = vcmask 23552
      %v2990 = vsel %vm2989, 0.0, %v2984
      %v2991 = vsel %vm2989, 0.0, %v2986
      %vm2992 = vcmask 154624
      %v2993 = vsel %vm2992, %v2990, 0.0
      %v2994 = vsel %vm2992, %v2991, 0.0
      %v2995 = vlaneseq
      %v2996 = vshrl.u32 %v2995, 7
      %v2997 = vsub.s32 2, %v2996
      %v2998 = vrot.slane %v1546, %v2997
      %v2999 = vmul.f32 %v2993, %v2998
      %v3000 = vmul.f32 %v2994, %v2998
      %3001 = vrot.lane.b32.xlu0 %v2832, 1
      %v3002 = vpop.permute.xlu0 %3001
      %3003 = vrot.lane.b32.xlu0 %v2835, 1
      %v3004 = vpop.permute.xlu0 %3003
      %v3007 = vsel %vm1625, 0.0, %v3002
      %v3008 = vsel %vm1625, 0.0, %v3004
      %v3009 = vsel %vm1562, %v3007, 0.0
      %v3010 = vsel %vm1562, %v3008, 0.0
      %v3011 = vlaneseq
      %v3012 = vshrl.u32 %v3011, 7
      %v3013 = vsub.s32 3, %v3012
      %v3014 = vrot.slane %v1546, %v3013
      %v3015 = vmul.f32 %v3009, %v3014
      %v3016 = vmul.f32 %v3010, %v3014
      %v3017 = vlaneseq
      %v3018 = vshrl.u32 %v3017, 7
      %v3019 = vsub.s32 5, %v3018
      %v3020 = vrot.slane %v1546, %v3019
      %3022 = vrot.lane.b32.xlu0 %v3020, 2
      %v3023 = vpop.permute.xlu0 %3022
      %v3025 = vmul.f32 %v3009, %v3023
      %v3026 = vmul.f32 %v3010, %v3023
      %v3027 = vlaneseq
      %v3028 = vshrl.u32 %v3027, 7
      %v3029 = vsub.s32 6, %v3028
      %v3030 = vrot.slane %v1546, %v3029
      %3032 = vrot.lane.b32.xlu0 %v3030, 6
      %v3033 = vpop.permute.xlu0 %3032
      %v3035 = vmul.f32 %v2993, %v3033
      %v3036 = vmul.f32 %v2994, %v3033
      %v3037 = vlaneseq
      %v3038 = vshrl.u32 %v3037, 7
      %v3039 = vsub.s32 7, %v3038
      %v3040 = vrot.slane %v1546, %v3039
      %3042 = vrot.lane.b32.xlu0 %v3040, 8
      %v3043 = vpop.permute.xlu0 %3042
      %v3045 = vmul.f32 %v2975, %v3043
      %v3046 = vmul.f32 %v2976, %v3043
      %v3047 = vlaneseq
      %v3048 = vshrl.u32 %v3047, 7
      %v3049 = vsub.s32 0, %v3048
      %v3050 = vrot.slane %v1547, %v3049
      %3052 = vrot.lane.b32.xlu0 %v3050, 10
      %v3053 = vpop.permute.xlu0 %3052
      %v3055 = vmul.f32 %v2957, %v3053
      %v3056 = vmul.f32 %v2958, %v3053
      %3059 = vrot.lane.b32.xlu0 %v3025, 126
      %v3060 = vpop.permute.xlu0 %3059
      %3061 = vrot.lane.b32.xlu0 %v3026, 126
      %v3062 = vpop.permute.xlu0 %3061
      %3067 = vrot.lane.b32.xlu0 %v3035, 122
      %v3068 = vpop.permute.xlu0 %3067
      %3069 = vrot.lane.b32.xlu0 %v3036, 122
      %v3070 = vpop.permute.xlu0 %3069
      %3075 = vrot.lane.b32.xlu0 %v3045, 120
      %v3076 = vpop.permute.xlu0 %3075
      %3077 = vrot.lane.b32.xlu0 %v3046, 120
      %v3078 = vpop.permute.xlu0 %3077
      %3083 = vrot.lane.b32.xlu0 %v3055, 118
      %v3084 = vpop.permute.xlu0 %3083
      %3085 = vrot.lane.b32.xlu0 %v3056, 118
      %v3086 = vpop.permute.xlu0 %3085
      %v3089 = vpack.c.bf16 %v2964, %v2963
      %v3090 = vpack.c.bf16 %v2982, %v2981
      %v3091 = vpack.c.bf16 %v3000, %v2999
      %v3092 = vpack.c.bf16 %v3016, %v3015
      %v3093 = vpack.c.bf16 %v2835, %v2832
      %v3094 = vpack.c.bf16 %v3062, %v3060
      %v3095 = vpack.c.bf16 %v3070, %v3068
      %v3096 = vpack.c.bf16 %v3078, %v3076
      %v3097 = vpack.c.bf16 %v3086, %v3084
      %v3098 = vld [vmem:[%s21] sm:$0xff]
      %v3099 = vld [vmem:[%s21 + $0x8] sm:$0xff]
      %v3100 = vld [vmem:[%s21 + $0x10] sm:$0xff]
      %v3101 = vld [vmem:[%s21 + $0x18] sm:$0xff]
      %v3102 = vld [vmem:[%s23] sm:$0xff]
      %v3103 = vld [vmem:[%s23 + $0x8] sm:$0xff]
      %v3104 = vld [vmem:[%s23 + $0x10] sm:$0xff]
      %v3105 = vld [vmem:[%s23 + $0x18] sm:$0xff]
      %3107 = vset.pattern.permute.xlu0 0
      %3108 = vperm.xlu0 %3107, %v3102
      %v3109 = vpop.permute.xlu0 %3108
      %3112 = vset.pattern.permute.xlu0 0
      %3113 = vperm.xlu0 %3112, %v3103
      %v3114 = vpop.permute.xlu0 %3113
      %3117 = vset.pattern.permute.xlu0 0
      %3118 = vperm.xlu0 %3117, %v3104
      %v3119 = vpop.permute.xlu0 %3118
      %3122 = vset.pattern.permute.xlu0 0
      %3123 = vperm.xlu0 %3122, %v3105
      %v3124 = vpop.permute.xlu0 %3123
      %v3130 = vunpack.c.l.b16 %v3098
      %v3131 = vunpack.c.h.b16 %v3098
      %v3132 = vunpack.c.l.b16 %v3099
      %v3133 = vunpack.c.h.b16 %v3099
      %v3134 = vunpack.c.l.b16 %v3100
      %v3135 = vunpack.c.h.b16 %v3100
      %v3136 = vunpack.c.l.b16 %v3101
      %v3137 = vunpack.c.h.b16 %v3101
      %v3138 = vpack.c.b16 %v3132, %v3130
      %v3139 = vpack.c.b16 %v3133, %v3131
      %v3140 = vpack.c.b16 %v3136, %v3134
      %v3141 = vpack.c.b16 %v3137, %v3135
      %v3145 = vsel %vm1583, %v3139, 0
      %v3148 = vsel %vm1583, %v3141, 0
      %3150 = vmatprep.subr.bf16.mxu0 0
      %3151 = vmatpush1.bf16.msra.mxu0 %v3096
      %3152 = vmatprep.subr.bf16.mxu0 0
      %3153 = vmatpush1.bf16.msra.mxu0 %v3095
      %3154 = vmatprep.subr.bf16.mxu0 0
      %3155 = vmatpush1.bf16.msra.mxu0 %v3094
      %3156 = vmatprep.subr.bf16.mxu0 0
      %3157 = vmatpush1.bf16.msra.mxu0 %v3093
      %3158 = vmatprep.subr.bf16.mxu0 0
      %3159 = vmatpush1.bf16.msra.mxu0 %v3092
      %3160 = vmatprep.subr.bf16.mxu0 0
      %3161 = vmatpush1.bf16.msra.mxu0 %v3091
      %3162 = vmatprep.subr.bf16.mxu0 0
      %3163 = vmatpush1.bf16.msra.mxu0 %v3090
      %3164 = vmatprep.subr.bf16.mxu0 0
      %3165 = vmatpush1.bf16.msra.mxu0 %v3089
      %3166 = vmatprep.subr.bf16.mxu0 0
      %3167 = vmatpush2.bf16.msra.mxu0 0
      %3168 = vmatprep.subr.bf16.mxu0 0
      %3169 = vmatpush2.bf16.msra.mxu0 0
      %3170 = vmatprep.subr.bf16.mxu0 0
      %3171 = vmatpush2.bf16.msra.mxu0 0
      %3172 = vmatprep.subr.bf16.mxu0 0
      %3173 = vmatpush2.bf16.msra.mxu0 0
      %3174 = vmatprep.subr.bf16.mxu0 0
      %3175 = vmatpush2.bf16.msra.mxu0 0
      %3176 = vmatprep.subr.bf16.mxu0 0
      %3177 = vmatpush2.bf16.msra.mxu0 0
      %3178 = vmatprep.subr.bf16.mxu0 0
      %3179 = vmatpush2.bf16.msra.mxu0 0
      %3180 = vmatprep.subr.bf16.mxu0 0
      %3181 = vmatpush2.bf16.msra.mxu0 %v3097
      %3182 = vmatprep.mubr.bf16.mxu0 %v3145
      %3183 = vmatmul.mubr.bf16.gmra.mxu0 %v3138
      %v3184 = vpop.f32.mrf.mxu0
      %v3185 = vadd.f32 %v3109, %v3184
      %v3186 = vpop.f32.mrf.mxu0
      %v3187 = vpop.f32.mrf.mxu0
      %v3188 = vadd.f32 %v3114, %v3187
      %v3189 = vpop.f32.mrf.mxu0
      %3190 = vmatprep.mubr.bf16.mxu0 %v3148
      %3191 = vmatmul.mubr.bf16.gmra.mxu0 %v3140
      %v3192 = vpop.f32.mrf.mxu0
      %v3193 = vadd.f32 %v3119, %v3192
      %v3194 = vpop.f32.mrf.mxu0
      %v3195 = vpop.f32.mrf.mxu0
      %v3196 = vadd.f32 %v3124, %v3195
      %v3197 = vpop.f32.mrf.mxu0
      %3198 = vdwg.mxu0
      %v3199 = vmax.f32 %v3185, 0.0
      %v3200 = vmax.f32 %v3188, 0.0
      %v3201 = vmax.f32 %v3193, 0.0
      %v3202 = vmax.f32 %v3196, 0.0
      %3205 = vrot.lane.b32.xlu0 %v2939, 5
      %v3206 = vpop.permute.xlu0 %3205
      %3207 = vrot.lane.b32.xlu0 %v2942, 5
      %v3208 = vpop.permute.xlu0 %3207
      %v3211 = vsel %vm2953, 0.0, %v3206
      %v3212 = vsel %vm2953, 0.0, %v3208
      %v3213 = vsel %vm2956, %v3211, 0.0
      %v3214 = vsel %vm2956, %v3212, 0.0
      %v3215 = vmul.f32 %v3213, %v2962
      %v3216 = vmul.f32 %v3214, %v2962
      %3217 = vrot.lane.b32.xlu0 %v2939, 4
      %v3218 = vpop.permute.xlu0 %3217
      %3219 = vrot.lane.b32.xlu0 %v2942, 4
      %v3220 = vpop.permute.xlu0 %3219
      %v3223 = vsel %vm2971, 0.0, %v3218
      %v3224 = vsel %vm2971, 0.0, %v3220
      %v3225 = vsel %vm2974, %v3223, 0.0
      %v3226 = vsel %vm2974, %v3224, 0.0
      %v3227 = vmul.f32 %v3225, %v2980
      %v3228 = vmul.f32 %v3226, %v2980
      %3229 = vrot.lane.b32.xlu0 %v2939, 3
      %v3230 = vpop.permute.xlu0 %3229
      %3231 = vrot.lane.b32.xlu0 %v2942, 3
      %v3232 = vpop.permute.xlu0 %3231
      %v3235 = vsel %vm2989, 0.0, %v3230
      %v3236 = vsel %vm2989, 0.0, %v3232
      %v3237 = vsel %vm2992, %v3235, 0.0
      %v3238 = vsel %vm2992, %v3236, 0.0
      %v3239 = vmul.f32 %v3237, %v2998
      %v3240 = vmul.f32 %v3238, %v2998
      %3241 = vrot.lane.b32.xlu0 %v2939, 1
      %v3242 = vpop.permute.xlu0 %3241
      %3243 = vrot.lane.b32.xlu0 %v2942, 1
      %v3244 = vpop.permute.xlu0 %3243
      %v3247 = vsel %vm1625, 0.0, %v3242
      %v3248 = vsel %vm1625, 0.0, %v3244
      %v3249 = vsel %vm1562, %v3247, 0.0
      %v3250 = vsel %vm1562, %v3248, 0.0
      %v3251 = vmul.f32 %v3249, %v3014
      %v3252 = vmul.f32 %v3250, %v3014
      %v3253 = vmul.f32 %v3249, %v3023
      %v3254 = vmul.f32 %v3250, %v3023
      %v3255 = vmul.f32 %v3237, %v3033
      %v3256 = vmul.f32 %v3238, %v3033
      %v3257 = vmul.f32 %v3225, %v3043
      %v3258 = vmul.f32 %v3226, %v3043
      %v3259 = vmul.f32 %v3213, %v3053
      %v3260 = vmul.f32 %v3214, %v3053
      %3263 = vrot.lane.b32.xlu0 %v3253, 126
      %v3264 = vpop.permute.xlu0 %3263
      %3265 = vrot.lane.b32.xlu0 %v3254, 126
      %v3266 = vpop.permute.xlu0 %3265
      %3271 = vrot.lane.b32.xlu0 %v3255, 122
      %v3272 = vpop.permute.xlu0 %3271
      %3273 = vrot.lane.b32.xlu0 %v3256, 122
      %v3274 = vpop.permute.xlu0 %3273
      %3279 = vrot.lane.b32.xlu0 %v3257, 120
      %v3280 = vpop.permute.xlu0 %3279
      %3281 = vrot.lane.b32.xlu0 %v3258, 120
      %v3282 = vpop.permute.xlu0 %3281
      %3287 = vrot.lane.b32.xlu0 %v3259, 118
      %v3288 = vpop.permute.xlu0 %3287
      %3289 = vrot.lane.b32.xlu0 %v3260, 118
      %v3290 = vpop.permute.xlu0 %3289
      %v3293 = vpack.c.bf16 %v3216, %v3215
      %v3294 = vpack.c.bf16 %v3228, %v3227
      %v3295 = vpack.c.bf16 %v3240, %v3239
      %v3296 = vpack.c.bf16 %v3252, %v3251
      %v3297 = vpack.c.bf16 %v2942, %v2939
      %v3298 = vpack.c.bf16 %v3266, %v3264
      %v3299 = vpack.c.bf16 %v3274, %v3272
      %v3300 = vpack.c.bf16 %v3282, %v3280
      %v3301 = vpack.c.bf16 %v3290, %v3288
      %v3302 = vld [vmem:[%s25] sm:$0xff]
      %v3303 = vld [vmem:[%s25 + $0x8] sm:$0xff]
      %v3304 = vld [vmem:[%s25 + $0x10] sm:$0xff]
      %v3305 = vld [vmem:[%s25 + $0x18] sm:$0xff]
      %v3306 = vld [vmem:[%s27] sm:$0xff]
      %v3307 = vld [vmem:[%s27 + $0x8] sm:$0xff]
      %v3308 = vld [vmem:[%s27 + $0x10] sm:$0xff]
      %v3309 = vld [vmem:[%s27 + $0x18] sm:$0xff]
      %3311 = vset.pattern.permute.xlu0 0
      %3312 = vperm.xlu0 %3311, %v3306
      %v3313 = vpop.permute.xlu0 %3312
      %3316 = vset.pattern.permute.xlu0 0
      %3317 = vperm.xlu0 %3316, %v3307
      %v3318 = vpop.permute.xlu0 %3317
      %3321 = vset.pattern.permute.xlu0 0
      %3322 = vperm.xlu0 %3321, %v3308
      %v3323 = vpop.permute.xlu0 %3322
      %3326 = vset.pattern.permute.xlu0 0
      %3327 = vperm.xlu0 %3326, %v3309
      %v3328 = vpop.permute.xlu0 %3327
      %v3334 = vunpack.c.l.b16 %v3302
      %v3335 = vunpack.c.h.b16 %v3302
      %v3336 = vunpack.c.l.b16 %v3303
      %v3337 = vunpack.c.h.b16 %v3303
      %v3338 = vunpack.c.l.b16 %v3304
      %v3339 = vunpack.c.h.b16 %v3304
      %v3340 = vunpack.c.l.b16 %v3305
      %v3341 = vunpack.c.h.b16 %v3305
      %v3342 = vpack.c.b16 %v3336, %v3334
      %v3343 = vpack.c.b16 %v3337, %v3335
      %v3344 = vpack.c.b16 %v3340, %v3338
      %v3345 = vpack.c.b16 %v3341, %v3339
      %v3349 = vsel %vm1583, %v3343, 0
      %v3352 = vsel %vm1583, %v3345, 0
      %3354 = vmatprep.subr.bf16.mxu0 0
      %3355 = vmatpush1.bf16.msra.mxu0 %v3300
      %3356 = vmatprep.subr.bf16.mxu0 0
      %3357 = vmatpush1.bf16.msra.mxu0 %v3299
      %3358 = vmatprep.subr.bf16.mxu0 0
      %3359 = vmatpush1.bf16.msra.mxu0 %v3298
      %3360 = vmatprep.subr.bf16.mxu0 0
      %3361 = vmatpush1.bf16.msra.mxu0 %v3297
      %3362 = vmatprep.subr.bf16.mxu0 0
      %3363 = vmatpush1.bf16.msra.mxu0 %v3296
      %3364 = vmatprep.subr.bf16.mxu0 0
      %3365 = vmatpush1.bf16.msra.mxu0 %v3295
      %3366 = vmatprep.subr.bf16.mxu0 0
      %3367 = vmatpush1.bf16.msra.mxu0 %v3294
      %3368 = vmatprep.subr.bf16.mxu0 0
      %3369 = vmatpush1.bf16.msra.mxu0 %v3293
      %3370 = vmatprep.subr.bf16.mxu0 0
      %3371 = vmatpush2.bf16.msra.mxu0 0
      %3372 = vmatprep.subr.bf16.mxu0 0
      %3373 = vmatpush2.bf16.msra.mxu0 0
      %3374 = vmatprep.subr.bf16.mxu0 0
      %3375 = vmatpush2.bf16.msra.mxu0 0
      %3376 = vmatprep.subr.bf16.mxu0 0
      %3377 = vmatpush2.bf16.msra.mxu0 0
      %3378 = vmatprep.subr.bf16.mxu0 0
      %3379 = vmatpush2.bf16.msra.mxu0 0
      %3380 = vmatprep.subr.bf16.mxu0 0
      %3381 = vmatpush2.bf16.msra.mxu0 0
      %3382 = vmatprep.subr.bf16.mxu0 0
      %3383 = vmatpush2.bf16.msra.mxu0 0
      %3384 = vmatprep.subr.bf16.mxu0 0
      %3385 = vmatpush2.bf16.msra.mxu0 %v3301
      %3386 = vmatprep.mubr.bf16.mxu0 %v3349
      %3387 = vmatmul.mubr.bf16.gmra.mxu0 %v3342
      %v3388 = vpop.f32.mrf.mxu0
      %v3389 = vadd.f32 %v3313, %v3388
      %v3390 = vpop.f32.mrf.mxu0
      %v3391 = vpop.f32.mrf.mxu0
      %v3392 = vadd.f32 %v3318, %v3391
      %v3393 = vpop.f32.mrf.mxu0
      %3394 = vmatprep.mubr.bf16.mxu0 %v3352
      %3395 = vmatmul.mubr.bf16.gmra.mxu0 %v3344
      %v3396 = vpop.f32.mrf.mxu0
      %v3397 = vadd.f32 %v3323, %v3396
      %v3398 = vpop.f32.mrf.mxu0
      %v3399 = vpop.f32.mrf.mxu0
      %v3400 = vadd.f32 %v3328, %v3399
      %v3401 = vpop.f32.mrf.mxu0
      %3402 = vdwg.mxu0
      %v3403 = vmax.f32 %v3389, 0.0
      %v3404 = vmax.f32 %v3392, 0.0
      %v3405 = vmax.f32 %v3397, 0.0
      %v3406 = vmax.f32 %v3400, 0.0
      %v3407 = vadd.f32 %v3199, %v3403
      %v3408 = vadd.f32 %v3200, %v3404
      %v3409 = vadd.f32 %v3201, %v3405
      %v3410 = vadd.f32 %v3202, %v3406
      %3415 = vrot.lane.b32.xlu0 %v3407, 1
      %v3416 = vpop.permute.xlu0 %3415
      %3417 = vrot.lane.b32.xlu0 %v3408, 1
      %v3418 = vpop.permute.xlu0 %3417
      %3419 = vrot.lane.b32.xlu0 %v3409, 1
      %v3420 = vpop.permute.xlu0 %3419
      %3421 = vrot.lane.b32.xlu0 %v3410, 1
      %v3422 = vpop.permute.xlu0 %3421
      %v3427 = vsel %vm1625, 0.0, %v3416
      %v3428 = vsel %vm1625, 0.0, %v3418
      %v3429 = vsel %vm1625, 0.0, %v3420
      %v3430 = vsel %vm1625, 0.0, %v3422
      %v3431 = vsel %vm1562, %v3427, 0.0
      %v3432 = vsel %vm1562, %v3428, 0.0
      %v3433 = vsel %vm1562, %v3429, 0.0
      %v3434 = vsel %vm1562, %v3430, 0.0
      %3439 = vrot.lane.b32.xlu0 %v3431, 126
      %v3440 = vpop.permute.xlu0 %3439
      %3441 = vrot.lane.b32.xlu0 %v3432, 126
      %v3442 = vpop.permute.xlu0 %3441
      %3443 = vrot.lane.b32.xlu0 %v3433, 126
      %v3444 = vpop.permute.xlu0 %3443
      %3445 = vrot.lane.b32.xlu0 %v3434, 126
      %v3446 = vpop.permute.xlu0 %3445
      %v3451 = vmax.f32 %v3407, %v3440
      %v3452 = vmax.f32 %v3408, %v3442
      %v3453 = vmax.f32 %v3409, %v3444
      %v3454 = vmax.f32 %v3410, %v3446
      %3455 = vrot.lane.b32.xlu0 %v3407, 4
      %v3456 = vpop.permute.xlu0 %3455
      %3457 = vrot.lane.b32.xlu0 %v3408, 4
      %v3458 = vpop.permute.xlu0 %3457
      %3459 = vrot.lane.b32.xlu0 %v3409, 4
      %v3460 = vpop.permute.xlu0 %3459
      %3461 = vrot.lane.b32.xlu0 %v3410, 4
      %v3462 = vpop.permute.xlu0 %3461
      %v3467 = vsel %vm2971, 0.0, %v3456
      %v3468 = vsel %vm2971, 0.0, %v3458
      %v3469 = vsel %vm2971, 0.0, %v3460
      %v3470 = vsel %vm2971, 0.0, %v3462
      %v3471 = vsel %vm2974, %v3467, 0.0
      %v3472 = vsel %vm2974, %v3468, 0.0
      %v3473 = vsel %vm2974, %v3469, 0.0
      %v3474 = vsel %vm2974, %v3470, 0.0
      %3475 = vrot.lane.b32.xlu0 %v3407, 5
      %v3476 = vpop.permute.xlu0 %3475
      %3477 = vrot.lane.b32.xlu0 %v3408, 5
      %v3478 = vpop.permute.xlu0 %3477
      %3479 = vrot.lane.b32.xlu0 %v3409, 5
      %v3480 = vpop.permute.xlu0 %3479
      %3481 = vrot.lane.b32.xlu0 %v3410, 5
      %v3482 = vpop.permute.xlu0 %3481
      %v3487 = vsel %vm2953, 0.0, %v3476
      %v3488 = vsel %vm2953, 0.0, %v3478
      %v3489 = vsel %vm2953, 0.0, %v3480
      %v3490 = vsel %vm2953, 0.0, %v3482
      %v3491 = vsel %vm2956, %v3487, 0.0
      %v3492 = vsel %vm2956, %v3488, 0.0
      %v3493 = vsel %vm2956, %v3489, 0.0
      %v3494 = vsel %vm2956, %v3490, 0.0
      %3499 = vrot.lane.b32.xlu0 %v3491, 126
      %v3500 = vpop.permute.xlu0 %3499
      %3501 = vrot.lane.b32.xlu0 %v3492, 126
      %v3502 = vpop.permute.xlu0 %3501
      %3503 = vrot.lane.b32.xlu0 %v3493, 126
      %v3504 = vpop.permute.xlu0 %3503
      %3505 = vrot.lane.b32.xlu0 %v3494, 126
      %v3506 = vpop.permute.xlu0 %3505
      %v3511 = vmax.f32 %v3471, %v3500
      %v3512 = vmax.f32 %v3472, %v3502
      %v3513 = vmax.f32 %v3473, %v3504
      %v3514 = vmax.f32 %v3474, %v3506
      %3519 = vrot.lane.b32.xlu0 %v3511, 120
      %v3520 = vpop.permute.xlu0 %3519
      %3521 = vrot.lane.b32.xlu0 %v3512, 120
      %v3522 = vpop.permute.xlu0 %3521
      %3523 = vrot.lane.b32.xlu0 %v3513, 120
      %v3524 = vpop.permute.xlu0 %3523
      %3525 = vrot.lane.b32.xlu0 %v3514, 120
      %v3526 = vpop.permute.xlu0 %3525
      %v3531 = vmax.f32 %v3451, %v3520
      %v3532 = vmax.f32 %v3452, %v3522
      %v3533 = vmax.f32 %v3453, %v3524
      %v3534 = vmax.f32 %v3454, %v3526
      %v3535 = vpack.c.bf16 %v3532, %v3531
      %v3536 = vpack.c.bf16 %v3534, %v3533
      %v3537 = vld [vmem:[%s91] sm:$0xf]
      %v3538 = vld [vmem:[%s91 + $0x4] sm:$0xf]
      %v3541 = vunpack.c.l.b16 %v3537
      %v3542 = vunpack.c.l.b16 %v3538
      %v3543 = vpack.c.b16 %v3542, %v3541
      %v3546 = vsel %vm1583, %v3535, 0
      %v3549 = vsel %vm1583, %v3536, 0
      %3551 = vmatprep.subr.bf16.mxu0 0
      %3552 = vmatpush1.bf16.msra.mxu0 0
      %3553 = vmatprep.subr.bf16.mxu0 0
      %3554 = vmatpush1.bf16.msra.mxu0 0
      %3555 = vmatprep.subr.bf16.mxu0 0
      %3556 = vmatpush1.bf16.msra.mxu0 0
      %3557 = vmatprep.subr.bf16.mxu0 0
      %3558 = vmatpush1.bf16.msra.mxu0 0
      %3559 = vmatprep.subr.bf16.mxu0 0
      %3560 = vmatpush1.bf16.msra.mxu0 0
      %3561 = vmatprep.subr.bf16.mxu0 0
      %3562 = vmatpush1.bf16.msra.mxu0 0
      %3563 = vmatprep.subr.bf16.mxu0 0
      %3564 = vmatpush1.bf16.msra.mxu0 0
      %3565 = vmatprep.subr.bf16.mxu0 0
      %3566 = vmatpush1.bf16.msra.mxu0 %v3543
      %3567 = vmatprep.subr.bf16.mxu0 0
      %3568 = vmatpush2.bf16.msra.mxu0 0
      %3569 = vmatprep.subr.bf16.mxu0 0
      %3570 = vmatpush2.bf16.msra.mxu0 0
      %3571 = vmatprep.subr.bf16.mxu0 0
      %3572 = vmatpush2.bf16.msra.mxu0 0
      %3573 = vmatprep.subr.bf16.mxu0 0
      %3574 = vmatpush2.bf16.msra.mxu0 0
      %3575 = vmatprep.subr.bf16.mxu0 0
      %3576 = vmatpush2.bf16.msra.mxu0 0
      %3577 = vmatprep.subr.bf16.mxu0 0
      %3578 = vmatpush2.bf16.msra.mxu0 0
      %3579 = vmatprep.subr.bf16.mxu0 0
      %3580 = vmatpush2.bf16.msra.mxu0 0
      %3581 = vmatprep.subr.bf16.mxu0 0
      %3582 = vmatpush2.bf16.msra.mxu0 0
      %3583 = vmatprep.mubr.bf16.mxu0 0
      %3584 = vmatmul.mubr.bf16.gmra.mxu0 %v3546
      %v3585 = vpop.f32.mrf.mxu0
      %v3586 = vadd.f32 0.0, %v3585
      %v3587 = vpop.f32.mrf.mxu0
      %v3588 = vpop.f32.mrf.mxu0
      %v3589 = vadd.f32 0.0, %v3588
      %v3590 = vpop.f32.mrf.mxu0
      %3591 = vmatprep.mubr.bf16.mxu0 0
      %3592 = vmatmul.mubr.bf16.gmra.mxu0 %v3549
      %v3593 = vpop.f32.mrf.mxu0
      %v3594 = vadd.f32 0.0, %v3593
      %v3595 = vpop.f32.mrf.mxu0
      %v3596 = vpop.f32.mrf.mxu0
      %v3597 = vadd.f32 0.0, %v3596
      %v3598 = vpop.f32.mrf.mxu0
      %3599 = vdwg.mxu0
      %3604 = vrot.lane.b32.xlu0 %v3403, 1
      %v3605 = vpop.permute.xlu0 %3604
      %3606 = vrot.lane.b32.xlu0 %v3404, 1
      %v3607 = vpop.permute.xlu0 %3606
      %3608 = vrot.lane.b32.xlu0 %v3405, 1
      %v3609 = vpop.permute.xlu0 %3608
      %3610 = vrot.lane.b32.xlu0 %v3406, 1
      %v3611 = vpop.permute.xlu0 %3610
      %v3616 = vsel %vm1625, 0.0, %v3605
      %v3617 = vsel %vm1625, 0.0, %v3607
      %v3618 = vsel %vm1625, 0.0, %v3609
      %v3619 = vsel %vm1625, 0.0, %v3611
      %v3620 = vsel %vm1562, %v3616, 0.0
      %v3621 = vsel %vm1562, %v3617, 0.0
      %v3622 = vsel %vm1562, %v3618, 0.0
      %v3623 = vsel %vm1562, %v3619, 0.0
      %3628 = vrot.lane.b32.xlu0 %v3620, 126
      %v3629 = vpop.permute.xlu0 %3628
      %3630 = vrot.lane.b32.xlu0 %v3621, 126
      %v3631 = vpop.permute.xlu0 %3630
      %3632 = vrot.lane.b32.xlu0 %v3622, 126
      %v3633 = vpop.permute.xlu0 %3632
      %3634 = vrot.lane.b32.xlu0 %v3623, 126
      %v3635 = vpop.permute.xlu0 %3634
      %v3640 = vmax.f32 %v3403, %v3629
      %v3641 = vmax.f32 %v3404, %v3631
      %v3642 = vmax.f32 %v3405, %v3633
      %v3643 = vmax.f32 %v3406, %v3635
      %3644 = vrot.lane.b32.xlu0 %v3403, 4
      %v3645 = vpop.permute.xlu0 %3644
      %3646 = vrot.lane.b32.xlu0 %v3404, 4
      %v3647 = vpop.permute.xlu0 %3646
      %3648 = vrot.lane.b32.xlu0 %v3405, 4
      %v3649 = vpop.permute.xlu0 %3648
      %3650 = vrot.lane.b32.xlu0 %v3406, 4
      %v3651 = vpop.permute.xlu0 %3650
      %v3656 = vsel %vm2971, 0.0, %v3645
      %v3657 = vsel %vm2971, 0.0, %v3647
      %v3658 = vsel %vm2971, 0.0, %v3649
      %v3659 = vsel %vm2971, 0.0, %v3651
      %v3660 = vsel %vm2974, %v3656, 0.0
      %v3661 = vsel %vm2974, %v3657, 0.0
      %v3662 = vsel %vm2974, %v3658, 0.0
      %v3663 = vsel %vm2974, %v3659, 0.0
      %3664 = vrot.lane.b32.xlu0 %v3403, 5
      %v3665 = vpop.permute.xlu0 %3664
      %3666 = vrot.lane.b32.xlu0 %v3404, 5
      %v3667 = vpop.permute.xlu0 %3666
      %3668 = vrot.lane.b32.xlu0 %v3405, 5
      %v3669 = vpop.permute.xlu0 %3668
      %3670 = vrot.lane.b32.xlu0 %v3406, 5
      %v3671 = vpop.permute.xlu0 %3670
      %v3676 = vsel %vm2953, 0.0, %v3665
      %v3677 = vsel %vm2953, 0.0, %v3667
      %v3678 = vsel %vm2953, 0.0, %v3669
      %v3679 = vsel %vm2953, 0.0, %v3671
      %v3680 = vsel %vm2956, %v3676, 0.0
      %v3681 = vsel %vm2956, %v3677, 0.0
      %v3682 = vsel %vm2956, %v3678, 0.0
      %v3683 = vsel %vm2956, %v3679, 0.0
      %3688 = vrot.lane.b32.xlu0 %v3680, 126
      %v3689 = vpop.permute.xlu0 %3688
      %3690 = vrot.lane.b32.xlu0 %v3681, 126
      %v3691 = vpop.permute.xlu0 %3690
      %3692 = vrot.lane.b32.xlu0 %v3682, 126
      %v3693 = vpop.permute.xlu0 %3692
      %3694 = vrot.lane.b32.xlu0 %v3683, 126
      %v3695 = vpop.permute.xlu0 %3694
      %v3700 = vmax.f32 %v3660, %v3689
      %v3701 = vmax.f32 %v3661, %v3691
      %v3702 = vmax.f32 %v3662, %v3693
      %v3703 = vmax.f32 %v3663, %v3695
      %3708 = vrot.lane.b32.xlu0 %v3700, 120
      %v3709 = vpop.permute.xlu0 %3708
      %3710 = vrot.lane.b32.xlu0 %v3701, 120
      %v3711 = vpop.permute.xlu0 %3710
      %3712 = vrot.lane.b32.xlu0 %v3702, 120
      %v3713 = vpop.permute.xlu0 %3712
      %3714 = vrot.lane.b32.xlu0 %v3703, 120
      %v3715 = vpop.permute.xlu0 %3714
      %v3720 = vmax.f32 %v3640, %v3709
      %v3721 = vmax.f32 %v3641, %v3711
      %v3722 = vmax.f32 %v3642, %v3713
      %v3723 = vmax.f32 %v3643, %v3715
      %v3724 = vpack.c.bf16 %v3721, %v3720
      %v3725 = vpack.c.bf16 %v3723, %v3722
      %v3727 = vsel %vm1583, %v3724, 0
      %v3730 = vsel %vm1583, %v3725, 0
      %3732 = vmatprep.subr.bf16.mxu0 0
      %3733 = vmatpush1.bf16.msra.mxu0 0
      %3734 = vmatprep.subr.bf16.mxu0 0
      %3735 = vmatpush1.bf16.msra.mxu0 0
      %3736 = vmatprep.subr.bf16.mxu0 0
      %3737 = vmatpush1.bf16.msra.mxu0 0
      %3738 = vmatprep.subr.bf16.mxu0 0
      %3739 = vmatpush1.bf16.msra.mxu0 0
      %3740 = vmatprep.subr.bf16.mxu0 0
      %3741 = vmatpush1.bf16.msra.mxu0 0
      %3742 = vmatprep.subr.bf16.mxu0 0
      %3743 = vmatpush1.bf16.msra.mxu0 0
      %3744 = vmatprep.subr.bf16.mxu0 0
      %3745 = vmatpush1.bf16.msra.mxu0 0
      %3746 = vmatprep.subr.bf16.mxu0 0
      %3747 = vmatpush1.bf16.msra.mxu0 %v3543
      %3748 = vmatprep.subr.bf16.mxu0 0
      %3749 = vmatpush2.bf16.msra.mxu0 0
      %3750 = vmatprep.subr.bf16.mxu0 0
      %3751 = vmatpush2.bf16.msra.mxu0 0
      %3752 = vmatprep.subr.bf16.mxu0 0
      %3753 = vmatpush2.bf16.msra.mxu0 0
      %3754 = vmatprep.subr.bf16.mxu0 0
      %3755 = vmatpush2.bf16.msra.mxu0 0
      %3756 = vmatprep.subr.bf16.mxu0 0
      %3757 = vmatpush2.bf16.msra.mxu0 0
      %3758 = vmatprep.subr.bf16.mxu0 0
      %3759 = vmatpush2.bf16.msra.mxu0 0
      %3760 = vmatprep.subr.bf16.mxu0 0
      %3761 = vmatpush2.bf16.msra.mxu0 0
      %3762 = vmatprep.subr.bf16.mxu0 0
      %3763 = vmatpush2.bf16.msra.mxu0 0
      %3764 = vmatprep.mubr.bf16.mxu0 0
      %3765 = vmatmul.mubr.bf16.gmra.mxu0 %v3727
      %v3766 = vpop.f32.mrf.mxu0
      %v3767 = vadd.f32 0.0, %v3766
      %v3768 = vpop.f32.mrf.mxu0
      %v3769 = vpop.f32.mrf.mxu0
      %v3770 = vadd.f32 0.0, %v3769
      %v3771 = vpop.f32.mrf.mxu0
      %3772 = vmatprep.mubr.bf16.mxu0 0
      %3773 = vmatmul.mubr.bf16.gmra.mxu0 %v3730
      %v3774 = vpop.f32.mrf.mxu0
      %v3775 = vadd.f32 0.0, %v3774
      %v3776 = vpop.f32.mrf.mxu0
      %v3777 = vpop.f32.mrf.mxu0
      %v3778 = vadd.f32 0.0, %v3777
      %v3779 = vpop.f32.mrf.mxu0
      %3780 = vdwg.mxu0
      %3785 = vrot.lane.b32.xlu0 %v3586, 3
      %v3786 = vpop.permute.xlu0 %3785
      %3787 = vrot.lane.b32.xlu0 %v3589, 3
      %v3788 = vpop.permute.xlu0 %3787
      %3789 = vrot.lane.b32.xlu0 %v3594, 3
      %v3790 = vpop.permute.xlu0 %3789
      %3791 = vrot.lane.b32.xlu0 %v3597, 3
      %v3792 = vpop.permute.xlu0 %3791
      %v3797 = vsel %vm2989, 0.0, %v3786
      %v3798 = vsel %vm2989, 0.0, %v3788
      %v3799 = vsel %vm2989, 0.0, %v3790
      %v3800 = vsel %vm2989, 0.0, %v3792
      %v3801 = vsel %vm2433, %v3797, 0.0
      %v3802 = vsel %vm2433, %v3798, 0.0
      %v3803 = vsel %vm2433, %v3799, 0.0
      %v3804 = vsel %vm2433, %v3800, 0.0
      %v3805 = vlaneseq
      %v3806 = vshrl.u32 %v3805, 7
      %v3807 = vsub.s32 0, %v3806
      %v3808 = vrot.slane %v1548, %v3807
      %v3809 = vmul.f32 %v3801, %v3808
      %v3810 = vmul.f32 %v3802, %v3808
      %v3811 = vmul.f32 %v3803, %v3808
      %v3812 = vmul.f32 %v3804, %v3808
      %3813 = vrot.lane.b32.xlu0 %v3586, 2
      %v3814 = vpop.permute.xlu0 %3813
      %3815 = vrot.lane.b32.xlu0 %v3589, 2
      %v3816 = vpop.permute.xlu0 %3815
      %3817 = vrot.lane.b32.xlu0 %v3594, 2
      %v3818 = vpop.permute.xlu0 %3817
      %3819 = vrot.lane.b32.xlu0 %v3597, 2
      %v3820 = vpop.permute.xlu0 %3819
      %v3825 = vsel %vm1656, 0.0, %v3814
      %v3826 = vsel %vm1656, 0.0, %v3816
      %v3827 = vsel %vm1656, 0.0, %v3818
      %v3828 = vsel %vm1656, 0.0, %v3820
      %vm3829 = vcmask 48128
      %v3830 = vsel %vm3829, %v3825, 0.0
      %v3831 = vsel %vm3829, %v3826, 0.0
      %v3832 = vsel %vm3829, %v3827, 0.0
      %v3833 = vsel %vm3829, %v3828, 0.0
      %v3834 = vlaneseq
      %v3835 = vshrl.u32 %v3834, 7
      %v3836 = vsub.s32 1, %v3835
      %v3837 = vrot.slane %v1548, %v3836
      %v3838 = vmul.f32 %v3830, %v3837
      %v3839 = vmul.f32 %v3831, %v3837
      %v3840 = vmul.f32 %v3832, %v3837
      %v3841 = vmul.f32 %v3833, %v3837
      %3842 = vrot.lane.b32.xlu0 %v3586, 1
      %v3843 = vpop.permute.xlu0 %3842
      %3844 = vrot.lane.b32.xlu0 %v3589, 1
      %v3845 = vpop.permute.xlu0 %3844
      %3846 = vrot.lane.b32.xlu0 %v3594, 1
      %v3847 = vpop.permute.xlu0 %3846
      %3848 = vrot.lane.b32.xlu0 %v3597, 1
      %v3849 = vpop.permute.xlu0 %3848
      %v3854 = vsel %vm1625, 0.0, %v3843
      %v3855 = vsel %vm1625, 0.0, %v3845
      %v3856 = vsel %vm1625, 0.0, %v3847
      %v3857 = vsel %vm1625, 0.0, %v3849
      %v3858 = vsel %vm2953, %v3854, 0.0
      %v3859 = vsel %vm2953, %v3855, 0.0
      %v3860 = vsel %vm2953, %v3856, 0.0
      %v3861 = vsel %vm2953, %v3857, 0.0
      %v3862 = vlaneseq
      %v3863 = vshrl.u32 %v3862, 7
      %v3864 = vsub.s32 2, %v3863
      %v3865 = vrot.slane %v1548, %v3864
      %v3866 = vmul.f32 %v3858, %v3865
      %v3867 = vmul.f32 %v3859, %v3865
      %v3868 = vmul.f32 %v3860, %v3865
      %v3869 = vmul.f32 %v3861, %v3865
      %v3870 = vlaneseq
      %v3871 = vshrl.u32 %v3870, 7
      %v3872 = vsub.s32 3, %v3871
      %v3873 = vrot.slane %v1548, %v3872
      %v3874 = vmul.f32 %v3858, %v3873
      %v3875 = vmul.f32 %v3859, %v3873
      %v3876 = vmul.f32 %v3860, %v3873
      %v3877 = vmul.f32 %v3861, %v3873
      %v3878 = vlaneseq
      %v3879 = vshrl.u32 %v3878, 7
      %v3880 = vsub.s32 5, %v3879
      %v3881 = vrot.slane %v1548, %v3880
      %3883 = vrot.lane.b32.xlu0 %v3881, 2
      %v3884 = vpop.permute.xlu0 %3883
      %v3886 = vmul.f32 %v3858, %v3884
      %v3887 = vmul.f32 %v3859, %v3884
      %v3888 = vmul.f32 %v3860, %v3884
      %v3889 = vmul.f32 %v3861, %v3884
      %v3890 = vlaneseq
      %v3891 = vshrl.u32 %v3890, 7
      %v3892 = vsub.s32 6, %v3891
      %v3893 = vrot.slane %v1548, %v3892
      %3895 = vrot.lane.b32.xlu0 %v3893, 2
      %v3896 = vpop.permute.xlu0 %3895
      %v3898 = vmul.f32 %v3858, %v3896
      %v3899 = vmul.f32 %v3859, %v3896
      %v3900 = vmul.f32 %v3860, %v3896
      %v3901 = vmul.f32 %v3861, %v3896
      %v3902 = vlaneseq
      %v3903 = vshrl.u32 %v3902, 7
      %v3904 = vsub.s32 7, %v3903
      %v3905 = vrot.slane %v1548, %v3904
      %3907 = vrot.lane.b32.xlu0 %v3905, 4
      %v3908 = vpop.permute.xlu0 %3907
      %v3910 = vmul.f32 %v3830, %v3908
      %v3911 = vmul.f32 %v3831, %v3908
      %v3912 = vmul.f32 %v3832, %v3908
      %v3913 = vmul.f32 %v3833, %v3908
      %v3914 = vlaneseq
      %v3915 = vshrl.u32 %v3914, 7
      %v3916 = vsub.s32 0, %v3915
      %v3917 = vrot.slane %v1549, %v3916
      %3919 = vrot.lane.b32.xlu0 %v3917, 6
      %v3920 = vpop.permute.xlu0 %3919
      %v3922 = vmul.f32 %v3801, %v3920
      %v3923 = vmul.f32 %v3802, %v3920
      %v3924 = vmul.f32 %v3803, %v3920
      %v3925 = vmul.f32 %v3804, %v3920
      %3930 = vrot.lane.b32.xlu0 %v3886, 126
      %v3931 = vpop.permute.xlu0 %3930
      %3932 = vrot.lane.b32.xlu0 %v3887, 126
      %v3933 = vpop.permute.xlu0 %3932
      %3934 = vrot.lane.b32.xlu0 %v3888, 126
      %v3935 = vpop.permute.xlu0 %3934
      %3936 = vrot.lane.b32.xlu0 %v3889, 126
      %v3937 = vpop.permute.xlu0 %3936
      %3946 = vrot.lane.b32.xlu0 %v3898, 126
      %v3947 = vpop.permute.xlu0 %3946
      %3948 = vrot.lane.b32.xlu0 %v3899, 126
      %v3949 = vpop.permute.xlu0 %3948
      %3950 = vrot.lane.b32.xlu0 %v3900, 126
      %v3951 = vpop.permute.xlu0 %3950
      %3952 = vrot.lane.b32.xlu0 %v3901, 126
      %v3953 = vpop.permute.xlu0 %3952
      %3962 = vrot.lane.b32.xlu0 %v3910, 124
      %v3963 = vpop.permute.xlu0 %3962
      %3964 = vrot.lane.b32.xlu0 %v3911, 124
      %v3965 = vpop.permute.xlu0 %3964
      %3966 = vrot.lane.b32.xlu0 %v3912, 124
      %v3967 = vpop.permute.xlu0 %3966
      %3968 = vrot.lane.b32.xlu0 %v3913, 124
      %v3969 = vpop.permute.xlu0 %3968
      %3978 = vrot.lane.b32.xlu0 %v3922, 122
      %v3979 = vpop.permute.xlu0 %3978
      %3980 = vrot.lane.b32.xlu0 %v3923, 122
      %v3981 = vpop.permute.xlu0 %3980
      %3982 = vrot.lane.b32.xlu0 %v3924, 122
      %v3983 = vpop.permute.xlu0 %3982
      %3984 = vrot.lane.b32.xlu0 %v3925, 122
      %v3985 = vpop.permute.xlu0 %3984
      %v3990 = vpack.c.bf16 %v3810, %v3809
      %v3991 = vpack.c.bf16 %v3812, %v3811
      %v3992 = vpack.c.bf16 %v3839, %v3838
      %v3993 = vpack.c.bf16 %v3841, %v3840
      %v3994 = vpack.c.bf16 %v3867, %v3866
      %v3995 = vpack.c.bf16 %v3869, %v3868
      %v3996 = vpack.c.bf16 %v3875, %v3874
      %v3997 = vpack.c.bf16 %v3877, %v3876
      %v3998 = vpack.c.bf16 %v3589, %v3586
      %v3999 = vpack.c.bf16 %v3597, %v3594
      %v4000 = vpack.c.bf16 %v3933, %v3931
      %v4001 = vpack.c.bf16 %v3937, %v3935
      %v4002 = vpack.c.bf16 %v3949, %v3947
      %v4003 = vpack.c.bf16 %v3953, %v3951
      %v4004 = vpack.c.bf16 %v3965, %v3963
      %v4005 = vpack.c.bf16 %v3969, %v3967
      %v4006 = vpack.c.bf16 %v3981, %v3979
      %v4007 = vpack.c.bf16 %v3985, %v3983
      %v4008 = vld [vmem:[%s29] sm:$0xff]
      %v4009 = vld [vmem:[%s29 + $0x8] sm:$0xf]
      %v4010 = vld [vmem:[%s29 + $0xc] sm:$0xff]
      %v4011 = vld [vmem:[%s29 + $0x14] sm:$0xf]
      %v4012 = vld [vmem:[%s29 + $0x18] sm:$0xff]
      %v4013 = vld [vmem:[%s29 + $0x20] sm:$0xf]
      %v4014 = vld [vmem:[%s29 + $0x24] sm:$0xff]
      %v4015 = vld [vmem:[%s29 + $0x2c] sm:$0xf]
      %v4016 = vld [vmem:[%s31] sm:$0xff]
      %v4017 = vld [vmem:[%s31 + $0x8] sm:$0xff]
      %v4018 = vld [vmem:[%s31 + $0x10] sm:$0xff]
      %v4019 = vld [vmem:[%s31 + $0x18] sm:$0xff]
      %4021 = vset.pattern.permute.xlu0 0
      %4022 = vperm.xlu0 %4021, %v4016
      %v4023 = vpop.permute.xlu0 %4022
      %4026 = vset.pattern.permute.xlu0 0
      %4027 = vperm.xlu0 %4026, %v4017
      %v4028 = vpop.permute.xlu0 %4027
      %4031 = vset.pattern.permute.xlu0 0
      %4032 = vperm.xlu0 %4031, %v4018
      %v4033 = vpop.permute.xlu0 %4032
      %4036 = vset.pattern.permute.xlu0 0
      %4037 = vperm.xlu0 %4036, %v4019
      %v4038 = vpop.permute.xlu0 %4037
      %v4048 = vunpack.c.l.b16 %v4008
      %v4049 = vunpack.c.h.b16 %v4008
      %v4050 = vunpack.c.l.b16 %v4009
      %v4051 = vunpack.c.l.b16 %v4010
      %v4052 = vunpack.c.h.b16 %v4010
      %v4053 = vunpack.c.l.b16 %v4011
      %v4054 = vunpack.c.l.b16 %v4012
      %v4055 = vunpack.c.h.b16 %v4012
      %v4056 = vunpack.c.l.b16 %v4013
      %v4057 = vunpack.c.l.b16 %v4014
      %v4058 = vunpack.c.h.b16 %v4014
      %v4059 = vunpack.c.l.b16 %v4015
      %v4060 = vpack.c.b16 %v4051, %v4048
      %v4061 = vpack.c.b16 %v4052, %v4049
      %v4062 = vpack.c.b16 %v4053, %v4050
      %v4063 = vpack.c.b16 %v4057, %v4054
      %v4064 = vpack.c.b16 %v4058, %v4055
      %v4065 = vpack.c.b16 %v4059, %v4056
      %v4071 = vsel %vm1700, %v4062, 0
      %v4074 = vsel %vm1700, %v4065, 0
      %4076 = vmatprep.subr.bf16.mxu0 0
      %4077 = vmatpush1.bf16.msra.mxu0 %v3997
      %4078 = vmatprep.subr.bf16.mxu0 0
      %4079 = vmatpush1.bf16.msra.mxu0 %v3996
      %4080 = vmatprep.subr.bf16.mxu0 0
      %4081 = vmatpush1.bf16.msra.mxu0 %v3995
      %4082 = vmatprep.subr.bf16.mxu0 0
      %4083 = vmatpush1.bf16.msra.mxu0 %v3994
      %4084 = vmatprep.subr.bf16.mxu0 0
      %4085 = vmatpush1.bf16.msra.mxu0 %v3993
      %4086 = vmatprep.subr.bf16.mxu0 0
      %4087 = vmatpush1.bf16.msra.mxu0 %v3992
      %4088 = vmatprep.subr.bf16.mxu0 0
      %4089 = vmatpush1.bf16.msra.mxu0 %v3991
      %4090 = vmatprep.subr.bf16.mxu0 0
      %4091 = vmatpush1.bf16.msra.mxu0 %v3990
      %4092 = vmatprep.subr.bf16.mxu0 0
      %4093 = vmatpush2.bf16.msra.mxu0 %v4005
      %4094 = vmatprep.subr.bf16.mxu0 0
      %4095 = vmatpush2.bf16.msra.mxu0 %v4004
      %4096 = vmatprep.subr.bf16.mxu0 0
      %4097 = vmatpush2.bf16.msra.mxu0 %v4003
      %4098 = vmatprep.subr.bf16.mxu0 0
      %4099 = vmatpush2.bf16.msra.mxu0 %v4002
      %4100 = vmatprep.subr.bf16.mxu0 0
      %4101 = vmatpush2.bf16.msra.mxu0 %v4001
      %4102 = vmatprep.subr.bf16.mxu0 0
      %4103 = vmatpush2.bf16.msra.mxu0 %v4000
      %4104 = vmatprep.subr.bf16.mxu0 0
      %4105 = vmatpush2.bf16.msra.mxu0 %v3999
      %4106 = vmatprep.subr.bf16.mxu0 0
      %4107 = vmatpush2.bf16.msra.mxu0 %v3998
      %4108 = vmatprep.mubr.bf16.mxu0 %v4061
      %4109 = vmatmul.mubr.bf16.gmra.mxu0 %v4060
      %v4110 = vpop.f32.mrf.mxu0
      %v4111 = vadd.f32 %v4023, %v4110
      %v4112 = vpop.f32.mrf.mxu0
      %v4113 = vpop.f32.mrf.mxu0
      %v4114 = vadd.f32 %v4028, %v4113
      %v4115 = vpop.f32.mrf.mxu0
      %4116 = vmatprep.mubr.bf16.mxu0 %v4064
      %4117 = vmatmul.mubr.bf16.gmra.mxu0 %v4063
      %v4118 = vpop.f32.mrf.mxu0
      %v4119 = vadd.f32 %v4033, %v4118
      %v4120 = vpop.f32.mrf.mxu0
      %v4121 = vpop.f32.mrf.mxu0
      %v4122 = vadd.f32 %v4038, %v4121
      %v4123 = vpop.f32.mrf.mxu0
      %4124 = vdwg.mxu0
      %4125 = vmatprep.subr.bf16.mxu0 0
      %4126 = vmatpush1.bf16.msra.mxu0 0
      %4127 = vmatprep.subr.bf16.mxu0 0
      %4128 = vmatpush1.bf16.msra.mxu0 0
      %4129 = vmatprep.subr.bf16.mxu0 0
      %4130 = vmatpush1.bf16.msra.mxu0 0
      %4131 = vmatprep.subr.bf16.mxu0 0
      %4132 = vmatpush1.bf16.msra.mxu0 0
      %4133 = vmatprep.subr.bf16.mxu0 0
      %4134 = vmatpush1.bf16.msra.mxu0 0
      %4135 = vmatprep.subr.bf16.mxu0 0
      %4136 = vmatpush1.bf16.msra.mxu0 0
      %4137 = vmatprep.subr.bf16.mxu0 0
      %4138 = vmatpush1.bf16.msra.mxu0 %v4007
      %4139 = vmatprep.subr.bf16.mxu0 0
      %4140 = vmatpush1.bf16.msra.mxu0 %v4006
      %4141 = vmatprep.subr.bf16.mxu0 0
      %4142 = vmatpush2.bf16.msra.mxu0 0
      %4143 = vmatprep.subr.bf16.mxu0 0
      %4144 = vmatpush2.bf16.msra.mxu0 0
      %4145 = vmatprep.subr.bf16.mxu0 0
      %4146 = vmatpush2.bf16.msra.mxu0 0
      %4147 = vmatprep.subr.bf16.mxu0 0
      %4148 = vmatpush2.bf16.msra.mxu0 0
      %4149 = vmatprep.subr.bf16.mxu0 0
      %4150 = vmatpush2.bf16.msra.mxu0 0
      %4151 = vmatprep.subr.bf16.mxu0 0
      %4152 = vmatpush2.bf16.msra.mxu0 0
      %4153 = vmatprep.subr.bf16.mxu0 0
      %4154 = vmatpush2.bf16.msra.mxu0 0
      %4155 = vmatprep.subr.bf16.mxu0 0
      %4156 = vmatpush2.bf16.msra.mxu0 0
      %4157 = vmatprep.mubr.bf16.mxu0 0
      %4158 = vmatmul.mubr.bf16.gmra.mxu0 %v4071
      %v4159 = vpop.f32.mrf.mxu0
      %v4160 = vadd.f32 %v4111, %v4159
      %v4161 = vpop.f32.mrf.mxu0
      %v4162 = vpop.f32.mrf.mxu0
      %v4163 = vadd.f32 %v4114, %v4162
      %v4164 = vpop.f32.mrf.mxu0
      %4165 = vmatprep.mubr.bf16.mxu0 0
      %4166 = vmatmul.mubr.bf16.gmra.mxu0 %v4074
      %v4167 = vpop.f32.mrf.mxu0
      %v4168 = vadd.f32 %v4119, %v4167
      %v4169 = vpop.f32.mrf.mxu0
      %v4170 = vpop.f32.mrf.mxu0
      %v4171 = vadd.f32 %v4122, %v4170
      %v4172 = vpop.f32.mrf.mxu0
      %4173 = vdwg.mxu0
      %v4174 = vmax.f32 %v4160, 0.0
      %v4175 = vmax.f32 %v4163, 0.0
      %v4176 = vmax.f32 %v4168, 0.0
      %v4177 = vmax.f32 %v4171, 0.0
      %4182 = vrot.lane.b32.xlu0 %v3767, 3
      %v4183 = vpop.permute.xlu0 %4182
      %4184 = vrot.lane.b32.xlu0 %v3770, 3
      %v4185 = vpop.permute.xlu0 %4184
      %4186 = vrot.lane.b32.xlu0 %v3775, 3
      %v4187 = vpop.permute.xlu0 %4186
      %4188 = vrot.lane.b32.xlu0 %v3778, 3
      %v4189 = vpop.permute.xlu0 %4188
      %v4194 = vsel %vm2989, 0.0, %v4183
      %v4195 = vsel %vm2989, 0.0, %v4185
      %v4196 = vsel %vm2989, 0.0, %v4187
      %v4197 = vsel %vm2989, 0.0, %v4189
      %v4198 = vsel %vm2433, %v4194, 0.0
      %v4199 = vsel %vm2433, %v4195, 0.0
      %v4200 = vsel %vm2433, %v4196, 0.0
      %v4201 = vsel %vm2433, %v4197, 0.0
      %v4202 = vmul.f32 %v4198, %v3808
      %v4203 = vmul.f32 %v4199, %v3808
      %v4204 = vmul.f32 %v4200, %v3808
      %v4205 = vmul.f32 %v4201, %v3808
      %4206 = vrot.lane.b32.xlu0 %v3767, 2
      %v4207 = vpop.permute.xlu0 %4206
      %4208 = vrot.lane.b32.xlu0 %v3770, 2
      %v4209 = vpop.permute.xlu0 %4208
      %4210 = vrot.lane.b32.xlu0 %v3775, 2
      %v4211 = vpop.permute.xlu0 %4210
      %4212 = vrot.lane.b32.xlu0 %v3778, 2
      %v4213 = vpop.permute.xlu0 %4212
      %v4218 = vsel %vm1656, 0.0, %v4207
      %v4219 = vsel %vm1656, 0.0, %v4209
      %v4220 = vsel %vm1656, 0.0, %v4211
      %v4221 = vsel %vm1656, 0.0, %v4213
      %v4222 = vsel %vm3829, %v4218, 0.0
      %v4223 = vsel %vm3829, %v4219, 0.0
      %v4224 = vsel %vm3829, %v4220, 0.0
      %v4225 = vsel %vm3829, %v4221, 0.0
      %v4226 = vmul.f32 %v4222, %v3837
      %v4227 = vmul.f32 %v4223, %v3837
      %v4228 = vmul.f32 %v4224, %v3837
      %v4229 = vmul.f32 %v4225, %v3837
      %4230 = vrot.lane.b32.xlu0 %v3767, 1
      %v4231 = vpop.permute.xlu0 %4230
      %4232 = vrot.lane.b32.xlu0 %v3770, 1
      %v4233 = vpop.permute.xlu0 %4232
      %4234 = vrot.lane.b32.xlu0 %v3775, 1
      %v4235 = vpop.permute.xlu0 %4234
      %4236 = vrot.lane.b32.xlu0 %v3778, 1
      %v4237 = vpop.permute.xlu0 %4236
      %v4242 = vsel %vm1625, 0.0, %v4231
      %v4243 = vsel %vm1625, 0.0, %v4233
      %v4244 = vsel %vm1625, 0.0, %v4235
      %v4245 = vsel %vm1625, 0.0, %v4237
      %v4246 = vsel %vm2953, %v4242, 0.0
      %v4247 = vsel %vm2953, %v4243, 0.0
      %v4248 = vsel %vm2953, %v4244, 0.0
      %v4249 = vsel %vm2953, %v4245, 0.0
      %v4250 = vmul.f32 %v4246, %v3865
      %v4251 = vmul.f32 %v4247, %v3865
      %v4252 = vmul.f32 %v4248, %v3865
      %v4253 = vmul.f32 %v4249, %v3865
      %v4254 = vmul.f32 %v4246, %v3873
      %v4255 = vmul.f32 %v4247, %v3873
      %v4256 = vmul.f32 %v4248, %v3873
      %v4257 = vmul.f32 %v4249, %v3873
      %v4258 = vmul.f32 %v4246, %v3884
      %v4259 = vmul.f32 %v4247, %v3884
      %v4260 = vmul.f32 %v4248, %v3884
      %v4261 = vmul.f32 %v4249, %v3884
      %v4262 = vmul.f32 %v4246, %v3896
      %v4263 = vmul.f32 %v4247, %v3896
      %v4264 = vmul.f32 %v4248, %v3896
      %v4265 = vmul.f32 %v4249, %v3896
      %v4266 = vmul.f32 %v4222, %v3908
      %v4267 = vmul.f32 %v4223, %v3908
      %v4268 = vmul.f32 %v4224, %v3908
      %v4269 = vmul.f32 %v4225, %v3908
      %v4270 = vmul.f32 %v4198, %v3920
      %v4271 = vmul.f32 %v4199, %v3920
      %v4272 = vmul.f32 %v4200, %v3920
      %v4273 = vmul.f32 %v4201, %v3920
      %4278 = vrot.lane.b32.xlu0 %v4258, 126
      %v4279 = vpop.permute.xlu0 %4278
      %4280 = vrot.lane.b32.xlu0 %v4259, 126
      %v4281 = vpop.permute.xlu0 %4280
      %4282 = vrot.lane.b32.xlu0 %v4260, 126
      %v4283 = vpop.permute.xlu0 %4282
      %4284 = vrot.lane.b32.xlu0 %v4261, 126
      %v4285 = vpop.permute.xlu0 %4284
      %4294 = vrot.lane.b32.xlu0 %v4262, 126
      %v4295 = vpop.permute.xlu0 %4294
      %4296 = vrot.lane.b32.xlu0 %v4263, 126
      %v4297 = vpop.permute.xlu0 %4296
      %4298 = vrot.lane.b32.xlu0 %v4264, 126
      %v4299 = vpop.permute.xlu0 %4298
      %4300 = vrot.lane.b32.xlu0 %v4265, 126
      %v4301 = vpop.permute.xlu0 %4300
      %4310 = vrot.lane.b32.xlu0 %v4266, 124
      %v4311 = vpop.permute.xlu0 %4310
      %4312 = vrot.lane.b32.xlu0 %v4267, 124
      %v4313 = vpop.permute.xlu0 %4312
      %4314 = vrot.lane.b32.xlu0 %v4268, 124
      %v4315 = vpop.permute.xlu0 %4314
      %4316 = vrot.lane.b32.xlu0 %v4269, 124
      %v4317 = vpop.permute.xlu0 %4316
      %4326 = vrot.lane.b32.xlu0 %v4270, 122
      %v4327 = vpop.permute.xlu0 %4326
      %4328 = vrot.lane.b32.xlu0 %v4271, 122
      %v4329 = vpop.permute.xlu0 %4328
      %4330 = vrot.lane.b32.xlu0 %v4272, 122
      %v4331 = vpop.permute.xlu0 %4330
      %4332 = vrot.lane.b32.xlu0 %v4273, 122
      %v4333 = vpop.permute.xlu0 %4332
      %v4338 = vpack.c.bf16 %v4203, %v4202
      %v4339 = vpack.c.bf16 %v4205, %v4204
      %v4340 = vpack.c.bf16 %v4227, %v4226
      %v4341 = vpack.c.bf16 %v4229, %v4228
      %v4342 = vpack.c.bf16 %v4251, %v4250
      %v4343 = vpack.c.bf16 %v4253, %v4252
      %v4344 = vpack.c.bf16 %v4255, %v4254
      %v4345 = vpack.c.bf16 %v4257, %v4256
      %v4346 = vpack.c.bf16 %v3770, %v3767
      %v4347 = vpack.c.bf16 %v3778, %v3775
      %v4348 = vpack.c.bf16 %v4281, %v4279
      %v4349 = vpack.c.bf16 %v4285, %v4283
      %v4350 = vpack.c.bf16 %v4297, %v4295
      %v4351 = vpack.c.bf16 %v4301, %v4299
      %v4352 = vpack.c.bf16 %v4313, %v4311
      %v4353 = vpack.c.bf16 %v4317, %v4315
      %v4354 = vpack.c.bf16 %v4329, %v4327
      %v4355 = vpack.c.bf16 %v4333, %v4331
      %v4356 = vld [vmem:[%s33] sm:$0xff]
      %v4357 = vld [vmem:[%s33 + $0x8] sm:$0xf]
      %v4358 = vld [vmem:[%s33 + $0xc] sm:$0xff]
      %v4359 = vld [vmem:[%s33 + $0x14] sm:$0xf]
      %v4360 = vld [vmem:[%s33 + $0x18] sm:$0xff]
      %v4361 = vld [vmem:[%s33 + $0x20] sm:$0xf]
      %v4362 = vld [vmem:[%s33 + $0x24] sm:$0xff]
      %v4363 = vld [vmem:[%s33 + $0x2c] sm:$0xf]
      %v4364 = vld [vmem:[%s35] sm:$0xff]
      %v4365 = vld [vmem:[%s35 + $0x8] sm:$0xff]
      %v4366 = vld [vmem:[%s35 + $0x10] sm:$0xff]
      %v4367 = vld [vmem:[%s35 + $0x18] sm:$0xff]
      %4369 = vset.pattern.permute.xlu0 0
      %4370 = vperm.xlu0 %4369, %v4364
      %v4371 = vpop.permute.xlu0 %4370
      %4374 = vset.pattern.permute.xlu0 0
      %4375 = vperm.xlu0 %4374, %v4365
      %v4376 = vpop.permute.xlu0 %4375
      %4379 = vset.pattern.permute.xlu0 0
      %4380 = vperm.xlu0 %4379, %v4366
      %v4381 = vpop.permute.xlu0 %4380
      %4384 = vset.pattern.permute.xlu0 0
      %4385 = vperm.xlu0 %4384, %v4367
      %v4386 = vpop.permute.xlu0 %4385
      %v4396 = vunpack.c.l.b16 %v4356
      %v4397 = vunpack.c.h.b16 %v4356
      %v4398 = vunpack.c.l.b16 %v4357
      %v4399 = vunpack.c.l.b16 %v4358
      %v4400 = vunpack.c.h.b16 %v4358
      %v4401 = vunpack.c.l.b16 %v4359
      %v4402 = vunpack.c.l.b16 %v4360
      %v4403 = vunpack.c.h.b16 %v4360
      %v4404 = vunpack.c.l.b16 %v4361
      %v4405 = vunpack.c.l.b16 %v4362
      %v4406 = vunpack.c.h.b16 %v4362
      %v4407 = vunpack.c.l.b16 %v4363
      %v4408 = vpack.c.b16 %v4399, %v4396
      %v4409 = vpack.c.b16 %v4400, %v4397
      %v4410 = vpack.c.b16 %v4401, %v4398
      %v4411 = vpack.c.b16 %v4405, %v4402
      %v4412 = vpack.c.b16 %v4406, %v4403
      %v4413 = vpack.c.b16 %v4407, %v4404
      %v4419 = vsel %vm1700, %v4410, 0
      %v4422 = vsel %vm1700, %v4413, 0
      %4424 = vmatprep.subr.bf16.mxu0 0
      %4425 = vmatpush1.bf16.msra.mxu0 %v4345
      %4426 = vmatprep.subr.bf16.mxu0 0
      %4427 = vmatpush1.bf16.msra.mxu0 %v4344
      %4428 = vmatprep.subr.bf16.mxu0 0
      %4429 = vmatpush1.bf16.msra.mxu0 %v4343
      %4430 = vmatprep.subr.bf16.mxu0 0
      %4431 = vmatpush1.bf16.msra.mxu0 %v4342
      %4432 = vmatprep.subr.bf16.mxu0 0
      %4433 = vmatpush1.bf16.msra.mxu0 %v4341
      %4434 = vmatprep.subr.bf16.mxu0 0
      %4435 = vmatpush1.bf16.msra.mxu0 %v4340
      %4436 = vmatprep.subr.bf16.mxu0 0
      %4437 = vmatpush1.bf16.msra.mxu0 %v4339
      %4438 = vmatprep.subr.bf16.mxu0 0
      %4439 = vmatpush1.bf16.msra.mxu0 %v4338
      %4440 = vmatprep.subr.bf16.mxu0 0
      %4441 = vmatpush2.bf16.msra.mxu0 %v4353
      %4442 = vmatprep.subr.bf16.mxu0 0
      %4443 = vmatpush2.bf16.msra.mxu0 %v4352
      %4444 = vmatprep.subr.bf16.mxu0 0
      %4445 = vmatpush2.bf16.msra.mxu0 %v4351
      %4446 = vmatprep.subr.bf16.mxu0 0
      %4447 = vmatpush2.bf16.msra.mxu0 %v4350
      %4448 = vmatprep.subr.bf16.mxu0 0
      %4449 = vmatpush2.bf16.msra.mxu0 %v4349
      %4450 = vmatprep.subr.bf16.mxu0 0
      %4451 = vmatpush2.bf16.msra.mxu0 %v4348
      %4452 = vmatprep.subr.bf16.mxu0 0
      %4453 = vmatpush2.bf16.msra.mxu0 %v4347
      %4454 = vmatprep.subr.bf16.mxu0 0
      %4455 = vmatpush2.bf16.msra.mxu0 %v4346
      %4456 = vmatprep.mubr.bf16.mxu0 %v4409
      %4457 = vmatmul.mubr.bf16.gmra.mxu0 %v4408
      %v4458 = vpop.f32.mrf.mxu0
      %v4459 = vadd.f32 %v4371, %v4458
      %v4460 = vpop.f32.mrf.mxu0
      %v4461 = vpop.f32.mrf.mxu0
      %v4462 = vadd.f32 %v4376, %v4461
      %v4463 = vpop.f32.mrf.mxu0
      %4464 = vmatprep.mubr.bf16.mxu0 %v4412
      %4465 = vmatmul.mubr.bf16.gmra.mxu0 %v4411
      %v4466 = vpop.f32.mrf.mxu0
      %v4467 = vadd.f32 %v4381, %v4466
      %v4468 = vpop.f32.mrf.mxu0
      %v4469 = vpop.f32.mrf.mxu0
      %v4470 = vadd.f32 %v4386, %v4469
      %v4471 = vpop.f32.mrf.mxu0
      %4472 = vdwg.mxu0
      %4473 = vmatprep.subr.bf16.mxu0 0
      %4474 = vmatpush1.bf16.msra.mxu0 0
      %4475 = vmatprep.subr.bf16.mxu0 0
      %4476 = vmatpush1.bf16.msra.mxu0 0
      %4477 = vmatprep.subr.bf16.mxu0 0
      %4478 = vmatpush1.bf16.msra.mxu0 0
      %4479 = vmatprep.subr.bf16.mxu0 0
      %4480 = vmatpush1.bf16.msra.mxu0 0
      %4481 = vmatprep.subr.bf16.mxu0 0
      %4482 = vmatpush1.bf16.msra.mxu0 0
      %4483 = vmatprep.subr.bf16.mxu0 0
      %4484 = vmatpush1.bf16.msra.mxu0 0
      %4485 = vmatprep.subr.bf16.mxu0 0
      %4486 = vmatpush1.bf16.msra.mxu0 %v4355
      %4487 = vmatprep.subr.bf16.mxu0 0
      %4488 = vmatpush1.bf16.msra.mxu0 %v4354
      %4489 = vmatprep.subr.bf16.mxu0 0
      %4490 = vmatpush2.bf16.msra.mxu0 0
      %4491 = vmatprep.subr.bf16.mxu0 0
      %4492 = vmatpush2.bf16.msra.mxu0 0
      %4493 = vmatprep.subr.bf16.mxu0 0
      %4494 = vmatpush2.bf16.msra.mxu0 0
      %4495 = vmatprep.subr.bf16.mxu0 0
      %4496 = vmatpush2.bf16.msra.mxu0 0
      %4497 = vmatprep.subr.bf16.mxu0 0
      %4498 = vmatpush2.bf16.msra.mxu0 0
      %4499 = vmatprep.subr.bf16.mxu0 0
      %4500 = vmatpush2.bf16.msra.mxu0 0
      %4501 = vmatprep.subr.bf16.mxu0 0
      %4502 = vmatpush2.bf16.msra.mxu0 0
      %4503 = vmatprep.subr.bf16.mxu0 0
      %4504 = vmatpush2.bf16.msra.mxu0 0
      %4505 = vmatprep.mubr.bf16.mxu0 0
      %4506 = vmatmul.mubr.bf16.gmra.mxu0 %v4419
      %v4507 = vpop.f32.mrf.mxu0
      %v4508 = vadd.f32 %v4459, %v4507
      %v4509 = vpop.f32.mrf.mxu0
      %v4510 = vpop.f32.mrf.mxu0
      %v4511 = vadd.f32 %v4462, %v4510
      %v4512 = vpop.f32.mrf.mxu0
      %4513 = vmatprep.mubr.bf16.mxu0 0
      %4514 = vmatmul.mubr.bf16.gmra.mxu0 %v4422
      %v4515 = vpop.f32.mrf.mxu0
      %v4516 = vadd.f32 %v4467, %v4515
      %v4517 = vpop.f32.mrf.mxu0
      %v4518 = vpop.f32.mrf.mxu0
      %v4519 = vadd.f32 %v4470, %v4518
      %v4520 = vpop.f32.mrf.mxu0
      %4521 = vdwg.mxu0
      %v4522 = vmax.f32 %v4508, 0.0
      %v4523 = vmax.f32 %v4511, 0.0
      %v4524 = vmax.f32 %v4516, 0.0
      %v4525 = vmax.f32 %v4519, 0.0
      %v4526 = vadd.f32 %v4174, %v4522
      %v4527 = vadd.f32 %v4175, %v4523
      %v4528 = vadd.f32 %v4176, %v4524
      %v4529 = vadd.f32 %v4177, %v4525
      %4534 = vrot.lane.b32.xlu0 %v4526, 1
      %v4535 = vpop.permute.xlu0 %4534
      %4536 = vrot.lane.b32.xlu0 %v4527, 1
      %v4537 = vpop.permute.xlu0 %4536
      %4538 = vrot.lane.b32.xlu0 %v4528, 1
      %v4539 = vpop.permute.xlu0 %4538
      %4540 = vrot.lane.b32.xlu0 %v4529, 1
      %v4541 = vpop.permute.xlu0 %4540
      %v4546 = vsel %vm1625, 0.0, %v4535
      %v4547 = vsel %vm1625, 0.0, %v4537
      %v4548 = vsel %vm1625, 0.0, %v4539
      %v4549 = vsel %vm1625, 0.0, %v4541
      %v4550 = vsel %vm2953, %v4546, 0.0
      %v4551 = vsel %vm2953, %v4547, 0.0
      %v4552 = vsel %vm2953, %v4548, 0.0
      %v4553 = vsel %vm2953, %v4549, 0.0
      %4558 = vrot.lane.b32.xlu0 %v4550, 126
      %v4559 = vpop.permute.xlu0 %4558
      %4560 = vrot.lane.b32.xlu0 %v4551, 126
      %v4561 = vpop.permute.xlu0 %4560
      %4562 = vrot.lane.b32.xlu0 %v4552, 126
      %v4563 = vpop.permute.xlu0 %4562
      %4564 = vrot.lane.b32.xlu0 %v4553, 126
      %v4565 = vpop.permute.xlu0 %4564
      %v4570 = vmax.f32 %v4526, %v4559
      %v4571 = vmax.f32 %v4527, %v4561
      %v4572 = vmax.f32 %v4528, %v4563
      %v4573 = vmax.f32 %v4529, %v4565
      %4574 = vrot.lane.b32.xlu0 %v4526, 2
      %v4575 = vpop.permute.xlu0 %4574
      %4576 = vrot.lane.b32.xlu0 %v4527, 2
      %v4577 = vpop.permute.xlu0 %4576
      %4578 = vrot.lane.b32.xlu0 %v4528, 2
      %v4579 = vpop.permute.xlu0 %4578
      %4580 = vrot.lane.b32.xlu0 %v4529, 2
      %v4581 = vpop.permute.xlu0 %4580
      %v4586 = vsel %vm1656, 0.0, %v4575
      %v4587 = vsel %vm1656, 0.0, %v4577
      %v4588 = vsel %vm1656, 0.0, %v4579
      %v4589 = vsel %vm1656, 0.0, %v4581
      %v4590 = vsel %vm3829, %v4586, 0.0
      %v4591 = vsel %vm3829, %v4587, 0.0
      %v4592 = vsel %vm3829, %v4588, 0.0
      %v4593 = vsel %vm3829, %v4589, 0.0
      %4594 = vrot.lane.b32.xlu0 %v4526, 3
      %v4595 = vpop.permute.xlu0 %4594
      %4596 = vrot.lane.b32.xlu0 %v4527, 3
      %v4597 = vpop.permute.xlu0 %4596
      %4598 = vrot.lane.b32.xlu0 %v4528, 3
      %v4599 = vpop.permute.xlu0 %4598
      %4600 = vrot.lane.b32.xlu0 %v4529, 3
      %v4601 = vpop.permute.xlu0 %4600
      %v4606 = vsel %vm2989, 0.0, %v4595
      %v4607 = vsel %vm2989, 0.0, %v4597
      %v4608 = vsel %vm2989, 0.0, %v4599
      %v4609 = vsel %vm2989, 0.0, %v4601
      %v4610 = vsel %vm2433, %v4606, 0.0
      %v4611 = vsel %vm2433, %v4607, 0.0
      %v4612 = vsel %vm2433, %v4608, 0.0
      %v4613 = vsel %vm2433, %v4609, 0.0
      %4618 = vrot.lane.b32.xlu0 %v4610, 126
      %v4619 = vpop.permute.xlu0 %4618
      %4620 = vrot.lane.b32.xlu0 %v4611, 126
      %v4621 = vpop.permute.xlu0 %4620
      %4622 = vrot.lane.b32.xlu0 %v4612, 126
      %v4623 = vpop.permute.xlu0 %4622
      %4624 = vrot.lane.b32.xlu0 %v4613, 126
      %v4625 = vpop.permute.xlu0 %4624
      %v4630 = vmax.f32 %v4590, %v4619
      %v4631 = vmax.f32 %v4591, %v4621
      %v4632 = vmax.f32 %v4592, %v4623
      %v4633 = vmax.f32 %v4593, %v4625
      %4638 = vrot.lane.b32.xlu0 %v4630, 124
      %v4639 = vpop.permute.xlu0 %4638
      %4640 = vrot.lane.b32.xlu0 %v4631, 124
      %v4641 = vpop.permute.xlu0 %4640
      %4642 = vrot.lane.b32.xlu0 %v4632, 124
      %v4643 = vpop.permute.xlu0 %4642
      %4644 = vrot.lane.b32.xlu0 %v4633, 124
      %v4645 = vpop.permute.xlu0 %4644
      %v4650 = vmax.f32 %v4570, %v4639
      %v4651 = vmax.f32 %v4571, %v4641
      %v4652 = vmax.f32 %v4572, %v4643
      %v4653 = vmax.f32 %v4573, %v4645
      %v4654 = vpack.c.bf16 %v4651, %v4650
      %v4655 = vpack.c.bf16 %v4653, %v4652
      %v4656 = vld [vmem:[%s93] sm:$0x3]
      %v4658 = vsel %vm2971, %v4654, 0
      %v4661 = vsel %vm2971, %v4655, 0
      %vm4663 = vcmask 1041408
      %v4665 = vsel %vm4663, %v4656, 0
      %4667 = vmatprep.subr.bf16.mxu0 0
      %4668 = vmatpush1.bf16.msra.mxu0 0
      %4669 = vmatprep.subr.bf16.mxu0 0
      %4670 = vmatpush1.bf16.msra.mxu0 0
      %4671 = vmatprep.subr.bf16.mxu0 0
      %4672 = vmatpush1.bf16.msra.mxu0 0
      %4673 = vmatprep.subr.bf16.mxu0 0
      %4674 = vmatpush1.bf16.msra.mxu0 0
      %4675 = vmatprep.subr.bf16.mxu0 0
      %4676 = vmatpush1.bf16.msra.mxu0 0
      %4677 = vmatprep.subr.bf16.mxu0 0
      %4678 = vmatpush1.bf16.msra.mxu0 0
      %4679 = vmatprep.subr.bf16.mxu0 0
      %4680 = vmatpush1.bf16.msra.mxu0 0
      %4681 = vmatprep.subr.bf16.mxu0 0
      %4682 = vmatpush1.bf16.msra.mxu0 %v4665
      %4683 = vmatprep.subr.bf16.mxu0 0
      %4684 = vmatpush2.bf16.msra.mxu0 0
      %4685 = vmatprep.subr.bf16.mxu0 0
      %4686 = vmatpush2.bf16.msra.mxu0 0
      %4687 = vmatprep.subr.bf16.mxu0 0
      %4688 = vmatpush2.bf16.msra.mxu0 0
      %4689 = vmatprep.subr.bf16.mxu0 0
      %4690 = vmatpush2.bf16.msra.mxu0 0
      %4691 = vmatprep.subr.bf16.mxu0 0
      %4692 = vmatpush2.bf16.msra.mxu0 0
      %4693 = vmatprep.subr.bf16.mxu0 0
      %4694 = vmatpush2.bf16.msra.mxu0 0
      %4695 = vmatprep.subr.bf16.mxu0 0
      %4696 = vmatpush2.bf16.msra.mxu0 0
      %4697 = vmatprep.subr.bf16.mxu0 0
      %4698 = vmatpush2.bf16.msra.mxu0 0
      %4699 = vmatprep.mubr.bf16.mxu0 0
      %4700 = vmatmul.mubr.bf16.gmra.mxu0 %v4658
      %v4701 = vpop.f32.mrf.mxu0
      %v4702 = vadd.f32 0.0, %v4701
      %v4703 = vpop.f32.mrf.mxu0
      %v4704 = vpop.f32.mrf.mxu0
      %v4705 = vadd.f32 0.0, %v4704
      %v4706 = vpop.f32.mrf.mxu0
      %4707 = vmatprep.mubr.bf16.mxu0 0
      %4708 = vmatmul.mubr.bf16.gmra.mxu0 %v4661
      %v4709 = vpop.f32.mrf.mxu0
      %v4710 = vadd.f32 0.0, %v4709
      %v4711 = vpop.f32.mrf.mxu0
      %v4712 = vpop.f32.mrf.mxu0
      %v4713 = vadd.f32 0.0, %v4712
      %v4714 = vpop.f32.mrf.mxu0
      %4715 = vdwg.mxu0
      %4720 = vrot.lane.b32.xlu0 %v4702, 2
      %v4721 = vpop.permute.xlu0 %4720
      %4722 = vrot.lane.b32.xlu0 %v4705, 2
      %v4723 = vpop.permute.xlu0 %4722
      %4724 = vrot.lane.b32.xlu0 %v4710, 2
      %v4725 = vpop.permute.xlu0 %4724
      %4726 = vrot.lane.b32.xlu0 %v4713, 2
      %v4727 = vpop.permute.xlu0 %4726
      %v4732 = vsel %vm1656, 0.0, %v4721
      %v4733 = vsel %vm1656, 0.0, %v4723
      %v4734 = vsel %vm1656, 0.0, %v4725
      %v4735 = vsel %vm1656, 0.0, %v4727
      %v4736 = vsel %vm2989, %v4732, 0.0
      %v4737 = vsel %vm2989, %v4733, 0.0
      %v4738 = vsel %vm2989, %v4734, 0.0
      %v4739 = vsel %vm2989, %v4735, 0.0
      %v4740 = vlaneseq
      %v4741 = vshrl.u32 %v4740, 7
      %v4742 = vsub.s32 0, %v4741
      %v4743 = vrot.slane %v1550, %v4742
      %v4744 = vmul.f32 %v4736, %v4743
      %v4745 = vmul.f32 %v4737, %v4743
      %v4746 = vmul.f32 %v4738, %v4743
      %v4747 = vmul.f32 %v4739, %v4743
      %4748 = vrot.lane.b32.xlu0 %v4702, 1
      %v4749 = vpop.permute.xlu0 %4748
      %4750 = vrot.lane.b32.xlu0 %v4705, 1
      %v4751 = vpop.permute.xlu0 %4750
      %4752 = vrot.lane.b32.xlu0 %v4710, 1
      %v4753 = vpop.permute.xlu0 %4752
      %4754 = vrot.lane.b32.xlu0 %v4713, 1
      %v4755 = vpop.permute.xlu0 %4754
      %v4760 = vsel %vm1625, 0.0, %v4749
      %v4761 = vsel %vm1625, 0.0, %v4751
      %v4762 = vsel %vm1625, 0.0, %v4753
      %v4763 = vsel %vm1625, 0.0, %v4755
      %v4764 = vsel %vm1656, %v4760, 0.0
      %v4765 = vsel %vm1656, %v4761, 0.0
      %v4766 = vsel %vm1656, %v4762, 0.0
      %v4767 = vsel %vm1656, %v4763, 0.0
      %v4768 = vlaneseq
      %v4769 = vshrl.u32 %v4768, 7
      %v4770 = vsub.s32 1, %v4769
      %v4771 = vrot.slane %v1550, %v4770
      %v4772 = vmul.f32 %v4764, %v4771
      %v4773 = vmul.f32 %v4765, %v4771
      %v4774 = vmul.f32 %v4766, %v4771
      %v4775 = vmul.f32 %v4767, %v4771
      %v4776 = vlaneseq
      %v4777 = vshrl.u32 %v4776, 7
      %v4778 = vsub.s32 2, %v4777
      %v4779 = vrot.slane %v1550, %v4778
      %v4780 = vmul.f32 %v4702, %v4779
      %v4781 = vmul.f32 %v4705, %v4779
      %v4782 = vmul.f32 %v4710, %v4779
      %v4783 = vmul.f32 %v4713, %v4779
      %v4784 = vlaneseq
      %v4785 = vshrl.u32 %v4784, 7
      %v4786 = vsub.s32 3, %v4785
      %v4787 = vrot.slane %v1550, %v4786
      %v4788 = vmul.f32 %v4764, %v4787
      %v4789 = vmul.f32 %v4765, %v4787
      %v4790 = vmul.f32 %v4766, %v4787
      %v4791 = vmul.f32 %v4767, %v4787
      %v4792 = vlaneseq
      %v4793 = vshrl.u32 %v4792, 7
      %v4794 = vsub.s32 5, %v4793
      %v4795 = vrot.slane %v1550, %v4794
      %4797 = vrot.lane.b32.xlu0 %v4795, 2
      %v4798 = vpop.permute.xlu0 %4797
      %v4800 = vmul.f32 %v4764, %v4798
      %v4801 = vmul.f32 %v4765, %v4798
      %v4802 = vmul.f32 %v4766, %v4798
      %v4803 = vmul.f32 %v4767, %v4798
      %v4804 = vlaneseq
      %v4805 = vshrl.u32 %v4804, 7
      %v4806 = vsub.s32 6, %v4805
      %v4807 = vrot.slane %v1550, %v4806
      %v4808 = vmul.f32 %v4702, %v4807
      %v4809 = vmul.f32 %v4705, %v4807
      %v4810 = vmul.f32 %v4710, %v4807
      %v4811 = vmul.f32 %v4713, %v4807
      %v4812 = vlaneseq
      %v4813 = vshrl.u32 %v4812, 7
      %v4814 = vsub.s32 7, %v4813
      %v4815 = vrot.slane %v1550, %v4814
      %4817 = vrot.lane.b32.xlu0 %v4815, 2
      %v4818 = vpop.permute.xlu0 %4817
      %v4820 = vmul.f32 %v4764, %v4818
      %v4821 = vmul.f32 %v4765, %v4818
      %v4822 = vmul.f32 %v4766, %v4818
      %v4823 = vmul.f32 %v4767, %v4818
      %v4824 = vlaneseq
      %v4825 = vshrl.u32 %v4824, 7
      %v4826 = vsub.s32 0, %v4825
      %v4827 = vrot.slane %v1551, %v4826
      %4829 = vrot.lane.b32.xlu0 %v4827, 4
      %v4830 = vpop.permute.xlu0 %4829
      %v4832 = vmul.f32 %v4736, %v4830
      %v4833 = vmul.f32 %v4737, %v4830
      %v4834 = vmul.f32 %v4738, %v4830
      %v4835 = vmul.f32 %v4739, %v4830
      %4840 = vrot.lane.b32.xlu0 %v4800, 126
      %v4841 = vpop.permute.xlu0 %4840
      %4842 = vrot.lane.b32.xlu0 %v4801, 126
      %v4843 = vpop.permute.xlu0 %4842
      %4844 = vrot.lane.b32.xlu0 %v4802, 126
      %v4845 = vpop.permute.xlu0 %4844
      %4846 = vrot.lane.b32.xlu0 %v4803, 126
      %v4847 = vpop.permute.xlu0 %4846
      %4856 = vrot.lane.b32.xlu0 %v4820, 126
      %v4857 = vpop.permute.xlu0 %4856
      %4858 = vrot.lane.b32.xlu0 %v4821, 126
      %v4859 = vpop.permute.xlu0 %4858
      %4860 = vrot.lane.b32.xlu0 %v4822, 126
      %v4861 = vpop.permute.xlu0 %4860
      %4862 = vrot.lane.b32.xlu0 %v4823, 126
      %v4863 = vpop.permute.xlu0 %4862
      %4872 = vrot.lane.b32.xlu0 %v4832, 124
      %v4873 = vpop.permute.xlu0 %4872
      %4874 = vrot.lane.b32.xlu0 %v4833, 124
      %v4875 = vpop.permute.xlu0 %4874
      %4876 = vrot.lane.b32.xlu0 %v4834, 124
      %v4877 = vpop.permute.xlu0 %4876
      %4878 = vrot.lane.b32.xlu0 %v4835, 124
      %v4879 = vpop.permute.xlu0 %4878
      %v4884 = vpack.c.bf16 %v4745, %v4744
      %v4885 = vpack.c.bf16 %v4747, %v4746
      %v4886 = vpack.c.bf16 %v4773, %v4772
      %v4887 = vpack.c.bf16 %v4775, %v4774
      %v4888 = vpack.c.bf16 %v4781, %v4780
      %v4889 = vpack.c.bf16 %v4783, %v4782
      %v4890 = vpack.c.bf16 %v4789, %v4788
      %v4891 = vpack.c.bf16 %v4791, %v4790
      %v4892 = vpack.c.bf16 %v4705, %v4702
      %v4893 = vpack.c.bf16 %v4713, %v4710
      %v4894 = vpack.c.bf16 %v4843, %v4841
      %v4895 = vpack.c.bf16 %v4847, %v4845
      %v4896 = vpack.c.bf16 %v4809, %v4808
      %v4897 = vpack.c.bf16 %v4811, %v4810
      %v4898 = vpack.c.bf16 %v4859, %v4857
      %v4899 = vpack.c.bf16 %v4863, %v4861
      %v4900 = vpack.c.bf16 %v4875, %v4873
      %v4901 = vpack.c.bf16 %v4879, %v4877
      %v4902 = vld [vmem:[%s37] sm:$0xff]
      %v4903 = vld [vmem:[%s37 + $0x8] sm:$0xf]
      %v4904 = vld [vmem:[%s37 + $0xc] sm:$0xff]
      %v4905 = vld [vmem:[%s37 + $0x14] sm:$0xf]
      %v4906 = vld [vmem:[%s37 + $0x18] sm:$0xff]
      %v4907 = vld [vmem:[%s37 + $0x20] sm:$0xf]
      %v4908 = vld [vmem:[%s37 + $0x24] sm:$0xff]
      %v4909 = vld [vmem:[%s37 + $0x2c] sm:$0xf]
      %v4910 = vld [vmem:[%s39] sm:$0xff]
      %v4911 = vld [vmem:[%s39 + $0x8] sm:$0xff]
      %v4912 = vld [vmem:[%s39 + $0x10] sm:$0xff]
      %v4913 = vld [vmem:[%s39 + $0x18] sm:$0xff]
      %v4922 = vunpack.c.l.b16 %v4902
      %v4923 = vunpack.c.h.b16 %v4902
      %v4924 = vunpack.c.l.b16 %v4903
      %v4925 = vunpack.c.l.b16 %v4904
      %v4926 = vunpack.c.h.b16 %v4904
      %v4927 = vunpack.c.l.b16 %v4905
      %v4928 = vunpack.c.l.b16 %v4906
      %v4929 = vunpack.c.h.b16 %v4906
      %v4930 = vunpack.c.l.b16 %v4907
      %v4931 = vunpack.c.l.b16 %v4908
      %v4932 = vunpack.c.h.b16 %v4908
      %v4933 = vunpack.c.l.b16 %v4909
      %v4934 = vpack.c.b16 %v4925, %v4922
      %v4935 = vpack.c.b16 %v4926, %v4923
      %v4936 = vpack.c.b16 %v4927, %v4924
      %v4937 = vpack.c.b16 %v4931, %v4928
      %v4938 = vpack.c.b16 %v4932, %v4929
      %v4939 = vpack.c.b16 %v4933, %v4930
      %v4945 = vsel %vm1700, %v4936, 0
      %v4948 = vsel %vm1700, %v4939, 0
      %4950 = vmatprep.subr.bf16.mxu0 0
      %4951 = vmatpush1.bf16.msra.mxu0 %v4891
      %4952 = vmatprep.subr.bf16.mxu0 0
      %4953 = vmatpush1.bf16.msra.mxu0 %v4890
      %4954 = vmatprep.subr.bf16.mxu0 0
      %4955 = vmatpush1.bf16.msra.mxu0 %v4889
      %4956 = vmatprep.subr.bf16.mxu0 0
      %4957 = vmatpush1.bf16.msra.mxu0 %v4888
      %4958 = vmatprep.subr.bf16.mxu0 0
      %4959 = vmatpush1.bf16.msra.mxu0 %v4887
      %4960 = vmatprep.subr.bf16.mxu0 0
      %4961 = vmatpush1.bf16.msra.mxu0 %v4886
      %4962 = vmatprep.subr.bf16.mxu0 0
      %4963 = vmatpush1.bf16.msra.mxu0 %v4885
      %4964 = vmatprep.subr.bf16.mxu0 0
      %4965 = vmatpush1.bf16.msra.mxu0 %v4884
      %4966 = vmatprep.subr.bf16.mxu0 0
      %4967 = vmatpush2.bf16.msra.mxu0 %v4899
      %4968 = vmatprep.subr.bf16.mxu0 0
      %4969 = vmatpush2.bf16.msra.mxu0 %v4898
      %4970 = vmatprep.subr.bf16.mxu0 0
      %4971 = vmatpush2.bf16.msra.mxu0 %v4897
      %4972 = vmatprep.subr.bf16.mxu0 0
      %4973 = vmatpush2.bf16.msra.mxu0 %v4896
      %4974 = vmatprep.subr.bf16.mxu0 0
      %4975 = vmatpush2.bf16.msra.mxu0 %v4895
      %4976 = vmatprep.subr.bf16.mxu0 0
      %4977 = vmatpush2.bf16.msra.mxu0 %v4894
      %4978 = vmatprep.subr.bf16.mxu0 0
      %4979 = vmatpush2.bf16.msra.mxu0 %v4893
      %4980 = vmatprep.subr.bf16.mxu0 0
      %4981 = vmatpush2.bf16.msra.mxu0 %v4892
      %4982 = vmatprep.mubr.bf16.mxu0 %v4935
      %4983 = vmatmul.mubr.bf16.gmra.mxu0 %v4934
      %v4984 = vpop.f32.mrf.mxu0
      %v4985 = vadd.f32 %v4910, %v4984
      %v4986 = vpop.f32.mrf.mxu0
      %v4987 = vpop.f32.mrf.mxu0
      %v4988 = vadd.f32 %v4911, %v4987
      %v4989 = vpop.f32.mrf.mxu0
      %4990 = vmatprep.mubr.bf16.mxu0 %v4938
      %4991 = vmatmul.mubr.bf16.gmra.mxu0 %v4937
      %v4992 = vpop.f32.mrf.mxu0
      %v4993 = vadd.f32 %v4912, %v4992
      %v4994 = vpop.f32.mrf.mxu0
      %v4995 = vpop.f32.mrf.mxu0
      %v4996 = vadd.f32 %v4913, %v4995
      %v4997 = vpop.f32.mrf.mxu0
      %4998 = vdwg.mxu0
      %4999 = vmatprep.subr.bf16.mxu0 0
      %5000 = vmatpush1.bf16.msra.mxu0 0
      %5001 = vmatprep.subr.bf16.mxu0 0
      %5002 = vmatpush1.bf16.msra.mxu0 0
      %5003 = vmatprep.subr.bf16.mxu0 0
      %5004 = vmatpush1.bf16.msra.mxu0 0
      %5005 = vmatprep.subr.bf16.mxu0 0
      %5006 = vmatpush1.bf16.msra.mxu0 0
      %5007 = vmatprep.subr.bf16.mxu0 0
      %5008 = vmatpush1.bf16.msra.mxu0 0
      %5009 = vmatprep.subr.bf16.mxu0 0
      %5010 = vmatpush1.bf16.msra.mxu0 0
      %5011 = vmatprep.subr.bf16.mxu0 0
      %5012 = vmatpush1.bf16.msra.mxu0 %v4901
      %5013 = vmatprep.subr.bf16.mxu0 0
      %5014 = vmatpush1.bf16.msra.mxu0 %v4900
      %5015 = vmatprep.subr.bf16.mxu0 0
      %5016 = vmatpush2.bf16.msra.mxu0 0
      %5017 = vmatprep.subr.bf16.mxu0 0
      %5018 = vmatpush2.bf16.msra.mxu0 0
      %5019 = vmatprep.subr.bf16.mxu0 0
      %5020 = vmatpush2.bf16.msra.mxu0 0
      %5021 = vmatprep.subr.bf16.mxu0 0
      %5022 = vmatpush2.bf16.msra.mxu0 0
      %5023 = vmatprep.subr.bf16.mxu0 0
      %5024 = vmatpush2.bf16.msra.mxu0 0
      %5025 = vmatprep.subr.bf16.mxu0 0
      %5026 = vmatpush2.bf16.msra.mxu0 0
      %5027 = vmatprep.subr.bf16.mxu0 0
      %5028 = vmatpush2.bf16.msra.mxu0 0
      %5029 = vmatprep.subr.bf16.mxu0 0
      %5030 = vmatpush2.bf16.msra.mxu0 0
      %5031 = vmatprep.mubr.bf16.mxu0 0
      %5032 = vmatmul.mubr.bf16.gmra.mxu0 %v4945
      %v5033 = vpop.f32.mrf.mxu0
      %v5034 = vadd.f32 %v4985, %v5033
      %v5035 = vpop.f32.mrf.mxu0
      %v5036 = vpop.f32.mrf.mxu0
      %v5037 = vadd.f32 %v4988, %v5036
      %v5038 = vpop.f32.mrf.mxu0
      %5039 = vmatprep.mubr.bf16.mxu0 0
      %5040 = vmatmul.mubr.bf16.gmra.mxu0 %v4948
      %v5041 = vpop.f32.mrf.mxu0
      %v5042 = vadd.f32 %v4993, %v5041
      %v5043 = vpop.f32.mrf.mxu0
      %v5044 = vpop.f32.mrf.mxu0
      %v5045 = vadd.f32 %v4996, %v5044
      %v5046 = vpop.f32.mrf.mxu0
      %5047 = vdwg.mxu0
      %v5048 = vmax.f32 %v5034, 0.0
      %v5049 = vmax.f32 %v5037, 0.0
      %v5050 = vmax.f32 %v5042, 0.0
      %v5051 = vmax.f32 %v5045, 0.0
      %v5052 = vpack.c.bf16 %v5049, %v5048
      %v5053 = vpack.c.bf16 %v5051, %v5050
      %v5054 = vld [vmem:[%s95] sm:$0x1]
      %v5056 = vsel %vm1625, %v5052, 0
      %v5059 = vsel %vm1625, %v5053, 0
      %vm5061 = vcmask 1040384
      %v5062 = vsel 0, 4294967295, 65535
      %v5063 = vsel %vm5061, %v5062, 0
      %v5065 = vand.u32 %v5054, %v5063
      %5067 = vmatprep.subr.bf16.mxu0 0
      %5068 = vmatpush1.bf16.msra.mxu0 0
      %5069 = vmatprep.subr.bf16.mxu0 0
      %5070 = vmatpush1.bf16.msra.mxu0 0
      %5071 = vmatprep.subr.bf16.mxu0 0
      %5072 = vmatpush1.bf16.msra.mxu0 0
      %5073 = vmatprep.subr.bf16.mxu0 0
      %5074 = vmatpush1.bf16.msra.mxu0 0
      %5075 = vmatprep.subr.bf16.mxu0 0
      %5076 = vmatpush1.bf16.msra.mxu0 0
      %5077 = vmatprep.subr.bf16.mxu0 0
      %5078 = vmatpush1.bf16.msra.mxu0 0
      %5079 = vmatprep.subr.bf16.mxu0 0
      %5080 = vmatpush1.bf16.msra.mxu0 0
      %5081 = vmatprep.subr.bf16.mxu0 0
      %5082 = vmatpush1.bf16.msra.mxu0 %v5065
      %5083 = vmatprep.subr.bf16.mxu0 0
      %5084 = vmatpush2.bf16.msra.mxu0 0
      %5085 = vmatprep.subr.bf16.mxu0 0
      %5086 = vmatpush2.bf16.msra.mxu0 0
      %5087 = vmatprep.subr.bf16.mxu0 0
      %5088 = vmatpush2.bf16.msra.mxu0 0
      %5089 = vmatprep.subr.bf16.mxu0 0
      %5090 = vmatpush2.bf16.msra.mxu0 0
      %5091 = vmatprep.subr.bf16.mxu0 0
      %5092 = vmatpush2.bf16.msra.mxu0 0
      %5093 = vmatprep.subr.bf16.mxu0 0
      %5094 = vmatpush2.bf16.msra.mxu0 0
      %5095 = vmatprep.subr.bf16.mxu0 0
      %5096 = vmatpush2.bf16.msra.mxu0 0
      %5097 = vmatprep.subr.bf16.mxu0 0
      %5098 = vmatpush2.bf16.msra.mxu0 0
      %5099 = vmatprep.mubr.bf16.mxu0 0
      %5100 = vmatmul.mubr.bf16.gmra.mxu0 %v5056
      %v5101 = vpop.f32.mrf.mxu0
      %v5102 = vadd.f32 0.0, %v5101
      %v5103 = vpop.f32.mrf.mxu0
      %v5104 = vpop.f32.mrf.mxu0
      %v5105 = vadd.f32 0.0, %v5104
      %v5106 = vpop.f32.mrf.mxu0
      %5107 = vmatprep.mubr.bf16.mxu0 0
      %5108 = vmatmul.mubr.bf16.gmra.mxu0 %v5059
      %v5109 = vpop.f32.mrf.mxu0
      %v5110 = vadd.f32 0.0, %v5109
      %v5111 = vpop.f32.mrf.mxu0
      %v5112 = vpop.f32.mrf.mxu0
      %v5113 = vadd.f32 0.0, %v5112
      %v5114 = vpop.f32.mrf.mxu0
      %5115 = vdwg.mxu0
      %5120 = vrot.lane.b32.xlu0 %v5102, 3
      %v5121 = vpop.permute.xlu0 %5120
      %5122 = vrot.lane.b32.xlu0 %v5105, 3
      %v5123 = vpop.permute.xlu0 %5122
      %5124 = vrot.lane.b32.xlu0 %v5110, 3
      %v5125 = vpop.permute.xlu0 %5124
      %5126 = vrot.lane.b32.xlu0 %v5113, 3
      %v5127 = vpop.permute.xlu0 %5126
      %v5132 = vsel %vm2989, 0.0, %v5121
      %v5133 = vsel %vm2989, 0.0, %v5123
      %v5134 = vsel %vm2989, 0.0, %v5125
      %v5135 = vsel %vm2989, 0.0, %v5127
      %v5136 = vsel %vm2433, %v5132, 0.0
      %v5137 = vsel %vm2433, %v5133, 0.0
      %v5138 = vsel %vm2433, %v5134, 0.0
      %v5139 = vsel %vm2433, %v5135, 0.0
      %v5140 = vmul.f32 %v5136, %v3808
      %v5141 = vmul.f32 %v5137, %v3808
      %v5142 = vmul.f32 %v5138, %v3808
      %v5143 = vmul.f32 %v5139, %v3808
      %5144 = vrot.lane.b32.xlu0 %v5102, 2
      %v5145 = vpop.permute.xlu0 %5144
      %5146 = vrot.lane.b32.xlu0 %v5105, 2
      %v5147 = vpop.permute.xlu0 %5146
      %5148 = vrot.lane.b32.xlu0 %v5110, 2
      %v5149 = vpop.permute.xlu0 %5148
      %5150 = vrot.lane.b32.xlu0 %v5113, 2
      %v5151 = vpop.permute.xlu0 %5150
      %v5156 = vsel %vm1656, 0.0, %v5145
      %v5157 = vsel %vm1656, 0.0, %v5147
      %v5158 = vsel %vm1656, 0.0, %v5149
      %v5159 = vsel %vm1656, 0.0, %v5151
      %v5160 = vsel %vm3829, %v5156, 0.0
      %v5161 = vsel %vm3829, %v5157, 0.0
      %v5162 = vsel %vm3829, %v5158, 0.0
      %v5163 = vsel %vm3829, %v5159, 0.0
      %v5164 = vmul.f32 %v5160, %v3837
      %v5165 = vmul.f32 %v5161, %v3837
      %v5166 = vmul.f32 %v5162, %v3837
      %v5167 = vmul.f32 %v5163, %v3837
      %5168 = vrot.lane.b32.xlu0 %v5102, 1
      %v5169 = vpop.permute.xlu0 %5168
      %5170 = vrot.lane.b32.xlu0 %v5105, 1
      %v5171 = vpop.permute.xlu0 %5170
      %5172 = vrot.lane.b32.xlu0 %v5110, 1
      %v5173 = vpop.permute.xlu0 %5172
      %5174 = vrot.lane.b32.xlu0 %v5113, 1
      %v5175 = vpop.permute.xlu0 %5174
      %v5180 = vsel %vm1625, 0.0, %v5169
      %v5181 = vsel %vm1625, 0.0, %v5171
      %v5182 = vsel %vm1625, 0.0, %v5173
      %v5183 = vsel %vm1625, 0.0, %v5175
      %v5184 = vsel %vm2953, %v5180, 0.0
      %v5185 = vsel %vm2953, %v5181, 0.0
      %v5186 = vsel %vm2953, %v5182, 0.0
      %v5187 = vsel %vm2953, %v5183, 0.0
      %v5188 = vmul.f32 %v5184, %v3865
      %v5189 = vmul.f32 %v5185, %v3865
      %v5190 = vmul.f32 %v5186, %v3865
      %v5191 = vmul.f32 %v5187, %v3865
      %v5192 = vmul.f32 %v5184, %v3873
      %v5193 = vmul.f32 %v5185, %v3873
      %v5194 = vmul.f32 %v5186, %v3873
      %v5195 = vmul.f32 %v5187, %v3873
      %v5196 = vmul.f32 %v5184, %v3884
      %v5197 = vmul.f32 %v5185, %v3884
      %v5198 = vmul.f32 %v5186, %v3884
      %v5199 = vmul.f32 %v5187, %v3884
      %v5200 = vmul.f32 %v5184, %v3896
      %v5201 = vmul.f32 %v5185, %v3896
      %v5202 = vmul.f32 %v5186, %v3896
      %v5203 = vmul.f32 %v5187, %v3896
      %v5204 = vmul.f32 %v5160, %v3908
      %v5205 = vmul.f32 %v5161, %v3908
      %v5206 = vmul.f32 %v5162, %v3908
      %v5207 = vmul.f32 %v5163, %v3908
      %v5208 = vmul.f32 %v5136, %v3920
      %v5209 = vmul.f32 %v5137, %v3920
      %v5210 = vmul.f32 %v5138, %v3920
      %v5211 = vmul.f32 %v5139, %v3920
      %5216 = vrot.lane.b32.xlu0 %v5196, 126
      %v5217 = vpop.permute.xlu0 %5216
      %5218 = vrot.lane.b32.xlu0 %v5197, 126
      %v5219 = vpop.permute.xlu0 %5218
      %5220 = vrot.lane.b32.xlu0 %v5198, 126
      %v5221 = vpop.permute.xlu0 %5220
      %5222 = vrot.lane.b32.xlu0 %v5199, 126
      %v5223 = vpop.permute.xlu0 %5222
      %5232 = vrot.lane.b32.xlu0 %v5200, 126
      %v5233 = vpop.permute.xlu0 %5232
      %5234 = vrot.lane.b32.xlu0 %v5201, 126
      %v5235 = vpop.permute.xlu0 %5234
      %5236 = vrot.lane.b32.xlu0 %v5202, 126
      %v5237 = vpop.permute.xlu0 %5236
      %5238 = vrot.lane.b32.xlu0 %v5203, 126
      %v5239 = vpop.permute.xlu0 %5238
      %5248 = vrot.lane.b32.xlu0 %v5204, 124
      %v5249 = vpop.permute.xlu0 %5248
      %5250 = vrot.lane.b32.xlu0 %v5205, 124
      %v5251 = vpop.permute.xlu0 %5250
      %5252 = vrot.lane.b32.xlu0 %v5206, 124
      %v5253 = vpop.permute.xlu0 %5252
      %5254 = vrot.lane.b32.xlu0 %v5207, 124
      %v5255 = vpop.permute.xlu0 %5254
      %5264 = vrot.lane.b32.xlu0 %v5208, 122
      %v5265 = vpop.permute.xlu0 %5264
      %5266 = vrot.lane.b32.xlu0 %v5209, 122
      %v5267 = vpop.permute.xlu0 %5266
      %5268 = vrot.lane.b32.xlu0 %v5210, 122
      %v5269 = vpop.permute.xlu0 %5268
      %5270 = vrot.lane.b32.xlu0 %v5211, 122
      %v5271 = vpop.permute.xlu0 %5270
      %v5276 = vpack.c.bf16 %v5141, %v5140
      %v5277 = vpack.c.bf16 %v5143, %v5142
      %v5278 = vpack.c.bf16 %v5165, %v5164
      %v5279 = vpack.c.bf16 %v5167, %v5166
      %v5280 = vpack.c.bf16 %v5189, %v5188
      %v5281 = vpack.c.bf16 %v5191, %v5190
      %v5282 = vpack.c.bf16 %v5193, %v5192
      %v5283 = vpack.c.bf16 %v5195, %v5194
      %v5284 = vpack.c.bf16 %v5105, %v5102
      %v5285 = vpack.c.bf16 %v5113, %v5110
      %v5286 = vpack.c.bf16 %v5219, %v5217
      %v5287 = vpack.c.bf16 %v5223, %v5221
      %v5288 = vpack.c.bf16 %v5235, %v5233
      %v5289 = vpack.c.bf16 %v5239, %v5237
      %v5290 = vpack.c.bf16 %v5251, %v5249
      %v5291 = vpack.c.bf16 %v5255, %v5253
      %v5292 = vpack.c.bf16 %v5267, %v5265
      %v5293 = vpack.c.bf16 %v5271, %v5269
      %v5294 = vld [vmem:[%s41] sm:$0xff]
      %v5295 = vld [vmem:[%s41 + $0x8] sm:$0xf]
      %v5296 = vld [vmem:[%s41 + $0xc] sm:$0xff]
      %v5297 = vld [vmem:[%s41 + $0x14] sm:$0xf]
      %v5298 = vld [vmem:[%s41 + $0x18] sm:$0xff]
      %v5299 = vld [vmem:[%s41 + $0x20] sm:$0xf]
      %v5300 = vld [vmem:[%s41 + $0x24] sm:$0xff]
      %v5301 = vld [vmem:[%s41 + $0x2c] sm:$0xf]
      %5306 = vrot.lane.b32.xlu0 %v4174, 3
      %v5307 = vpop.permute.xlu0 %5306
      %5308 = vrot.lane.b32.xlu0 %v4175, 3
      %v5309 = vpop.permute.xlu0 %5308
      %5310 = vrot.lane.b32.xlu0 %v4176, 3
      %v5311 = vpop.permute.xlu0 %5310
      %5312 = vrot.lane.b32.xlu0 %v4177, 3
      %v5313 = vpop.permute.xlu0 %5312
      %v5318 = vsel %vm2989, 0.0, %v5307
      %v5319 = vsel %vm2989, 0.0, %v5309
      %v5320 = vsel %vm2989, 0.0, %v5311
      %v5321 = vsel %vm2989, 0.0, %v5313
      %v5322 = vsel %vm2433, %v5318, 0.0
      %v5323 = vsel %vm2433, %v5319, 0.0
      %v5324 = vsel %vm2433, %v5320, 0.0
      %v5325 = vsel %vm2433, %v5321, 0.0
      %v5326 = vmul.f32 %v5322, %v3808
      %v5327 = vmul.f32 %v5323, %v3808
      %v5328 = vmul.f32 %v5324, %v3808
      %v5329 = vmul.f32 %v5325, %v3808
      %5330 = vrot.lane.b32.xlu0 %v4174, 2
      %v5331 = vpop.permute.xlu0 %5330
      %5332 = vrot.lane.b32.xlu0 %v4175, 2
      %v5333 = vpop.permute.xlu0 %5332
      %5334 = vrot.lane.b32.xlu0 %v4176, 2
      %v5335 = vpop.permute.xlu0 %5334
      %5336 = vrot.lane.b32.xlu0 %v4177, 2
      %v5337 = vpop.permute.xlu0 %5336
      %v5342 = vsel %vm1656, 0.0, %v5331
      %v5343 = vsel %vm1656, 0.0, %v5333
      %v5344 = vsel %vm1656, 0.0, %v5335
      %v5345 = vsel %vm1656, 0.0, %v5337
      %v5346 = vsel %vm3829, %v5342, 0.0
      %v5347 = vsel %vm3829, %v5343, 0.0
      %v5348 = vsel %vm3829, %v5344, 0.0
      %v5349 = vsel %vm3829, %v5345, 0.0
      %v5350 = vmul.f32 %v5346, %v3837
      %v5351 = vmul.f32 %v5347, %v3837
      %v5352 = vmul.f32 %v5348, %v3837
      %v5353 = vmul.f32 %v5349, %v3837
      %5354 = vrot.lane.b32.xlu0 %v4174, 1
      %v5355 = vpop.permute.xlu0 %5354
      %5356 = vrot.lane.b32.xlu0 %v4175, 1
      %v5357 = vpop.permute.xlu0 %5356
      %5358 = vrot.lane.b32.xlu0 %v4176, 1
      %v5359 = vpop.permute.xlu0 %5358
      %5360 = vrot.lane.b32.xlu0 %v4177, 1
      %v5361 = vpop.permute.xlu0 %5360
      %v5366 = vsel %vm1625, 0.0, %v5355
      %v5367 = vsel %vm1625, 0.0, %v5357
      %v5368 = vsel %vm1625, 0.0, %v5359
      %v5369 = vsel %vm1625, 0.0, %v5361
      %v5370 = vsel %vm2953, %v5366, 0.0
      %v5371 = vsel %vm2953, %v5367, 0.0
      %v5372 = vsel %vm2953, %v5368, 0.0
      %v5373 = vsel %vm2953, %v5369, 0.0
      %v5374 = vmul.f32 %v5370, %v3865
      %v5375 = vmul.f32 %v5371, %v3865
      %v5376 = vmul.f32 %v5372, %v3865
      %v5377 = vmul.f32 %v5373, %v3865
      %v5378 = vmul.f32 %v5370, %v3873
      %v5379 = vmul.f32 %v5371, %v3873
      %v5380 = vmul.f32 %v5372, %v3873
      %v5381 = vmul.f32 %v5373, %v3873
      %v5382 = vmul.f32 %v5370, %v3884
      %v5383 = vmul.f32 %v5371, %v3884
      %v5384 = vmul.f32 %v5372, %v3884
      %v5385 = vmul.f32 %v5373, %v3884
      %v5386 = vmul.f32 %v5370, %v3896
      %v5387 = vmul.f32 %v5371, %v3896
      %v5388 = vmul.f32 %v5372, %v3896
      %v5389 = vmul.f32 %v5373, %v3896
      %v5390 = vmul.f32 %v5346, %v3908
      %v5391 = vmul.f32 %v5347, %v3908
      %v5392 = vmul.f32 %v5348, %v3908
      %v5393 = vmul.f32 %v5349, %v3908
      %v5394 = vmul.f32 %v5322, %v3920
      %v5395 = vmul.f32 %v5323, %v3920
      %v5396 = vmul.f32 %v5324, %v3920
      %v5397 = vmul.f32 %v5325, %v3920
      %5402 = vrot.lane.b32.xlu0 %v5382, 126
      %v5403 = vpop.permute.xlu0 %5402
      %5404 = vrot.lane.b32.xlu0 %v5383, 126
      %v5405 = vpop.permute.xlu0 %5404
      %5406 = vrot.lane.b32.xlu0 %v5384, 126
      %v5407 = vpop.permute.xlu0 %5406
      %5408 = vrot.lane.b32.xlu0 %v5385, 126
      %v5409 = vpop.permute.xlu0 %5408
      %5418 = vrot.lane.b32.xlu0 %v5386, 126
      %v5419 = vpop.permute.xlu0 %5418
      %5420 = vrot.lane.b32.xlu0 %v5387, 126
      %v5421 = vpop.permute.xlu0 %5420
      %5422 = vrot.lane.b32.xlu0 %v5388, 126
      %v5423 = vpop.permute.xlu0 %5422
      %5424 = vrot.lane.b32.xlu0 %v5389, 126
      %v5425 = vpop.permute.xlu0 %5424
      %5434 = vrot.lane.b32.xlu0 %v5390, 124
      %v5435 = vpop.permute.xlu0 %5434
      %5436 = vrot.lane.b32.xlu0 %v5391, 124
      %v5437 = vpop.permute.xlu0 %5436
      %5438 = vrot.lane.b32.xlu0 %v5392, 124
      %v5439 = vpop.permute.xlu0 %5438
      %5440 = vrot.lane.b32.xlu0 %v5393, 124
      %v5441 = vpop.permute.xlu0 %5440
      %5450 = vrot.lane.b32.xlu0 %v5394, 122
      %v5451 = vpop.permute.xlu0 %5450
      %5452 = vrot.lane.b32.xlu0 %v5395, 122
      %v5453 = vpop.permute.xlu0 %5452
      %5454 = vrot.lane.b32.xlu0 %v5396, 122
      %v5455 = vpop.permute.xlu0 %5454
      %5456 = vrot.lane.b32.xlu0 %v5397, 122
      %v5457 = vpop.permute.xlu0 %5456
      %v5462 = vpack.c.bf16 %v5327, %v5326
      %v5463 = vpack.c.bf16 %v5329, %v5328
      %v5464 = vpack.c.bf16 %v5351, %v5350
      %v5465 = vpack.c.bf16 %v5353, %v5352
      %v5466 = vpack.c.bf16 %v5375, %v5374
      %v5467 = vpack.c.bf16 %v5377, %v5376
      %v5468 = vpack.c.bf16 %v5379, %v5378
      %v5469 = vpack.c.bf16 %v5381, %v5380
      %v5470 = vpack.c.bf16 %v4175, %v4174
      %v5471 = vpack.c.bf16 %v4177, %v4176
      %v5472 = vpack.c.bf16 %v5405, %v5403
      %v5473 = vpack.c.bf16 %v5409, %v5407
      %v5474 = vpack.c.bf16 %v5421, %v5419
      %v5475 = vpack.c.bf16 %v5425, %v5423
      %v5476 = vpack.c.bf16 %v5437, %v5435
      %v5477 = vpack.c.bf16 %v5441, %v5439
      %v5478 = vpack.c.bf16 %v5453, %v5451
      %v5479 = vpack.c.bf16 %v5457, %v5455
      %v5480 = vld [vmem:[%s43] sm:$0xff]
      %v5481 = vld [vmem:[%s43 + $0x8] sm:$0xf]
      %v5482 = vld [vmem:[%s43 + $0xc] sm:$0xff]
      %v5483 = vld [vmem:[%s43 + $0x14] sm:$0xf]
      %v5484 = vld [vmem:[%s43 + $0x18] sm:$0xff]
      %v5485 = vld [vmem:[%s43 + $0x20] sm:$0xf]
      %v5486 = vld [vmem:[%s43 + $0x24] sm:$0xff]
      %v5487 = vld [vmem:[%s43 + $0x2c] sm:$0xf]
      %v5496 = vunpack.c.l.b16 %v5480
      %v5497 = vunpack.c.h.b16 %v5480
      %v5498 = vunpack.c.l.b16 %v5481
      %v5499 = vunpack.c.l.b16 %v5482
      %v5500 = vunpack.c.h.b16 %v5482
      %v5501 = vunpack.c.l.b16 %v5483
      %v5502 = vunpack.c.l.b16 %v5484
      %v5503 = vunpack.c.h.b16 %v5484
      %v5504 = vunpack.c.l.b16 %v5485
      %v5505 = vunpack.c.l.b16 %v5486
      %v5506 = vunpack.c.h.b16 %v5486
      %v5507 = vunpack.c.l.b16 %v5487
      %v5508 = vpack.c.b16 %v5499, %v5496
      %v5509 = vpack.c.b16 %v5500, %v5497
      %v5510 = vpack.c.b16 %v5501, %v5498
      %v5511 = vpack.c.b16 %v5505, %v5502
      %v5512 = vpack.c.b16 %v5506, %v5503
      %v5513 = vpack.c.b16 %v5507, %v5504
      %v5519 = vsel %vm1700, %v5510, 0
      %v5522 = vsel %vm1700, %v5513, 0
      %5524 = vmatprep.subr.bf16.mxu0 0
      %5525 = vmatpush1.bf16.msra.mxu0 %v5469
      %5526 = vmatprep.subr.bf16.mxu0 0
      %5527 = vmatpush1.bf16.msra.mxu0 %v5468
      %5528 = vmatprep.subr.bf16.mxu0 0
      %5529 = vmatpush1.bf16.msra.mxu0 %v5467
      %5530 = vmatprep.subr.bf16.mxu0 0
      %5531 = vmatpush1.bf16.msra.mxu0 %v5466
      %5532 = vmatprep.subr.bf16.mxu0 0
      %5533 = vmatpush1.bf16.msra.mxu0 %v5465
      %5534 = vmatprep.subr.bf16.mxu0 0
      %5535 = vmatpush1.bf16.msra.mxu0 %v5464
      %5536 = vmatprep.subr.bf16.mxu0 0
      %5537 = vmatpush1.bf16.msra.mxu0 %v5463
      %5538 = vmatprep.subr.bf16.mxu0 0
      %5539 = vmatpush1.bf16.msra.mxu0 %v5462
      %5540 = vmatprep.subr.bf16.mxu0 0
      %5541 = vmatpush2.bf16.msra.mxu0 %v5477
      %5542 = vmatprep.subr.bf16.mxu0 0
      %5543 = vmatpush2.bf16.msra.mxu0 %v5476
      %5544 = vmatprep.subr.bf16.mxu0 0
      %5545 = vmatpush2.bf16.msra.mxu0 %v5475
      %5546 = vmatprep.subr.bf16.mxu0 0
      %5547 = vmatpush2.bf16.msra.mxu0 %v5474
      %5548 = vmatprep.subr.bf16.mxu0 0
      %5549 = vmatpush2.bf16.msra.mxu0 %v5473
      %5550 = vmatprep.subr.bf16.mxu0 0
      %5551 = vmatpush2.bf16.msra.mxu0 %v5472
      %5552 = vmatprep.subr.bf16.mxu0 0
      %5553 = vmatpush2.bf16.msra.mxu0 %v5471
      %5554 = vmatprep.subr.bf16.mxu0 0
      %5555 = vmatpush2.bf16.msra.mxu0 %v5470
      %5556 = vmatprep.mubr.bf16.mxu0 %v5509
      %5557 = vmatmul.mubr.bf16.gmra.mxu0 %v5508
      %v5558 = vpop.f32.mrf.mxu0
      %v5559 = vadd.f32 0.0, %v5558
      %v5560 = vpop.f32.mrf.mxu0
      %v5561 = vpop.f32.mrf.mxu0
      %v5562 = vadd.f32 0.0, %v5561
      %v5563 = vpop.f32.mrf.mxu0
      %5564 = vmatprep.mubr.bf16.mxu0 %v5512
      %5565 = vmatmul.mubr.bf16.gmra.mxu0 %v5511
      %v5566 = vpop.f32.mrf.mxu0
      %v5567 = vadd.f32 0.0, %v5566
      %v5568 = vpop.f32.mrf.mxu0
      %v5569 = vpop.f32.mrf.mxu0
      %v5570 = vadd.f32 0.0, %v5569
      %v5571 = vpop.f32.mrf.mxu0
      %5572 = vdwg.mxu0
      %5573 = vmatprep.subr.bf16.mxu0 0
      %5574 = vmatpush1.bf16.msra.mxu0 0
      %5575 = vmatprep.subr.bf16.mxu0 0
      %5576 = vmatpush1.bf16.msra.mxu0 0
      %5577 = vmatprep.subr.bf16.mxu0 0
      %5578 = vmatpush1.bf16.msra.mxu0 0
      %5579 = vmatprep.subr.bf16.mxu0 0
      %5580 = vmatpush1.bf16.msra.mxu0 0
      %5581 = vmatprep.subr.bf16.mxu0 0
      %5582 = vmatpush1.bf16.msra.mxu0 0
      %5583 = vmatprep.subr.bf16.mxu0 0
      %5584 = vmatpush1.bf16.msra.mxu0 0
      %5585 = vmatprep.subr.bf16.mxu0 0
      %5586 = vmatpush1.bf16.msra.mxu0 %v5479
      %5587 = vmatprep.subr.bf16.mxu0 0
      %5588 = vmatpush1.bf16.msra.mxu0 %v5478
      %5589 = vmatprep.subr.bf16.mxu0 0
      %5590 = vmatpush2.bf16.msra.mxu0 0
      %5591 = vmatprep.subr.bf16.mxu0 0
      %5592 = vmatpush2.bf16.msra.mxu0 0
      %5593 = vmatprep.subr.bf16.mxu0 0
      %5594 = vmatpush2.bf16.msra.mxu0 0
      %5595 = vmatprep.subr.bf16.mxu0 0
      %5596 = vmatpush2.bf16.msra.mxu0 0
      %5597 = vmatprep.subr.bf16.mxu0 0
      %5598 = vmatpush2.bf16.msra.mxu0 0
      %5599 = vmatprep.subr.bf16.mxu0 0
      %5600 = vmatpush2.bf16.msra.mxu0 0
      %5601 = vmatprep.subr.bf16.mxu0 0
      %5602 = vmatpush2.bf16.msra.mxu0 0
      %5603 = vmatprep.subr.bf16.mxu0 0
      %5604 = vmatpush2.bf16.msra.mxu0 0
      %5605 = vmatprep.mubr.bf16.mxu0 0
      %5606 = vmatmul.mubr.bf16.gmra.mxu0 %v5519
      %v5607 = vpop.f32.mrf.mxu0
      %v5608 = vadd.f32 %v5559, %v5607
      %v5609 = vpop.f32.mrf.mxu0
      %v5610 = vpop.f32.mrf.mxu0
      %v5611 = vadd.f32 %v5562, %v5610
      %v5612 = vpop.f32.mrf.mxu0
      %5613 = vmatprep.mubr.bf16.mxu0 0
      %5614 = vmatmul.mubr.bf16.gmra.mxu0 %v5522
      %v5615 = vpop.f32.mrf.mxu0
      %v5616 = vadd.f32 %v5567, %v5615
      %v5617 = vpop.f32.mrf.mxu0
      %v5618 = vpop.f32.mrf.mxu0
      %v5619 = vadd.f32 %v5570, %v5618
      %v5620 = vpop.f32.mrf.mxu0
      %5621 = vdwg.mxu0
      %v5630 = vunpack.c.l.b16 %v5294
      %v5631 = vunpack.c.h.b16 %v5294
      %v5632 = vunpack.c.l.b16 %v5295
      %v5633 = vunpack.c.l.b16 %v5296
      %v5634 = vunpack.c.h.b16 %v5296
      %v5635 = vunpack.c.l.b16 %v5297
      %v5636 = vunpack.c.l.b16 %v5298
      %v5637 = vunpack.c.h.b16 %v5298
      %v5638 = vunpack.c.l.b16 %v5299
      %v5639 = vunpack.c.l.b16 %v5300
      %v5640 = vunpack.c.h.b16 %v5300
      %v5641 = vunpack.c.l.b16 %v5301
      %v5642 = vpack.c.b16 %v5633, %v5630
      %v5643 = vpack.c.b16 %v5634, %v5631
      %v5644 = vpack.c.b16 %v5635, %v5632
      %v5645 = vpack.c.b16 %v5639, %v5636
      %v5646 = vpack.c.b16 %v5640, %v5637
      %v5647 = vpack.c.b16 %v5641, %v5638
      %v5653 = vsel %vm1700, %v5644, 0
      %v5656 = vsel %vm1700, %v5647, 0
      %5658 = vmatprep.subr.bf16.mxu0 0
      %5659 = vmatpush1.bf16.msra.mxu0 %v5283
      %5660 = vmatprep.subr.bf16.mxu0 0
      %5661 = vmatpush1.bf16.msra.mxu0 %v5282
      %5662 = vmatprep.subr.bf16.mxu0 0
      %5663 = vmatpush1.bf16.msra.mxu0 %v5281
      %5664 = vmatprep.subr.bf16.mxu0 0
      %5665 = vmatpush1.bf16.msra.mxu0 %v5280
      %5666 = vmatprep.subr.bf16.mxu0 0
      %5667 = vmatpush1.bf16.msra.mxu0 %v5279
      %5668 = vmatprep.subr.bf16.mxu0 0
      %5669 = vmatpush1.bf16.msra.mxu0 %v5278
      %5670 = vmatprep.subr.bf16.mxu0 0
      %5671 = vmatpush1.bf16.msra.mxu0 %v5277
      %5672 = vmatprep.subr.bf16.mxu0 0
      %5673 = vmatpush1.bf16.msra.mxu0 %v5276
      %5674 = vmatprep.subr.bf16.mxu0 0
      %5675 = vmatpush2.bf16.msra.mxu0 %v5291
      %5676 = vmatprep.subr.bf16.mxu0 0
      %5677 = vmatpush2.bf16.msra.mxu0 %v5290
      %5678 = vmatprep.subr.bf16.mxu0 0
      %5679 = vmatpush2.bf16.msra.mxu0 %v5289
      %5680 = vmatprep.subr.bf16.mxu0 0
      %5681 = vmatpush2.bf16.msra.mxu0 %v5288
      %5682 = vmatprep.subr.bf16.mxu0 0
      %5683 = vmatpush2.bf16.msra.mxu0 %v5287
      %5684 = vmatprep.subr.bf16.mxu0 0
      %5685 = vmatpush2.bf16.msra.mxu0 %v5286
      %5686 = vmatprep.subr.bf16.mxu0 0
      %5687 = vmatpush2.bf16.msra.mxu0 %v5285
      %5688 = vmatprep.subr.bf16.mxu0 0
      %5689 = vmatpush2.bf16.msra.mxu0 %v5284
      %5690 = vmatprep.mubr.bf16.mxu0 %v5643
      %5691 = vmatmul.mubr.bf16.gmra.mxu0 %v5642
      %v5692 = vpop.f32.mrf.mxu0
      %v5693 = vadd.f32 %v5608, %v5692
      %v5694 = vpop.f32.mrf.mxu0
      %v5695 = vpop.f32.mrf.mxu0
      %v5696 = vadd.f32 %v5611, %v5695
      %v5697 = vpop.f32.mrf.mxu0
      %5698 = vmatprep.mubr.bf16.mxu0 %v5646
      %5699 = vmatmul.mubr.bf16.gmra.mxu0 %v5645
      %v5700 = vpop.f32.mrf.mxu0
      %v5701 = vadd.f32 %v5616, %v5700
      %v5702 = vpop.f32.mrf.mxu0
      %v5703 = vpop.f32.mrf.mxu0
      %v5704 = vadd.f32 %v5619, %v5703
      %v5705 = vpop.f32.mrf.mxu0
      %5706 = vdwg.mxu0
      %5707 = vmatprep.subr.bf16.mxu0 0
      %5708 = vmatpush1.bf16.msra.mxu0 0
      %5709 = vmatprep.subr.bf16.mxu0 0
      %5710 = vmatpush1.bf16.msra.mxu0 0
      %5711 = vmatprep.subr.bf16.mxu0 0
      %5712 = vmatpush1.bf16.msra.mxu0 0
      %5713 = vmatprep.subr.bf16.mxu0 0
      %5714 = vmatpush1.bf16.msra.mxu0 0
      %5715 = vmatprep.subr.bf16.mxu0 0
      %5716 = vmatpush1.bf16.msra.mxu0 0
      %5717 = vmatprep.subr.bf16.mxu0 0
      %5718 = vmatpush1.bf16.msra.mxu0 0
      %5719 = vmatprep.subr.bf16.mxu0 0
      %5720 = vmatpush1.bf16.msra.mxu0 %v5293
      %5721 = vmatprep.subr.bf16.mxu0 0
      %5722 = vmatpush1.bf16.msra.mxu0 %v5292
      %5723 = vmatprep.subr.bf16.mxu0 0
      %5724 = vmatpush2.bf16.msra.mxu0 0
      %5725 = vmatprep.subr.bf16.mxu0 0
      %5726 = vmatpush2.bf16.msra.mxu0 0
      %5727 = vmatprep.subr.bf16.mxu0 0
      %5728 = vmatpush2.bf16.msra.mxu0 0
      %5729 = vmatprep.subr.bf16.mxu0 0
      %5730 = vmatpush2.bf16.msra.mxu0 0
      %5731 = vmatprep.subr.bf16.mxu0 0
      %5732 = vmatpush2.bf16.msra.mxu0 0
      %5733 = vmatprep.subr.bf16.mxu0 0
      %5734 = vmatpush2.bf16.msra.mxu0 0
      %5735 = vmatprep.subr.bf16.mxu0 0
      %5736 = vmatpush2.bf16.msra.mxu0 0
      %5737 = vmatprep.subr.bf16.mxu0 0
      %5738 = vmatpush2.bf16.msra.mxu0 0
      %5739 = vmatprep.mubr.bf16.mxu0 0
      %5740 = vmatmul.mubr.bf16.gmra.mxu0 %v5653
      %v5741 = vpop.f32.mrf.mxu0
      %v5742 = vadd.f32 %v5693, %v5741
      %v5743 = vpop.f32.mrf.mxu0
      %v5744 = vpop.f32.mrf.mxu0
      %v5745 = vadd.f32 %v5696, %v5744
      %v5746 = vpop.f32.mrf.mxu0
      %5747 = vmatprep.mubr.bf16.mxu0 0
      %5748 = vmatmul.mubr.bf16.gmra.mxu0 %v5656
      %v5749 = vpop.f32.mrf.mxu0
      %v5750 = vadd.f32 %v5701, %v5749
      %v5751 = vpop.f32.mrf.mxu0
      %v5752 = vpop.f32.mrf.mxu0
      %v5753 = vadd.f32 %v5704, %v5752
      %v5754 = vpop.f32.mrf.mxu0
      %5755 = vdwg.mxu0
      %5760 = vrot.lane.b32.xlu0 %v4522, 3
      %v5761 = vpop.permute.xlu0 %5760
      %5762 = vrot.lane.b32.xlu0 %v4523, 3
      %v5763 = vpop.permute.xlu0 %5762
      %5764 = vrot.lane.b32.xlu0 %v4524, 3
      %v5765 = vpop.permute.xlu0 %5764
      %5766 = vrot.lane.b32.xlu0 %v4525, 3
      %v5767 = vpop.permute.xlu0 %5766
      %v5772 = vsel %vm2989, 0.0, %v5761
      %v5773 = vsel %vm2989, 0.0, %v5763
      %v5774 = vsel %vm2989, 0.0, %v5765
      %v5775 = vsel %vm2989, 0.0, %v5767
      %v5776 = vsel %vm2433, %v5772, 0.0
      %v5777 = vsel %vm2433, %v5773, 0.0
      %v5778 = vsel %vm2433, %v5774, 0.0
      %v5779 = vsel %vm2433, %v5775, 0.0
      %v5780 = vmul.f32 %v5776, %v3808
      %v5781 = vmul.f32 %v5777, %v3808
      %v5782 = vmul.f32 %v5778, %v3808
      %v5783 = vmul.f32 %v5779, %v3808
      %5784 = vrot.lane.b32.xlu0 %v4522, 2
      %v5785 = vpop.permute.xlu0 %5784
      %5786 = vrot.lane.b32.xlu0 %v4523, 2
      %v5787 = vpop.permute.xlu0 %5786
      %5788 = vrot.lane.b32.xlu0 %v4524, 2
      %v5789 = vpop.permute.xlu0 %5788
      %5790 = vrot.lane.b32.xlu0 %v4525, 2
      %v5791 = vpop.permute.xlu0 %5790
      %v5796 = vsel %vm1656, 0.0, %v5785
      %v5797 = vsel %vm1656, 0.0, %v5787
      %v5798 = vsel %vm1656, 0.0, %v5789
      %v5799 = vsel %vm1656, 0.0, %v5791
      %v5800 = vsel %vm3829, %v5796, 0.0
      %v5801 = vsel %vm3829, %v5797, 0.0
      %v5802 = vsel %vm3829, %v5798, 0.0
      %v5803 = vsel %vm3829, %v5799, 0.0
      %v5804 = vmul.f32 %v5800, %v3837
      %v5805 = vmul.f32 %v5801, %v3837
      %v5806 = vmul.f32 %v5802, %v3837
      %v5807 = vmul.f32 %v5803, %v3837
      %5808 = vrot.lane.b32.xlu0 %v4522, 1
      %v5809 = vpop.permute.xlu0 %5808
      %5810 = vrot.lane.b32.xlu0 %v4523, 1
      %v5811 = vpop.permute.xlu0 %5810
      %5812 = vrot.lane.b32.xlu0 %v4524, 1
      %v5813 = vpop.permute.xlu0 %5812
      %5814 = vrot.lane.b32.xlu0 %v4525, 1
      %v5815 = vpop.permute.xlu0 %5814
      %v5820 = vsel %vm1625, 0.0, %v5809
      %v5821 = vsel %vm1625, 0.0, %v5811
      %v5822 = vsel %vm1625, 0.0, %v5813
      %v5823 = vsel %vm1625, 0.0, %v5815
      %v5824 = vsel %vm2953, %v5820, 0.0
      %v5825 = vsel %vm2953, %v5821, 0.0
      %v5826 = vsel %vm2953, %v5822, 0.0
      %v5827 = vsel %vm2953, %v5823, 0.0
      %v5828 = vmul.f32 %v5824, %v3865
      %v5829 = vmul.f32 %v5825, %v3865
      %v5830 = vmul.f32 %v5826, %v3865
      %v5831 = vmul.f32 %v5827, %v3865
      %v5832 = vmul.f32 %v5824, %v3873
      %v5833 = vmul.f32 %v5825, %v3873
      %v5834 = vmul.f32 %v5826, %v3873
      %v5835 = vmul.f32 %v5827, %v3873
      %v5836 = vmul.f32 %v5824, %v3884
      %v5837 = vmul.f32 %v5825, %v3884
      %v5838 = vmul.f32 %v5826, %v3884
      %v5839 = vmul.f32 %v5827, %v3884
      %v5840 = vmul.f32 %v5824, %v3896
      %v5841 = vmul.f32 %v5825, %v3896
      %v5842 = vmul.f32 %v5826, %v3896
      %v5843 = vmul.f32 %v5827, %v3896
      %v5844 = vmul.f32 %v5800, %v3908
      %v5845 = vmul.f32 %v5801, %v3908
      %v5846 = vmul.f32 %v5802, %v3908
      %v5847 = vmul.f32 %v5803, %v3908
      %v5848 = vmul.f32 %v5776, %v3920
      %v5849 = vmul.f32 %v5777, %v3920
      %v5850 = vmul.f32 %v5778, %v3920
      %v5851 = vmul.f32 %v5779, %v3920
      %5856 = vrot.lane.b32.xlu0 %v5836, 126
      %v5857 = vpop.permute.xlu0 %5856
      %5858 = vrot.lane.b32.xlu0 %v5837, 126
      %v5859 = vpop.permute.xlu0 %5858
      %5860 = vrot.lane.b32.xlu0 %v5838, 126
      %v5861 = vpop.permute.xlu0 %5860
      %5862 = vrot.lane.b32.xlu0 %v5839, 126
      %v5863 = vpop.permute.xlu0 %5862
      %5872 = vrot.lane.b32.xlu0 %v5840, 126
      %v5873 = vpop.permute.xlu0 %5872
      %5874 = vrot.lane.b32.xlu0 %v5841, 126
      %v5875 = vpop.permute.xlu0 %5874
      %5876 = vrot.lane.b32.xlu0 %v5842, 126
      %v5877 = vpop.permute.xlu0 %5876
      %5878 = vrot.lane.b32.xlu0 %v5843, 126
      %v5879 = vpop.permute.xlu0 %5878
      %5888 = vrot.lane.b32.xlu0 %v5844, 124
      %v5889 = vpop.permute.xlu0 %5888
      %5890 = vrot.lane.b32.xlu0 %v5845, 124
      %v5891 = vpop.permute.xlu0 %5890
      %5892 = vrot.lane.b32.xlu0 %v5846, 124
      %v5893 = vpop.permute.xlu0 %5892
      %5894 = vrot.lane.b32.xlu0 %v5847, 124
      %v5895 = vpop.permute.xlu0 %5894
      %5904 = vrot.lane.b32.xlu0 %v5848, 122
      %v5905 = vpop.permute.xlu0 %5904
      %5906 = vrot.lane.b32.xlu0 %v5849, 122
      %v5907 = vpop.permute.xlu0 %5906
      %5908 = vrot.lane.b32.xlu0 %v5850, 122
      %v5909 = vpop.permute.xlu0 %5908
      %5910 = vrot.lane.b32.xlu0 %v5851, 122
      %v5911 = vpop.permute.xlu0 %5910
      %v5916 = vpack.c.bf16 %v5781, %v5780
      %v5917 = vpack.c.bf16 %v5783, %v5782
      %v5918 = vpack.c.bf16 %v5805, %v5804
      %v5919 = vpack.c.bf16 %v5807, %v5806
      %v5920 = vpack.c.bf16 %v5829, %v5828
      %v5921 = vpack.c.bf16 %v5831, %v5830
      %v5922 = vpack.c.bf16 %v5833, %v5832
      %v5923 = vpack.c.bf16 %v5835, %v5834
      %v5924 = vpack.c.bf16 %v4523, %v4522
      %v5925 = vpack.c.bf16 %v4525, %v4524
      %v5926 = vpack.c.bf16 %v5859, %v5857
      %v5927 = vpack.c.bf16 %v5863, %v5861
      %v5928 = vpack.c.bf16 %v5875, %v5873
      %v5929 = vpack.c.bf16 %v5879, %v5877
      %v5930 = vpack.c.bf16 %v5891, %v5889
      %v5931 = vpack.c.bf16 %v5895, %v5893
      %v5932 = vpack.c.bf16 %v5907, %v5905
      %v5933 = vpack.c.bf16 %v5911, %v5909
      %v5934 = vld [vmem:[%s45] sm:$0xff]
      %v5935 = vld [vmem:[%s45 + $0x8] sm:$0xf]
      %v5936 = vld [vmem:[%s45 + $0xc] sm:$0xff]
      %v5937 = vld [vmem:[%s45 + $0x14] sm:$0xf]
      %v5938 = vld [vmem:[%s45 + $0x18] sm:$0xff]
      %v5939 = vld [vmem:[%s45 + $0x20] sm:$0xf]
      %v5940 = vld [vmem:[%s45 + $0x24] sm:$0xff]
      %v5941 = vld [vmem:[%s45 + $0x2c] sm:$0xf]
      %v5950 = vunpack.c.l.b16 %v5934
      %v5951 = vunpack.c.h.b16 %v5934
      %v5952 = vunpack.c.l.b16 %v5935
      %v5953 = vunpack.c.l.b16 %v5936
      %v5954 = vunpack.c.h.b16 %v5936
      %v5955 = vunpack.c.l.b16 %v5937
      %v5956 = vunpack.c.l.b16 %v5938
      %v5957 = vunpack.c.h.b16 %v5938
      %v5958 = vunpack.c.l.b16 %v5939
      %v5959 = vunpack.c.l.b16 %v5940
      %v5960 = vunpack.c.h.b16 %v5940
      %v5961 = vunpack.c.l.b16 %v5941
      %v5962 = vpack.c.b16 %v5953, %v5950
      %v5963 = vpack.c.b16 %v5954, %v5951
      %v5964 = vpack.c.b16 %v5955, %v5952
      %v5965 = vpack.c.b16 %v5959, %v5956
      %v5966 = vpack.c.b16 %v5960, %v5957
      %v5967 = vpack.c.b16 %v5961, %v5958
      %v5973 = vsel %vm1700, %v5964, 0
      %v5976 = vsel %vm1700, %v5967, 0
      %5978 = vmatprep.subr.bf16.mxu0 0
      %5979 = vmatpush1.bf16.msra.mxu0 %v5923
      %5980 = vmatprep.subr.bf16.mxu0 0
      %5981 = vmatpush1.bf16.msra.mxu0 %v5922
      %5982 = vmatprep.subr.bf16.mxu0 0
      %5983 = vmatpush1.bf16.msra.mxu0 %v5921
      %5984 = vmatprep.subr.bf16.mxu0 0
      %5985 = vmatpush1.bf16.msra.mxu0 %v5920
      %5986 = vmatprep.subr.bf16.mxu0 0
      %5987 = vmatpush1.bf16.msra.mxu0 %v5919
      %5988 = vmatprep.subr.bf16.mxu0 0
      %5989 = vmatpush1.bf16.msra.mxu0 %v5918
      %5990 = vmatprep.subr.bf16.mxu0 0
      %5991 = vmatpush1.bf16.msra.mxu0 %v5917
      %5992 = vmatprep.subr.bf16.mxu0 0
      %5993 = vmatpush1.bf16.msra.mxu0 %v5916
      %5994 = vmatprep.subr.bf16.mxu0 0
      %5995 = vmatpush2.bf16.msra.mxu0 %v5931
      %5996 = vmatprep.subr.bf16.mxu0 0
      %5997 = vmatpush2.bf16.msra.mxu0 %v5930
      %5998 = vmatprep.subr.bf16.mxu0 0
      %5999 = vmatpush2.bf16.msra.mxu0 %v5929
      %6000 = vmatprep.subr.bf16.mxu0 0
      %6001 = vmatpush2.bf16.msra.mxu0 %v5928
      %6002 = vmatprep.subr.bf16.mxu0 0
      %6003 = vmatpush2.bf16.msra.mxu0 %v5927
      %6004 = vmatprep.subr.bf16.mxu0 0
      %6005 = vmatpush2.bf16.msra.mxu0 %v5926
      %6006 = vmatprep.subr.bf16.mxu0 0
      %6007 = vmatpush2.bf16.msra.mxu0 %v5925
      %6008 = vmatprep.subr.bf16.mxu0 0
      %6009 = vmatpush2.bf16.msra.mxu0 %v5924
      %6010 = vmatprep.mubr.bf16.mxu0 %v5963
      %6011 = vmatmul.mubr.bf16.gmra.mxu0 %v5962
      %v6012 = vpop.f32.mrf.mxu0
      %v6013 = vadd.f32 0.0, %v6012
      %v6014 = vpop.f32.mrf.mxu0
      %v6015 = vpop.f32.mrf.mxu0
      %v6016 = vadd.f32 0.0, %v6015
      %v6017 = vpop.f32.mrf.mxu0
      %6018 = vmatprep.mubr.bf16.mxu0 %v5966
      %6019 = vmatmul.mubr.bf16.gmra.mxu0 %v5965
      %v6020 = vpop.f32.mrf.mxu0
      %v6021 = vadd.f32 0.0, %v6020
      %v6022 = vpop.f32.mrf.mxu0
      %v6023 = vpop.f32.mrf.mxu0
      %v6024 = vadd.f32 0.0, %v6023
      %v6025 = vpop.f32.mrf.mxu0
      %6026 = vdwg.mxu0
      %6027 = vmatprep.subr.bf16.mxu0 0
      %6028 = vmatpush1.bf16.msra.mxu0 0
      %6029 = vmatprep.subr.bf16.mxu0 0
      %6030 = vmatpush1.bf16.msra.mxu0 0
      %6031 = vmatprep.subr.bf16.mxu0 0
      %6032 = vmatpush1.bf16.msra.mxu0 0
      %6033 = vmatprep.subr.bf16.mxu0 0
      %6034 = vmatpush1.bf16.msra.mxu0 0
      %6035 = vmatprep.subr.bf16.mxu0 0
      %6036 = vmatpush1.bf16.msra.mxu0 0
      %6037 = vmatprep.subr.bf16.mxu0 0
      %6038 = vmatpush1.bf16.msra.mxu0 0
      %6039 = vmatprep.subr.bf16.mxu0 0
      %6040 = vmatpush1.bf16.msra.mxu0 %v5933
      %6041 = vmatprep.subr.bf16.mxu0 0
      %6042 = vmatpush1.bf16.msra.mxu0 %v5932
      %6043 = vmatprep.subr.bf16.mxu0 0
      %6044 = vmatpush2.bf16.msra.mxu0 0
      %6045 = vmatprep.subr.bf16.mxu0 0
      %6046 = vmatpush2.bf16.msra.mxu0 0
      %6047 = vmatprep.subr.bf16.mxu0 0
      %6048 = vmatpush2.bf16.msra.mxu0 0
      %6049 = vmatprep.subr.bf16.mxu0 0
      %6050 = vmatpush2.bf16.msra.mxu0 0
      %6051 = vmatprep.subr.bf16.mxu0 0
      %6052 = vmatpush2.bf16.msra.mxu0 0
      %6053 = vmatprep.subr.bf16.mxu0 0
      %6054 = vmatpush2.bf16.msra.mxu0 0
      %6055 = vmatprep.subr.bf16.mxu0 0
      %6056 = vmatpush2.bf16.msra.mxu0 0
      %6057 = vmatprep.subr.bf16.mxu0 0
      %6058 = vmatpush2.bf16.msra.mxu0 0
      %6059 = vmatprep.mubr.bf16.mxu0 0
      %6060 = vmatmul.mubr.bf16.gmra.mxu0 %v5973
      %v6061 = vpop.f32.mrf.mxu0
      %v6062 = vadd.f32 %v6013, %v6061
      %v6063 = vpop.f32.mrf.mxu0
      %v6064 = vpop.f32.mrf.mxu0
      %v6065 = vadd.f32 %v6016, %v6064
      %v6066 = vpop.f32.mrf.mxu0
      %6067 = vmatprep.mubr.bf16.mxu0 0
      %6068 = vmatmul.mubr.bf16.gmra.mxu0 %v5976
      %v6069 = vpop.f32.mrf.mxu0
      %v6070 = vadd.f32 %v6021, %v6069
      %v6071 = vpop.f32.mrf.mxu0
      %v6072 = vpop.f32.mrf.mxu0
      %v6073 = vadd.f32 %v6024, %v6072
      %v6074 = vpop.f32.mrf.mxu0
      %6075 = vdwg.mxu0
      %v6076 = vadd.f32 %v5742, %v6062
      %v6077 = vadd.f32 %v5745, %v6065
      %v6078 = vadd.f32 %v5750, %v6070
      %v6079 = vadd.f32 %v5753, %v6073
      %v6080 = vld [vmem:[%s47] sm:$0xff]
      %v6081 = vld [vmem:[%s47 + $0x8] sm:$0xff]
      %v6082 = vld [vmem:[%s47 + $0x10] sm:$0xff]
      %v6083 = vld [vmem:[%s47 + $0x18] sm:$0xff]
      %6085 = vset.pattern.permute.xlu0 0
      %6086 = vperm.xlu0 %6085, %v6080
      %v6087 = vpop.permute.xlu0 %6086
      %6090 = vset.pattern.permute.xlu0 0
      %6091 = vperm.xlu0 %6090, %v6081
      %v6092 = vpop.permute.xlu0 %6091
      %6095 = vset.pattern.permute.xlu0 0
      %6096 = vperm.xlu0 %6095, %v6082
      %v6097 = vpop.permute.xlu0 %6096
      %6100 = vset.pattern.permute.xlu0 0
      %6101 = vperm.xlu0 %6100, %v6083
      %v6102 = vpop.permute.xlu0 %6101
      %v6104 = vadd.f32 %v6076, %v6087
      %v6105 = vadd.f32 %v6077, %v6092
      %v6106 = vadd.f32 %v6078, %v6097
      %v6107 = vadd.f32 %v6079, %v6102
      %v6108 = vmax.f32 %v6104, 0.0
      %v6109 = vmax.f32 %v6105, 0.0
      %v6110 = vmax.f32 %v6106, 0.0
      %v6111 = vmax.f32 %v6107, 0.0
      %v6112 = vpack.c.bf16 %v6109, %v6108
      %v6113 = vpack.c.bf16 %v6111, %v6110
      %v6114 = vld [vmem:[%s97] sm:$0x3]
      %v6116 = vsel %vm2971, %v6112, 0
      %v6119 = vsel %vm2971, %v6113, 0
      %v6122 = vsel %vm4663, %v6114, 0
      %6124 = vmatprep.subr.bf16.mxu0 0
      %6125 = vmatpush1.bf16.msra.mxu0 0
      %6126 = vmatprep.subr.bf16.mxu0 0
      %6127 = vmatpush1.bf16.msra.mxu0 0
      %6128 = vmatprep.subr.bf16.mxu0 0
      %6129 = vmatpush1.bf16.msra.mxu0 0
      %6130 = vmatprep.subr.bf16.mxu0 0
      %6131 = vmatpush1.bf16.msra.mxu0 0
      %6132 = vmatprep.subr.bf16.mxu0 0
      %6133 = vmatpush1.bf16.msra.mxu0 0
      %6134 = vmatprep.subr.bf16.mxu0 0
      %6135 = vmatpush1.bf16.msra.mxu0 0
      %6136 = vmatprep.subr.bf16.mxu0 0
      %6137 = vmatpush1.bf16.msra.mxu0 0
      %6138 = vmatprep.subr.bf16.mxu0 0
      %6139 = vmatpush1.bf16.msra.mxu0 %v6122
      %6140 = vmatprep.subr.bf16.mxu0 0
      %6141 = vmatpush2.bf16.msra.mxu0 0
      %6142 = vmatprep.subr.bf16.mxu0 0
      %6143 = vmatpush2.bf16.msra.mxu0 0
      %6144 = vmatprep.subr.bf16.mxu0 0
      %6145 = vmatpush2.bf16.msra.mxu0 0
      %6146 = vmatprep.subr.bf16.mxu0 0
      %6147 = vmatpush2.bf16.msra.mxu0 0
      %6148 = vmatprep.subr.bf16.mxu0 0
      %6149 = vmatpush2.bf16.msra.mxu0 0
      %6150 = vmatprep.subr.bf16.mxu0 0
      %6151 = vmatpush2.bf16.msra.mxu0 0
      %6152 = vmatprep.subr.bf16.mxu0 0
      %6153 = vmatpush2.bf16.msra.mxu0 0
      %6154 = vmatprep.subr.bf16.mxu0 0
      %6155 = vmatpush2.bf16.msra.mxu0 0
      %6156 = vmatprep.mubr.bf16.mxu0 0
      %6157 = vmatmul.mubr.bf16.gmra.mxu0 %v6116
      %v6158 = vpop.f32.mrf.mxu0
      %v6159 = vadd.f32 0.0, %v6158
      %v6160 = vpop.f32.mrf.mxu0
      %v6161 = vpop.f32.mrf.mxu0
      %v6162 = vadd.f32 0.0, %v6161
      %v6163 = vpop.f32.mrf.mxu0
      %6164 = vmatprep.mubr.bf16.mxu0 0
      %6165 = vmatmul.mubr.bf16.gmra.mxu0 %v6119
      %v6166 = vpop.f32.mrf.mxu0
      %v6167 = vadd.f32 0.0, %v6166
      %v6168 = vpop.f32.mrf.mxu0
      %v6169 = vpop.f32.mrf.mxu0
      %v6170 = vadd.f32 0.0, %v6169
      %v6171 = vpop.f32.mrf.mxu0
      %6172 = vdwg.mxu0
      %6177 = vrot.lane.b32.xlu0 %v6159, 5
      %v6178 = vpop.permute.xlu0 %6177
      %6179 = vrot.lane.b32.xlu0 %v6162, 5
      %v6180 = vpop.permute.xlu0 %6179
      %6181 = vrot.lane.b32.xlu0 %v6167, 5
      %v6182 = vpop.permute.xlu0 %6181
      %6183 = vrot.lane.b32.xlu0 %v6170, 5
      %v6184 = vpop.permute.xlu0 %6183
      %v6189 = vsel %vm2953, 0.0, %v6178
      %v6190 = vsel %vm2953, 0.0, %v6180
      %v6191 = vsel %vm2953, 0.0, %v6182
      %v6192 = vsel %vm2953, 0.0, %v6184
      %v6193 = vsel %vm2956, %v6189, 0.0
      %v6194 = vsel %vm2956, %v6190, 0.0
      %v6195 = vsel %vm2956, %v6191, 0.0
      %v6196 = vsel %vm2956, %v6192, 0.0
      %v6197 = vmul.f32 %v6193, %v2962
      %v6198 = vmul.f32 %v6194, %v2962
      %v6199 = vmul.f32 %v6195, %v2962
      %v6200 = vmul.f32 %v6196, %v2962
      %6201 = vrot.lane.b32.xlu0 %v6159, 4
      %v6202 = vpop.permute.xlu0 %6201
      %6203 = vrot.lane.b32.xlu0 %v6162, 4
      %v6204 = vpop.permute.xlu0 %6203
      %6205 = vrot.lane.b32.xlu0 %v6167, 4
      %v6206 = vpop.permute.xlu0 %6205
      %6207 = vrot.lane.b32.xlu0 %v6170, 4
      %v6208 = vpop.permute.xlu0 %6207
      %v6213 = vsel %vm2971, 0.0, %v6202
      %v6214 = vsel %vm2971, 0.0, %v6204
      %v6215 = vsel %vm2971, 0.0, %v6206
      %v6216 = vsel %vm2971, 0.0, %v6208
      %v6217 = vsel %vm2974, %v6213, 0.0
      %v6218 = vsel %vm2974, %v6214, 0.0
      %v6219 = vsel %vm2974, %v6215, 0.0
      %v6220 = vsel %vm2974, %v6216, 0.0
      %v6221 = vmul.f32 %v6217, %v2980
      %v6222 = vmul.f32 %v6218, %v2980
      %v6223 = vmul.f32 %v6219, %v2980
      %v6224 = vmul.f32 %v6220, %v2980
      %6225 = vrot.lane.b32.xlu0 %v6159, 3
      %v6226 = vpop.permute.xlu0 %6225
      %6227 = vrot.lane.b32.xlu0 %v6162, 3
      %v6228 = vpop.permute.xlu0 %6227
      %6229 = vrot.lane.b32.xlu0 %v6167, 3
      %v6230 = vpop.permute.xlu0 %6229
      %6231 = vrot.lane.b32.xlu0 %v6170, 3
      %v6232 = vpop.permute.xlu0 %6231
      %v6237 = vsel %vm2989, 0.0, %v6226
      %v6238 = vsel %vm2989, 0.0, %v6228
      %v6239 = vsel %vm2989, 0.0, %v6230
      %v6240 = vsel %vm2989, 0.0, %v6232
      %v6241 = vsel %vm2992, %v6237, 0.0
      %v6242 = vsel %vm2992, %v6238, 0.0
      %v6243 = vsel %vm2992, %v6239, 0.0
      %v6244 = vsel %vm2992, %v6240, 0.0
      %v6245 = vmul.f32 %v6241, %v2998
      %v6246 = vmul.f32 %v6242, %v2998
      %v6247 = vmul.f32 %v6243, %v2998
      %v6248 = vmul.f32 %v6244, %v2998
      %6249 = vrot.lane.b32.xlu0 %v6159, 1
      %v6250 = vpop.permute.xlu0 %6249
      %6251 = vrot.lane.b32.xlu0 %v6162, 1
      %v6252 = vpop.permute.xlu0 %6251
      %6253 = vrot.lane.b32.xlu0 %v6167, 1
      %v6254 = vpop.permute.xlu0 %6253
      %6255 = vrot.lane.b32.xlu0 %v6170, 1
      %v6256 = vpop.permute.xlu0 %6255
      %v6261 = vsel %vm1625, 0.0, %v6250
      %v6262 = vsel %vm1625, 0.0, %v6252
      %v6263 = vsel %vm1625, 0.0, %v6254
      %v6264 = vsel %vm1625, 0.0, %v6256
      %v6265 = vsel %vm1562, %v6261, 0.0
      %v6266 = vsel %vm1562, %v6262, 0.0
      %v6267 = vsel %vm1562, %v6263, 0.0
      %v6268 = vsel %vm1562, %v6264, 0.0
      %v6269 = vmul.f32 %v6265, %v3014
      %v6270 = vmul.f32 %v6266, %v3014
      %v6271 = vmul.f32 %v6267, %v3014
      %v6272 = vmul.f32 %v6268, %v3014
      %v6273 = vmul.f32 %v6265, %v3023
      %v6274 = vmul.f32 %v6266, %v3023
      %v6275 = vmul.f32 %v6267, %v3023
      %v6276 = vmul.f32 %v6268, %v3023
      %v6277 = vmul.f32 %v6241, %v3033
      %v6278 = vmul.f32 %v6242, %v3033
      %v6279 = vmul.f32 %v6243, %v3033
      %v6280 = vmul.f32 %v6244, %v3033
      %v6281 = vmul.f32 %v6217, %v3043
      %v6282 = vmul.f32 %v6218, %v3043
      %v6283 = vmul.f32 %v6219, %v3043
      %v6284 = vmul.f32 %v6220, %v3043
      %v6285 = vmul.f32 %v6193, %v3053
      %v6286 = vmul.f32 %v6194, %v3053
      %v6287 = vmul.f32 %v6195, %v3053
      %v6288 = vmul.f32 %v6196, %v3053
      %6293 = vrot.lane.b32.xlu0 %v6273, 126
      %v6294 = vpop.permute.xlu0 %6293
      %6295 = vrot.lane.b32.xlu0 %v6274, 126
      %v6296 = vpop.permute.xlu0 %6295
      %6297 = vrot.lane.b32.xlu0 %v6275, 126
      %v6298 = vpop.permute.xlu0 %6297
      %6299 = vrot.lane.b32.xlu0 %v6276, 126
      %v6300 = vpop.permute.xlu0 %6299
      %6309 = vrot.lane.b32.xlu0 %v6277, 122
      %v6310 = vpop.permute.xlu0 %6309
      %6311 = vrot.lane.b32.xlu0 %v6278, 122
      %v6312 = vpop.permute.xlu0 %6311
      %6313 = vrot.lane.b32.xlu0 %v6279, 122
      %v6314 = vpop.permute.xlu0 %6313
      %6315 = vrot.lane.b32.xlu0 %v6280, 122
      %v6316 = vpop.permute.xlu0 %6315
      %6325 = vrot.lane.b32.xlu0 %v6281, 120
      %v6326 = vpop.permute.xlu0 %6325
      %6327 = vrot.lane.b32.xlu0 %v6282, 120
      %v6328 = vpop.permute.xlu0 %6327
      %6329 = vrot.lane.b32.xlu0 %v6283, 120
      %v6330 = vpop.permute.xlu0 %6329
      %6331 = vrot.lane.b32.xlu0 %v6284, 120
      %v6332 = vpop.permute.xlu0 %6331
      %6341 = vrot.lane.b32.xlu0 %v6285, 118
      %v6342 = vpop.permute.xlu0 %6341
      %6343 = vrot.lane.b32.xlu0 %v6286, 118
      %v6344 = vpop.permute.xlu0 %6343
      %6345 = vrot.lane.b32.xlu0 %v6287, 118
      %v6346 = vpop.permute.xlu0 %6345
      %6347 = vrot.lane.b32.xlu0 %v6288, 118
      %v6348 = vpop.permute.xlu0 %6347
      %v6353 = vpack.c.bf16 %v6198, %v6197
      %v6354 = vpack.c.bf16 %v6200, %v6199
      %v6355 = vpack.c.bf16 %v6222, %v6221
      %v6356 = vpack.c.bf16 %v6224, %v6223
      %v6357 = vpack.c.bf16 %v6246, %v6245
      %v6358 = vpack.c.bf16 %v6248, %v6247
      %v6359 = vpack.c.bf16 %v6270, %v6269
      %v6360 = vpack.c.bf16 %v6272, %v6271
      %v6361 = vpack.c.bf16 %v6162, %v6159
      %v6362 = vpack.c.bf16 %v6170, %v6167
      %v6363 = vpack.c.bf16 %v6296, %v6294
      %v6364 = vpack.c.bf16 %v6300, %v6298
      %v6365 = vpack.c.bf16 %v6312, %v6310
      %v6366 = vpack.c.bf16 %v6316, %v6314
      %v6367 = vpack.c.bf16 %v6328, %v6326
      %v6368 = vpack.c.bf16 %v6332, %v6330
      %v6369 = vpack.c.bf16 %v6344, %v6342
      %v6370 = vpack.c.bf16 %v6348, %v6346
      %v6371 = vld [vmem:[%s49] sm:$0xff]
      %v6372 = vld [vmem:[%s49 + $0x8] sm:$0xf]
      %v6373 = vld [vmem:[%s49 + $0xc] sm:$0xff]
      %v6374 = vld [vmem:[%s49 + $0x14] sm:$0xf]
      %v6375 = vld [vmem:[%s49 + $0x18] sm:$0xff]
      %v6376 = vld [vmem:[%s49 + $0x20] sm:$0xf]
      %v6377 = vld [vmem:[%s49 + $0x24] sm:$0xff]
      %v6378 = vld [vmem:[%s49 + $0x2c] sm:$0xf]
      %6383 = vrot.lane.b32.xlu0 %v3199, 5
      %v6384 = vpop.permute.xlu0 %6383
      %6385 = vrot.lane.b32.xlu0 %v3200, 5
      %v6386 = vpop.permute.xlu0 %6385
      %6387 = vrot.lane.b32.xlu0 %v3201, 5
      %v6388 = vpop.permute.xlu0 %6387
      %6389 = vrot.lane.b32.xlu0 %v3202, 5
      %v6390 = vpop.permute.xlu0 %6389
      %v6395 = vsel %vm2953, 0.0, %v6384
      %v6396 = vsel %vm2953, 0.0, %v6386
      %v6397 = vsel %vm2953, 0.0, %v6388
      %v6398 = vsel %vm2953, 0.0, %v6390
      %v6399 = vsel %vm2956, %v6395, 0.0
      %v6400 = vsel %vm2956, %v6396, 0.0
      %v6401 = vsel %vm2956, %v6397, 0.0
      %v6402 = vsel %vm2956, %v6398, 0.0
      %v6403 = vmul.f32 %v6399, %v2962
      %v6404 = vmul.f32 %v6400, %v2962
      %v6405 = vmul.f32 %v6401, %v2962
      %v6406 = vmul.f32 %v6402, %v2962
      %6407 = vrot.lane.b32.xlu0 %v3199, 4
      %v6408 = vpop.permute.xlu0 %6407
      %6409 = vrot.lane.b32.xlu0 %v3200, 4
      %v6410 = vpop.permute.xlu0 %6409
      %6411 = vrot.lane.b32.xlu0 %v3201, 4
      %v6412 = vpop.permute.xlu0 %6411
      %6413 = vrot.lane.b32.xlu0 %v3202, 4
      %v6414 = vpop.permute.xlu0 %6413
      %v6419 = vsel %vm2971, 0.0, %v6408
      %v6420 = vsel %vm2971, 0.0, %v6410
      %v6421 = vsel %vm2971, 0.0, %v6412
      %v6422 = vsel %vm2971, 0.0, %v6414
      %v6423 = vsel %vm2974, %v6419, 0.0
      %v6424 = vsel %vm2974, %v6420, 0.0
      %v6425 = vsel %vm2974, %v6421, 0.0
      %v6426 = vsel %vm2974, %v6422, 0.0
      %v6427 = vmul.f32 %v6423, %v2980
      %v6428 = vmul.f32 %v6424, %v2980
      %v6429 = vmul.f32 %v6425, %v2980
      %v6430 = vmul.f32 %v6426, %v2980
      %6431 = vrot.lane.b32.xlu0 %v3199, 3
      %v6432 = vpop.permute.xlu0 %6431
      %6433 = vrot.lane.b32.xlu0 %v3200, 3
      %v6434 = vpop.permute.xlu0 %6433
      %6435 = vrot.lane.b32.xlu0 %v3201, 3
      %v6436 = vpop.permute.xlu0 %6435
      %6437 = vrot.lane.b32.xlu0 %v3202, 3
      %v6438 = vpop.permute.xlu0 %6437
      %v6443 = vsel %vm2989, 0.0, %v6432
      %v6444 = vsel %vm2989, 0.0, %v6434
      %v6445 = vsel %vm2989, 0.0, %v6436
      %v6446 = vsel %vm2989, 0.0, %v6438
      %v6447 = vsel %vm2992, %v6443, 0.0
      %v6448 = vsel %vm2992, %v6444, 0.0
      %v6449 = vsel %vm2992, %v6445, 0.0
      %v6450 = vsel %vm2992, %v6446, 0.0
      %v6451 = vmul.f32 %v6447, %v2998
      %v6452 = vmul.f32 %v6448, %v2998
      %v6453 = vmul.f32 %v6449, %v2998
      %v6454 = vmul.f32 %v6450, %v2998
      %6455 = vrot.lane.b32.xlu0 %v3199, 1
      %v6456 = vpop.permute.xlu0 %6455
      %6457 = vrot.lane.b32.xlu0 %v3200, 1
      %v6458 = vpop.permute.xlu0 %6457
      %6459 = vrot.lane.b32.xlu0 %v3201, 1
      %v6460 = vpop.permute.xlu0 %6459
      %6461 = vrot.lane.b32.xlu0 %v3202, 1
      %v6462 = vpop.permute.xlu0 %6461
      %v6467 = vsel %vm1625, 0.0, %v6456
      %v6468 = vsel %vm1625, 0.0, %v6458
      %v6469 = vsel %vm1625, 0.0, %v6460
      %v6470 = vsel %vm1625, 0.0, %v6462
      %v6471 = vsel %vm1562, %v6467, 0.0
      %v6472 = vsel %vm1562, %v6468, 0.0
      %v6473 = vsel %vm1562, %v6469, 0.0
      %v6474 = vsel %vm1562, %v6470, 0.0
      %v6475 = vmul.f32 %v6471, %v3014
      %v6476 = vmul.f32 %v6472, %v3014
      %v6477 = vmul.f32 %v6473, %v3014
      %v6478 = vmul.f32 %v6474, %v3014
      %v6479 = vmul.f32 %v6471, %v3023
      %v6480 = vmul.f32 %v6472, %v3023
      %v6481 = vmul.f32 %v6473, %v3023
      %v6482 = vmul.f32 %v6474, %v3023
      %v6483 = vmul.f32 %v6447, %v3033
      %v6484 = vmul.f32 %v6448, %v3033
      %v6485 = vmul.f32 %v6449, %v3033
      %v6486 = vmul.f32 %v6450, %v3033
      %v6487 = vmul.f32 %v6423, %v3043
      %v6488 = vmul.f32 %v6424, %v3043
      %v6489 = vmul.f32 %v6425, %v3043
      %v6490 = vmul.f32 %v6426, %v3043
      %v6491 = vmul.f32 %v6399, %v3053
      %v6492 = vmul.f32 %v6400, %v3053
      %v6493 = vmul.f32 %v6401, %v3053
      %v6494 = vmul.f32 %v6402, %v3053
      %6499 = vrot.lane.b32.xlu0 %v6479, 126
      %v6500 = vpop.permute.xlu0 %6499
      %6501 = vrot.lane.b32.xlu0 %v6480, 126
      %v6502 = vpop.permute.xlu0 %6501
      %6503 = vrot.lane.b32.xlu0 %v6481, 126
      %v6504 = vpop.permute.xlu0 %6503
      %6505 = vrot.lane.b32.xlu0 %v6482, 126
      %v6506 = vpop.permute.xlu0 %6505
      %6515 = vrot.lane.b32.xlu0 %v6483, 122
      %v6516 = vpop.permute.xlu0 %6515
      %6517 = vrot.lane.b32.xlu0 %v6484, 122
      %v6518 = vpop.permute.xlu0 %6517
      %6519 = vrot.lane.b32.xlu0 %v6485, 122
      %v6520 = vpop.permute.xlu0 %6519
      %6521 = vrot.lane.b32.xlu0 %v6486, 122
      %v6522 = vpop.permute.xlu0 %6521
      %6531 = vrot.lane.b32.xlu0 %v6487, 120
      %v6532 = vpop.permute.xlu0 %6531
      %6533 = vrot.lane.b32.xlu0 %v6488, 120
      %v6534 = vpop.permute.xlu0 %6533
      %6535 = vrot.lane.b32.xlu0 %v6489, 120
      %v6536 = vpop.permute.xlu0 %6535
      %6537 = vrot.lane.b32.xlu0 %v6490, 120
      %v6538 = vpop.permute.xlu0 %6537
      %6547 = vrot.lane.b32.xlu0 %v6491, 118
      %v6548 = vpop.permute.xlu0 %6547
      %6549 = vrot.lane.b32.xlu0 %v6492, 118
      %v6550 = vpop.permute.xlu0 %6549
      %6551 = vrot.lane.b32.xlu0 %v6493, 118
      %v6552 = vpop.permute.xlu0 %6551
      %6553 = vrot.lane.b32.xlu0 %v6494, 118
      %v6554 = vpop.permute.xlu0 %6553
      %v6559 = vpack.c.bf16 %v6404, %v6403
      %v6560 = vpack.c.bf16 %v6406, %v6405
      %v6561 = vpack.c.bf16 %v6428, %v6427
      %v6562 = vpack.c.bf16 %v6430, %v6429
      %v6563 = vpack.c.bf16 %v6452, %v6451
      %v6564 = vpack.c.bf16 %v6454, %v6453
      %v6565 = vpack.c.bf16 %v6476, %v6475
      %v6566 = vpack.c.bf16 %v6478, %v6477
      %v6567 = vpack.c.bf16 %v3200, %v3199
      %v6568 = vpack.c.bf16 %v3202, %v3201
      %v6569 = vpack.c.bf16 %v6502, %v6500
      %v6570 = vpack.c.bf16 %v6506, %v6504
      %v6571 = vpack.c.bf16 %v6518, %v6516
      %v6572 = vpack.c.bf16 %v6522, %v6520
      %v6573 = vpack.c.bf16 %v6534, %v6532
      %v6574 = vpack.c.bf16 %v6538, %v6536
      %v6575 = vpack.c.bf16 %v6550, %v6548
      %v6576 = vpack.c.bf16 %v6554, %v6552
      %v6577 = vld [vmem:[%s51] sm:$0xff]
      %v6578 = vld [vmem:[%s51 + $0x8] sm:$0xf]
      %v6579 = vld [vmem:[%s51 + $0xc] sm:$0xff]
      %v6580 = vld [vmem:[%s51 + $0x14] sm:$0xf]
      %v6581 = vld [vmem:[%s51 + $0x18] sm:$0xff]
      %v6582 = vld [vmem:[%s51 + $0x20] sm:$0xf]
      %v6583 = vld [vmem:[%s51 + $0x24] sm:$0xff]
      %v6584 = vld [vmem:[%s51 + $0x2c] sm:$0xf]
      %v6593 = vunpack.c.l.b16 %v6577
      %v6594 = vunpack.c.h.b16 %v6577
      %v6595 = vunpack.c.l.b16 %v6578
      %v6596 = vunpack.c.l.b16 %v6579
      %v6597 = vunpack.c.h.b16 %v6579
      %v6598 = vunpack.c.l.b16 %v6580
      %v6599 = vunpack.c.l.b16 %v6581
      %v6600 = vunpack.c.h.b16 %v6581
      %v6601 = vunpack.c.l.b16 %v6582
      %v6602 = vunpack.c.l.b16 %v6583
      %v6603 = vunpack.c.h.b16 %v6583
      %v6604 = vunpack.c.l.b16 %v6584
      %v6605 = vpack.c.b16 %v6596, %v6593
      %v6606 = vpack.c.b16 %v6597, %v6594
      %v6607 = vpack.c.b16 %v6598, %v6595
      %v6608 = vpack.c.b16 %v6602, %v6599
      %v6609 = vpack.c.b16 %v6603, %v6600
      %v6610 = vpack.c.b16 %v6604, %v6601
      %v6616 = vsel %vm1700, %v6607, 0
      %v6619 = vsel %vm1700, %v6610, 0
      %6621 = vmatprep.subr.bf16.mxu0 0
      %6622 = vmatpush1.bf16.msra.mxu0 %v6566
      %6623 = vmatprep.subr.bf16.mxu0 0
      %6624 = vmatpush1.bf16.msra.mxu0 %v6565
      %6625 = vmatprep.subr.bf16.mxu0 0
      %6626 = vmatpush1.bf16.msra.mxu0 %v6564
      %6627 = vmatprep.subr.bf16.mxu0 0
      %6628 = vmatpush1.bf16.msra.mxu0 %v6563
      %6629 = vmatprep.subr.bf16.mxu0 0
      %6630 = vmatpush1.bf16.msra.mxu0 %v6562
      %6631 = vmatprep.subr.bf16.mxu0 0
      %6632 = vmatpush1.bf16.msra.mxu0 %v6561
      %6633 = vmatprep.subr.bf16.mxu0 0
      %6634 = vmatpush1.bf16.msra.mxu0 %v6560
      %6635 = vmatprep.subr.bf16.mxu0 0
      %6636 = vmatpush1.bf16.msra.mxu0 %v6559
      %6637 = vmatprep.subr.bf16.mxu0 0
      %6638 = vmatpush2.bf16.msra.mxu0 %v6574
      %6639 = vmatprep.subr.bf16.mxu0 0
      %6640 = vmatpush2.bf16.msra.mxu0 %v6573
      %6641 = vmatprep.subr.bf16.mxu0 0
      %6642 = vmatpush2.bf16.msra.mxu0 %v6572
      %6643 = vmatprep.subr.bf16.mxu0 0
      %6644 = vmatpush2.bf16.msra.mxu0 %v6571
      %6645 = vmatprep.subr.bf16.mxu0 0
      %6646 = vmatpush2.bf16.msra.mxu0 %v6570
      %6647 = vmatprep.subr.bf16.mxu0 0
      %6648 = vmatpush2.bf16.msra.mxu0 %v6569
      %6649 = vmatprep.subr.bf16.mxu0 0
      %6650 = vmatpush2.bf16.msra.mxu0 %v6568
      %6651 = vmatprep.subr.bf16.mxu0 0
      %6652 = vmatpush2.bf16.msra.mxu0 %v6567
      %6653 = vmatprep.mubr.bf16.mxu0 %v6606
      %6654 = vmatmul.mubr.bf16.gmra.mxu0 %v6605
      %v6655 = vpop.f32.mrf.mxu0
      %v6656 = vadd.f32 0.0, %v6655
      %v6657 = vpop.f32.mrf.mxu0
      %v6658 = vpop.f32.mrf.mxu0
      %v6659 = vadd.f32 0.0, %v6658
      %v6660 = vpop.f32.mrf.mxu0
      %6661 = vmatprep.mubr.bf16.mxu0 %v6609
      %6662 = vmatmul.mubr.bf16.gmra.mxu0 %v6608
      %v6663 = vpop.f32.mrf.mxu0
      %v6664 = vadd.f32 0.0, %v6663
      %v6665 = vpop.f32.mrf.mxu0
      %v6666 = vpop.f32.mrf.mxu0
      %v6667 = vadd.f32 0.0, %v6666
      %v6668 = vpop.f32.mrf.mxu0
      %6669 = vdwg.mxu0
      %6670 = vmatprep.subr.bf16.mxu0 0
      %6671 = vmatpush1.bf16.msra.mxu0 0
      %6672 = vmatprep.subr.bf16.mxu0 0
      %6673 = vmatpush1.bf16.msra.mxu0 0
      %6674 = vmatprep.subr.bf16.mxu0 0
      %6675 = vmatpush1.bf16.msra.mxu0 0
      %6676 = vmatprep.subr.bf16.mxu0 0
      %6677 = vmatpush1.bf16.msra.mxu0 0
      %6678 = vmatprep.subr.bf16.mxu0 0
      %6679 = vmatpush1.bf16.msra.mxu0 0
      %6680 = vmatprep.subr.bf16.mxu0 0
      %6681 = vmatpush1.bf16.msra.mxu0 0
      %6682 = vmatprep.subr.bf16.mxu0 0
      %6683 = vmatpush1.bf16.msra.mxu0 %v6576
      %6684 = vmatprep.subr.bf16.mxu0 0
      %6685 = vmatpush1.bf16.msra.mxu0 %v6575
      %6686 = vmatprep.subr.bf16.mxu0 0
      %6687 = vmatpush2.bf16.msra.mxu0 0
      %6688 = vmatprep.subr.bf16.mxu0 0
      %6689 = vmatpush2.bf16.msra.mxu0 0
      %6690 = vmatprep.subr.bf16.mxu0 0
      %6691 = vmatpush2.bf16.msra.mxu0 0
      %6692 = vmatprep.subr.bf16.mxu0 0
      %6693 = vmatpush2.bf16.msra.mxu0 0
      %6694 = vmatprep.subr.bf16.mxu0 0
      %6695 = vmatpush2.bf16.msra.mxu0 0
      %6696 = vmatprep.subr.bf16.mxu0 0
      %6697 = vmatpush2.bf16.msra.mxu0 0
      %6698 = vmatprep.subr.bf16.mxu0 0
      %6699 = vmatpush2.bf16.msra.mxu0 0
      %6700 = vmatprep.subr.bf16.mxu0 0
      %6701 = vmatpush2.bf16.msra.mxu0 0
      %6702 = vmatprep.mubr.bf16.mxu0 0
      %6703 = vmatmul.mubr.bf16.gmra.mxu0 %v6616
      %v6704 = vpop.f32.mrf.mxu0
      %v6705 = vadd.f32 %v6656, %v6704
      %v6706 = vpop.f32.mrf.mxu0
      %v6707 = vpop.f32.mrf.mxu0
      %v6708 = vadd.f32 %v6659, %v6707
      %v6709 = vpop.f32.mrf.mxu0
      %6710 = vmatprep.mubr.bf16.mxu0 0
      %6711 = vmatmul.mubr.bf16.gmra.mxu0 %v6619
      %v6712 = vpop.f32.mrf.mxu0
      %v6713 = vadd.f32 %v6664, %v6712
      %v6714 = vpop.f32.mrf.mxu0
      %v6715 = vpop.f32.mrf.mxu0
      %v6716 = vadd.f32 %v6667, %v6715
      %v6717 = vpop.f32.mrf.mxu0
      %6718 = vdwg.mxu0
      %v6727 = vunpack.c.l.b16 %v6371
      %v6728 = vunpack.c.h.b16 %v6371
      %v6729 = vunpack.c.l.b16 %v6372
      %v6730 = vunpack.c.l.b16 %v6373
      %v6731 = vunpack.c.h.b16 %v6373
      %v6732 = vunpack.c.l.b16 %v6374
      %v6733 = vunpack.c.l.b16 %v6375
      %v6734 = vunpack.c.h.b16 %v6375
      %v6735 = vunpack.c.l.b16 %v6376
      %v6736 = vunpack.c.l.b16 %v6377
      %v6737 = vunpack.c.h.b16 %v6377
      %v6738 = vunpack.c.l.b16 %v6378
      %v6739 = vpack.c.b16 %v6730, %v6727
      %v6740 = vpack.c.b16 %v6731, %v6728
      %v6741 = vpack.c.b16 %v6732, %v6729
      %v6742 = vpack.c.b16 %v6736, %v6733
      %v6743 = vpack.c.b16 %v6737, %v6734
      %v6744 = vpack.c.b16 %v6738, %v6735
      %v6750 = vsel %vm1700, %v6741, 0
      %v6753 = vsel %vm1700, %v6744, 0
      %6755 = vmatprep.subr.bf16.mxu0 0
      %6756 = vmatpush1.bf16.msra.mxu0 %v6360
      %6757 = vmatprep.subr.bf16.mxu0 0
      %6758 = vmatpush1.bf16.msra.mxu0 %v6359
      %6759 = vmatprep.subr.bf16.mxu0 0
      %6760 = vmatpush1.bf16.msra.mxu0 %v6358
      %6761 = vmatprep.subr.bf16.mxu0 0
      %6762 = vmatpush1.bf16.msra.mxu0 %v6357
      %6763 = vmatprep.subr.bf16.mxu0 0
      %6764 = vmatpush1.bf16.msra.mxu0 %v6356
      %6765 = vmatprep.subr.bf16.mxu0 0
      %6766 = vmatpush1.bf16.msra.mxu0 %v6355
      %6767 = vmatprep.subr.bf16.mxu0 0
      %6768 = vmatpush1.bf16.msra.mxu0 %v6354
      %6769 = vmatprep.subr.bf16.mxu0 0
      %6770 = vmatpush1.bf16.msra.mxu0 %v6353
      %6771 = vmatprep.subr.bf16.mxu0 0
      %6772 = vmatpush2.bf16.msra.mxu0 %v6368
      %6773 = vmatprep.subr.bf16.mxu0 0
      %6774 = vmatpush2.bf16.msra.mxu0 %v6367
      %6775 = vmatprep.subr.bf16.mxu0 0
      %6776 = vmatpush2.bf16.msra.mxu0 %v6366
      %6777 = vmatprep.subr.bf16.mxu0 0
      %6778 = vmatpush2.bf16.msra.mxu0 %v6365
      %6779 = vmatprep.subr.bf16.mxu0 0
      %6780 = vmatpush2.bf16.msra.mxu0 %v6364
      %6781 = vmatprep.subr.bf16.mxu0 0
      %6782 = vmatpush2.bf16.msra.mxu0 %v6363
      %6783 = vmatprep.subr.bf16.mxu0 0
      %6784 = vmatpush2.bf16.msra.mxu0 %v6362
      %6785 = vmatprep.subr.bf16.mxu0 0
      %6786 = vmatpush2.bf16.msra.mxu0 %v6361
      %6787 = vmatprep.mubr.bf16.mxu0 %v6740
      %6788 = vmatmul.mubr.bf16.gmra.mxu0 %v6739
      %v6789 = vpop.f32.mrf.mxu0
      %v6790 = vadd.f32 %v6705, %v6789
      %v6791 = vpop.f32.mrf.mxu0
      %v6792 = vpop.f32.mrf.mxu0
      %v6793 = vadd.f32 %v6708, %v6792
      %v6794 = vpop.f32.mrf.mxu0
      %6795 = vmatprep.mubr.bf16.mxu0 %v6743
      %6796 = vmatmul.mubr.bf16.gmra.mxu0 %v6742
      %v6797 = vpop.f32.mrf.mxu0
      %v6798 = vadd.f32 %v6713, %v6797
      %v6799 = vpop.f32.mrf.mxu0
      %v6800 = vpop.f32.mrf.mxu0
      %v6801 = vadd.f32 %v6716, %v6800
      %v6802 = vpop.f32.mrf.mxu0
      %6803 = vdwg.mxu0
      %6804 = vmatprep.subr.bf16.mxu0 0
      %6805 = vmatpush1.bf16.msra.mxu0 0
      %6806 = vmatprep.subr.bf16.mxu0 0
      %6807 = vmatpush1.bf16.msra.mxu0 0
      %6808 = vmatprep.subr.bf16.mxu0 0
      %6809 = vmatpush1.bf16.msra.mxu0 0
      %6810 = vmatprep.subr.bf16.mxu0 0
      %6811 = vmatpush1.bf16.msra.mxu0 0
      %6812 = vmatprep.subr.bf16.mxu0 0
      %6813 = vmatpush1.bf16.msra.mxu0 0
      %6814 = vmatprep.subr.bf16.mxu0 0
      %6815 = vmatpush1.bf16.msra.mxu0 0
      %6816 = vmatprep.subr.bf16.mxu0 0
      %6817 = vmatpush1.bf16.msra.mxu0 %v6370
      %6818 = vmatprep.subr.bf16.mxu0 0
      %6819 = vmatpush1.bf16.msra.mxu0 %v6369
      %6820 = vmatprep.subr.bf16.mxu0 0
      %6821 = vmatpush2.bf16.msra.mxu0 0
      %6822 = vmatprep.subr.bf16.mxu0 0
      %6823 = vmatpush2.bf16.msra.mxu0 0
      %6824 = vmatprep.subr.bf16.mxu0 0
      %6825 = vmatpush2.bf16.msra.mxu0 0
      %6826 = vmatprep.subr.bf16.mxu0 0
      %6827 = vmatpush2.bf16.msra.mxu0 0
      %6828 = vmatprep.subr.bf16.mxu0 0
      %6829 = vmatpush2.bf16.msra.mxu0 0
      %6830 = vmatprep.subr.bf16.mxu0 0
      %6831 = vmatpush2.bf16.msra.mxu0 0
      %6832 = vmatprep.subr.bf16.mxu0 0
      %6833 = vmatpush2.bf16.msra.mxu0 0
      %6834 = vmatprep.subr.bf16.mxu0 0
      %6835 = vmatpush2.bf16.msra.mxu0 0
      %6836 = vmatprep.mubr.bf16.mxu0 0
      %6837 = vmatmul.mubr.bf16.gmra.mxu0 %v6750
      %v6838 = vpop.f32.mrf.mxu0
      %v6839 = vadd.f32 %v6790, %v6838
      %v6840 = vpop.f32.mrf.mxu0
      %v6841 = vpop.f32.mrf.mxu0
      %v6842 = vadd.f32 %v6793, %v6841
      %v6843 = vpop.f32.mrf.mxu0
      %6844 = vmatprep.mubr.bf16.mxu0 0
      %6845 = vmatmul.mubr.bf16.gmra.mxu0 %v6753
      %v6846 = vpop.f32.mrf.mxu0
      %v6847 = vadd.f32 %v6798, %v6846
      %v6848 = vpop.f32.mrf.mxu0
      %v6849 = vpop.f32.mrf.mxu0
      %v6850 = vadd.f32 %v6801, %v6849
      %v6851 = vpop.f32.mrf.mxu0
      %6852 = vdwg.mxu0
      %v6853 = vmul.f32 %v3680, %v2962
      %v6854 = vmul.f32 %v3681, %v2962
      %v6855 = vmul.f32 %v3682, %v2962
      %v6856 = vmul.f32 %v3683, %v2962
      %v6857 = vmul.f32 %v3660, %v2980
      %v6858 = vmul.f32 %v3661, %v2980
      %v6859 = vmul.f32 %v3662, %v2980
      %v6860 = vmul.f32 %v3663, %v2980
      %6861 = vrot.lane.b32.xlu0 %v3403, 3
      %v6862 = vpop.permute.xlu0 %6861
      %6863 = vrot.lane.b32.xlu0 %v3404, 3
      %v6864 = vpop.permute.xlu0 %6863
      %6865 = vrot.lane.b32.xlu0 %v3405, 3
      %v6866 = vpop.permute.xlu0 %6865
      %6867 = vrot.lane.b32.xlu0 %v3406, 3
      %v6868 = vpop.permute.xlu0 %6867
      %v6873 = vsel %vm2989, 0.0, %v6862
      %v6874 = vsel %vm2989, 0.0, %v6864
      %v6875 = vsel %vm2989, 0.0, %v6866
      %v6876 = vsel %vm2989, 0.0, %v6868
      %v6877 = vsel %vm2992, %v6873, 0.0
      %v6878 = vsel %vm2992, %v6874, 0.0
      %v6879 = vsel %vm2992, %v6875, 0.0
      %v6880 = vsel %vm2992, %v6876, 0.0
      %v6881 = vmul.f32 %v6877, %v2998
      %v6882 = vmul.f32 %v6878, %v2998
      %v6883 = vmul.f32 %v6879, %v2998
      %v6884 = vmul.f32 %v6880, %v2998
      %v6885 = vmul.f32 %v3620, %v3014
      %v6886 = vmul.f32 %v3621, %v3014
      %v6887 = vmul.f32 %v3622, %v3014
      %v6888 = vmul.f32 %v3623, %v3014
      %v6889 = vmul.f32 %v3620, %v3023
      %v6890 = vmul.f32 %v3621, %v3023
      %v6891 = vmul.f32 %v3622, %v3023
      %v6892 = vmul.f32 %v3623, %v3023
      %v6893 = vmul.f32 %v6877, %v3033
      %v6894 = vmul.f32 %v6878, %v3033
      %v6895 = vmul.f32 %v6879, %v3033
      %v6896 = vmul.f32 %v6880, %v3033
      %v6897 = vmul.f32 %v3660, %v3043
      %v6898 = vmul.f32 %v3661, %v3043
      %v6899 = vmul.f32 %v3662, %v3043
      %v6900 = vmul.f32 %v3663, %v3043
      %v6901 = vmul.f32 %v3680, %v3053
      %v6902 = vmul.f32 %v3681, %v3053
      %v6903 = vmul.f32 %v3682, %v3053
      %v6904 = vmul.f32 %v3683, %v3053
      %6909 = vrot.lane.b32.xlu0 %v6889, 126
      %v6910 = vpop.permute.xlu0 %6909
      %6911 = vrot.lane.b32.xlu0 %v6890, 126
      %v6912 = vpop.permute.xlu0 %6911
      %6913 = vrot.lane.b32.xlu0 %v6891, 126
      %v6914 = vpop.permute.xlu0 %6913
      %6915 = vrot.lane.b32.xlu0 %v6892, 126
      %v6916 = vpop.permute.xlu0 %6915
      %6925 = vrot.lane.b32.xlu0 %v6893, 122
      %v6926 = vpop.permute.xlu0 %6925
      %6927 = vrot.lane.b32.xlu0 %v6894, 122
      %v6928 = vpop.permute.xlu0 %6927
      %6929 = vrot.lane.b32.xlu0 %v6895, 122
      %v6930 = vpop.permute.xlu0 %6929
      %6931 = vrot.lane.b32.xlu0 %v6896, 122
      %v6932 = vpop.permute.xlu0 %6931
      %6941 = vrot.lane.b32.xlu0 %v6897, 120
      %v6942 = vpop.permute.xlu0 %6941
      %6943 = vrot.lane.b32.xlu0 %v6898, 120
      %v6944 = vpop.permute.xlu0 %6943
      %6945 = vrot.lane.b32.xlu0 %v6899, 120
      %v6946 = vpop.permute.xlu0 %6945
      %6947 = vrot.lane.b32.xlu0 %v6900, 120
      %v6948 = vpop.permute.xlu0 %6947
      %6957 = vrot.lane.b32.xlu0 %v6901, 118
      %v6958 = vpop.permute.xlu0 %6957
      %6959 = vrot.lane.b32.xlu0 %v6902, 118
      %v6960 = vpop.permute.xlu0 %6959
      %6961 = vrot.lane.b32.xlu0 %v6903, 118
      %v6962 = vpop.permute.xlu0 %6961
      %6963 = vrot.lane.b32.xlu0 %v6904, 118
      %v6964 = vpop.permute.xlu0 %6963
      %v6969 = vpack.c.bf16 %v6854, %v6853
      %v6970 = vpack.c.bf16 %v6856, %v6855
      %v6971 = vpack.c.bf16 %v6858, %v6857
      %v6972 = vpack.c.bf16 %v6860, %v6859
      %v6973 = vpack.c.bf16 %v6882, %v6881
      %v6974 = vpack.c.bf16 %v6884, %v6883
      %v6975 = vpack.c.bf16 %v6886, %v6885
      %v6976 = vpack.c.bf16 %v6888, %v6887
      %v6977 = vpack.c.bf16 %v3404, %v3403
      %v6978 = vpack.c.bf16 %v3406, %v3405
      %v6979 = vpack.c.bf16 %v6912, %v6910
      %v6980 = vpack.c.bf16 %v6916, %v6914
      %v6981 = vpack.c.bf16 %v6928, %v6926
      %v6982 = vpack.c.bf16 %v6932, %v6930
      %v6983 = vpack.c.bf16 %v6944, %v6942
      %v6984 = vpack.c.bf16 %v6948, %v6946
      %v6985 = vpack.c.bf16 %v6960, %v6958
      %v6986 = vpack.c.bf16 %v6964, %v6962
      %v6987 = vld [vmem:[%s53] sm:$0xff]
      %v6988 = vld [vmem:[%s53 + $0x8] sm:$0xf]
      %v6989 = vld [vmem:[%s53 + $0xc] sm:$0xff]
      %v6990 = vld [vmem:[%s53 + $0x14] sm:$0xf]
      %v6991 = vld [vmem:[%s53 + $0x18] sm:$0xff]
      %v6992 = vld [vmem:[%s53 + $0x20] sm:$0xf]
      %v6993 = vld [vmem:[%s53 + $0x24] sm:$0xff]
      %v6994 = vld [vmem:[%s53 + $0x2c] sm:$0xf]
      %v7003 = vunpack.c.l.b16 %v6987
      %v7004 = vunpack.c.h.b16 %v6987
      %v7005 = vunpack.c.l.b16 %v6988
      %v7006 = vunpack.c.l.b16 %v6989
      %v7007 = vunpack.c.h.b16 %v6989
      %v7008 = vunpack.c.l.b16 %v6990
      %v7009 = vunpack.c.l.b16 %v6991
      %v7010 = vunpack.c.h.b16 %v6991
      %v7011 = vunpack.c.l.b16 %v6992
      %v7012 = vunpack.c.l.b16 %v6993
      %v7013 = vunpack.c.h.b16 %v6993
      %v7014 = vunpack.c.l.b16 %v6994
      %v7015 = vpack.c.b16 %v7006, %v7003
      %v7016 = vpack.c.b16 %v7007, %v7004
      %v7017 = vpack.c.b16 %v7008, %v7005
      %v7018 = vpack.c.b16 %v7012, %v7009
      %v7019 = vpack.c.b16 %v7013, %v7010
      %v7020 = vpack.c.b16 %v7014, %v7011
      %v7026 = vsel %vm1700, %v7017, 0
      %v7029 = vsel %vm1700, %v7020, 0
      %7031 = vmatprep.subr.bf16.mxu0 0
      %7032 = vmatpush1.bf16.msra.mxu0 %v6976
      %7033 = vmatprep.subr.bf16.mxu0 0
      %7034 = vmatpush1.bf16.msra.mxu0 %v6975
      %7035 = vmatprep.subr.bf16.mxu0 0
      %7036 = vmatpush1.bf16.msra.mxu0 %v6974
      %7037 = vmatprep.subr.bf16.mxu0 0
      %7038 = vmatpush1.bf16.msra.mxu0 %v6973
      %7039 = vmatprep.subr.bf16.mxu0 0
      %7040 = vmatpush1.bf16.msra.mxu0 %v6972
      %7041 = vmatprep.subr.bf16.mxu0 0
      %7042 = vmatpush1.bf16.msra.mxu0 %v6971
      %7043 = vmatprep.subr.bf16.mxu0 0
      %7044 = vmatpush1.bf16.msra.mxu0 %v6970
      %7045 = vmatprep.subr.bf16.mxu0 0
      %7046 = vmatpush1.bf16.msra.mxu0 %v6969
      %7047 = vmatprep.subr.bf16.mxu0 0
      %7048 = vmatpush2.bf16.msra.mxu0 %v6984
      %7049 = vmatprep.subr.bf16.mxu0 0
      %7050 = vmatpush2.bf16.msra.mxu0 %v6983
      %7051 = vmatprep.subr.bf16.mxu0 0
      %7052 = vmatpush2.bf16.msra.mxu0 %v6982
      %7053 = vmatprep.subr.bf16.mxu0 0
      %7054 = vmatpush2.bf16.msra.mxu0 %v6981
      %7055 = vmatprep.subr.bf16.mxu0 0
      %7056 = vmatpush2.bf16.msra.mxu0 %v6980
      %7057 = vmatprep.subr.bf16.mxu0 0
      %7058 = vmatpush2.bf16.msra.mxu0 %v6979
      %7059 = vmatprep.subr.bf16.mxu0 0
      %7060 = vmatpush2.bf16.msra.mxu0 %v6978
      %7061 = vmatprep.subr.bf16.mxu0 0
      %7062 = vmatpush2.bf16.msra.mxu0 %v6977
      %7063 = vmatprep.mubr.bf16.mxu0 %v7016
      %7064 = vmatmul.mubr.bf16.gmra.mxu0 %v7015
      %v7065 = vpop.f32.mrf.mxu0
      %v7066 = vadd.f32 0.0, %v7065
      %v7067 = vpop.f32.mrf.mxu0
      %v7068 = vpop.f32.mrf.mxu0
      %v7069 = vadd.f32 0.0, %v7068
      %v7070 = vpop.f32.mrf.mxu0
      %7071 = vmatprep.mubr.bf16.mxu0 %v7019
      %7072 = vmatmul.mubr.bf16.gmra.mxu0 %v7018
      %v7073 = vpop.f32.mrf.mxu0
      %v7074 = vadd.f32 0.0, %v7073
      %v7075 = vpop.f32.mrf.mxu0
      %v7076 = vpop.f32.mrf.mxu0
      %v7077 = vadd.f32 0.0, %v7076
      %v7078 = vpop.f32.mrf.mxu0
      %7079 = vdwg.mxu0
      %7080 = vmatprep.subr.bf16.mxu0 0
      %7081 = vmatpush1.bf16.msra.mxu0 0
      %7082 = vmatprep.subr.bf16.mxu0 0
      %7083 = vmatpush1.bf16.msra.mxu0 0
      %7084 = vmatprep.subr.bf16.mxu0 0
      %7085 = vmatpush1.bf16.msra.mxu0 0
      %7086 = vmatprep.subr.bf16.mxu0 0
      %7087 = vmatpush1.bf16.msra.mxu0 0
      %7088 = vmatprep.subr.bf16.mxu0 0
      %7089 = vmatpush1.bf16.msra.mxu0 0
      %7090 = vmatprep.subr.bf16.mxu0 0
      %7091 = vmatpush1.bf16.msra.mxu0 0
      %7092 = vmatprep.subr.bf16.mxu0 0
      %7093 = vmatpush1.bf16.msra.mxu0 %v6986
      %7094 = vmatprep.subr.bf16.mxu0 0
      %7095 = vmatpush1.bf16.msra.mxu0 %v6985
      %7096 = vmatprep.subr.bf16.mxu0 0
      %7097 = vmatpush2.bf16.msra.mxu0 0
      %7098 = vmatprep.subr.bf16.mxu0 0
      %7099 = vmatpush2.bf16.msra.mxu0 0
      %7100 = vmatprep.subr.bf16.mxu0 0
      %7101 = vmatpush2.bf16.msra.mxu0 0
      %7102 = vmatprep.subr.bf16.mxu0 0
      %7103 = vmatpush2.bf16.msra.mxu0 0
      %7104 = vmatprep.subr.bf16.mxu0 0
      %7105 = vmatpush2.bf16.msra.mxu0 0
      %7106 = vmatprep.subr.bf16.mxu0 0
      %7107 = vmatpush2.bf16.msra.mxu0 0
      %7108 = vmatprep.subr.bf16.mxu0 0
      %7109 = vmatpush2.bf16.msra.mxu0 0
      %7110 = vmatprep.subr.bf16.mxu0 0
      %7111 = vmatpush2.bf16.msra.mxu0 0
      %7112 = vmatprep.mubr.bf16.mxu0 0
      %7113 = vmatmul.mubr.bf16.gmra.mxu0 %v7026
      %v7114 = vpop.f32.mrf.mxu0
      %v7115 = vadd.f32 %v7066, %v7114
      %v7116 = vpop.f32.mrf.mxu0
      %v7117 = vpop.f32.mrf.mxu0
      %v7118 = vadd.f32 %v7069, %v7117
      %v7119 = vpop.f32.mrf.mxu0
      %7120 = vmatprep.mubr.bf16.mxu0 0
      %7121 = vmatmul.mubr.bf16.gmra.mxu0 %v7029
      %v7122 = vpop.f32.mrf.mxu0
      %v7123 = vadd.f32 %v7074, %v7122
      %v7124 = vpop.f32.mrf.mxu0
      %v7125 = vpop.f32.mrf.mxu0
      %v7126 = vadd.f32 %v7077, %v7125
      %v7127 = vpop.f32.mrf.mxu0
      %7128 = vdwg.mxu0
      %v7129 = vadd.f32 %v6839, %v7115
      %v7130 = vadd.f32 %v6842, %v7118
      %v7131 = vadd.f32 %v6847, %v7123
      %v7132 = vadd.f32 %v6850, %v7126
      %v7133 = vld [vmem:[%s55] sm:$0xff]
      %v7134 = vld [vmem:[%s55 + $0x8] sm:$0xff]
      %v7135 = vld [vmem:[%s55 + $0x10] sm:$0xff]
      %v7136 = vld [vmem:[%s55 + $0x18] sm:$0xff]
      %7138 = vset.pattern.permute.xlu0 0
      %7139 = vperm.xlu0 %7138, %v7133
      %v7140 = vpop.permute.xlu0 %7139
      %7143 = vset.pattern.permute.xlu0 0
      %7144 = vperm.xlu0 %7143, %v7134
      %v7145 = vpop.permute.xlu0 %7144
      %7148 = vset.pattern.permute.xlu0 0
      %7149 = vperm.xlu0 %7148, %v7135
      %v7150 = vpop.permute.xlu0 %7149
      %7153 = vset.pattern.permute.xlu0 0
      %7154 = vperm.xlu0 %7153, %v7136
      %v7155 = vpop.permute.xlu0 %7154
      %v7157 = vadd.f32 %v7129, %v7140
      %v7158 = vadd.f32 %v7130, %v7145
      %v7159 = vadd.f32 %v7131, %v7150
      %v7160 = vadd.f32 %v7132, %v7155
      %v7161 = vmax.f32 %v7157, 0.0
      %v7162 = vmax.f32 %v7158, 0.0
      %v7163 = vmax.f32 %v7159, 0.0
      %v7164 = vmax.f32 %v7160, 0.0
      %v7165 = vpack.c.bf16 %v7162, %v7161
      %v7166 = vpack.c.bf16 %v7164, %v7163
      %v7167 = vld [vmem:[%s99] sm:$0xf]
      %v7168 = vld [vmem:[%s99 + $0x4] sm:$0xf]
      %v7171 = vunpack.c.l.b16 %v7167
      %v7172 = vunpack.c.l.b16 %v7168
      %v7173 = vpack.c.b16 %v7172, %v7171
      %v7176 = vsel %vm1583, %v7165, 0
      %v7179 = vsel %vm1583, %v7166, 0
      %7181 = vmatprep.subr.bf16.mxu0 0
      %7182 = vmatpush1.bf16.msra.mxu0 0
      %7183 = vmatprep.subr.bf16.mxu0 0
      %7184 = vmatpush1.bf16.msra.mxu0 0
      %7185 = vmatprep.subr.bf16.mxu0 0
      %7186 = vmatpush1.bf16.msra.mxu0 0
      %7187 = vmatprep.subr.bf16.mxu0 0
      %7188 = vmatpush1.bf16.msra.mxu0 0
      %7189 = vmatprep.subr.bf16.mxu0 0
      %7190 = vmatpush1.bf16.msra.mxu0 0
      %7191 = vmatprep.subr.bf16.mxu0 0
      %7192 = vmatpush1.bf16.msra.mxu0 0
      %7193 = vmatprep.subr.bf16.mxu0 0
      %7194 = vmatpush1.bf16.msra.mxu0 0
      %7195 = vmatprep.subr.bf16.mxu0 0
      %7196 = vmatpush1.bf16.msra.mxu0 %v7173
      %7197 = vmatprep.subr.bf16.mxu0 0
      %7198 = vmatpush2.bf16.msra.mxu0 0
      %7199 = vmatprep.subr.bf16.mxu0 0
      %7200 = vmatpush2.bf16.msra.mxu0 0
      %7201 = vmatprep.subr.bf16.mxu0 0
      %7202 = vmatpush2.bf16.msra.mxu0 0
      %7203 = vmatprep.subr.bf16.mxu0 0
      %7204 = vmatpush2.bf16.msra.mxu0 0
      %7205 = vmatprep.subr.bf16.mxu0 0
      %7206 = vmatpush2.bf16.msra.mxu0 0
      %7207 = vmatprep.subr.bf16.mxu0 0
      %7208 = vmatpush2.bf16.msra.mxu0 0
      %7209 = vmatprep.subr.bf16.mxu0 0
      %7210 = vmatpush2.bf16.msra.mxu0 0
      %7211 = vmatprep.subr.bf16.mxu0 0
      %7212 = vmatpush2.bf16.msra.mxu0 0
      %7213 = vmatprep.mubr.bf16.mxu0 0
      %7214 = vmatmul.mubr.bf16.gmra.mxu0 %v7176
      %v7215 = vpop.f32.mrf.mxu0
      %v7216 = vadd.f32 0.0, %v7215
      %v7217 = vpop.f32.mrf.mxu0
      %v7218 = vpop.f32.mrf.mxu0
      %v7219 = vadd.f32 0.0, %v7218
      %v7220 = vpop.f32.mrf.mxu0
      %7221 = vmatprep.mubr.bf16.mxu0 0
      %7222 = vmatmul.mubr.bf16.gmra.mxu0 %v7179
      %v7223 = vpop.f32.mrf.mxu0
      %v7224 = vadd.f32 0.0, %v7223
      %v7225 = vpop.f32.mrf.mxu0
      %v7226 = vpop.f32.mrf.mxu0
      %v7227 = vadd.f32 0.0, %v7226
      %v7228 = vpop.f32.mrf.mxu0
      %7229 = vdwg.mxu0
      %7234 = vrot.lane.b32.xlu0 %v7216, 9
      %v7235 = vpop.permute.xlu0 %7234
      %7236 = vrot.lane.b32.xlu0 %v7219, 9
      %v7237 = vpop.permute.xlu0 %7236
      %7238 = vrot.lane.b32.xlu0 %v7224, 9
      %v7239 = vpop.permute.xlu0 %7238
      %7240 = vrot.lane.b32.xlu0 %v7227, 9
      %v7241 = vpop.permute.xlu0 %7240
      %v7246 = vsel %vm2410, 0.0, %v7235
      %v7247 = vsel %vm2410, 0.0, %v7237
      %v7248 = vsel %vm2410, 0.0, %v7239
      %v7249 = vsel %vm2410, 0.0, %v7241
      %v7250 = vsel %vm2412, %v7246, 0.0
      %v7251 = vsel %vm2412, %v7247, 0.0
      %v7252 = vsel %vm2412, %v7248, 0.0
      %v7253 = vsel %vm2412, %v7249, 0.0
      %v7254 = vmul.f32 %v7250, %v2417
      %v7255 = vmul.f32 %v7251, %v2417
      %v7256 = vmul.f32 %v7252, %v2417
      %v7257 = vmul.f32 %v7253, %v2417
      %7258 = vrot.lane.b32.xlu0 %v7216, 8
      %v7259 = vpop.permute.xlu0 %7258
      %7260 = vrot.lane.b32.xlu0 %v7219, 8
      %v7261 = vpop.permute.xlu0 %7260
      %7262 = vrot.lane.b32.xlu0 %v7224, 8
      %v7263 = vpop.permute.xlu0 %7262
      %7264 = vrot.lane.b32.xlu0 %v7227, 8
      %v7265 = vpop.permute.xlu0 %7264
      %v7270 = vsel %vm2422, 0.0, %v7259
      %v7271 = vsel %vm2422, 0.0, %v7261
      %v7272 = vsel %vm2422, 0.0, %v7263
      %v7273 = vsel %vm2422, 0.0, %v7265
      %v7274 = vsel %vm1803, %v7270, 0.0
      %v7275 = vsel %vm1803, %v7271, 0.0
      %v7276 = vsel %vm1803, %v7272, 0.0
      %v7277 = vsel %vm1803, %v7273, 0.0
      %v7278 = vmul.f32 %v7274, %v2428
      %v7279 = vmul.f32 %v7275, %v2428
      %v7280 = vmul.f32 %v7276, %v2428
      %v7281 = vmul.f32 %v7277, %v2428
      %7282 = vrot.lane.b32.xlu0 %v7216, 7
      %v7283 = vpop.permute.xlu0 %7282
      %7284 = vrot.lane.b32.xlu0 %v7219, 7
      %v7285 = vpop.permute.xlu0 %7284
      %7286 = vrot.lane.b32.xlu0 %v7224, 7
      %v7287 = vpop.permute.xlu0 %7286
      %7288 = vrot.lane.b32.xlu0 %v7227, 7
      %v7289 = vpop.permute.xlu0 %7288
      %v7294 = vsel %vm2433, 0.0, %v7283
      %v7295 = vsel %vm2433, 0.0, %v7285
      %v7296 = vsel %vm2433, 0.0, %v7287
      %v7297 = vsel %vm2433, 0.0, %v7289
      %v7298 = vsel %vm2435, %v7294, 0.0
      %v7299 = vsel %vm2435, %v7295, 0.0
      %v7300 = vsel %vm2435, %v7296, 0.0
      %v7301 = vsel %vm2435, %v7297, 0.0
      %v7302 = vmul.f32 %v7298, %v2440
      %v7303 = vmul.f32 %v7299, %v2440
      %v7304 = vmul.f32 %v7300, %v2440
      %v7305 = vmul.f32 %v7301, %v2440
      %7306 = vrot.lane.b32.xlu0 %v7216, 1
      %v7307 = vpop.permute.xlu0 %7306
      %7308 = vrot.lane.b32.xlu0 %v7219, 1
      %v7309 = vpop.permute.xlu0 %7308
      %7310 = vrot.lane.b32.xlu0 %v7224, 1
      %v7311 = vpop.permute.xlu0 %7310
      %7312 = vrot.lane.b32.xlu0 %v7227, 1
      %v7313 = vpop.permute.xlu0 %7312
      %v7318 = vsel %vm1625, 0.0, %v7307
      %v7319 = vsel %vm1625, 0.0, %v7309
      %v7320 = vsel %vm1625, 0.0, %v7311
      %v7321 = vsel %vm1625, 0.0, %v7313
      %v7322 = vsel %vm2446, %v7318, 0.0
      %v7323 = vsel %vm2446, %v7319, 0.0
      %v7324 = vsel %vm2446, %v7320, 0.0
      %v7325 = vsel %vm2446, %v7321, 0.0
      %v7326 = vmul.f32 %v7322, %v2451
      %v7327 = vmul.f32 %v7323, %v2451
      %v7328 = vmul.f32 %v7324, %v2451
      %v7329 = vmul.f32 %v7325, %v2451
      %v7330 = vmul.f32 %v7322, %v2459
      %v7331 = vmul.f32 %v7323, %v2459
      %v7332 = vmul.f32 %v7324, %v2459
      %v7333 = vmul.f32 %v7325, %v2459
      %v7334 = vmul.f32 %v7298, %v2468
      %v7335 = vmul.f32 %v7299, %v2468
      %v7336 = vmul.f32 %v7300, %v2468
      %v7337 = vmul.f32 %v7301, %v2468
      %v7338 = vmul.f32 %v7274, %v2477
      %v7339 = vmul.f32 %v7275, %v2477
      %v7340 = vmul.f32 %v7276, %v2477
      %v7341 = vmul.f32 %v7277, %v2477
      %v7342 = vmul.f32 %v7250, %v2486
      %v7343 = vmul.f32 %v7251, %v2486
      %v7344 = vmul.f32 %v7252, %v2486
      %v7345 = vmul.f32 %v7253, %v2486
      %7350 = vrot.lane.b32.xlu0 %v7330, 126
      %v7351 = vpop.permute.xlu0 %7350
      %7352 = vrot.lane.b32.xlu0 %v7331, 126
      %v7353 = vpop.permute.xlu0 %7352
      %7354 = vrot.lane.b32.xlu0 %v7332, 126
      %v7355 = vpop.permute.xlu0 %7354
      %7356 = vrot.lane.b32.xlu0 %v7333, 126
      %v7357 = vpop.permute.xlu0 %7356
      %7366 = vrot.lane.b32.xlu0 %v7334, 114
      %v7367 = vpop.permute.xlu0 %7366
      %7368 = vrot.lane.b32.xlu0 %v7335, 114
      %v7369 = vpop.permute.xlu0 %7368
      %7370 = vrot.lane.b32.xlu0 %v7336, 114
      %v7371 = vpop.permute.xlu0 %7370
      %7372 = vrot.lane.b32.xlu0 %v7337, 114
      %v7373 = vpop.permute.xlu0 %7372
      %7382 = vrot.lane.b32.xlu0 %v7338, 112
      %v7383 = vpop.permute.xlu0 %7382
      %7384 = vrot.lane.b32.xlu0 %v7339, 112
      %v7385 = vpop.permute.xlu0 %7384
      %7386 = vrot.lane.b32.xlu0 %v7340, 112
      %v7387 = vpop.permute.xlu0 %7386
      %7388 = vrot.lane.b32.xlu0 %v7341, 112
      %v7389 = vpop.permute.xlu0 %7388
      %7398 = vrot.lane.b32.xlu0 %v7342, 110
      %v7399 = vpop.permute.xlu0 %7398
      %7400 = vrot.lane.b32.xlu0 %v7343, 110
      %v7401 = vpop.permute.xlu0 %7400
      %7402 = vrot.lane.b32.xlu0 %v7344, 110
      %v7403 = vpop.permute.xlu0 %7402
      %7404 = vrot.lane.b32.xlu0 %v7345, 110
      %v7405 = vpop.permute.xlu0 %7404
      %v7410 = vpack.c.bf16 %v7255, %v7254
      %v7411 = vpack.c.bf16 %v7257, %v7256
      %v7412 = vpack.c.bf16 %v7279, %v7278
      %v7413 = vpack.c.bf16 %v7281, %v7280
      %v7414 = vpack.c.bf16 %v7303, %v7302
      %v7415 = vpack.c.bf16 %v7305, %v7304
      %v7416 = vpack.c.bf16 %v7327, %v7326
      %v7417 = vpack.c.bf16 %v7329, %v7328
      %v7418 = vpack.c.bf16 %v7219, %v7216
      %v7419 = vpack.c.bf16 %v7227, %v7224
      %v7420 = vpack.c.bf16 %v7353, %v7351
      %v7421 = vpack.c.bf16 %v7357, %v7355
      %v7422 = vpack.c.bf16 %v7369, %v7367
      %v7423 = vpack.c.bf16 %v7373, %v7371
      %v7424 = vpack.c.bf16 %v7385, %v7383
      %v7425 = vpack.c.bf16 %v7389, %v7387
      %v7426 = vpack.c.bf16 %v7401, %v7399
      %v7427 = vpack.c.bf16 %v7405, %v7403
      %v7428 = vld [vmem:[%s57] sm:$0xff]
      %v7429 = vld [vmem:[%s57 + $0x8] sm:$0xf]
      %v7430 = vld [vmem:[%s57 + $0xc] sm:$0xff]
      %v7431 = vld [vmem:[%s57 + $0x14] sm:$0xf]
      %7434 = vrot.lane.b32.xlu0 %v2576, 9
      %v7435 = vpop.permute.xlu0 %7434
      %7436 = vrot.lane.b32.xlu0 %v2577, 9
      %v7437 = vpop.permute.xlu0 %7436
      %v7440 = vsel %vm2410, 0.0, %v7435
      %v7441 = vsel %vm2410, 0.0, %v7437
      %v7442 = vsel %vm2412, %v7440, 0.0
      %v7443 = vsel %vm2412, %v7441, 0.0
      %v7444 = vmul.f32 %v7442, %v2417
      %v7445 = vmul.f32 %v7443, %v2417
      %7446 = vrot.lane.b32.xlu0 %v2576, 8
      %v7447 = vpop.permute.xlu0 %7446
      %7448 = vrot.lane.b32.xlu0 %v2577, 8
      %v7449 = vpop.permute.xlu0 %7448
      %v7452 = vsel %vm2422, 0.0, %v7447
      %v7453 = vsel %vm2422, 0.0, %v7449
      %v7454 = vsel %vm1803, %v7452, 0.0
      %v7455 = vsel %vm1803, %v7453, 0.0
      %v7456 = vmul.f32 %v7454, %v2428
      %v7457 = vmul.f32 %v7455, %v2428
      %7458 = vrot.lane.b32.xlu0 %v2576, 7
      %v7459 = vpop.permute.xlu0 %7458
      %7460 = vrot.lane.b32.xlu0 %v2577, 7
      %v7461 = vpop.permute.xlu0 %7460
      %v7464 = vsel %vm2433, 0.0, %v7459
      %v7465 = vsel %vm2433, 0.0, %v7461
      %v7466 = vsel %vm2435, %v7464, 0.0
      %v7467 = vsel %vm2435, %v7465, 0.0
      %v7468 = vmul.f32 %v7466, %v2440
      %v7469 = vmul.f32 %v7467, %v2440
      %7470 = vrot.lane.b32.xlu0 %v2576, 1
      %v7471 = vpop.permute.xlu0 %7470
      %7472 = vrot.lane.b32.xlu0 %v2577, 1
      %v7473 = vpop.permute.xlu0 %7472
      %v7476 = vsel %vm1625, 0.0, %v7471
      %v7477 = vsel %vm1625, 0.0, %v7473
      %v7478 = vsel %vm2446, %v7476, 0.0
      %v7479 = vsel %vm2446, %v7477, 0.0
      %v7480 = vmul.f32 %v7478, %v2451
      %v7481 = vmul.f32 %v7479, %v2451
      %v7482 = vmul.f32 %v7478, %v2459
      %v7483 = vmul.f32 %v7479, %v2459
      %v7484 = vmul.f32 %v7466, %v2468
      %v7485 = vmul.f32 %v7467, %v2468
      %v7486 = vmul.f32 %v7454, %v2477
      %v7487 = vmul.f32 %v7455, %v2477
      %v7488 = vmul.f32 %v7442, %v2486
      %v7489 = vmul.f32 %v7443, %v2486
      %7492 = vrot.lane.b32.xlu0 %v7482, 126
      %v7493 = vpop.permute.xlu0 %7492
      %7494 = vrot.lane.b32.xlu0 %v7483, 126
      %v7495 = vpop.permute.xlu0 %7494
      %7500 = vrot.lane.b32.xlu0 %v7484, 114
      %v7501 = vpop.permute.xlu0 %7500
      %7502 = vrot.lane.b32.xlu0 %v7485, 114
      %v7503 = vpop.permute.xlu0 %7502
      %7508 = vrot.lane.b32.xlu0 %v7486, 112
      %v7509 = vpop.permute.xlu0 %7508
      %7510 = vrot.lane.b32.xlu0 %v7487, 112
      %v7511 = vpop.permute.xlu0 %7510
      %7516 = vrot.lane.b32.xlu0 %v7488, 110
      %v7517 = vpop.permute.xlu0 %7516
      %7518 = vrot.lane.b32.xlu0 %v7489, 110
      %v7519 = vpop.permute.xlu0 %7518
      %v7522 = vpack.c.bf16 %v7445, %v7444
      %v7523 = vpack.c.bf16 %v7457, %v7456
      %v7524 = vpack.c.bf16 %v7469, %v7468
      %v7525 = vpack.c.bf16 %v7481, %v7480
      %v7526 = vpack.c.bf16 %v2577, %v2576
      %v7527 = vpack.c.bf16 %v7495, %v7493
      %v7528 = vpack.c.bf16 %v7503, %v7501
      %v7529 = vpack.c.bf16 %v7511, %v7509
      %v7530 = vpack.c.bf16 %v7519, %v7517
      %v7531 = vld [vmem:[%s59] sm:$0xff]
      %v7532 = vld [vmem:[%s59 + $0x8] sm:$0xff]
      %v7535 = vunpack.c.l.b16 %v7531
      %v7536 = vunpack.c.h.b16 %v7531
      %v7537 = vunpack.c.l.b16 %v7532
      %v7538 = vunpack.c.h.b16 %v7532
      %v7539 = vpack.c.b16 %v7537, %v7535
      %v7540 = vpack.c.b16 %v7538, %v7536
      %v7543 = vsel %vm1583, %v7540, 0
      %7545 = vmatprep.subr.bf16.mxu0 0
      %7546 = vmatpush1.bf16.msra.mxu0 %v7529
      %7547 = vmatprep.subr.bf16.mxu0 0
      %7548 = vmatpush1.bf16.msra.mxu0 %v7528
      %7549 = vmatprep.subr.bf16.mxu0 0
      %7550 = vmatpush1.bf16.msra.mxu0 %v7527
      %7551 = vmatprep.subr.bf16.mxu0 0
      %7552 = vmatpush1.bf16.msra.mxu0 %v7526
      %7553 = vmatprep.subr.bf16.mxu0 0
      %7554 = vmatpush1.bf16.msra.mxu0 %v7525
      %7555 = vmatprep.subr.bf16.mxu0 0
      %7556 = vmatpush1.bf16.msra.mxu0 %v7524
      %7557 = vmatprep.subr.bf16.mxu0 0
      %7558 = vmatpush1.bf16.msra.mxu0 %v7523
      %7559 = vmatprep.subr.bf16.mxu0 0
      %7560 = vmatpush1.bf16.msra.mxu0 %v7522
      %7561 = vmatprep.subr.bf16.mxu0 0
      %7562 = vmatpush2.bf16.msra.mxu0 0
      %7563 = vmatprep.subr.bf16.mxu0 0
      %7564 = vmatpush2.bf16.msra.mxu0 0
      %7565 = vmatprep.subr.bf16.mxu0 0
      %7566 = vmatpush2.bf16.msra.mxu0 0
      %7567 = vmatprep.subr.bf16.mxu0 0
      %7568 = vmatpush2.bf16.msra.mxu0 0
      %7569 = vmatprep.subr.bf16.mxu0 0
      %7570 = vmatpush2.bf16.msra.mxu0 0
      %7571 = vmatprep.subr.bf16.mxu0 0
      %7572 = vmatpush2.bf16.msra.mxu0 0
      %7573 = vmatprep.subr.bf16.mxu0 0
      %7574 = vmatpush2.bf16.msra.mxu0 0
      %7575 = vmatprep.subr.bf16.mxu0 0
      %7576 = vmatpush2.bf16.msra.mxu0 %v7530
      %7577 = vmatprep.mubr.bf16.mxu0 %v7543
      %7578 = vmatmul.mubr.bf16.gmra.mxu0 %v7539
      %v7579 = vpop.f32.mrf.mxu0
      %v7580 = vadd.f32 0.0, %v7579
      %v7581 = vpop.f32.mrf.mxu0
      %v7582 = vpop.f32.mrf.mxu0
      %v7583 = vadd.f32 0.0, %v7582
      %v7584 = vpop.f32.mrf.mxu0
      %7585 = vdwg.mxu0
      %v7590 = vunpack.c.l.b16 %v7428
      %v7591 = vunpack.c.h.b16 %v7428
      %v7592 = vunpack.c.l.b16 %v7429
      %v7593 = vunpack.c.l.b16 %v7430
      %v7594 = vunpack.c.h.b16 %v7430
      %v7595 = vunpack.c.l.b16 %v7431
      %v7596 = vpack.c.b16 %v7593, %v7590
      %v7597 = vpack.c.b16 %v7594, %v7591
      %v7598 = vpack.c.b16 %v7595, %v7592
      %v7602 = vsel %vm1700, %v7598, 0
      %7604 = vmatprep.subr.bf16.mxu0 0
      %7605 = vmatpush1.bf16.msra.mxu0 %v7417
      %7606 = vmatprep.subr.bf16.mxu0 0
      %7607 = vmatpush1.bf16.msra.mxu0 %v7416
      %7608 = vmatprep.subr.bf16.mxu0 0
      %7609 = vmatpush1.bf16.msra.mxu0 %v7415
      %7610 = vmatprep.subr.bf16.mxu0 0
      %7611 = vmatpush1.bf16.msra.mxu0 %v7414
      %7612 = vmatprep.subr.bf16.mxu0 0
      %7613 = vmatpush1.bf16.msra.mxu0 %v7413
      %7614 = vmatprep.subr.bf16.mxu0 0
      %7615 = vmatpush1.bf16.msra.mxu0 %v7412
      %7616 = vmatprep.subr.bf16.mxu0 0
      %7617 = vmatpush1.bf16.msra.mxu0 %v7411
      %7618 = vmatprep.subr.bf16.mxu0 0
      %7619 = vmatpush1.bf16.msra.mxu0 %v7410
      %7620 = vmatprep.subr.bf16.mxu0 0
      %7621 = vmatpush2.bf16.msra.mxu0 %v7425
      %7622 = vmatprep.subr.bf16.mxu0 0
      %7623 = vmatpush2.bf16.msra.mxu0 %v7424
      %7624 = vmatprep.subr.bf16.mxu0 0
      %7625 = vmatpush2.bf16.msra.mxu0 %v7423
      %7626 = vmatprep.subr.bf16.mxu0 0
      %7627 = vmatpush2.bf16.msra.mxu0 %v7422
      %7628 = vmatprep.subr.bf16.mxu0 0
      %7629 = vmatpush2.bf16.msra.mxu0 %v7421
      %7630 = vmatprep.subr.bf16.mxu0 0
      %7631 = vmatpush2.bf16.msra.mxu0 %v7420
      %7632 = vmatprep.subr.bf16.mxu0 0
      %7633 = vmatpush2.bf16.msra.mxu0 %v7419
      %7634 = vmatprep.subr.bf16.mxu0 0
      %7635 = vmatpush2.bf16.msra.mxu0 %v7418
      %7636 = vmatprep.mubr.bf16.mxu0 %v7597
      %7637 = vmatmul.mubr.bf16.gmra.mxu0 %v7596
      %v7638 = vpop.f32.mrf.mxu0
      %v7639 = vadd.f32 %v7580, %v7638
      %v7640 = vpop.f32.mrf.mxu0
      %v7641 = vpop.f32.mrf.mxu0
      %v7642 = vadd.f32 %v7583, %v7641
      %v7643 = vpop.f32.mrf.mxu0
      %7644 = vdwg.mxu0
      %7645 = vmatprep.subr.bf16.mxu0 0
      %7646 = vmatpush1.bf16.msra.mxu0 0
      %7647 = vmatprep.subr.bf16.mxu0 0
      %7648 = vmatpush1.bf16.msra.mxu0 0
      %7649 = vmatprep.subr.bf16.mxu0 0
      %7650 = vmatpush1.bf16.msra.mxu0 0
      %7651 = vmatprep.subr.bf16.mxu0 0
      %7652 = vmatpush1.bf16.msra.mxu0 0
      %7653 = vmatprep.subr.bf16.mxu0 0
      %7654 = vmatpush1.bf16.msra.mxu0 0
      %7655 = vmatprep.subr.bf16.mxu0 0
      %7656 = vmatpush1.bf16.msra.mxu0 0
      %7657 = vmatprep.subr.bf16.mxu0 0
      %7658 = vmatpush1.bf16.msra.mxu0 %v7427
      %7659 = vmatprep.subr.bf16.mxu0 0
      %7660 = vmatpush1.bf16.msra.mxu0 %v7426
      %7661 = vmatprep.subr.bf16.mxu0 0
      %7662 = vmatpush2.bf16.msra.mxu0 0
      %7663 = vmatprep.subr.bf16.mxu0 0
      %7664 = vmatpush2.bf16.msra.mxu0 0
      %7665 = vmatprep.subr.bf16.mxu0 0
      %7666 = vmatpush2.bf16.msra.mxu0 0
      %7667 = vmatprep.subr.bf16.mxu0 0
      %7668 = vmatpush2.bf16.msra.mxu0 0
      %7669 = vmatprep.subr.bf16.mxu0 0
      %7670 = vmatpush2.bf16.msra.mxu0 0
      %7671 = vmatprep.subr.bf16.mxu0 0
      %7672 = vmatpush2.bf16.msra.mxu0 0
      %7673 = vmatprep.subr.bf16.mxu0 0
      %7674 = vmatpush2.bf16.msra.mxu0 0
      %7675 = vmatprep.subr.bf16.mxu0 0
      %7676 = vmatpush2.bf16.msra.mxu0 0
      %7677 = vmatprep.mubr.bf16.mxu0 0
      %7678 = vmatmul.mubr.bf16.gmra.mxu0 %v7602
      %v7679 = vpop.f32.mrf.mxu0
      %v7680 = vadd.f32 %v7639, %v7679
      %v7681 = vpop.f32.mrf.mxu0
      %v7682 = vpop.f32.mrf.mxu0
      %v7683 = vadd.f32 %v7642, %v7682
      %v7684 = vpop.f32.mrf.mxu0
      %7685 = vdwg.mxu0
      %v7686 = vmul.f32 %v2878, %v2417
      %v7687 = vmul.f32 %v2879, %v2417
      %v7688 = vmul.f32 %v2868, %v2428
      %v7689 = vmul.f32 %v2869, %v2428
      %7690 = vrot.lane.b32.xlu0 %v2694, 7
      %v7691 = vpop.permute.xlu0 %7690
      %7692 = vrot.lane.b32.xlu0 %v2695, 7
      %v7693 = vpop.permute.xlu0 %7692
      %v7696 = vsel %vm2433, 0.0, %v7691
      %v7697 = vsel %vm2433, 0.0, %v7693
      %v7698 = vsel %vm2435, %v7696, 0.0
      %v7699 = vsel %vm2435, %v7697, 0.0
      %v7700 = vmul.f32 %v7698, %v2440
      %v7701 = vmul.f32 %v7699, %v2440
      %v7702 = vmul.f32 %v2848, %v2451
      %v7703 = vmul.f32 %v2849, %v2451
      %v7704 = vmul.f32 %v2848, %v2459
      %v7705 = vmul.f32 %v2849, %v2459
      %v7706 = vmul.f32 %v7698, %v2468
      %v7707 = vmul.f32 %v7699, %v2468
      %v7708 = vmul.f32 %v2868, %v2477
      %v7709 = vmul.f32 %v2869, %v2477
      %v7710 = vmul.f32 %v2878, %v2486
      %v7711 = vmul.f32 %v2879, %v2486
      %7714 = vrot.lane.b32.xlu0 %v7704, 126
      %v7715 = vpop.permute.xlu0 %7714
      %7716 = vrot.lane.b32.xlu0 %v7705, 126
      %v7717 = vpop.permute.xlu0 %7716
      %7722 = vrot.lane.b32.xlu0 %v7706, 114
      %v7723 = vpop.permute.xlu0 %7722
      %7724 = vrot.lane.b32.xlu0 %v7707, 114
      %v7725 = vpop.permute.xlu0 %7724
      %7730 = vrot.lane.b32.xlu0 %v7708, 112
      %v7731 = vpop.permute.xlu0 %7730
      %7732 = vrot.lane.b32.xlu0 %v7709, 112
      %v7733 = vpop.permute.xlu0 %7732
      %7738 = vrot.lane.b32.xlu0 %v7710, 110
      %v7739 = vpop.permute.xlu0 %7738
      %7740 = vrot.lane.b32.xlu0 %v7711, 110
      %v7741 = vpop.permute.xlu0 %7740
      %v7744 = vpack.c.bf16 %v7687, %v7686
      %v7745 = vpack.c.bf16 %v7689, %v7688
      %v7746 = vpack.c.bf16 %v7701, %v7700
      %v7747 = vpack.c.bf16 %v7703, %v7702
      %v7748 = vpack.c.bf16 %v2695, %v2694
      %v7749 = vpack.c.bf16 %v7717, %v7715
      %v7750 = vpack.c.bf16 %v7725, %v7723
      %v7751 = vpack.c.bf16 %v7733, %v7731
      %v7752 = vpack.c.bf16 %v7741, %v7739
      %v7753 = vld [vmem:[%s61] sm:$0xff]
      %v7754 = vld [vmem:[%s61 + $0x8] sm:$0xff]
      %v7757 = vunpack.c.l.b16 %v7753
      %v7758 = vunpack.c.h.b16 %v7753
      %v7759 = vunpack.c.l.b16 %v7754
      %v7760 = vunpack.c.h.b16 %v7754
      %v7761 = vpack.c.b16 %v7759, %v7757
      %v7762 = vpack.c.b16 %v7760, %v7758
      %v7765 = vsel %vm1583, %v7762, 0
      %7767 = vmatprep.subr.bf16.mxu0 0
      %7768 = vmatpush1.bf16.msra.mxu0 %v7751
      %7769 = vmatprep.subr.bf16.mxu0 0
      %7770 = vmatpush1.bf16.msra.mxu0 %v7750
      %7771 = vmatprep.subr.bf16.mxu0 0
      %7772 = vmatpush1.bf16.msra.mxu0 %v7749
      %7773 = vmatprep.subr.bf16.mxu0 0
      %7774 = vmatpush1.bf16.msra.mxu0 %v7748
      %7775 = vmatprep.subr.bf16.mxu0 0
      %7776 = vmatpush1.bf16.msra.mxu0 %v7747
      %7777 = vmatprep.subr.bf16.mxu0 0
      %7778 = vmatpush1.bf16.msra.mxu0 %v7746
      %7779 = vmatprep.subr.bf16.mxu0 0
      %7780 = vmatpush1.bf16.msra.mxu0 %v7745
      %7781 = vmatprep.subr.bf16.mxu0 0
      %7782 = vmatpush1.bf16.msra.mxu0 %v7744
      %7783 = vmatprep.subr.bf16.mxu0 0
      %7784 = vmatpush2.bf16.msra.mxu0 0
      %7785 = vmatprep.subr.bf16.mxu0 0
      %7786 = vmatpush2.bf16.msra.mxu0 0
      %7787 = vmatprep.subr.bf16.mxu0 0
      %7788 = vmatpush2.bf16.msra.mxu0 0
      %7789 = vmatprep.subr.bf16.mxu0 0
      %7790 = vmatpush2.bf16.msra.mxu0 0
      %7791 = vmatprep.subr.bf16.mxu0 0
      %7792 = vmatpush2.bf16.msra.mxu0 0
      %7793 = vmatprep.subr.bf16.mxu0 0
      %7794 = vmatpush2.bf16.msra.mxu0 0
      %7795 = vmatprep.subr.bf16.mxu0 0
      %7796 = vmatpush2.bf16.msra.mxu0 0
      %7797 = vmatprep.subr.bf16.mxu0 0
      %7798 = vmatpush2.bf16.msra.mxu0 %v7752
      %7799 = vmatprep.mubr.bf16.mxu0 %v7765
      %7800 = vmatmul.mubr.bf16.gmra.mxu0 %v7761
      %v7801 = vpop.f32.mrf.mxu0
      %v7802 = vadd.f32 0.0, %v7801
      %v7803 = vpop.f32.mrf.mxu0
      %v7804 = vpop.f32.mrf.mxu0
      %v7805 = vadd.f32 0.0, %v7804
      %v7806 = vpop.f32.mrf.mxu0
      %7807 = vdwg.mxu0
      %v7808 = vadd.f32 %v7680, %v7802
      %v7809 = vadd.f32 %v7683, %v7805
      %v7810 = vld [vmem:[%s63] sm:$0xff]
      %v7811 = vld [vmem:[%s63 + $0x8] sm:$0xff]
      %7813 = vset.pattern.permute.xlu0 0
      %7814 = vperm.xlu0 %7813, %v7810
      %v7815 = vpop.permute.xlu0 %7814
      %7818 = vset.pattern.permute.xlu0 0
      %7819 = vperm.xlu0 %7818, %v7811
      %v7820 = vpop.permute.xlu0 %7819
      %v7822 = vadd.f32 %v7808, %v7815
      %v7823 = vadd.f32 %v7809, %v7820
      %v7824 = vmax.f32 %v7822, 0.0
      %v7825 = vmax.f32 %v7823, 0.0
      %v7826 = vpack.c.bf16 %v7825, %v7824
      %v7827 = vld [vmem:[%s101] sm:$0xff]
      %v7828 = vld [vmem:[%s101 + $0x8] sm:$0xff]
      %v7829 = vld [vmem:[%s101 + $0x10] sm:$0xff]
      %v7830 = vld [vmem:[%s101 + $0x18] sm:$0xff]
      %v7831 = vld [vmem:[%s101 + $0x20] sm:$0xff]
      %v7832 = vld [vmem:[%s101 + $0x28] sm:$0xff]
      %v7833 = vld [vmem:[%s101 + $0x30] sm:$0xff]
      %v7834 = vld [vmem:[%s101 + $0x38] sm:$0xff]
      %v7843 = vunpack.c.l.b16 %v7827
      %v7844 = vunpack.c.h.b16 %v7827
      %v7845 = vunpack.c.l.b16 %v7828
      %v7846 = vunpack.c.h.b16 %v7828
      %v7847 = vunpack.c.l.b16 %v7829
      %v7848 = vunpack.c.h.b16 %v7829
      %v7849 = vunpack.c.l.b16 %v7830
      %v7850 = vunpack.c.h.b16 %v7830
      %v7851 = vunpack.c.l.b16 %v7831
      %v7852 = vunpack.c.h.b16 %v7831
      %v7853 = vunpack.c.l.b16 %v7832
      %v7854 = vunpack.c.h.b16 %v7832
      %v7855 = vunpack.c.l.b16 %v7833
      %v7856 = vunpack.c.h.b16 %v7833
      %v7857 = vunpack.c.l.b16 %v7834
      %v7858 = vunpack.c.h.b16 %v7834
      %v7859 = vpack.c.b16 %v7845, %v7843
      %v7860 = vpack.c.b16 %v7846, %v7844
      %v7861 = vpack.c.b16 %v7849, %v7847
      %v7862 = vpack.c.b16 %v7850, %v7848
      %v7863 = vpack.c.b16 %v7853, %v7851
      %v7864 = vpack.c.b16 %v7854, %v7852
      %v7865 = vpack.c.b16 %v7857, %v7855
      %v7866 = vpack.c.b16 %v7858, %v7856
      %v7876 = vsel %vm2793, %v7826, 0
      %7878 = vmatprep.subr.bf16.mxu0 0
      %7879 = vmatpush1.bf16.msra.mxu0 0
      %7880 = vmatprep.subr.bf16.mxu0 0
      %7881 = vmatpush1.bf16.msra.mxu0 0
      %7882 = vmatprep.subr.bf16.mxu0 0
      %7883 = vmatpush1.bf16.msra.mxu0 0
      %7884 = vmatprep.subr.bf16.mxu0 0
      %7885 = vmatpush1.bf16.msra.mxu0 0
      %7886 = vmatprep.subr.bf16.mxu0 %v7866
      %7887 = vmatpush1.bf16.msra.mxu0 %v7865
      %7888 = vmatprep.subr.bf16.mxu0 %v7864
      %7889 = vmatpush1.bf16.msra.mxu0 %v7863
      %7890 = vmatprep.subr.bf16.mxu0 %v7862
      %7891 = vmatpush1.bf16.msra.mxu0 %v7861
      %7892 = vmatprep.subr.bf16.mxu0 %v7860
      %7893 = vmatpush1.bf16.msra.mxu0 %v7859
      %7894 = vmatprep.subr.bf16.mxu0 0
      %7895 = vmatpush2.bf16.msra.mxu0 0
      %7896 = vmatprep.subr.bf16.mxu0 0
      %7897 = vmatpush2.bf16.msra.mxu0 0
      %7898 = vmatprep.subr.bf16.mxu0 0
      %7899 = vmatpush2.bf16.msra.mxu0 0
      %7900 = vmatprep.subr.bf16.mxu0 0
      %7901 = vmatpush2.bf16.msra.mxu0 0
      %7902 = vmatprep.subr.bf16.mxu0 0
      %7903 = vmatpush2.bf16.msra.mxu0 0
      %7904 = vmatprep.subr.bf16.mxu0 0
      %7905 = vmatpush2.bf16.msra.mxu0 0
      %7906 = vmatprep.subr.bf16.mxu0 0
      %7907 = vmatpush2.bf16.msra.mxu0 0
      %7908 = vmatprep.subr.bf16.mxu0 0
      %7909 = vmatpush2.bf16.msra.mxu0 0
      %7910 = vmatprep.mubr.bf16.mxu0 0
      %7911 = vmatmul.mubr.bf16.gmra.mxu0 %v7876
      %v7912 = vpop.f32.mrf.mxu0
      %v7913 = vadd.f32 0.0, %v7912
      %v7914 = vpop.f32.mrf.mxu0
      %v7915 = vadd.f32 0.0, %v7914
      %v7916 = vpop.f32.mrf.mxu0
      %v7917 = vadd.f32 0.0, %v7916
      %v7918 = vpop.f32.mrf.mxu0
      %v7919 = vadd.f32 0.0, %v7918
      %7920 = vdwg.mxu0
      %7925 = vrot.lane.b32.xlu0 %v7913, 17
      %v7926 = vpop.permute.xlu0 %7925
      %7927 = vrot.lane.b32.xlu0 %v7915, 17
      %v7928 = vpop.permute.xlu0 %7927
      %7929 = vrot.lane.b32.xlu0 %v7917, 17
      %v7930 = vpop.permute.xlu0 %7929
      %7931 = vrot.lane.b32.xlu0 %v7919, 17
      %v7932 = vpop.permute.xlu0 %7931
      %v7933 = vsel %vm1562, %v7926, %v7928
      %v7934 = vsel %vm1562, %v7930, %v7932
      %v7941 = vsel %vm1562, 0.0, %v7926
      %v7942 = vsel %vm1562, 0.0, %v7930
      %v7943 = vsel %vm1562, %v7928, 0.0
      %v7944 = vsel %vm1562, %v7932, 0.0
      %v7945 = vmul.f32 %v7941, %v1572
      %v7946 = vmul.f32 %v7933, %v1576
      %v7947 = vmul.f32 %v7942, %v1572
      %v7948 = vmul.f32 %v7934, %v1576
      %7949 = vrot.lane.b32.xlu0 %v7913, 16
      %v7950 = vpop.permute.xlu0 %7949
      %7951 = vrot.lane.b32.xlu0 %v7915, 16
      %v7952 = vpop.permute.xlu0 %7951
      %7953 = vrot.lane.b32.xlu0 %v7917, 16
      %v7954 = vpop.permute.xlu0 %7953
      %7955 = vrot.lane.b32.xlu0 %v7919, 16
      %v7956 = vpop.permute.xlu0 %7955
      %v7957 = vsel %vm1583, %v7950, %v7952
      %v7958 = vsel %vm1583, %v7954, %v7956
      %v7965 = vsel %vm1583, 0.0, %v7950
      %v7966 = vsel %vm1583, 0.0, %v7954
      %v7967 = vsel %vm1583, %v7952, 0.0
      %v7968 = vsel %vm1583, %v7956, 0.0
      %v7969 = vmul.f32 %v7965, %v1593
      %v7970 = vmul.f32 %v7957, %v1597
      %v7971 = vmul.f32 %v7966, %v1593
      %v7972 = vmul.f32 %v7958, %v1597
      %7973 = vrot.lane.b32.xlu0 %v7913, 15
      %v7974 = vpop.permute.xlu0 %7973
      %7975 = vrot.lane.b32.xlu0 %v7915, 15
      %v7976 = vpop.permute.xlu0 %7975
      %7977 = vrot.lane.b32.xlu0 %v7917, 15
      %v7978 = vpop.permute.xlu0 %7977
      %7979 = vrot.lane.b32.xlu0 %v7919, 15
      %v7980 = vpop.permute.xlu0 %7979
      %v7981 = vsel %vm1604, %v7974, %v7976
      %v7982 = vsel %vm1604, %v7978, %v7980
      %v7989 = vsel %vm1604, 0.0, %v7974
      %v7990 = vsel %vm1604, 0.0, %v7978
      %v7991 = vsel %vm1604, %v7976, 0.0
      %v7992 = vsel %vm1604, %v7980, 0.0
      %v7993 = vmul.f32 %v7989, %v1614
      %v7994 = vmul.f32 %v7981, %v1618
      %v7995 = vmul.f32 %v7990, %v1614
      %v7996 = vmul.f32 %v7982, %v1618
      %7997 = vrot.lane.b32.xlu0 %v7913, 1
      %v7998 = vpop.permute.xlu0 %7997
      %7999 = vrot.lane.b32.xlu0 %v7915, 1
      %v8000 = vpop.permute.xlu0 %7999
      %8001 = vrot.lane.b32.xlu0 %v7917, 1
      %v8002 = vpop.permute.xlu0 %8001
      %8003 = vrot.lane.b32.xlu0 %v7919, 1
      %v8004 = vpop.permute.xlu0 %8003
      %v8005 = vsel %vm1625, %v7998, %v8000
      %v8006 = vsel %vm1625, %v8002, %v8004
      %v8013 = vsel %vm1625, 0.0, %v7998
      %v8014 = vsel %vm1625, 0.0, %v8002
      %v8015 = vsel %vm1625, %v8000, 0.0
      %v8016 = vsel %vm1625, %v8004, 0.0
      %v8017 = vmul.f32 %v8013, %v1635
      %v8018 = vmul.f32 %v8005, %v1639
      %v8019 = vmul.f32 %v8014, %v1635
      %v8020 = vmul.f32 %v8006, %v1639
      %v8021 = vmul.f32 %v8013, %v1653
      %v8022 = vmul.f32 %v8005, %v1657
      %v8023 = vmul.f32 %v8015, %v1655
      %v8024 = vmul.f32 %v8014, %v1653
      %v8025 = vmul.f32 %v8006, %v1657
      %v8026 = vmul.f32 %v8016, %v1655
      %v8027 = vmul.f32 %v7989, %v1675
      %v8028 = vmul.f32 %v7981, %v1679
      %v8029 = vmul.f32 %v7991, %v1677
      %v8030 = vmul.f32 %v7990, %v1675
      %v8031 = vmul.f32 %v7982, %v1679
      %v8032 = vmul.f32 %v7992, %v1677
      %v8033 = vmul.f32 %v7965, %v1697
      %v8034 = vmul.f32 %v7957, %v1701
      %v8035 = vmul.f32 %v7967, %v1699
      %v8036 = vmul.f32 %v7966, %v1697
      %v8037 = vmul.f32 %v7958, %v1701
      %v8038 = vmul.f32 %v7968, %v1699
      %v8039 = vmul.f32 %v7941, %v1719
      %v8040 = vmul.f32 %v7933, %v1723
      %v8041 = vmul.f32 %v7943, %v1721
      %v8042 = vmul.f32 %v7942, %v1719
      %v8043 = vmul.f32 %v7934, %v1723
      %v8044 = vmul.f32 %v7944, %v1721
      %8051 = vrot.lane.b32.xlu0 %v8021, 126
      %v8052 = vpop.permute.xlu0 %8051
      %8053 = vrot.lane.b32.xlu0 %v8022, 126
      %v8054 = vpop.permute.xlu0 %8053
      %8055 = vrot.lane.b32.xlu0 %v8023, 126
      %v8056 = vpop.permute.xlu0 %8055
      %8057 = vrot.lane.b32.xlu0 %v8024, 126
      %v8058 = vpop.permute.xlu0 %8057
      %8059 = vrot.lane.b32.xlu0 %v8025, 126
      %v8060 = vpop.permute.xlu0 %8059
      %8061 = vrot.lane.b32.xlu0 %v8026, 126
      %v8062 = vpop.permute.xlu0 %8061
      %v8063 = vsel %vm1739, %v8052, %v8054
      %v8064 = vsel %vm1739, %v8054, %v8056
      %v8065 = vsel %vm1739, %v8058, %v8060
      %v8066 = vsel %vm1739, %v8060, %v8062
      %8077 = vrot.lane.b32.xlu0 %v8027, 98
      %v8078 = vpop.permute.xlu0 %8077
      %8079 = vrot.lane.b32.xlu0 %v8028, 98
      %v8080 = vpop.permute.xlu0 %8079
      %8081 = vrot.lane.b32.xlu0 %v8029, 98
      %v8082 = vpop.permute.xlu0 %8081
      %8083 = vrot.lane.b32.xlu0 %v8030, 98
      %v8084 = vpop.permute.xlu0 %8083
      %8085 = vrot.lane.b32.xlu0 %v8031, 98
      %v8086 = vpop.permute.xlu0 %8085
      %8087 = vrot.lane.b32.xlu0 %v8032, 98
      %v8088 = vpop.permute.xlu0 %8087
      %v8089 = vsel %vm1753, %v8078, %v8080
      %v8090 = vsel %vm1753, %v8080, %v8082
      %v8091 = vsel %vm1753, %v8084, %v8086
      %v8092 = vsel %vm1753, %v8086, %v8088
      %8103 = vrot.lane.b32.xlu0 %v8033, 96
      %v8104 = vpop.permute.xlu0 %8103
      %8105 = vrot.lane.b32.xlu0 %v8034, 96
      %v8106 = vpop.permute.xlu0 %8105
      %8107 = vrot.lane.b32.xlu0 %v8035, 96
      %v8108 = vpop.permute.xlu0 %8107
      %8109 = vrot.lane.b32.xlu0 %v8036, 96
      %v8110 = vpop.permute.xlu0 %8109
      %8111 = vrot.lane.b32.xlu0 %v8037, 96
      %v8112 = vpop.permute.xlu0 %8111
      %8113 = vrot.lane.b32.xlu0 %v8038, 96
      %v8114 = vpop.permute.xlu0 %8113
      %v8115 = vsel %vm1767, %v8104, %v8106
      %v8116 = vsel %vm1767, %v8106, %v8108
      %v8117 = vsel %vm1767, %v8110, %v8112
      %v8118 = vsel %vm1767, %v8112, %v8114
      %8129 = vrot.lane.b32.xlu0 %v8039, 94
      %v8130 = vpop.permute.xlu0 %8129
      %8131 = vrot.lane.b32.xlu0 %v8040, 94
      %v8132 = vpop.permute.xlu0 %8131
      %8133 = vrot.lane.b32.xlu0 %v8041, 94
      %v8134 = vpop.permute.xlu0 %8133
      %8135 = vrot.lane.b32.xlu0 %v8042, 94
      %v8136 = vpop.permute.xlu0 %8135
      %8137 = vrot.lane.b32.xlu0 %v8043, 94
      %v8138 = vpop.permute.xlu0 %8137
      %8139 = vrot.lane.b32.xlu0 %v8044, 94
      %v8140 = vpop.permute.xlu0 %8139
      %v8141 = vsel %vm1781, %v8130, %v8132
      %v8142 = vsel %vm1781, %v8132, %v8134
      %v8143 = vsel %vm1781, %v8136, %v8138
      %v8144 = vsel %vm1781, %v8138, %v8140
      %v8149 = vpack.c.bf16 %v7947, %v7945
      %v8150 = vpack.c.bf16 %v7948, %v7946
      %v8151 = vpack.c.bf16 %v7971, %v7969
      %v8152 = vpack.c.bf16 %v7972, %v7970
      %v8153 = vpack.c.bf16 %v7995, %v7993
      %v8154 = vpack.c.bf16 %v7996, %v7994
      %v8155 = vpack.c.bf16 %v8019, %v8017
      %v8156 = vpack.c.bf16 %v8020, %v8018
      %v8157 = vpack.c.bf16 %v7917, %v7913
      %v8158 = vpack.c.bf16 %v7919, %v7915
      %v8159 = vpack.c.bf16 %v8065, %v8063
      %v8160 = vpack.c.bf16 %v8066, %v8064
      %v8161 = vpack.c.bf16 %v8091, %v8089
      %v8162 = vpack.c.bf16 %v8092, %v8090
      %v8163 = vpack.c.bf16 %v8117, %v8115
      %v8164 = vpack.c.bf16 %v8118, %v8116
      %v8165 = vpack.c.bf16 %v8143, %v8141
      %v8166 = vpack.c.bf16 %v8144, %v8142
      %v8167 = vld [vmem:[%s65] sm:$0xff]
      %8170 = vrot.lane.b32.xlu0 %v1855, 17
      %v8171 = vpop.permute.xlu0 %8170
      %8172 = vrot.lane.b32.xlu0 %v1856, 17
      %v8173 = vpop.permute.xlu0 %8172
      %v8174 = vsel %vm1562, %v8171, %v8173
      %v8178 = vsel %vm1562, 0.0, %v8171
      %v8179 = vsel %vm1562, %v8173, 0.0
      %v8180 = vmul.f32 %v8178, %v1572
      %v8181 = vmul.f32 %v8174, %v1576
      %8182 = vrot.lane.b32.xlu0 %v1855, 16
      %v8183 = vpop.permute.xlu0 %8182
      %8184 = vrot.lane.b32.xlu0 %v1856, 16
      %v8185 = vpop.permute.xlu0 %8184
      %v8186 = vsel %vm1583, %v8183, %v8185
      %v8190 = vsel %vm1583, 0.0, %v8183
      %v8191 = vsel %vm1583, %v8185, 0.0
      %v8192 = vmul.f32 %v8190, %v1593
      %v8193 = vmul.f32 %v8186, %v1597
      %8194 = vrot.lane.b32.xlu0 %v1855, 15
      %v8195 = vpop.permute.xlu0 %8194
      %8196 = vrot.lane.b32.xlu0 %v1856, 15
      %v8197 = vpop.permute.xlu0 %8196
      %v8198 = vsel %vm1604, %v8195, %v8197
      %v8202 = vsel %vm1604, 0.0, %v8195
      %v8203 = vsel %vm1604, %v8197, 0.0
      %v8204 = vmul.f32 %v8202, %v1614
      %v8205 = vmul.f32 %v8198, %v1618
      %8206 = vrot.lane.b32.xlu0 %v1855, 1
      %v8207 = vpop.permute.xlu0 %8206
      %8208 = vrot.lane.b32.xlu0 %v1856, 1
      %v8209 = vpop.permute.xlu0 %8208
      %v8210 = vsel %vm1625, %v8207, %v8209
      %v8214 = vsel %vm1625, 0.0, %v8207
      %v8215 = vsel %vm1625, %v8209, 0.0
      %v8216 = vmul.f32 %v8214, %v1635
      %v8217 = vmul.f32 %v8210, %v1639
      %v8218 = vmul.f32 %v8214, %v1653
      %v8219 = vmul.f32 %v8210, %v1657
      %v8220 = vmul.f32 %v8215, %v1655
      %v8221 = vmul.f32 %v8202, %v1675
      %v8222 = vmul.f32 %v8198, %v1679
      %v8223 = vmul.f32 %v8203, %v1677
      %v8224 = vmul.f32 %v8190, %v1697
      %v8225 = vmul.f32 %v8186, %v1701
      %v8226 = vmul.f32 %v8191, %v1699
      %v8227 = vmul.f32 %v8178, %v1719
      %v8228 = vmul.f32 %v8174, %v1723
      %v8229 = vmul.f32 %v8179, %v1721
      %8233 = vrot.lane.b32.xlu0 %v8218, 126
      %v8234 = vpop.permute.xlu0 %8233
      %8235 = vrot.lane.b32.xlu0 %v8219, 126
      %v8236 = vpop.permute.xlu0 %8235
      %8237 = vrot.lane.b32.xlu0 %v8220, 126
      %v8238 = vpop.permute.xlu0 %8237
      %v8239 = vsel %vm1739, %v8234, %v8236
      %v8240 = vsel %vm1739, %v8236, %v8238
      %8246 = vrot.lane.b32.xlu0 %v8221, 98
      %v8247 = vpop.permute.xlu0 %8246
      %8248 = vrot.lane.b32.xlu0 %v8222, 98
      %v8249 = vpop.permute.xlu0 %8248
      %8250 = vrot.lane.b32.xlu0 %v8223, 98
      %v8251 = vpop.permute.xlu0 %8250
      %v8252 = vsel %vm1753, %v8247, %v8249
      %v8253 = vsel %vm1753, %v8249, %v8251
      %8259 = vrot.lane.b32.xlu0 %v8224, 96
      %v8260 = vpop.permute.xlu0 %8259
      %8261 = vrot.lane.b32.xlu0 %v8225, 96
      %v8262 = vpop.permute.xlu0 %8261
      %8263 = vrot.lane.b32.xlu0 %v8226, 96
      %v8264 = vpop.permute.xlu0 %8263
      %v8265 = vsel %vm1767, %v8260, %v8262
      %v8266 = vsel %vm1767, %v8262, %v8264
      %8272 = vrot.lane.b32.xlu0 %v8227, 94
      %v8273 = vpop.permute.xlu0 %8272
      %8274 = vrot.lane.b32.xlu0 %v8228, 94
      %v8275 = vpop.permute.xlu0 %8274
      %8276 = vrot.lane.b32.xlu0 %v8229, 94
      %v8277 = vpop.permute.xlu0 %8276
      %v8278 = vsel %vm1781, %v8273, %v8275
      %v8279 = vsel %vm1781, %v8275, %v8277
      %v8282 = vpack.c.bf16 %v8192, %v8180
      %v8283 = vpack.c.bf16 %v8193, %v8181
      %v8284 = vpack.c.bf16 %v8216, %v8204
      %v8285 = vpack.c.bf16 %v8217, %v8205
      %v8286 = vpack.c.bf16 %v8239, %v1855
      %v8287 = vpack.c.bf16 %v8240, %v1856
      %v8288 = vpack.c.bf16 %v8265, %v8252
      %v8289 = vpack.c.bf16 %v8266, %v8253
      %v8290 = vpack.c.bf16 %v8278, %v8278
      %v8291 = vpack.c.bf16 %v8279, %v8279
      %v8292 = vld [vmem:[%s67] sm:$0xf]
      %v8294 = vsel %vm1803, %v8292, 0
      %v8297 = vsel %vm1807, %v8290, 0
      %v8300 = vsel %vm1807, %v8291, 0
      %8302 = vmatprep.subr.bf16.mxu0 0
      %8303 = vmatpush1.bf16.msra.mxu0 0
      %8304 = vmatprep.subr.bf16.mxu0 0
      %8305 = vmatpush1.bf16.msra.mxu0 0
      %8306 = vmatprep.subr.bf16.mxu0 0
      %8307 = vmatpush1.bf16.msra.mxu0 0
      %8308 = vmatprep.subr.bf16.mxu0 %v8300
      %8309 = vmatpush1.bf16.msra.mxu0 %v8297
      %8310 = vmatprep.subr.bf16.mxu0 %v8289
      %8311 = vmatpush1.bf16.msra.mxu0 %v8288
      %8312 = vmatprep.subr.bf16.mxu0 %v8287
      %8313 = vmatpush1.bf16.msra.mxu0 %v8286
      %8314 = vmatprep.subr.bf16.mxu0 %v8285
      %8315 = vmatpush1.bf16.msra.mxu0 %v8284
      %8316 = vmatprep.subr.bf16.mxu0 %v8283
      %8317 = vmatpush1.bf16.msra.mxu0 %v8282
      %8318 = vmatprep.subr.bf16.mxu0 0
      %8319 = vmatpush2.bf16.msra.mxu0 0
      %8320 = vmatprep.subr.bf16.mxu0 0
      %8321 = vmatpush2.bf16.msra.mxu0 0
      %8322 = vmatprep.subr.bf16.mxu0 0
      %8323 = vmatpush2.bf16.msra.mxu0 0
      %8324 = vmatprep.subr.bf16.mxu0 0
      %8325 = vmatpush2.bf16.msra.mxu0 0
      %8326 = vmatprep.subr.bf16.mxu0 0
      %8327 = vmatpush2.bf16.msra.mxu0 0
      %8328 = vmatprep.subr.bf16.mxu0 0
      %8329 = vmatpush2.bf16.msra.mxu0 0
      %8330 = vmatprep.subr.bf16.mxu0 0
      %8331 = vmatpush2.bf16.msra.mxu0 0
      %8332 = vmatprep.subr.bf16.mxu0 0
      %8333 = vmatpush2.bf16.msra.mxu0 0
      %8334 = vmatprep.mubr.bf16.mxu0 0
      %8335 = vmatmul.mubr.bf16.gmra.mxu0 %v8294
      %v8336 = vpop.f32.mrf.mxu0
      %v8337 = vadd.f32 0.0, %v8336
      %v8338 = vpop.f32.mrf.mxu0
      %v8339 = vadd.f32 0.0, %v8338
      %v8340 = vpop.f32.mrf.mxu0
      %v8341 = vpop.f32.mrf.mxu0
      %8342 = vdwg.mxu0
      %v8344 = vunpack.c.l.b16 %v8167
      %v8345 = vunpack.c.h.b16 %v8167
      %v8346 = vpack.c.b16 %v8344, %v8344
      %v8347 = vpack.c.b16 %v8345, %v8345
      %v8350 = vsel %vm1583, %v8347, 0
      %8352 = vmatprep.subr.bf16.mxu0 %v8164
      %8353 = vmatpush1.bf16.msra.mxu0 %v8163
      %8354 = vmatprep.subr.bf16.mxu0 %v8162
      %8355 = vmatpush1.bf16.msra.mxu0 %v8161
      %8356 = vmatprep.subr.bf16.mxu0 %v8160
      %8357 = vmatpush1.bf16.msra.mxu0 %v8159
      %8358 = vmatprep.subr.bf16.mxu0 %v8158
      %8359 = vmatpush1.bf16.msra.mxu0 %v8157
      %8360 = vmatprep.subr.bf16.mxu0 %v8156
      %8361 = vmatpush1.bf16.msra.mxu0 %v8155
      %8362 = vmatprep.subr.bf16.mxu0 %v8154
      %8363 = vmatpush1.bf16.msra.mxu0 %v8153
      %8364 = vmatprep.subr.bf16.mxu0 %v8152
      %8365 = vmatpush1.bf16.msra.mxu0 %v8151
      %8366 = vmatprep.subr.bf16.mxu0 %v8150
      %8367 = vmatpush1.bf16.msra.mxu0 %v8149
      %8368 = vmatprep.subr.bf16.mxu0 0
      %8369 = vmatpush2.bf16.msra.mxu0 0
      %8370 = vmatprep.subr.bf16.mxu0 0
      %8371 = vmatpush2.bf16.msra.mxu0 0
      %8372 = vmatprep.subr.bf16.mxu0 0
      %8373 = vmatpush2.bf16.msra.mxu0 0
      %8374 = vmatprep.subr.bf16.mxu0 0
      %8375 = vmatpush2.bf16.msra.mxu0 0
      %8376 = vmatprep.subr.bf16.mxu0 0
      %8377 = vmatpush2.bf16.msra.mxu0 0
      %8378 = vmatprep.subr.bf16.mxu0 0
      %8379 = vmatpush2.bf16.msra.mxu0 0
      %8380 = vmatprep.subr.bf16.mxu0 0
      %8381 = vmatpush2.bf16.msra.mxu0 0
      %8382 = vmatprep.subr.bf16.mxu0 %v8166
      %8383 = vmatpush2.bf16.msra.mxu0 %v8165
      %8384 = vmatprep.mubr.bf16.mxu0 %v8350
      %8385 = vmatmul.mubr.bf16.gmra.mxu0 %v8346
      %v8386 = vpop.f32.mrf.mxu0
      %v8387 = vadd.f32 %v8337, %v8386
      %v8388 = vpop.f32.mrf.mxu0
      %v8389 = vadd.f32 %v8339, %v8388
      %v8390 = vpop.f32.mrf.mxu0
      %v8391 = vpop.f32.mrf.mxu0
      %8392 = vdwg.mxu0
      %v8393 = vmul.f32 %v2331, %v1572
      %v8394 = vmul.f32 %v2327, %v1576
      %v8395 = vmul.f32 %v2321, %v1593
      %v8396 = vmul.f32 %v2317, %v1597
      %8397 = vrot.lane.b32.xlu0 %v2038, 15
      %v8398 = vpop.permute.xlu0 %8397
      %8399 = vrot.lane.b32.xlu0 %v2039, 15
      %v8400 = vpop.permute.xlu0 %8399
      %v8401 = vsel %vm1604, %v8398, %v8400
      %v8405 = vsel %vm1604, 0.0, %v8398
      %v8406 = vsel %vm1604, %v8400, 0.0
      %v8407 = vmul.f32 %v8405, %v1614
      %v8408 = vmul.f32 %v8401, %v1618
      %v8409 = vmul.f32 %v2297, %v1635
      %v8410 = vmul.f32 %v2293, %v1639
      %v8411 = vmul.f32 %v2297, %v1653
      %v8412 = vmul.f32 %v2293, %v1657
      %v8413 = vmul.f32 %v2298, %v1655
      %v8414 = vmul.f32 %v8405, %v1675
      %v8415 = vmul.f32 %v8401, %v1679
      %v8416 = vmul.f32 %v8406, %v1677
      %v8417 = vmul.f32 %v2321, %v1697
      %v8418 = vmul.f32 %v2317, %v1701
      %v8419 = vmul.f32 %v2322, %v1699
      %v8420 = vmul.f32 %v2331, %v1719
      %v8421 = vmul.f32 %v2327, %v1723
      %v8422 = vmul.f32 %v2332, %v1721
      %8426 = vrot.lane.b32.xlu0 %v8411, 126
      %v8427 = vpop.permute.xlu0 %8426
      %8428 = vrot.lane.b32.xlu0 %v8412, 126
      %v8429 = vpop.permute.xlu0 %8428
      %8430 = vrot.lane.b32.xlu0 %v8413, 126
      %v8431 = vpop.permute.xlu0 %8430
      %v8432 = vsel %vm1739, %v8427, %v8429
      %v8433 = vsel %vm1739, %v8429, %v8431
      %8439 = vrot.lane.b32.xlu0 %v8414, 98
      %v8440 = vpop.permute.xlu0 %8439
      %8441 = vrot.lane.b32.xlu0 %v8415, 98
      %v8442 = vpop.permute.xlu0 %8441
      %8443 = vrot.lane.b32.xlu0 %v8416, 98
      %v8444 = vpop.permute.xlu0 %8443
      %v8445 = vsel %vm1753, %v8440, %v8442
      %v8446 = vsel %vm1753, %v8442, %v8444
      %8452 = vrot.lane.b32.xlu0 %v8417, 96
      %v8453 = vpop.permute.xlu0 %8452
      %8454 = vrot.lane.b32.xlu0 %v8418, 96
      %v8455 = vpop.permute.xlu0 %8454
      %8456 = vrot.lane.b32.xlu0 %v8419, 96
      %v8457 = vpop.permute.xlu0 %8456
      %v8458 = vsel %vm1767, %v8453, %v8455
      %v8459 = vsel %vm1767, %v8455, %v8457
      %8465 = vrot.lane.b32.xlu0 %v8420, 94
      %v8466 = vpop.permute.xlu0 %8465
      %8467 = vrot.lane.b32.xlu0 %v8421, 94
      %v8468 = vpop.permute.xlu0 %8467
      %8469 = vrot.lane.b32.xlu0 %v8422, 94
      %v8470 = vpop.permute.xlu0 %8469
      %v8471 = vsel %vm1781, %v8466, %v8468
      %v8472 = vsel %vm1781, %v8468, %v8470
      %v8475 = vpack.c.bf16 %v8395, %v8393
      %v8476 = vpack.c.bf16 %v8396, %v8394
      %v8477 = vpack.c.bf16 %v8409, %v8407
      %v8478 = vpack.c.bf16 %v8410, %v8408
      %v8479 = vpack.c.bf16 %v8432, %v2038
      %v8480 = vpack.c.bf16 %v8433, %v2039
      %v8481 = vpack.c.bf16 %v8458, %v8445
      %v8482 = vpack.c.bf16 %v8459, %v8446
      %v8483 = vpack.c.bf16 %v8471, %v8471
      %v8484 = vpack.c.bf16 %v8472, %v8472
      %v8485 = vld [vmem:[%s69] sm:$0xf]
      %v8487 = vsel %vm1803, %v8485, 0
      %v8490 = vsel %vm1807, %v8483, 0
      %v8493 = vsel %vm1807, %v8484, 0
      %8495 = vmatprep.subr.bf16.mxu0 0
      %8496 = vmatpush1.bf16.msra.mxu0 0
      %8497 = vmatprep.subr.bf16.mxu0 0
      %8498 = vmatpush1.bf16.msra.mxu0 0
      %8499 = vmatprep.subr.bf16.mxu0 0
      %8500 = vmatpush1.bf16.msra.mxu0 0
      %8501 = vmatprep.subr.bf16.mxu0 %v8493
      %8502 = vmatpush1.bf16.msra.mxu0 %v8490
      %8503 = vmatprep.subr.bf16.mxu0 %v8482
      %8504 = vmatpush1.bf16.msra.mxu0 %v8481
      %8505 = vmatprep.subr.bf16.mxu0 %v8480
      %8506 = vmatpush1.bf16.msra.mxu0 %v8479
      %8507 = vmatprep.subr.bf16.mxu0 %v8478
      %8508 = vmatpush1.bf16.msra.mxu0 %v8477
      %8509 = vmatprep.subr.bf16.mxu0 %v8476
      %8510 = vmatpush1.bf16.msra.mxu0 %v8475
      %8511 = vmatprep.subr.bf16.mxu0 0
      %8512 = vmatpush2.bf16.msra.mxu0 0
      %8513 = vmatprep.subr.bf16.mxu0 0
      %8514 = vmatpush2.bf16.msra.mxu0 0
      %8515 = vmatprep.subr.bf16.mxu0 0
      %8516 = vmatpush2.bf16.msra.mxu0 0
      %8517 = vmatprep.subr.bf16.mxu0 0
      %8518 = vmatpush2.bf16.msra.mxu0 0
      %8519 = vmatprep.subr.bf16.mxu0 0
      %8520 = vmatpush2.bf16.msra.mxu0 0
      %8521 = vmatprep.subr.bf16.mxu0 0
      %8522 = vmatpush2.bf16.msra.mxu0 0
      %8523 = vmatprep.subr.bf16.mxu0 0
      %8524 = vmatpush2.bf16.msra.mxu0 0
      %8525 = vmatprep.subr.bf16.mxu0 0
      %8526 = vmatpush2.bf16.msra.mxu0 0
      %8527 = vmatprep.mubr.bf16.mxu0 0
      %8528 = vmatmul.mubr.bf16.gmra.mxu0 %v8487
      %v8529 = vpop.f32.mrf.mxu0
      %v8530 = vadd.f32 0.0, %v8529
      %v8531 = vpop.f32.mrf.mxu0
      %v8532 = vadd.f32 0.0, %v8531
      %v8533 = vpop.f32.mrf.mxu0
      %v8534 = vpop.f32.mrf.mxu0
      %8535 = vdwg.mxu0
      %v8536 = vadd.f32 %v8387, %v8530
      %v8537 = vadd.f32 %v8389, %v8532
      %v8538 = vld [vmem:[%s71] sm:$0xff]
      %8540 = vset.pattern.permute.xlu0 0
      %8541 = vperm.xlu0 %8540, %v8538
      %v8542 = vpop.permute.xlu0 %8541
      %v8544 = vadd.f32 %v8536, %v8542
      %v8545 = vadd.f32 %v8537, %v8542
      %v8546 = vmax.f32 %v8544, 0.0
      %v8547 = vmax.f32 %v8545, 0.0
      %v8548 = vld [vmem:[%s73] sm:$0x7]
      %v8549 = vpack.c.bf16 %v8546, %v8546
      %v8550 = vpack.c.bf16 %v8547, %v8547
      %v8551 = vld [vmem:[%s75] sm:$0x1f]
      %8553 = vset.pattern.permute.xlu0 0
      %8554 = vperm.xlu0 %8553, %v8551
      %v8555 = vpop.permute.xlu0 %8554
      %v8558 = vsel %vm2422, %v8548, 0
      %v8561 = vsel %vm1807, %v8549, 0
      %v8564 = vsel %vm1807, %v8550, 0
      %8566 = vmatprep.subr.bf16.mxu0 0
      %8567 = vmatpush1.bf16.msra.mxu0 0
      %8568 = vmatprep.subr.bf16.mxu0 0
      %8569 = vmatpush1.bf16.msra.mxu0 0
      %8570 = vmatprep.subr.bf16.mxu0 0
      %8571 = vmatpush1.bf16.msra.mxu0 0
      %8572 = vmatprep.subr.bf16.mxu0 0
      %8573 = vmatpush1.bf16.msra.mxu0 0
      %8574 = vmatprep.subr.bf16.mxu0 0
      %8575 = vmatpush1.bf16.msra.mxu0 0
      %8576 = vmatprep.subr.bf16.mxu0 0
      %8577 = vmatpush1.bf16.msra.mxu0 0
      %8578 = vmatprep.subr.bf16.mxu0 0
      %8579 = vmatpush1.bf16.msra.mxu0 0
      %8580 = vmatprep.subr.bf16.mxu0 %v8564
      %8581 = vmatpush1.bf16.msra.mxu0 %v8561
      %8582 = vmatprep.subr.bf16.mxu0 0
      %8583 = vmatpush2.bf16.msra.mxu0 0
      %8584 = vmatprep.subr.bf16.mxu0 0
      %8585 = vmatpush2.bf16.msra.mxu0 0
      %8586 = vmatprep.subr.bf16.mxu0 0
      %8587 = vmatpush2.bf16.msra.mxu0 0
      %8588 = vmatprep.subr.bf16.mxu0 0
      %8589 = vmatpush2.bf16.msra.mxu0 0
      %8590 = vmatprep.subr.bf16.mxu0 0
      %8591 = vmatpush2.bf16.msra.mxu0 0
      %8592 = vmatprep.subr.bf16.mxu0 0
      %8593 = vmatpush2.bf16.msra.mxu0 0
      %8594 = vmatprep.subr.bf16.mxu0 0
      %8595 = vmatpush2.bf16.msra.mxu0 0
      %8596 = vmatprep.subr.bf16.mxu0 0
      %8597 = vmatpush2.bf16.msra.mxu0 0
      %8598 = vmatprep.mubr.bf16.mxu0 0
      %8599 = vmatmul.mubr.bf16.gmra.mxu0 %v8558
      %v8600 = vpop.f32.mrf.mxu0
      %v8601 = vadd.f32 %v8555, %v8600
      %v8602 = vpop.f32.mrf.mxu0
      %v8603 = vadd.f32 %v8555, %v8602
      %v8604 = vpop.f32.mrf.mxu0
      %v8605 = vpop.f32.mrf.mxu0
      %8606 = vdwg.mxu0
      %8607 = vst [vmem:[%s1538] sm:$0x1f] %v8601
      %8608 = vst [vmem:[%s1538 + $0x8] sm:$0x1f] %v8603
      %p8609 = scmp.lt.s32.totalorder %s114, 1
      %s8610 = scalar_select %p8609, %s114, 1
      %s8611 = smul.addr %s8610, 2
      %s8612 = smul.addr %s8611, 8
      %s8613 = scalar_lea.vmem %s103, %s8612
      // Predicated region
      $region225: #{dual_unet_cwf.1} parent=223 // pred_check
        %p8614 = pneg %p1213
      $region226: #{dual_unet_cwf.1} parent=223 // pred_check_branch
        %8616 = sbr.rel (%p8614) target = $region228
      $region227: #{dual_unet_cwf.1} parent=223 // pred_region
        _
      $region228: #{dual_unet_cwf.1} parent=223 // pred_fallthru
        _
    $region224: #{dual_unet_cwf.1} parent=5 // pred_fallthru
      _
    %p8617 = scmp.le.s32.totalorder 2, %s109
    // Predicated region
    $region229: #{dual_unet_cwf.1} parent=5 // pred_check
      %p8618 = pneg %p8617
    $region230: #{dual_unet_cwf.1} parent=5 // pred_check_branch
      %8620 = sbr.rel (%p8618) target = $region232
    $region231: #{dual_unet_cwf.1} parent=5 // pred_region
      %s8621 = ssub.s32 %s109, 2
      // Predicated region
      $region233: #{dual_unet_cwf.1} parent=231 // pred_check
        %p8622 = pneg %p1219
      $region234: #{dual_unet_cwf.1} parent=231 // pred_check_branch
        %8624 = sbr.rel (%p8622) target = $region236
      $region235: #{dual_unet_cwf.1} parent=231 // pred_region
        %p8625 = scmp.lt.s32.totalorder %s115, 1
        %s8626 = scalar_select %p8625, %s115, 1
        %s8627 = smul.addr %s8626, 2
        %s8628 = smul.addr %s8627, 8
        %s8629 = scalar_lea.vmem %s103, %s8628
      $region236: #{dual_unet_cwf.1} parent=231 // pred_fallthru
        _
    $region232: #{dual_unet_cwf.1} parent=5 // pred_fallthru
      _
  $region6: #{dual_unet_cwf.1} parent=0 // loop_footer
    %s113 = sadd.s32 1, %s109
  $region7: #{dual_unet_cwf.1} parent=0 // loop_footer_branch
    %108 = sbr.rel target = $region3
  $region8: #{dual_unet_cwf.1} parent=0 // loop_exit
    _

</llo_original>
